<compile_context>
chip_gen: v6e
topology: v6e:2x2x1
jax: 0.10.0
libtpu: 0.0.40
codegen_flags: <defaults>
</compile_context>

<pallas_src>
import functools

import jax
import jax.numpy as jnp
from jax import lax
from jax.experimental import pallas as pl
from jax.experimental.pallas import tpu as pltpu


_MOSAIC = pltpu.CompilerParams(vmem_limit_bytes=32 * 1024 * 1024)


# ---------------------------------------------------------------------------
# Fused matmul (+ bias, optional ReLU).  All operands at these sizes fit in
# VMEM, so a single grid-less invocation with one big MXU matmul is the
# fastest structure (no per-step pipeline overhead, no relayouts).
# ---------------------------------------------------------------------------
def _matmul_bias_kernel(x_ref, w_ref, b_ref, o_ref, *, relu):
    acc = jnp.dot(x_ref[...], w_ref[...], preferred_element_type=jnp.float32)
    acc = acc + b_ref[...]            # (1, N) broadcast, f32
    if relu:
        acc = jnp.maximum(acc, 0.0)
    o_ref[...] = acc


def matmul_bias(x, w, b, *, relu=False):
    M, K = x.shape
    K2, N = w.shape
    assert K == K2
    kernel = functools.partial(_matmul_bias_kernel, relu=relu)
    return pl.pallas_call(
        kernel,
        out_shape=jax.ShapeDtypeStruct((M, N), jnp.float32),
        compiler_params=_MOSAIC,
    )(x, w, b.reshape(1, N))


# ---------------------------------------------------------------------------
# im2col in the wrapper (XLA handles the shifted slices; the Pallas kernel then
# sees a single dense (M, KH*KW*Cin) @ (KH*KW*Cin, Cout) contraction).
# Column order is (kh, kw, c), matching w_hwio.reshape(KH*KW*Cin, Cout).
# ---------------------------------------------------------------------------
def _im2col(x_nhwc, k):
    N, H, W, C = x_nhwc.shape
    p = k // 2
    xp = jnp.pad(x_nhwc, ((0, 0), (p, p), (p, p), (0, 0)))
    cols = [xp[:, kh:kh + H, kw:kw + W, :] for kh in range(k) for kw in range(k)]
    patches = jnp.concatenate(cols, axis=-1)          # (N, H, W, k*k*C)
    return patches.reshape(N * H * W, k * k * C)


# ---------------------------------------------------------------------------
# Single-layer unidirectional GRU (h0 = 0), gate order [r, z, n] as in PyTorch,
# fused with the Linear + Softmax head.  gi = x @ W_ih + b_ih is precomputed
# outside; the recurrence carries h in registers via lax.fori_loop and does only
# one (B, Hd)@(Hd, 3Hd) matmul + gate math (+ the tiny classifier) per step.
# ---------------------------------------------------------------------------
def _gru_head_kernel(gi_ref, whh_ref, bhh_ref, wlin_ref, blin_ref, o_ref):
    S, B, _ = gi_ref.shape
    Hd = whh_ref.shape[0]
    bhh = bhh_ref[...]                                  # (1, 3*Hd) f32
    blin = blin_ref[...]                                # (1, C)    f32

    def step(t, h):
        gi_t = gi_ref[t]                                # (B, 3*Hd) f32
        gh = jnp.dot(h.astype(jnp.bfloat16), whh_ref[...],
                     preferred_element_type=jnp.float32) + bhh
        r = jax.nn.sigmoid(gi_t[:, 0 * Hd:1 * Hd] + gh[:, 0 * Hd:1 * Hd])
        z = jax.nn.sigmoid(gi_t[:, 1 * Hd:2 * Hd] + gh[:, 1 * Hd:2 * Hd])
        n = jnp.tanh(gi_t[:, 2 * Hd:3 * Hd] + r * gh[:, 2 * Hd:3 * Hd])
        h_new = (1.0 - z) * n + z * h
        # Fused classifier head: Linear + Softmax on this step's hidden state.
        logits = jnp.dot(h_new.astype(jnp.bfloat16), wlin_ref[...],
                         preferred_element_type=jnp.float32) + blin
        logits = logits - jnp.max(logits, axis=-1, keepdims=True)
        e = jnp.exp(logits)
        o_ref[t] = e * pl.reciprocal(jnp.sum(e, axis=-1, keepdims=True), approx=True)
        return h_new

    lax.fori_loop(0, S, step, jnp.zeros((B, Hd), jnp.float32))


def gru_linear_softmax(gi, w_hh_bf16, b_hh, w_lin_bf16, b_lin):
    S, B, G = gi.shape
    C = w_lin_bf16.shape[1]
    return pl.pallas_call(
        _gru_head_kernel,
        out_shape=jax.ShapeDtypeStruct((S, B, C), jnp.float32),
        compiler_params=_MOSAIC,
    )(gi, w_hh_bf16, b_hh.reshape(1, G), w_lin_bf16, b_lin.reshape(1, C))


# ---------------------------------------------------------------------------
# Parameters (deterministic synthetic init, shapes from EmotionRecognizer.__init__)
# ---------------------------------------------------------------------------
def init_params(key, hidden_dims=256, num_classes=8, kernel_size=5):
    ks = jax.random.split(key, 10)
    s = 0.08
    return dict(
        conv1_w=jax.random.normal(ks[0], (kernel_size, kernel_size, 1, 64), jnp.float32) * s,
        conv1_b=jax.random.normal(ks[1], (64,), jnp.float32) * s,
        conv2_w=jax.random.normal(ks[2], (kernel_size, kernel_size, 64, 64), jnp.float32) * s,
        conv2_b=jax.random.normal(ks[3], (64,), jnp.float32) * s,
        w_ih_t=jax.random.normal(ks[4], (64, 3 * hidden_dims), jnp.float32) * s,
        w_hh_t=jax.random.normal(ks[5], (hidden_dims, 3 * hidden_dims), jnp.float32) * s,
        b_ih=jax.random.normal(ks[6], (3 * hidden_dims,), jnp.float32) * s,
        b_hh=jax.random.normal(ks[7], (3 * hidden_dims,), jnp.float32) * s,
        lin_w_t=jax.random.normal(ks[8], (hidden_dims, num_classes), jnp.float32) * s,
        lin_b=jax.random.normal(ks[9], (num_classes,), jnp.float32) * s,
    )


# ---------------------------------------------------------------------------
# Full forward (inference / eval mode: dropout = identity)
# ---------------------------------------------------------------------------
@jax.jit
def emotion_recognizer_forward(x_nchw, p):
    N, Cin, H, W = x_nchw.shape
    K = p["conv1_w"].shape[0]            # kernel_size
    Cmid = p["conv1_w"].shape[-1]        # 64
    Hd = p["w_hh_t"].shape[0]            # hidden_dims
    bf16 = jnp.bfloat16

    x = jnp.transpose(x_nchw, (0, 2, 3, 1)).astype(jnp.float32)   # NCHW -> NHWC

    # ---- conv1 + ReLU (+ dropout1 = id): one (N*H*W, 25)@(25, 64) matmul.
    p1 = _im2col(x, K)                                            # (N*H*W, K*K*Cin)
    w1 = p["conv1_w"].reshape(K * K * Cin, Cmid)
    kpad = (-p1.shape[1]) % 8            # pad tiny contraction 25 -> 32 (zeros are exact)
    p1 = jnp.pad(p1, ((0, 0), (0, kpad)))
    w1 = jnp.pad(w1, ((0, kpad), (0, 0)))
    y1 = matmul_bias(p1.astype(bf16), w1.astype(bf16), p["conv1_b"], relu=True)

    # ---- conv2 + ReLU (+ dropout2 = id): one (N*H*W, 1600)@(1600, 64) matmul.
    p2 = _im2col(y1.reshape(N, H, W, Cmid), K)                    # (N*H*W, K*K*64)
    w2 = p["conv2_w"].reshape(K * K * Cmid, Cmid)
    y2 = matmul_bias(p2.astype(bf16), w2.astype(bf16), p["conv2_b"], relu=True)

    # ---- (N, H*W, 64) -> (seq=H*W, batch=N, 64)
    seq = jnp.transpose(y2.reshape(N, H * W, Cmid), (1, 0, 2))    # (S, B, 64)
    S, B, F = seq.shape

    # ---- GRU input projection hoisted out of the recurrence: one big matmul.
    gi = matmul_bias(seq.reshape(S * B, F).astype(bf16),
                     p["w_ih_t"].astype(bf16), p["b_ih"], relu=False)
    gi = gi.reshape(S, B, 3 * Hd)

    # ---- GRU recurrence fused with Linear + Softmax head.
    probs = gru_linear_softmax(gi,
                               p["w_hh_t"].astype(bf16), p["b_hh"],
                               p["lin_w_t"].astype(bf16), p["lin_b"])
    return probs                                                  # (S, N, num_classes)


if __name__ == "__main__":
    key = jax.random.PRNGKey(0)
    pkey, xkey = jax.random.split(key)
    params = init_params(pkey)
    x = jax.random.normal(xkey, (2, 1, 16, 16), jnp.float32)   # NCHW, 1 input channel

    out = jax.block_until_ready(emotion_recognizer_forward(x, params))

    assert out.shape == (16 * 16, 2, 8), out.shape
    assert bool(jnp.all(jnp.isfinite(out)))
    # approx-reciprocal softmax denominator => rows sum to 1 within ~1e-4
    assert bool(jnp.allclose(jnp.sum(out, axis=-1), 1.0, atol=5e-3))
    print("KERNEL_OK")
</pallas_src>

<mosaic_0001>
module attributes {stable_mosaic.version = 11 : i64} {
  func.func @_matmul_bias_kernel(%arg0: memref<512x32xbf16, #tpu.memory_space<vmem>>, %arg1: memref<32x64xbf16, #tpu.memory_space<vmem>>, %arg2: memref<1x64xf32, #tpu.memory_space<vmem>>, %arg3: memref<512x64xf32, #tpu.memory_space<vmem>>) attributes {dimension_semantics = [], scalar_prefetch = 0 : i64, scratch_operands = 0 : i64, tpu.core_type = #tpu.core_type<tc>} {
    %c0 = arith.constant 0 : index
    %c0_0 = arith.constant 0 : index
    %0 = vector.load %arg0[%c0, %c0_0] : memref<512x32xbf16, #tpu.memory_space<vmem>>, vector<512x32xbf16>
    %c0_1 = arith.constant 0 : index
    %c0_2 = arith.constant 0 : index
    %1 = vector.load %arg1[%c0_1, %c0_2] : memref<32x64xbf16, #tpu.memory_space<vmem>>, vector<32x64xbf16>
    %cst = arith.constant dense<0.000000e+00> : vector<512x64xf32>
    %2 = tpu.matmul %0, %1, %cst {dimension_numbers = #tpu.dot_dimension_numbers<[1], [0], [0], [1], [0, 0, 1, 1], [], []>} : vector<512x32xbf16>, vector<32x64xbf16>, vector<512x64xf32> -> vector<512x64xf32>
    %c0_3 = arith.constant 0 : index
    %c0_4 = arith.constant 0 : index
    %3 = vector.load %arg2[%c0_3, %c0_4] : memref<1x64xf32, #tpu.memory_space<vmem>>, vector<1x64xf32>
    %4 = vector.broadcast %3 : vector<1x64xf32> to vector<512x64xf32>
    %5 = arith.addf %2, %4 : vector<512x64xf32>
    %cst_5 = arith.constant 0.000000e+00 : f32
    %6 = vector.broadcast %cst_5 : f32 to vector<512x64xf32>
    %7 = arith.maximumf %5, %6 : vector<512x64xf32>
    %c0_6 = arith.constant 0 : index
    %c0_7 = arith.constant 0 : index
    %8 = vector.load %arg3[%c0_6, %c0_7] : memref<512x64xf32, #tpu.memory_space<vmem>>, vector<512x64xf32>
    tpu.vector_store %arg3[%c0_6, %c0_7], %7 {strides = array<i32>} : memref<512x64xf32, #tpu.memory_space<vmem>>, vector<512x64xf32>,
    return
  }
}

module attributes {stable_mosaic.version = 11 : i64} {
  func.func @_matmul_bias_kernel(%arg0: memref<512x1600xbf16, #tpu.memory_space<vmem>>, %arg1: memref<1600x64xbf16, #tpu.memory_space<vmem>>, %arg2: memref<1x64xf32, #tpu.memory_space<vmem>>, %arg3: memref<512x64xf32, #tpu.memory_space<vmem>>) attributes {dimension_semantics = [], scalar_prefetch = 0 : i64, scratch_operands = 0 : i64, tpu.core_type = #tpu.core_type<tc>} {
    %c0 = arith.constant 0 : index
    %c0_0 = arith.constant 0 : index
    %0 = vector.load %arg0[%c0, %c0_0] : memref<512x1600xbf16, #tpu.memory_space<vmem>>, vector<512x1600xbf16>
    %c0_1 = arith.constant 0 : index
    %c0_2 = arith.constant 0 : index
    %1 = vector.load %arg1[%c0_1, %c0_2] : memref<1600x64xbf16, #tpu.memory_space<vmem>>, vector<1600x64xbf16>
    %cst = arith.constant dense<0.000000e+00> : vector<512x64xf32>
    %2 = tpu.matmul %0, %1, %cst {dimension_numbers = #tpu.dot_dimension_numbers<[1], [0], [0], [1], [0, 0, 1, 1], [], []>} : vector<512x1600xbf16>, vector<1600x64xbf16>, vector<512x64xf32> -> vector<512x64xf32>
    %c0_3 = arith.constant 0 : index
    %c0_4 = arith.constant 0 : index
    %3 = vector.load %arg2[%c0_3, %c0_4] : memref<1x64xf32, #tpu.memory_space<vmem>>, vector<1x64xf32>
    %4 = vector.broadcast %3 : vector<1x64xf32> to vector<512x64xf32>
    %5 = arith.addf %2, %4 : vector<512x64xf32>
    %cst_5 = arith.constant 0.000000e+00 : f32
    %6 = vector.broadcast %cst_5 : f32 to vector<512x64xf32>
    %7 = arith.maximumf %5, %6 : vector<512x64xf32>
    %c0_6 = arith.constant 0 : index
    %c0_7 = arith.constant 0 : index
    %8 = vector.load %arg3[%c0_6, %c0_7] : memref<512x64xf32, #tpu.memory_space<vmem>>, vector<512x64xf32>
    tpu.vector_store %arg3[%c0_6, %c0_7], %7 {strides = array<i32>} : memref<512x64xf32, #tpu.memory_space<vmem>>, vector<512x64xf32>,
    return
  }
}

module attributes {stable_mosaic.version = 11 : i64} {
  func.func @_matmul_bias_kernel(%arg0: memref<512x64xbf16, #tpu.memory_space<vmem>>, %arg1: memref<64x768xbf16, #tpu.memory_space<vmem>>, %arg2: memref<1x768xf32, #tpu.memory_space<vmem>>, %arg3: memref<512x768xf32, #tpu.memory_space<vmem>>) attributes {dimension_semantics = [], scalar_prefetch = 0 : i64, scratch_operands = 0 : i64, tpu.core_type = #tpu.core_type<tc>} {
    %c0 = arith.constant 0 : index
    %c0_0 = arith.constant 0 : index
    %0 = vector.load %arg0[%c0, %c0_0] : memref<512x64xbf16, #tpu.memory_space<vmem>>, vector<512x64xbf16>
    %c0_1 = arith.constant 0 : index
    %c0_2 = arith.constant 0 : index
    %1 = vector.load %arg1[%c0_1, %c0_2] : memref<64x768xbf16, #tpu.memory_space<vmem>>, vector<64x768xbf16>
    %cst = arith.constant dense<0.000000e+00> : vector<512x768xf32>
    %2 = tpu.matmul %0, %1, %cst {dimension_numbers = #tpu.dot_dimension_numbers<[1], [0], [0], [1], [0, 0, 1, 1], [], []>} : vector<512x64xbf16>, vector<64x768xbf16>, vector<512x768xf32> -> vector<512x768xf32>
    %c0_3 = arith.constant 0 : index
    %c0_4 = arith.constant 0 : index
    %3 = vector.load %arg2[%c0_3, %c0_4] : memref<1x768xf32, #tpu.memory_space<vmem>>, vector<1x768xf32>
    %4 = vector.broadcast %3 : vector<1x768xf32> to vector<512x768xf32>
    %5 = arith.addf %2, %4 : vector<512x768xf32>
    %c0_5 = arith.constant 0 : index
    %c0_6 = arith.constant 0 : index
    %6 = vector.load %arg3[%c0_5, %c0_6] : memref<512x768xf32, #tpu.memory_space<vmem>>, vector<512x768xf32>
    tpu.vector_store %arg3[%c0_5, %c0_6], %5 {strides = array<i32>} : memref<512x768xf32, #tpu.memory_space<vmem>>, vector<512x768xf32>,
    return
  }
}

module attributes {stable_mosaic.version = 11 : i64} {
  func.func @_gru_head_kernel(%arg0: memref<256x2x768xf32, #tpu.memory_space<vmem>>, %arg1: memref<256x768xbf16, #tpu.memory_space<vmem>>, %arg2: memref<1x768xf32, #tpu.memory_space<vmem>>, %arg3: memref<256x8xbf16, #tpu.memory_space<vmem>>, %arg4: memref<1x8xf32, #tpu.memory_space<vmem>>, %arg5: memref<256x2x8xf32, #tpu.memory_space<vmem>>) attributes {dimension_semantics = [], scalar_prefetch = 0 : i64, scratch_operands = 0 : i64, tpu.core_type = #tpu.core_type<tc>} {
    %c0 = arith.constant 0 : index
    %c0_0 = arith.constant 0 : index
    %0 = vector.load %arg2[%c0, %c0_0] : memref<1x768xf32, #tpu.memory_space<vmem>>, vector<1x768xf32>
    %c0_1 = arith.constant 0 : index
    %c0_2 = arith.constant 0 : index
    %1 = vector.load %arg4[%c0_1, %c0_2] : memref<1x8xf32, #tpu.memory_space<vmem>>, vector<1x8xf32>
    %cst = arith.constant 0.000000e+00 : f32
    %2 = vector.broadcast %cst : f32 to vector<2x256xf32>
    %c0_i32 = arith.constant 0 : i32
    %c256_i32 = arith.constant 256 : i32
    %3 = arith.addi %c0_i32, %c256_i32 : i32
    %c1_i32 = arith.constant 1 : i32
    %4 = scf.for %arg6 = %c0_i32 to %3 step %c1_i32 iter_args(%arg7 = %2) -> (vector<2x256xf32>)  : i32 {
      %5 = arith.index_cast %arg6 : i32 to index
      %c0_4 = arith.constant 0 : index
      %c0_5 = arith.constant 0 : index
      %6 = vector.load %arg0[%5, %c0_4, %c0_5] : memref<256x2x768xf32, #tpu.memory_space<vmem>>, vector<1x2x768xf32>
      %7 = vector.shape_cast %6 : vector<1x2x768xf32> to vector<2x768xf32>
      %8 = arith.truncf %arg7 : vector<2x256xf32> to vector<2x256xbf16>
      %c0_6 = arith.constant 0 : index
      %c0_7 = arith.constant 0 : index
      %9 = vector.load %arg1[%c0_6, %c0_7] : memref<256x768xbf16, #tpu.memory_space<vmem>>, vector<256x768xbf16>
      %cst_8 = arith.constant dense<0.000000e+00> : vector<2x768xf32>
      %10 = tpu.matmul %8, %9, %cst_8 {dimension_numbers = #tpu.dot_dimension_numbers<[1], [0], [0], [1], [0, 0, 1, 1], [], []>} : vector<2x256xbf16>, vector<256x768xbf16>, vector<2x768xf32> -> vector<2x768xf32>
      %11 = vector.broadcast %0 : vector<1x768xf32> to vector<2x768xf32>
      %12 = arith.addf %10, %11 : vector<2x768xf32>
      %13 = vector.extract_strided_slice %7 {offsets = [0, 0], sizes = [2, 256], strides = [1, 1]} : vector<2x768xf32> to vector<2x256xf32>
      %14 = vector.extract_strided_slice %12 {offsets = [0, 0], sizes = [2, 256], strides = [1, 1]} : vector<2x768xf32> to vector<2x256xf32>
      %15 = arith.addf %13, %14 : vector<2x256xf32>
      %16 = arith.negf %15 : vector<2x256xf32>
      %17 = math.exp %16 : vector<2x256xf32>
      %cst_9 = arith.constant 1.000000e+00 : f32
      %18 = vector.broadcast %cst_9 : f32 to vector<2x256xf32>
      %19 = arith.addf %18, %17 : vector<2x256xf32>
      %20 = arith.divf %18, %19 : vector<2x256xf32>
      %21 = vector.extract_strided_slice %7 {offsets = [0, 256], sizes = [2, 256], strides = [1, 1]} : vector<2x768xf32> to vector<2x256xf32>
      %22 = vector.extract_strided_slice %12 {offsets = [0, 256], sizes = [2, 256], strides = [1, 1]} : vector<2x768xf32> to vector<2x256xf32>
      %23 = arith.addf %21, %22 : vector<2x256xf32>
      %24 = arith.negf %23 : vector<2x256xf32>
      %25 = math.exp %24 : vector<2x256xf32>
      %cst_10 = arith.constant 1.000000e+00 : f32
      %26 = vector.broadcast %cst_10 : f32 to vector<2x256xf32>
      %27 = arith.addf %26, %25 : vector<2x256xf32>
      %28 = arith.divf %26, %27 : vector<2x256xf32>
      %29 = vector.extract_strided_slice %7 {offsets = [0, 512], sizes = [2, 256], strides = [1, 1]} : vector<2x768xf32> to vector<2x256xf32>
      %30 = vector.extract_strided_slice %12 {offsets = [0, 512], sizes = [2, 256], strides = [1, 1]} : vector<2x768xf32> to vector<2x256xf32>
      %31 = arith.mulf %20, %30 : vector<2x256xf32>
      %32 = arith.addf %29, %31 : vector<2x256xf32>
      %33 = math.tanh %32 : vector<2x256xf32>
      %cst_11 = arith.constant 1.000000e+00 : f32
      %34 = vector.broadcast %cst_11 : f32 to vector<2x256xf32>
      %35 = arith.subf %34, %28 : vector<2x256xf32>
      %36 = arith.mulf %35, %33 : vector<2x256xf32>
      %37 = arith.mulf %28, %arg7 : vector<2x256xf32>
      %38 = arith.addf %36, %37 : vector<2x256xf32>
      %39 = arith.truncf %38 : vector<2x256xf32> to vector<2x256xbf16>
      %c0_12 = arith.constant 0 : index
      %c0_13 = arith.constant 0 : index
      %40 = vector.load %arg3[%c0_12, %c0_13] : memref<256x8xbf16, #tpu.memory_space<vmem>>, vector<256x8xbf16>
      %cst_14 = arith.constant dense<0.000000e+00> : vector<2x8xf32>
      %41 = tpu.matmul %39, %40, %cst_14 {dimension_numbers = #tpu.dot_dimension_numbers<[1], [0], [0], [1], [0, 0, 1, 1], [], []>} : vector<2x256xbf16>, vector<256x8xbf16>, vector<2x8xf32> -> vector<2x8xf32>
      %42 = vector.broadcast %1 : vector<1x8xf32> to vector<2x8xf32>
      %43 = arith.addf %41, %42 : vector<2x8xf32>
      %cst_15 = arith.constant dense<0xFF800000> : vector<2xf32>
      %44 = vector.multi_reduction <maximumf>, %43, %cst_15 [1] : vector<2x8xf32> to vector<2xf32>
      %45 = vector.shape_cast %44 : vector<2xf32> to vector<2x1xf32>
      %46 = vector.broadcast %45 : vector<2x1xf32> to vector<2x8xf32>
      %47 = arith.subf %43, %46 : vector<2x8xf32>
      %48 = math.exp %47 : vector<2x8xf32>
      %cst_16 = arith.constant dense<0.000000e+00> : vector<2xf32>
      %49 = vector.multi_reduction <add>, %48, %cst_16 [1] : vector<2x8xf32> to vector<2xf32>
      %50 = vector.shape_cast %49 : vector<2xf32> to vector<2x1xf32>
      %51 = tpu.reciprocal %50 {approx = true} : vector<2x1xf32> -> vector<2x1xf32>
      %52 = vector.broadcast %51 : vector<2x1xf32> to vector<2x8xf32>
      %53 = arith.mulf %48, %52 : vector<2x8xf32>
      %54 = arith.index_cast %arg6 : i32 to index
      %c0_17 = arith.constant 0 : index
      %c0_18 = arith.constant 0 : index
      %55 = vector.load %arg5[%54, %c0_17, %c0_18] : memref<256x2x8xf32, #tpu.memory_space<vmem>>, vector<1x2x8xf32>
      %56 = vector.shape_cast %55 : vector<1x2x8xf32> to vector<2x8xf32>
      %57 = vector.shape_cast %53 : vector<2x8xf32> to vector<1x2x8xf32>
      tpu.vector_store %arg5[%54, %c0_17, %c0_18], %57 {strides = array<i32>} : memref<256x2x8xf32, #tpu.memory_space<vmem>>, vector<1x2x8xf32>,
      scf.yield %38 : vector<2x256xf32>
    }
    %c256_i32_3 = arith.constant 256 : i32
    return
  }
}

</mosaic_0001>

<llo_original>
// kernel: emotion_recognizer_forward.4
$region0: #{emotion_recognizer_forward.4}
  #allocation0 [shape = 'u32[]', space=smem, size = 0x4, offset = 0x4, fixed_abs, tag = 'smem constant byte address 0x4 - core index']
  #allocation1 [shape = 'u32[144,128]{1,0:T(1,128)}', space=vmem, size = 0x12000, scoped, tag = 'internal scratch']
  %s0 = inlined_call_operand.vmem [shape: bf16[512,32], index: 0, kind: input, shape index: {}]
  %s1 = inlined_call_operand.vmem [shape: bf16[32,64], index: 1, kind: input, shape index: {}]
  %s2 = inlined_call_operand.hbm [shape: f32[1,64], index: 2, kind: input, shape index: {}]
  %s3 = inlined_call_operand.vmem [shape: f32[512,64], index: 3, kind: output, shape index: {}]
  %s4 = sld [smem:[#allocation0]]
  $region26: #{emotion_recognizer_forward.4} parent=0
    _
  %s6 = ssub.s32 1, %s4
  %s7 = scalar_select 0, %s6, %s4
  $region1: #{emotion_recognizer_forward.4} parent=0
    #allocation2 [shape = 'u8[512]{0}', space=vmem, size = 0x400, scoped, tag = 'input window, operand 2, single buffered']
    #allocation3 [shape = 's32[1]{0}', space=sflag, size = 0x4, scoped, tag = 'scoped memory for emotion_recognizer_forward.4']
    %8 = vsyncpa [#allocation3], 0
    // Predicated region
    $region2: #{emotion_recognizer_forward.4} parent=1 // pred_check
      _
    $region3: #{emotion_recognizer_forward.4} parent=1 // pred_check_branch
      %10 = sbr.rel (0) target = $region5
    $region4: #{emotion_recognizer_forward.4} parent=1 // pred_region
      _
    $region5: #{emotion_recognizer_forward.4} parent=1 // pred_fallthru
      _
    // Predicated region
    $region6: #{emotion_recognizer_forward.4} parent=1 // pred_check
      _
    $region7: #{emotion_recognizer_forward.4} parent=1 // pred_check_branch
      %12 = sbr.rel (0) target = $region9
    $region8: #{emotion_recognizer_forward.4} parent=1 // pred_region
      _
    $region9: #{emotion_recognizer_forward.4} parent=1 // pred_fallthru
      _
    // Predicated region
    $region10: #{emotion_recognizer_forward.4} parent=1 // pred_check
      _
    $region11: #{emotion_recognizer_forward.4} parent=1 // pred_check_branch
      %14 = sbr.rel (0) target = $region13
    $region12: #{emotion_recognizer_forward.4} parent=1 // pred_region
      %s16 = ssub.s32 16, 16
      %17 = vsyncadd [#allocation3], %s16
      %s19 = sshll.u32 [#allocation2], 4
      %s20 = int_to_ptr.vmem [resolvable:$true] %s19
      %22 = dma.hbm_to_vmem [thread:$0]  %s2, 16, %s20, [#allocation3]
    $region13: #{emotion_recognizer_forward.4} parent=1 // pred_fallthru
      _
    // Predicated region
    $region14: #{emotion_recognizer_forward.4} parent=1 // pred_check
      _
    $region15: #{emotion_recognizer_forward.4} parent=1 // pred_check_branch
      %24 = sbr.rel (0) target = $region17
    $region16: #{emotion_recognizer_forward.4} parent=1 // pred_region
      %25 = dma.done [#allocation3], 16
    $region17: #{emotion_recognizer_forward.4} parent=1 // pred_fallthru
      _
    %v27 = vld [vmem:[%s0] sm:$0xf]
    %v28 = vld [vmem:[%s0 + $0x4] sm:$0xf]
    %v29 = vld [vmem:[%s0 + $0x8] sm:$0xf]
    %v30 = vld [vmem:[%s0 + $0xc] sm:$0xf]
    %v31 = vld [vmem:[%s0 + $0x10] sm:$0xf]
    %v32 = vld [vmem:[%s0 + $0x14] sm:$0xf]
    %v33 = vld [vmem:[%s0 + $0x18] sm:$0xf]
    %v34 = vld [vmem:[%s0 + $0x1c] sm:$0xf]
    %v35 = vld [vmem:[%s0 + $0x20] sm:$0xf]
    %v36 = vld [vmem:[%s0 + $0x24] sm:$0xf]
    %v37 = vld [vmem:[%s0 + $0x28] sm:$0xf]
    %v38 = vld [vmem:[%s0 + $0x2c] sm:$0xf]
    %v39 = vld [vmem:[%s0 + $0x30] sm:$0xf]
    %v40 = vld [vmem:[%s0 + $0x34] sm:$0xf]
    %v41 = vld [vmem:[%s0 + $0x38] sm:$0xf]
    %v42 = vld [vmem:[%s0 + $0x3c] sm:$0xf]
    %v43 = vld [vmem:[%s0 + $0x40] sm:$0xf]
    %v44 = vld [vmem:[%s0 + $0x44] sm:$0xf]
    %v45 = vld [vmem:[%s0 + $0x48] sm:$0xf]
    %v46 = vld [vmem:[%s0 + $0x4c] sm:$0xf]
    %v47 = vld [vmem:[%s0 + $0x50] sm:$0xf]
    %v48 = vld [vmem:[%s0 + $0x54] sm:$0xf]
    %v49 = vld [vmem:[%s0 + $0x58] sm:$0xf]
    %v50 = vld [vmem:[%s0 + $0x5c] sm:$0xf]
    %v51 = vld [vmem:[%s0 + $0x60] sm:$0xf]
    %v52 = vld [vmem:[%s0 + $0x64] sm:$0xf]
    %v53 = vld [vmem:[%s0 + $0x68] sm:$0xf]
    %v54 = vld [vmem:[%s0 + $0x6c] sm:$0xf]
    %v55 = vld [vmem:[%s0 + $0x70] sm:$0xf]
    %v56 = vld [vmem:[%s0 + $0x74] sm:$0xf]
    %v57 = vld [vmem:[%s0 + $0x78] sm:$0xf]
    %v58 = vld [vmem:[%s0 + $0x7c] sm:$0xf]
    %v59 = vld [vmem:[%s0 + $0x80] sm:$0xf]
    %v60 = vld [vmem:[%s0 + $0x84] sm:$0xf]
    %v61 = vld [vmem:[%s0 + $0x88] sm:$0xf]
    %v62 = vld [vmem:[%s0 + $0x8c] sm:$0xf]
    %v63 = vld [vmem:[%s0 + $0x90] sm:$0xf]
    %v64 = vld [vmem:[%s0 + $0x94] sm:$0xf]
    %v65 = vld [vmem:[%s0 + $0x98] sm:$0xf]
    %v66 = vld [vmem:[%s0 + $0x9c] sm:$0xf]
    %v67 = vld [vmem:[%s0 + $0xa0] sm:$0xf]
    %v68 = vld [vmem:[%s0 + $0xa4] sm:$0xf]
    %v69 = vld [vmem:[%s0 + $0xa8] sm:$0xf]
    %v70 = vld [vmem:[%s0 + $0xac] sm:$0xf]
    %v71 = vld [vmem:[%s0 + $0xb0] sm:$0xf]
    %v72 = vld [vmem:[%s0 + $0xb4] sm:$0xf]
    %v73 = vld [vmem:[%s0 + $0xb8] sm:$0xf]
    %v74 = vld [vmem:[%s0 + $0xbc] sm:$0xf]
    %v75 = vld [vmem:[%s0 + $0xc0] sm:$0xf]
    %v76 = vld [vmem:[%s0 + $0xc4] sm:$0xf]
    %v77 = vld [vmem:[%s0 + $0xc8] sm:$0xf]
    %v78 = vld [vmem:[%s0 + $0xcc] sm:$0xf]
    %v79 = vld [vmem:[%s0 + $0xd0] sm:$0xf]
    %v80 = vld [vmem:[%s0 + $0xd4] sm:$0xf]
    %v81 = vld [vmem:[%s0 + $0xd8] sm:$0xf]
    %v82 = vld [vmem:[%s0 + $0xdc] sm:$0xf]
    %v83 = vld [vmem:[%s0 + $0xe0] sm:$0xf]
    %v84 = vld [vmem:[%s0 + $0xe4] sm:$0xf]
    %v85 = vld [vmem:[%s0 + $0xe8] sm:$0xf]
    %v86 = vld [vmem:[%s0 + $0xec] sm:$0xf]
    %v87 = vld [vmem:[%s0 + $0xf0] sm:$0xf]
    %v88 = vld [vmem:[%s0 + $0xf4] sm:$0xf]
    %v89 = vld [vmem:[%s0 + $0xf8] sm:$0xf]
    %v90 = vld [vmem:[%s0 + $0xfc] sm:$0xf]
    %v91 = vld [vmem:[%s1] sm:$0xf]
    %v92 = vld [vmem:[%s1 + $0x4] sm:$0xf]
    %v93 = vld [vmem:[%s1 + $0x8] sm:$0xf]
    %v94 = vld [vmem:[%s1 + $0xc] sm:$0xf]
    %v95 = vld [vmem:[#allocation2] sm:$0x1]
    %v97 = vlaneseq
    %v98 = vshrl.u32 %v97, 7
    %v99 = vsub.s32 0, %v98
    %v100 = vrot.slane %v95, %v99
    %v166 = vunpack.c.l.b16 %v27
    %v167 = vunpack.c.l.b16 %v28
    %v168 = vunpack.c.l.b16 %v29
    %v169 = vunpack.c.l.b16 %v30
    %v170 = vunpack.c.l.b16 %v31
    %v171 = vunpack.c.l.b16 %v32
    %v172 = vunpack.c.l.b16 %v33
    %v173 = vunpack.c.l.b16 %v34
    %v174 = vunpack.c.l.b16 %v35
    %v175 = vunpack.c.l.b16 %v36
    %v176 = vunpack.c.l.b16 %v37
    %v177 = vunpack.c.l.b16 %v38
    %v178 = vunpack.c.l.b16 %v39
    %v179 = vunpack.c.l.b16 %v40
    %v180 = vunpack.c.l.b16 %v41
    %v181 = vunpack.c.l.b16 %v42
    %v182 = vunpack.c.l.b16 %v43
    %v183 = vunpack.c.l.b16 %v44
    %v184 = vunpack.c.l.b16 %v45
    %v185 = vunpack.c.l.b16 %v46
    %v186 = vunpack.c.l.b16 %v47
    %v187 = vunpack.c.l.b16 %v48
    %v188 = vunpack.c.l.b16 %v49
    %v189 = vunpack.c.l.b16 %v50
    %v190 = vunpack.c.l.b16 %v51
    %v191 = vunpack.c.l.b16 %v52
    %v192 = vunpack.c.l.b16 %v53
    %v193 = vunpack.c.l.b16 %v54
    %v194 = vunpack.c.l.b16 %v55
    %v195 = vunpack.c.l.b16 %v56
    %v196 = vunpack.c.l.b16 %v57
    %v197 = vunpack.c.l.b16 %v58
    %v198 = vunpack.c.l.b16 %v59
    %v199 = vunpack.c.l.b16 %v60
    %v200 = vunpack.c.l.b16 %v61
    %v201 = vunpack.c.l.b16 %v62
    %v202 = vunpack.c.l.b16 %v63
    %v203 = vunpack.c.l.b16 %v64
    %v204 = vunpack.c.l.b16 %v65
    %v205 = vunpack.c.l.b16 %v66
    %v206 = vunpack.c.l.b16 %v67
    %v207 = vunpack.c.l.b16 %v68
    %v208 = vunpack.c.l.b16 %v69
    %v209 = vunpack.c.l.b16 %v70
    %v210 = vunpack.c.l.b16 %v71
    %v211 = vunpack.c.l.b16 %v72
    %v212 = vunpack.c.l.b16 %v73
    %v213 = vunpack.c.l.b16 %v74
    %v214 = vunpack.c.l.b16 %v75
    %v215 = vunpack.c.l.b16 %v76
    %v216 = vunpack.c.l.b16 %v77
    %v217 = vunpack.c.l.b16 %v78
    %v218 = vunpack.c.l.b16 %v79
    %v219 = vunpack.c.l.b16 %v80
    %v220 = vunpack.c.l.b16 %v81
    %v221 = vunpack.c.l.b16 %v82
    %v222 = vunpack.c.l.b16 %v83
    %v223 = vunpack.c.l.b16 %v84
    %v224 = vunpack.c.l.b16 %v85
    %v225 = vunpack.c.l.b16 %v86
    %v226 = vunpack.c.l.b16 %v87
    %v227 = vunpack.c.l.b16 %v88
    %v228 = vunpack.c.l.b16 %v89
    %v229 = vunpack.c.l.b16 %v90
    %v230 = vpack.c.b16 %v167, %v166
    %v231 = vpack.c.b16 %v169, %v168
    %v232 = vpack.c.b16 %v171, %v170
    %v233 = vpack.c.b16 %v173, %v172
    %v234 = vpack.c.b16 %v175, %v174
    %v235 = vpack.c.b16 %v177, %v176
    %v236 = vpack.c.b16 %v179, %v178
    %v237 = vpack.c.b16 %v181, %v180
    %v238 = vpack.c.b16 %v183, %v182
    %v239 = vpack.c.b16 %v185, %v184
    %v240 = vpack.c.b16 %v187, %v186
    %v241 = vpack.c.b16 %v189, %v188
    %v242 = vpack.c.b16 %v191, %v190
    %v243 = vpack.c.b16 %v193, %v192
    %v244 = vpack.c.b16 %v195, %v194
    %v245 = vpack.c.b16 %v197, %v196
    %v246 = vpack.c.b16 %v199, %v198
    %v247 = vpack.c.b16 %v201, %v200
    %v248 = vpack.c.b16 %v203, %v202
    %v249 = vpack.c.b16 %v205, %v204
    %v250 = vpack.c.b16 %v207, %v206
    %v251 = vpack.c.b16 %v209, %v208
    %v252 = vpack.c.b16 %v211, %v210
    %v253 = vpack.c.b16 %v213, %v212
    %v254 = vpack.c.b16 %v215, %v214
    %v255 = vpack.c.b16 %v217, %v216
    %v256 = vpack.c.b16 %v219, %v218
    %v257 = vpack.c.b16 %v221, %v220
    %v258 = vpack.c.b16 %v223, %v222
    %v259 = vpack.c.b16 %v225, %v224
    %v260 = vpack.c.b16 %v227, %v226
    %v261 = vpack.c.b16 %v229, %v228
    %v266 = vunpack.c.l.b16 %v91
    %v267 = vunpack.c.l.b16 %v92
    %v268 = vunpack.c.l.b16 %v93
    %v269 = vunpack.c.l.b16 %v94
    %v270 = vpack.c.b16 %v267, %v266
    %v271 = vpack.c.b16 %v269, %v268
    %vm274 = vcmask 261120
    %v276 = vsel %vm274, %v230, 0
    %v279 = vsel %vm274, %v231, 0
    %v282 = vsel %vm274, %v232, 0
    %v285 = vsel %vm274, %v233, 0
    %v288 = vsel %vm274, %v234, 0
    %v291 = vsel %vm274, %v235, 0
    %v294 = vsel %vm274, %v236, 0
    %v297 = vsel %vm274, %v237, 0
    %v300 = vsel %vm274, %v238, 0
    %v303 = vsel %vm274, %v239, 0
    %v306 = vsel %vm274, %v240, 0
    %v309 = vsel %vm274, %v241, 0
    %v312 = vsel %vm274, %v242, 0
    %v315 = vsel %vm274, %v243, 0
    %v318 = vsel %vm274, %v244, 0
    %v321 = vsel %vm274, %v245, 0
    %v324 = vsel %vm274, %v246, 0
    %v327 = vsel %vm274, %v247, 0
    %v330 = vsel %vm274, %v248, 0
    %v333 = vsel %vm274, %v249, 0
    %v336 = vsel %vm274, %v250, 0
    %v339 = vsel %vm274, %v251, 0
    %v342 = vsel %vm274, %v252, 0
    %v345 = vsel %vm274, %v253, 0
    %v348 = vsel %vm274, %v254, 0
    %v351 = vsel %vm274, %v255, 0
    %v354 = vsel %vm274, %v256, 0
    %v357 = vsel %vm274, %v257, 0
    %v360 = vsel %vm274, %v258, 0
    %v363 = vsel %vm274, %v259, 0
    %v366 = vsel %vm274, %v260, 0
    %v369 = vsel %vm274, %v261, 0
    %371 = vmatprep.subr.bf16.mxu0 0
    %372 = vmatpush1.bf16.msra.mxu0 0
    %373 = vmatprep.subr.bf16.mxu0 0
    %374 = vmatpush1.bf16.msra.mxu0 0
    %375 = vmatprep.subr.bf16.mxu0 0
    %376 = vmatpush1.bf16.msra.mxu0 0
    %377 = vmatprep.subr.bf16.mxu0 0
    %378 = vmatpush1.bf16.msra.mxu0 0
    %379 = vmatprep.subr.bf16.mxu0 0
    %380 = vmatpush1.bf16.msra.mxu0 0
    %381 = vmatprep.subr.bf16.mxu0 0
    %382 = vmatpush1.bf16.msra.mxu0 0
    %383 = vmatprep.subr.bf16.mxu0 0
    %384 = vmatpush1.bf16.msra.mxu0 %v271
    %385 = vmatprep.subr.bf16.mxu0 0
    %386 = vmatpush1.bf16.msra.mxu0 %v270
    %387 = vmatprep.subr.bf16.mxu0 0
    %388 = vmatpush2.bf16.msra.mxu0 0
    %389 = vmatprep.subr.bf16.mxu0 0
    %390 = vmatpush2.bf16.msra.mxu0 0
    %391 = vmatprep.subr.bf16.mxu0 0
    %392 = vmatpush2.bf16.msra.mxu0 0
    %393 = vmatprep.subr.bf16.mxu0 0
    %394 = vmatpush2.bf16.msra.mxu0 0
    %395 = vmatprep.subr.bf16.mxu0 0
    %396 = vmatpush2.bf16.msra.mxu0 0
    %397 = vmatprep.subr.bf16.mxu0 0
    %398 = vmatpush2.bf16.msra.mxu0 0
    %399 = vmatprep.subr.bf16.mxu0 0
    %400 = vmatpush2.bf16.msra.mxu0 0
    %401 = vmatprep.subr.bf16.mxu0 0
    %402 = vmatpush2.bf16.msra.mxu0 0
    %403 = vmatprep.mubr.bf16.mxu0 0
    %404 = vmatmul.mubr.bf16.gmra.mxu0 %v276
    %v405 = vpop.f32.mrf.mxu0
    %v406 = vadd.f32 %v100, %v405
    %v407 = vpop.f32.mrf.mxu0
    %v408 = vpop.f32.mrf.mxu0
    %v409 = vadd.f32 %v100, %v408
    %v410 = vpop.f32.mrf.mxu0
    %411 = vmatprep.mubr.bf16.mxu0 0
    %412 = vmatmul.mubr.bf16.gmra.mxu0 %v279
    %v413 = vpop.f32.mrf.mxu0
    %v414 = vadd.f32 %v100, %v413
    %v415 = vpop.f32.mrf.mxu0
    %v416 = vpop.f32.mrf.mxu0
    %v417 = vadd.f32 %v100, %v416
    %v418 = vpop.f32.mrf.mxu0
    %419 = vmatprep.mubr.bf16.mxu0 0
    %420 = vmatmul.mubr.bf16.gmra.mxu0 %v282
    %v421 = vpop.f32.mrf.mxu0
    %v422 = vadd.f32 %v100, %v421
    %v423 = vpop.f32.mrf.mxu0
    %v424 = vpop.f32.mrf.mxu0
    %v425 = vadd.f32 %v100, %v424
    %v426 = vpop.f32.mrf.mxu0
    %427 = vmatprep.mubr.bf16.mxu0 0
    %428 = vmatmul.mubr.bf16.gmra.mxu0 %v285
    %v429 = vpop.f32.mrf.mxu0
    %v430 = vadd.f32 %v100, %v429
    %v431 = vpop.f32.mrf.mxu0
    %v432 = vpop.f32.mrf.mxu0
    %v433 = vadd.f32 %v100, %v432
    %v434 = vpop.f32.mrf.mxu0
    %435 = vmatprep.mubr.bf16.mxu0 0
    %436 = vmatmul.mubr.bf16.gmra.mxu0 %v288
    %v437 = vpop.f32.mrf.mxu0
    %v438 = vadd.f32 %v100, %v437
    %v439 = vpop.f32.mrf.mxu0
    %v440 = vpop.f32.mrf.mxu0
    %v441 = vadd.f32 %v100, %v440
    %v442 = vpop.f32.mrf.mxu0
    %443 = vmatprep.mubr.bf16.mxu0 0
    %444 = vmatmul.mubr.bf16.gmra.mxu0 %v291
    %v445 = vpop.f32.mrf.mxu0
    %v446 = vadd.f32 %v100, %v445
    %v447 = vpop.f32.mrf.mxu0
    %v448 = vpop.f32.mrf.mxu0
    %v449 = vadd.f32 %v100, %v448
    %v450 = vpop.f32.mrf.mxu0
    %451 = vmatprep.mubr.bf16.mxu0 0
    %452 = vmatmul.mubr.bf16.gmra.mxu0 %v294
    %v453 = vpop.f32.mrf.mxu0
    %v454 = vadd.f32 %v100, %v453
    %v455 = vpop.f32.mrf.mxu0
    %v456 = vpop.f32.mrf.mxu0
    %v457 = vadd.f32 %v100, %v456
    %v458 = vpop.f32.mrf.mxu0
    %459 = vmatprep.mubr.bf16.mxu0 0
    %460 = vmatmul.mubr.bf16.gmra.mxu0 %v297
    %v461 = vpop.f32.mrf.mxu0
    %v462 = vadd.f32 %v100, %v461
    %v463 = vpop.f32.mrf.mxu0
    %v464 = vpop.f32.mrf.mxu0
    %v465 = vadd.f32 %v100, %v464
    %v466 = vpop.f32.mrf.mxu0
    %467 = vmatprep.mubr.bf16.mxu0 0
    %468 = vmatmul.mubr.bf16.gmra.mxu0 %v300
    %v469 = vpop.f32.mrf.mxu0
    %v470 = vadd.f32 %v100, %v469
    %v471 = vpop.f32.mrf.mxu0
    %v472 = vpop.f32.mrf.mxu0
    %v473 = vadd.f32 %v100, %v472
    %v474 = vpop.f32.mrf.mxu0
    %475 = vmatprep.mubr.bf16.mxu0 0
    %476 = vmatmul.mubr.bf16.gmra.mxu0 %v303
    %v477 = vpop.f32.mrf.mxu0
    %v478 = vadd.f32 %v100, %v477
    %v479 = vpop.f32.mrf.mxu0
    %v480 = vpop.f32.mrf.mxu0
    %v481 = vadd.f32 %v100, %v480
    %v482 = vpop.f32.mrf.mxu0
    %483 = vmatprep.mubr.bf16.mxu0 0
    %484 = vmatmul.mubr.bf16.gmra.mxu0 %v306
    %v485 = vpop.f32.mrf.mxu0
    %v486 = vadd.f32 %v100, %v485
    %v487 = vpop.f32.mrf.mxu0
    %v488 = vpop.f32.mrf.mxu0
    %v489 = vadd.f32 %v100, %v488
    %v490 = vpop.f32.mrf.mxu0
    %491 = vmatprep.mubr.bf16.mxu0 0
    %492 = vmatmul.mubr.bf16.gmra.mxu0 %v309
    %v493 = vpop.f32.mrf.mxu0
    %v494 = vadd.f32 %v100, %v493
    %v495 = vpop.f32.mrf.mxu0
    %v496 = vpop.f32.mrf.mxu0
    %v497 = vadd.f32 %v100, %v496
    %v498 = vpop.f32.mrf.mxu0
    %499 = vmatprep.mubr.bf16.mxu0 0
    %500 = vmatmul.mubr.bf16.gmra.mxu0 %v312
    %v501 = vpop.f32.mrf.mxu0
    %v502 = vadd.f32 %v100, %v501
    %v503 = vpop.f32.mrf.mxu0
    %v504 = vpop.f32.mrf.mxu0
    %v505 = vadd.f32 %v100, %v504
    %v506 = vpop.f32.mrf.mxu0
    %507 = vmatprep.mubr.bf16.mxu0 0
    %508 = vmatmul.mubr.bf16.gmra.mxu0 %v315
    %v509 = vpop.f32.mrf.mxu0
    %v510 = vadd.f32 %v100, %v509
    %v511 = vpop.f32.mrf.mxu0
    %v512 = vpop.f32.mrf.mxu0
    %v513 = vadd.f32 %v100, %v512
    %v514 = vpop.f32.mrf.mxu0
    %515 = vmatprep.mubr.bf16.mxu0 0
    %516 = vmatmul.mubr.bf16.gmra.mxu0 %v318
    %v517 = vpop.f32.mrf.mxu0
    %v518 = vadd.f32 %v100, %v517
    %v519 = vpop.f32.mrf.mxu0
    %v520 = vpop.f32.mrf.mxu0
    %v521 = vadd.f32 %v100, %v520
    %v522 = vpop.f32.mrf.mxu0
    %523 = vmatprep.mubr.bf16.mxu0 0
    %524 = vmatmul.mubr.bf16.gmra.mxu0 %v321
    %v525 = vpop.f32.mrf.mxu0
    %v526 = vadd.f32 %v100, %v525
    %v527 = vpop.f32.mrf.mxu0
    %v528 = vpop.f32.mrf.mxu0
    %v529 = vadd.f32 %v100, %v528
    %v530 = vpop.f32.mrf.mxu0
    %531 = vmatprep.mubr.bf16.mxu0 0
    %532 = vmatmul.mubr.bf16.gmra.mxu0 %v324
    %v533 = vpop.f32.mrf.mxu0
    %v534 = vadd.f32 %v100, %v533
    %v535 = vpop.f32.mrf.mxu0
    %v536 = vpop.f32.mrf.mxu0
    %v537 = vadd.f32 %v100, %v536
    %v538 = vpop.f32.mrf.mxu0
    %539 = vmatprep.mubr.bf16.mxu0 0
    %540 = vmatmul.mubr.bf16.gmra.mxu0 %v327
    %v541 = vpop.f32.mrf.mxu0
    %v542 = vadd.f32 %v100, %v541
    %v543 = vpop.f32.mrf.mxu0
    %v544 = vpop.f32.mrf.mxu0
    %v545 = vadd.f32 %v100, %v544
    %v546 = vpop.f32.mrf.mxu0
    %547 = vmatprep.mubr.bf16.mxu0 0
    %548 = vmatmul.mubr.bf16.gmra.mxu0 %v330
    %v549 = vpop.f32.mrf.mxu0
    %v550 = vadd.f32 %v100, %v549
    %v551 = vpop.f32.mrf.mxu0
    %v552 = vpop.f32.mrf.mxu0
    %v553 = vadd.f32 %v100, %v552
    %v554 = vpop.f32.mrf.mxu0
    %555 = vmatprep.mubr.bf16.mxu0 0
    %556 = vmatmul.mubr.bf16.gmra.mxu0 %v333
    %v557 = vpop.f32.mrf.mxu0
    %v558 = vadd.f32 %v100, %v557
    %v559 = vpop.f32.mrf.mxu0
    %v560 = vpop.f32.mrf.mxu0
    %v561 = vadd.f32 %v100, %v560
    %v562 = vpop.f32.mrf.mxu0
    %563 = vmatprep.mubr.bf16.mxu0 0
    %564 = vmatmul.mubr.bf16.gmra.mxu0 %v336
    %v565 = vpop.f32.mrf.mxu0
    %v566 = vadd.f32 %v100, %v565
    %v567 = vpop.f32.mrf.mxu0
    %v568 = vpop.f32.mrf.mxu0
    %v569 = vadd.f32 %v100, %v568
    %v570 = vpop.f32.mrf.mxu0
    %571 = vmatprep.mubr.bf16.mxu0 0
    %572 = vmatmul.mubr.bf16.gmra.mxu0 %v339
    %v573 = vpop.f32.mrf.mxu0
    %v574 = vadd.f32 %v100, %v573
    %v575 = vpop.f32.mrf.mxu0
    %v576 = vpop.f32.mrf.mxu0
    %v577 = vadd.f32 %v100, %v576
    %v578 = vpop.f32.mrf.mxu0
    %579 = vmatprep.mubr.bf16.mxu0 0
    %580 = vmatmul.mubr.bf16.gmra.mxu0 %v342
    %v581 = vpop.f32.mrf.mxu0
    %v582 = vadd.f32 %v100, %v581
    %v583 = vpop.f32.mrf.mxu0
    %v584 = vpop.f32.mrf.mxu0
    %v585 = vadd.f32 %v100, %v584
    %v586 = vpop.f32.mrf.mxu0
    %587 = vmatprep.mubr.bf16.mxu0 0
    %588 = vmatmul.mubr.bf16.gmra.mxu0 %v345
    %v589 = vpop.f32.mrf.mxu0
    %v590 = vadd.f32 %v100, %v589
    %v591 = vpop.f32.mrf.mxu0
    %v592 = vpop.f32.mrf.mxu0
    %v593 = vadd.f32 %v100, %v592
    %v594 = vpop.f32.mrf.mxu0
    %595 = vmatprep.mubr.bf16.mxu0 0
    %596 = vmatmul.mubr.bf16.gmra.mxu0 %v348
    %v597 = vpop.f32.mrf.mxu0
    %v598 = vadd.f32 %v100, %v597
    %v599 = vpop.f32.mrf.mxu0
    %v600 = vpop.f32.mrf.mxu0
    %v601 = vadd.f32 %v100, %v600
    %v602 = vpop.f32.mrf.mxu0
    %603 = vmatprep.mubr.bf16.mxu0 0
    %604 = vmatmul.mubr.bf16.gmra.mxu0 %v351
    %v605 = vpop.f32.mrf.mxu0
    %v606 = vadd.f32 %v100, %v605
    %v607 = vpop.f32.mrf.mxu0
    %v608 = vpop.f32.mrf.mxu0
    %v609 = vadd.f32 %v100, %v608
    %v610 = vpop.f32.mrf.mxu0
    %611 = vmatprep.mubr.bf16.mxu0 0
    %612 = vmatmul.mubr.bf16.gmra.mxu0 %v354
    %v613 = vpop.f32.mrf.mxu0
    %v614 = vadd.f32 %v100, %v613
    %v615 = vpop.f32.mrf.mxu0
    %v616 = vpop.f32.mrf.mxu0
    %v617 = vadd.f32 %v100, %v616
    %v618 = vpop.f32.mrf.mxu0
    %619 = vmatprep.mubr.bf16.mxu0 0
    %620 = vmatmul.mubr.bf16.gmra.mxu0 %v357
    %v621 = vpop.f32.mrf.mxu0
    %v622 = vadd.f32 %v100, %v621
    %v623 = vpop.f32.mrf.mxu0
    %v624 = vpop.f32.mrf.mxu0
    %v625 = vadd.f32 %v100, %v624
    %v626 = vpop.f32.mrf.mxu0
    %627 = vmatprep.mubr.bf16.mxu0 0
    %628 = vmatmul.mubr.bf16.gmra.mxu0 %v360
    %v629 = vpop.f32.mrf.mxu0
    %v630 = vadd.f32 %v100, %v629
    %v631 = vpop.f32.mrf.mxu0
    %v632 = vpop.f32.mrf.mxu0
    %v633 = vadd.f32 %v100, %v632
    %v634 = vpop.f32.mrf.mxu0
    %635 = vmatprep.mubr.bf16.mxu0 0
    %636 = vmatmul.mubr.bf16.gmra.mxu0 %v363
    %v637 = vpop.f32.mrf.mxu0
    %v638 = vadd.f32 %v100, %v637
    %v639 = vpop.f32.mrf.mxu0
    %v640 = vpop.f32.mrf.mxu0
    %v641 = vadd.f32 %v100, %v640
    %v642 = vpop.f32.mrf.mxu0
    %643 = vmatprep.mubr.bf16.mxu0 0
    %644 = vmatmul.mubr.bf16.gmra.mxu0 %v366
    %v645 = vpop.f32.mrf.mxu0
    %v646 = vadd.f32 %v100, %v645
    %v647 = vpop.f32.mrf.mxu0
    %v648 = vpop.f32.mrf.mxu0
    %v649 = vadd.f32 %v100, %v648
    %v650 = vpop.f32.mrf.mxu0
    %651 = vmatprep.mubr.bf16.mxu0 0
    %652 = vmatmul.mubr.bf16.gmra.mxu0 %v369
    %v653 = vpop.f32.mrf.mxu0
    %v654 = vadd.f32 %v100, %v653
    %v655 = vpop.f32.mrf.mxu0
    %v656 = vpop.f32.mrf.mxu0
    %v657 = vadd.f32 %v100, %v656
    %v658 = vpop.f32.mrf.mxu0
    %659 = vdwg.mxu0
    %v660 = vmax.f32 %v406, 0.0
    %v661 = vmax.f32 %v409, 0.0
    %v662 = vmax.f32 %v414, 0.0
    %v663 = vmax.f32 %v417, 0.0
    %v664 = vmax.f32 %v422, 0.0
    %v665 = vmax.f32 %v425, 0.0
    %v666 = vmax.f32 %v430, 0.0
    %v667 = vmax.f32 %v433, 0.0
    %v668 = vmax.f32 %v438, 0.0
    %v669 = vmax.f32 %v441, 0.0
    %v670 = vmax.f32 %v446, 0.0
    %v671 = vmax.f32 %v449, 0.0
    %v672 = vmax.f32 %v454, 0.0
    %v673 = vmax.f32 %v457, 0.0
    %v674 = vmax.f32 %v462, 0.0
    %v675 = vmax.f32 %v465, 0.0
    %v676 = vmax.f32 %v470, 0.0
    %v677 = vmax.f32 %v473, 0.0
    %v678 = vmax.f32 %v478, 0.0
    %v679 = vmax.f32 %v481, 0.0
    %v680 = vmax.f32 %v486, 0.0
    %v681 = vmax.f32 %v489, 0.0
    %v682 = vmax.f32 %v494, 0.0
    %v683 = vmax.f32 %v497, 0.0
    %v684 = vmax.f32 %v502, 0.0
    %v685 = vmax.f32 %v505, 0.0
    %v686 = vmax.f32 %v510, 0.0
    %v687 = vmax.f32 %v513, 0.0
    %v688 = vmax.f32 %v518, 0.0
    %v689 = vmax.f32 %v521, 0.0
    %v690 = vmax.f32 %v526, 0.0
    %v691 = vmax.f32 %v529, 0.0
    %v692 = vmax.f32 %v534, 0.0
    %v693 = vmax.f32 %v537, 0.0
    %v694 = vmax.f32 %v542, 0.0
    %v695 = vmax.f32 %v545, 0.0
    %v696 = vmax.f32 %v550, 0.0
    %v697 = vmax.f32 %v553, 0.0
    %v698 = vmax.f32 %v558, 0.0
    %v699 = vmax.f32 %v561, 0.0
    %v700 = vmax.f32 %v566, 0.0
    %v701 = vmax.f32 %v569, 0.0
    %v702 = vmax.f32 %v574, 0.0
    %v703 = vmax.f32 %v577, 0.0
    %v704 = vmax.f32 %v582, 0.0
    %v705 = vmax.f32 %v585, 0.0
    %v706 = vmax.f32 %v590, 0.0
    %v707 = vmax.f32 %v593, 0.0
    %v708 = vmax.f32 %v598, 0.0
    %v709 = vmax.f32 %v601, 0.0
    %v710 = vmax.f32 %v606, 0.0
    %v711 = vmax.f32 %v609, 0.0
    %v712 = vmax.f32 %v614, 0.0
    %v713 = vmax.f32 %v617, 0.0
    %v714 = vmax.f32 %v622, 0.0
    %v715 = vmax.f32 %v625, 0.0
    %v716 = vmax.f32 %v630, 0.0
    %v717 = vmax.f32 %v633, 0.0
    %v718 = vmax.f32 %v638, 0.0
    %v719 = vmax.f32 %v641, 0.0
    %v720 = vmax.f32 %v646, 0.0
    %v721 = vmax.f32 %v649, 0.0
    %v722 = vmax.f32 %v654, 0.0
    %v723 = vmax.f32 %v657, 0.0
    %vm724 = vcmask 523264
    %725 = vst.msk [vmem:[%s3] sm:$0xff] %vm724, %v660
    %726 = vst.msk [vmem:[%s3 + $0x8] sm:$0xff] %vm724, %v661
    %727 = vst.msk [vmem:[%s3 + $0x10] sm:$0xff] %vm724, %v662
    %728 = vst.msk [vmem:[%s3 + $0x18] sm:$0xff] %vm724, %v663
    %729 = vst.msk [vmem:[%s3 + $0x20] sm:$0xff] %vm724, %v664
    %730 = vst.msk [vmem:[%s3 + $0x28] sm:$0xff] %vm724, %v665
    %731 = vst.msk [vmem:[%s3 + $0x30] sm:$0xff] %vm724, %v666
    %732 = vst.msk [vmem:[%s3 + $0x38] sm:$0xff] %vm724, %v667
    %733 = vst.msk [vmem:[%s3 + $0x40] sm:$0xff] %vm724, %v668
    %734 = vst.msk [vmem:[%s3 + $0x48] sm:$0xff] %vm724, %v669
    %735 = vst.msk [vmem:[%s3 + $0x50] sm:$0xff] %vm724, %v670
    %736 = vst.msk [vmem:[%s3 + $0x58] sm:$0xff] %vm724, %v671
    %737 = vst.msk [vmem:[%s3 + $0x60] sm:$0xff] %vm724, %v672
    %738 = vst.msk [vmem:[%s3 + $0x68] sm:$0xff] %vm724, %v673
    %739 = vst.msk [vmem:[%s3 + $0x70] sm:$0xff] %vm724, %v674
    %740 = vst.msk [vmem:[%s3 + $0x78] sm:$0xff] %vm724, %v675
    %741 = vst.msk [vmem:[%s3 + $0x80] sm:$0xff] %vm724, %v676
    %742 = vst.msk [vmem:[%s3 + $0x88] sm:$0xff] %vm724, %v677
    %743 = vst.msk [vmem:[%s3 + $0x90] sm:$0xff] %vm724, %v678
    %744 = vst.msk [vmem:[%s3 + $0x98] sm:$0xff] %vm724, %v679
    %745 = vst.msk [vmem:[%s3 + $0xa0] sm:$0xff] %vm724, %v680
    %746 = vst.msk [vmem:[%s3 + $0xa8] sm:$0xff] %vm724, %v681
    %747 = vst.msk [vmem:[%s3 + $0xb0] sm:$0xff] %vm724, %v682
    %748 = vst.msk [vmem:[%s3 + $0xb8] sm:$0xff] %vm724, %v683
    %749 = vst.msk [vmem:[%s3 + $0xc0] sm:$0xff] %vm724, %v684
    %750 = vst.msk [vmem:[%s3 + $0xc8] sm:$0xff] %vm724, %v685
    %751 = vst.msk [vmem:[%s3 + $0xd0] sm:$0xff] %vm724, %v686
    %752 = vst.msk [vmem:[%s3 + $0xd8] sm:$0xff] %vm724, %v687
    %753 = vst.msk [vmem:[%s3 + $0xe0] sm:$0xff] %vm724, %v688
    %754 = vst.msk [vmem:[%s3 + $0xe8] sm:$0xff] %vm724, %v689
    %755 = vst.msk [vmem:[%s3 + $0xf0] sm:$0xff] %vm724, %v690
    %756 = vst.msk [vmem:[%s3 + $0xf8] sm:$0xff] %vm724, %v691
    %757 = vst.msk [vmem:[%s3 + $0x100] sm:$0xff] %vm724, %v692
    %758 = vst.msk [vmem:[%s3 + $0x108] sm:$0xff] %vm724, %v693
    %759 = vst.msk [vmem:[%s3 + $0x110] sm:$0xff] %vm724, %v694
    %760 = vst.msk [vmem:[%s3 + $0x118] sm:$0xff] %vm724, %v695
    %761 = vst.msk [vmem:[%s3 + $0x120] sm:$0xff] %vm724, %v696
    %762 = vst.msk [vmem:[%s3 + $0x128] sm:$0xff] %vm724, %v697
    %763 = vst.msk [vmem:[%s3 + $0x130] sm:$0xff] %vm724, %v698
    %764 = vst.msk [vmem:[%s3 + $0x138] sm:$0xff] %vm724, %v699
    %765 = vst.msk [vmem:[%s3 + $0x140] sm:$0xff] %vm724, %v700
    %766 = vst.msk [vmem:[%s3 + $0x148] sm:$0xff] %vm724, %v701
    %767 = vst.msk [vmem:[%s3 + $0x150] sm:$0xff] %vm724, %v702
    %768 = vst.msk [vmem:[%s3 + $0x158] sm:$0xff] %vm724, %v703
    %769 = vst.msk [vmem:[%s3 + $0x160] sm:$0xff] %vm724, %v704
    %770 = vst.msk [vmem:[%s3 + $0x168] sm:$0xff] %vm724, %v705
    %771 = vst.msk [vmem:[%s3 + $0x170] sm:$0xff] %vm724, %v706
    %772 = vst.msk [vmem:[%s3 + $0x178] sm:$0xff] %vm724, %v707
    %773 = vst.msk [vmem:[%s3 + $0x180] sm:$0xff] %vm724, %v708
    %774 = vst.msk [vmem:[%s3 + $0x188] sm:$0xff] %vm724, %v709
    %775 = vst.msk [vmem:[%s3 + $0x190] sm:$0xff] %vm724, %v710
    %776 = vst.msk [vmem:[%s3 + $0x198] sm:$0xff] %vm724, %v711
    %777 = vst.msk [vmem:[%s3 + $0x1a0] sm:$0xff] %vm724, %v712
    %778 = vst.msk [vmem:[%s3 + $0x1a8] sm:$0xff] %vm724, %v713
    %779 = vst.msk [vmem:[%s3 + $0x1b0] sm:$0xff] %vm724, %v714
    %780 = vst.msk [vmem:[%s3 + $0x1b8] sm:$0xff] %vm724, %v715
    %781 = vst.msk [vmem:[%s3 + $0x1c0] sm:$0xff] %vm724, %v716
    %782 = vst.msk [vmem:[%s3 + $0x1c8] sm:$0xff] %vm724, %v717
    %783 = vst.msk [vmem:[%s3 + $0x1d0] sm:$0xff] %vm724, %v718
    %784 = vst.msk [vmem:[%s3 + $0x1d8] sm:$0xff] %vm724, %v719
    %785 = vst.msk [vmem:[%s3 + $0x1e0] sm:$0xff] %vm724, %v720
    %786 = vst.msk [vmem:[%s3 + $0x1e8] sm:$0xff] %vm724, %v721
    %787 = vst.msk [vmem:[%s3 + $0x1f0] sm:$0xff] %vm724, %v722
    %788 = vst.msk [vmem:[%s3 + $0x1f8] sm:$0xff] %vm724, %v723
    // Predicated region
    $region18: #{emotion_recognizer_forward.4} parent=1 // pred_check
      _
    $region19: #{emotion_recognizer_forward.4} parent=1 // pred_check_branch
      %790 = sbr.rel (0) target = $region21
    $region20: #{emotion_recognizer_forward.4} parent=1 // pred_region
      _
    $region21: #{emotion_recognizer_forward.4} parent=1 // pred_fallthru
      _
    // Predicated region
    $region22: #{emotion_recognizer_forward.4} parent=1 // pred_check
      _
    $region23: #{emotion_recognizer_forward.4} parent=1 // pred_check_branch
      %792 = sbr.rel (0) target = $region25
    $region24: #{emotion_recognizer_forward.4} parent=1 // pred_region
      _
    $region25: #{emotion_recognizer_forward.4} parent=1 // pred_fallthru
      _
    %793 = vsyncpa [#allocation3], 1

// kernel: emotion_recognizer_forward.6
$region0: #{emotion_recognizer_forward.6}
  #allocation0 [shape = 'u32[]', space=smem, size = 0x4, offset = 0x4, fixed_abs, tag = 'smem constant byte address 0x4 - core index']
  #allocation1 [shape = 'u32[144,128]{1,0:T(1,128)}', space=vmem, size = 0x12000, scoped, tag = 'internal scratch']
  %s0 = inlined_call_operand.vmem [shape: bf16[512,64], index: 0, kind: input, shape index: {}]
  %s1 = inlined_call_operand.vmem [shape: bf16[64,768], index: 1, kind: input, shape index: {}]
  %s2 = inlined_call_operand.vmem [shape: f32[1,768], index: 2, kind: input, shape index: {}]
  %s3 = inlined_call_operand.vmem [shape: f32[512,768], index: 3, kind: output, shape index: {}]
  %s4 = sld [smem:[#allocation0]]
  $region22: #{emotion_recognizer_forward.6} parent=0
    _
  %s6 = ssub.s32 1, %s4
  %s7 = scalar_select 0, %s6, %s4
  // Predicated region
  $region2: #{emotion_recognizer_forward.6} parent=0 // pred_check
    _
  $region3: #{emotion_recognizer_forward.6} parent=0 // pred_check_branch
    %9 = sbr.rel (0) target = $region5
  $region4: #{emotion_recognizer_forward.6} parent=0 // pred_region
    _
  $region5: #{emotion_recognizer_forward.6} parent=0 // pred_fallthru
    _
  // Predicated region
  $region6: #{emotion_recognizer_forward.6} parent=0 // pred_check
    _
  $region7: #{emotion_recognizer_forward.6} parent=0 // pred_check_branch
    %11 = sbr.rel (0) target = $region9
  $region8: #{emotion_recognizer_forward.6} parent=0 // pred_region
    _
  $region9: #{emotion_recognizer_forward.6} parent=0 // pred_fallthru
    _
  // Predicated region
  $region10: #{emotion_recognizer_forward.6} parent=0 // pred_check
    _
  $region11: #{emotion_recognizer_forward.6} parent=0 // pred_check_branch
    %13 = sbr.rel (0) target = $region13
  $region12: #{emotion_recognizer_forward.6} parent=0 // pred_region
    _
  $region13: #{emotion_recognizer_forward.6} parent=0 // pred_fallthru
    _
  %v15 = vld [vmem:[%s0] sm:$0xf]
  %v16 = vld [vmem:[%s0 + $0x4] sm:$0xf]
  %v17 = vld [vmem:[%s0 + $0x8] sm:$0xf]
  %v18 = vld [vmem:[%s0 + $0xc] sm:$0xf]
  %v19 = vld [vmem:[%s0 + $0x10] sm:$0xf]
  %v20 = vld [vmem:[%s0 + $0x14] sm:$0xf]
  %v21 = vld [vmem:[%s0 + $0x18] sm:$0xf]
  %v22 = vld [vmem:[%s0 + $0x1c] sm:$0xf]
  %v23 = vld [vmem:[%s0 + $0x20] sm:$0xf]
  %v24 = vld [vmem:[%s0 + $0x24] sm:$0xf]
  %v25 = vld [vmem:[%s0 + $0x28] sm:$0xf]
  %v26 = vld [vmem:[%s0 + $0x2c] sm:$0xf]
  %v27 = vld [vmem:[%s0 + $0x30] sm:$0xf]
  %v28 = vld [vmem:[%s0 + $0x34] sm:$0xf]
  %v29 = vld [vmem:[%s0 + $0x38] sm:$0xf]
  %v30 = vld [vmem:[%s0 + $0x3c] sm:$0xf]
  %v31 = vld [vmem:[%s0 + $0x40] sm:$0xf]
  %v32 = vld [vmem:[%s0 + $0x44] sm:$0xf]
  %v33 = vld [vmem:[%s0 + $0x48] sm:$0xf]
  %v34 = vld [vmem:[%s0 + $0x4c] sm:$0xf]
  %v35 = vld [vmem:[%s0 + $0x50] sm:$0xf]
  %v36 = vld [vmem:[%s0 + $0x54] sm:$0xf]
  %v37 = vld [vmem:[%s0 + $0x58] sm:$0xf]
  %v38 = vld [vmem:[%s0 + $0x5c] sm:$0xf]
  %v39 = vld [vmem:[%s0 + $0x60] sm:$0xf]
  %v40 = vld [vmem:[%s0 + $0x64] sm:$0xf]
  %v41 = vld [vmem:[%s0 + $0x68] sm:$0xf]
  %v42 = vld [vmem:[%s0 + $0x6c] sm:$0xf]
  %v43 = vld [vmem:[%s0 + $0x70] sm:$0xf]
  %v44 = vld [vmem:[%s0 + $0x74] sm:$0xf]
  %v45 = vld [vmem:[%s0 + $0x78] sm:$0xf]
  %v46 = vld [vmem:[%s0 + $0x7c] sm:$0xf]
  %v47 = vld [vmem:[%s0 + $0x80] sm:$0xf]
  %v48 = vld [vmem:[%s0 + $0x84] sm:$0xf]
  %v49 = vld [vmem:[%s0 + $0x88] sm:$0xf]
  %v50 = vld [vmem:[%s0 + $0x8c] sm:$0xf]
  %v51 = vld [vmem:[%s0 + $0x90] sm:$0xf]
  %v52 = vld [vmem:[%s0 + $0x94] sm:$0xf]
  %v53 = vld [vmem:[%s0 + $0x98] sm:$0xf]
  %v54 = vld [vmem:[%s0 + $0x9c] sm:$0xf]
  %v55 = vld [vmem:[%s0 + $0xa0] sm:$0xf]
  %v56 = vld [vmem:[%s0 + $0xa4] sm:$0xf]
  %v57 = vld [vmem:[%s0 + $0xa8] sm:$0xf]
  %v58 = vld [vmem:[%s0 + $0xac] sm:$0xf]
  %v59 = vld [vmem:[%s0 + $0xb0] sm:$0xf]
  %v60 = vld [vmem:[%s0 + $0xb4] sm:$0xf]
  %v61 = vld [vmem:[%s0 + $0xb8] sm:$0xf]
  %v62 = vld [vmem:[%s0 + $0xbc] sm:$0xf]
  %v63 = vld [vmem:[%s0 + $0xc0] sm:$0xf]
  %v64 = vld [vmem:[%s0 + $0xc4] sm:$0xf]
  %v65 = vld [vmem:[%s0 + $0xc8] sm:$0xf]
  %v66 = vld [vmem:[%s0 + $0xcc] sm:$0xf]
  %v67 = vld [vmem:[%s0 + $0xd0] sm:$0xf]
  %v68 = vld [vmem:[%s0 + $0xd4] sm:$0xf]
  %v69 = vld [vmem:[%s0 + $0xd8] sm:$0xf]
  %v70 = vld [vmem:[%s0 + $0xdc] sm:$0xf]
  %v71 = vld [vmem:[%s0 + $0xe0] sm:$0xf]
  %v72 = vld [vmem:[%s0 + $0xe4] sm:$0xf]
  %v73 = vld [vmem:[%s0 + $0xe8] sm:$0xf]
  %v74 = vld [vmem:[%s0 + $0xec] sm:$0xf]
  %v75 = vld [vmem:[%s0 + $0xf0] sm:$0xf]
  %v76 = vld [vmem:[%s0 + $0xf4] sm:$0xf]
  %v77 = vld [vmem:[%s0 + $0xf8] sm:$0xf]
  %v78 = vld [vmem:[%s0 + $0xfc] sm:$0xf]
  %v79 = vld [vmem:[%s1] sm:$0xff]
  %v80 = vld [vmem:[%s1 + $0x8] sm:$0xff]
  %v81 = vld [vmem:[%s1 + $0x10] sm:$0xff]
  %v82 = vld [vmem:[%s1 + $0x18] sm:$0xff]
  %v83 = vld [vmem:[%s1 + $0x20] sm:$0xff]
  %v84 = vld [vmem:[%s1 + $0x28] sm:$0xff]
  %v85 = vld [vmem:[%s1 + $0x30] sm:$0xff]
  %v86 = vld [vmem:[%s1 + $0x38] sm:$0xff]
  %v87 = vld [vmem:[%s1 + $0x40] sm:$0xff]
  %v88 = vld [vmem:[%s1 + $0x48] sm:$0xff]
  %v89 = vld [vmem:[%s1 + $0x50] sm:$0xff]
  %v90 = vld [vmem:[%s1 + $0x58] sm:$0xff]
  %v91 = vld [vmem:[%s1 + $0x60] sm:$0xff]
  %v92 = vld [vmem:[%s1 + $0x68] sm:$0xff]
  %v93 = vld [vmem:[%s1 + $0x70] sm:$0xff]
  %v94 = vld [vmem:[%s1 + $0x78] sm:$0xff]
  %v95 = vld [vmem:[%s1 + $0x80] sm:$0xff]
  %v96 = vld [vmem:[%s1 + $0x88] sm:$0xff]
  %v97 = vld [vmem:[%s1 + $0x90] sm:$0xff]
  %v98 = vld [vmem:[%s1 + $0x98] sm:$0xff]
  %v99 = vld [vmem:[%s1 + $0xa0] sm:$0xff]
  %v100 = vld [vmem:[%s1 + $0xa8] sm:$0xff]
  %v101 = vld [vmem:[%s1 + $0xb0] sm:$0xff]
  %v102 = vld [vmem:[%s1 + $0xb8] sm:$0xff]
  %v103 = vld [vmem:[%s2] sm:$0x3f]
  %v105 = vlaneseq
  %v106 = vshrl.u32 %v105, 7
  %v107 = vsub.s32 0, %v106
  %v108 = vrot.slane %v103, %v107
  %v109 = vlaneseq
  %v110 = vshrl.u32 %v109, 7
  %v111 = vsub.s32 1, %v110
  %v112 = vrot.slane %v103, %v111
  %v113 = vlaneseq
  %v114 = vshrl.u32 %v113, 7
  %v115 = vsub.s32 2, %v114
  %v116 = vrot.slane %v103, %v115
  %v117 = vlaneseq
  %v118 = vshrl.u32 %v117, 7
  %v119 = vsub.s32 3, %v118
  %v120 = vrot.slane %v103, %v119
  %v121 = vlaneseq
  %v122 = vshrl.u32 %v121, 7
  %v123 = vsub.s32 4, %v122
  %v124 = vrot.slane %v103, %v123
  %v125 = vlaneseq
  %v126 = vshrl.u32 %v125, 7
  %v127 = vsub.s32 5, %v126
  %v128 = vrot.slane %v103, %v127
  %v199 = vunpack.c.l.b16 %v15
  %v200 = vunpack.c.l.b16 %v16
  %v201 = vunpack.c.l.b16 %v17
  %v202 = vunpack.c.l.b16 %v18
  %v203 = vunpack.c.l.b16 %v19
  %v204 = vunpack.c.l.b16 %v20
  %v205 = vunpack.c.l.b16 %v21
  %v206 = vunpack.c.l.b16 %v22
  %v207 = vunpack.c.l.b16 %v23
  %v208 = vunpack.c.l.b16 %v24
  %v209 = vunpack.c.l.b16 %v25
  %v210 = vunpack.c.l.b16 %v26
  %v211 = vunpack.c.l.b16 %v27
  %v212 = vunpack.c.l.b16 %v28
  %v213 = vunpack.c.l.b16 %v29
  %v214 = vunpack.c.l.b16 %v30
  %v215 = vunpack.c.l.b16 %v31
  %v216 = vunpack.c.l.b16 %v32
  %v217 = vunpack.c.l.b16 %v33
  %v218 = vunpack.c.l.b16 %v34
  %v219 = vunpack.c.l.b16 %v35
  %v220 = vunpack.c.l.b16 %v36
  %v221 = vunpack.c.l.b16 %v37
  %v222 = vunpack.c.l.b16 %v38
  %v223 = vunpack.c.l.b16 %v39
  %v224 = vunpack.c.l.b16 %v40
  %v225 = vunpack.c.l.b16 %v41
  %v226 = vunpack.c.l.b16 %v42
  %v227 = vunpack.c.l.b16 %v43
  %v228 = vunpack.c.l.b16 %v44
  %v229 = vunpack.c.l.b16 %v45
  %v230 = vunpack.c.l.b16 %v46
  %v231 = vunpack.c.l.b16 %v47
  %v232 = vunpack.c.l.b16 %v48
  %v233 = vunpack.c.l.b16 %v49
  %v234 = vunpack.c.l.b16 %v50
  %v235 = vunpack.c.l.b16 %v51
  %v236 = vunpack.c.l.b16 %v52
  %v237 = vunpack.c.l.b16 %v53
  %v238 = vunpack.c.l.b16 %v54
  %v239 = vunpack.c.l.b16 %v55
  %v240 = vunpack.c.l.b16 %v56
  %v241 = vunpack.c.l.b16 %v57
  %v242 = vunpack.c.l.b16 %v58
  %v243 = vunpack.c.l.b16 %v59
  %v244 = vunpack.c.l.b16 %v60
  %v245 = vunpack.c.l.b16 %v61
  %v246 = vunpack.c.l.b16 %v62
  %v247 = vunpack.c.l.b16 %v63
  %v248 = vunpack.c.l.b16 %v64
  %v249 = vunpack.c.l.b16 %v65
  %v250 = vunpack.c.l.b16 %v66
  %v251 = vunpack.c.l.b16 %v67
  %v252 = vunpack.c.l.b16 %v68
  %v253 = vunpack.c.l.b16 %v69
  %v254 = vunpack.c.l.b16 %v70
  %v255 = vunpack.c.l.b16 %v71
  %v256 = vunpack.c.l.b16 %v72
  %v257 = vunpack.c.l.b16 %v73
  %v258 = vunpack.c.l.b16 %v74
  %v259 = vunpack.c.l.b16 %v75
  %v260 = vunpack.c.l.b16 %v76
  %v261 = vunpack.c.l.b16 %v77
  %v262 = vunpack.c.l.b16 %v78
  %v263 = vpack.c.b16 %v200, %v199
  %v264 = vpack.c.b16 %v202, %v201
  %v265 = vpack.c.b16 %v204, %v203
  %v266 = vpack.c.b16 %v206, %v205
  %v267 = vpack.c.b16 %v208, %v207
  %v268 = vpack.c.b16 %v210, %v209
  %v269 = vpack.c.b16 %v212, %v211
  %v270 = vpack.c.b16 %v214, %v213
  %v271 = vpack.c.b16 %v216, %v215
  %v272 = vpack.c.b16 %v218, %v217
  %v273 = vpack.c.b16 %v220, %v219
  %v274 = vpack.c.b16 %v222, %v221
  %v275 = vpack.c.b16 %v224, %v223
  %v276 = vpack.c.b16 %v226, %v225
  %v277 = vpack.c.b16 %v228, %v227
  %v278 = vpack.c.b16 %v230, %v229
  %v279 = vpack.c.b16 %v232, %v231
  %v280 = vpack.c.b16 %v234, %v233
  %v281 = vpack.c.b16 %v236, %v235
  %v282 = vpack.c.b16 %v238, %v237
  %v283 = vpack.c.b16 %v240, %v239
  %v284 = vpack.c.b16 %v242, %v241
  %v285 = vpack.c.b16 %v244, %v243
  %v286 = vpack.c.b16 %v246, %v245
  %v287 = vpack.c.b16 %v248, %v247
  %v288 = vpack.c.b16 %v250, %v249
  %v289 = vpack.c.b16 %v252, %v251
  %v290 = vpack.c.b16 %v254, %v253
  %v291 = vpack.c.b16 %v256, %v255
  %v292 = vpack.c.b16 %v258, %v257
  %v293 = vpack.c.b16 %v260, %v259
  %v294 = vpack.c.b16 %v262, %v261
  %v319 = vunpack.c.l.b16 %v79
  %v320 = vunpack.c.h.b16 %v79
  %v321 = vunpack.c.l.b16 %v80
  %v322 = vunpack.c.h.b16 %v80
  %v323 = vunpack.c.l.b16 %v81
  %v324 = vunpack.c.h.b16 %v81
  %v325 = vunpack.c.l.b16 %v82
  %v326 = vunpack.c.h.b16 %v82
  %v327 = vunpack.c.l.b16 %v83
  %v328 = vunpack.c.h.b16 %v83
  %v329 = vunpack.c.l.b16 %v84
  %v330 = vunpack.c.h.b16 %v84
  %v331 = vunpack.c.l.b16 %v85
  %v332 = vunpack.c.h.b16 %v85
  %v333 = vunpack.c.l.b16 %v86
  %v334 = vunpack.c.h.b16 %v86
  %v335 = vunpack.c.l.b16 %v87
  %v336 = vunpack.c.h.b16 %v87
  %v337 = vunpack.c.l.b16 %v88
  %v338 = vunpack.c.h.b16 %v88
  %v339 = vunpack.c.l.b16 %v89
  %v340 = vunpack.c.h.b16 %v89
  %v341 = vunpack.c.l.b16 %v90
  %v342 = vunpack.c.h.b16 %v90
  %v343 = vunpack.c.l.b16 %v91
  %v344 = vunpack.c.h.b16 %v91
  %v345 = vunpack.c.l.b16 %v92
  %v346 = vunpack.c.h.b16 %v92
  %v347 = vunpack.c.l.b16 %v93
  %v348 = vunpack.c.h.b16 %v93
  %v349 = vunpack.c.l.b16 %v94
  %v350 = vunpack.c.h.b16 %v94
  %v351 = vunpack.c.l.b16 %v95
  %v352 = vunpack.c.h.b16 %v95
  %v353 = vunpack.c.l.b16 %v96
  %v354 = vunpack.c.h.b16 %v96
  %v355 = vunpack.c.l.b16 %v97
  %v356 = vunpack.c.h.b16 %v97
  %v357 = vunpack.c.l.b16 %v98
  %v358 = vunpack.c.h.b16 %v98
  %v359 = vunpack.c.l.b16 %v99
  %v360 = vunpack.c.h.b16 %v99
  %v361 = vunpack.c.l.b16 %v100
  %v362 = vunpack.c.h.b16 %v100
  %v363 = vunpack.c.l.b16 %v101
  %v364 = vunpack.c.h.b16 %v101
  %v365 = vunpack.c.l.b16 %v102
  %v366 = vunpack.c.h.b16 %v102
  %v367 = vpack.c.b16 %v325, %v319
  %v368 = vpack.c.b16 %v326, %v320
  %v369 = vpack.c.b16 %v327, %v321
  %v370 = vpack.c.b16 %v328, %v322
  %v371 = vpack.c.b16 %v329, %v323
  %v372 = vpack.c.b16 %v330, %v324
  %v373 = vpack.c.b16 %v337, %v331
  %v374 = vpack.c.b16 %v338, %v332
  %v375 = vpack.c.b16 %v339, %v333
  %v376 = vpack.c.b16 %v340, %v334
  %v377 = vpack.c.b16 %v341, %v335
  %v378 = vpack.c.b16 %v342, %v336
  %v379 = vpack.c.b16 %v349, %v343
  %v380 = vpack.c.b16 %v350, %v344
  %v381 = vpack.c.b16 %v351, %v345
  %v382 = vpack.c.b16 %v352, %v346
  %v383 = vpack.c.b16 %v353, %v347
  %v384 = vpack.c.b16 %v354, %v348
  %v385 = vpack.c.b16 %v361, %v355
  %v386 = vpack.c.b16 %v362, %v356
  %v387 = vpack.c.b16 %v363, %v357
  %v388 = vpack.c.b16 %v364, %v358
  %v389 = vpack.c.b16 %v365, %v359
  %v390 = vpack.c.b16 %v366, %v360
  %vm415 = vcmask 523264
  %v417 = vsel %vm415, %v263, 0
  %v420 = vsel %vm415, %v264, 0
  %v423 = vsel %vm415, %v265, 0
  %v426 = vsel %vm415, %v266, 0
  %v429 = vsel %vm415, %v267, 0
  %v432 = vsel %vm415, %v268, 0
  %v435 = vsel %vm415, %v269, 0
  %v438 = vsel %vm415, %v270, 0
  %v441 = vsel %vm415, %v271, 0
  %v444 = vsel %vm415, %v272, 0
  %v447 = vsel %vm415, %v273, 0
  %v450 = vsel %vm415, %v274, 0
  %v453 = vsel %vm415, %v275, 0
  %v456 = vsel %vm415, %v276, 0
  %v459 = vsel %vm415, %v277, 0
  %v462 = vsel %vm415, %v278, 0
  %v465 = vsel %vm415, %v279, 0
  %v468 = vsel %vm415, %v280, 0
  %v471 = vsel %vm415, %v281, 0
  %v474 = vsel %vm415, %v282, 0
  %v477 = vsel %vm415, %v283, 0
  %v480 = vsel %vm415, %v284, 0
  %v483 = vsel %vm415, %v285, 0
  %v486 = vsel %vm415, %v286, 0
  %v489 = vsel %vm415, %v287, 0
  %v492 = vsel %vm415, %v288, 0
  %v495 = vsel %vm415, %v289, 0
  %v498 = vsel %vm415, %v290, 0
  %v501 = vsel %vm415, %v291, 0
  %v504 = vsel %vm415, %v292, 0
  %v507 = vsel %vm415, %v293, 0
  %v510 = vsel %vm415, %v294, 0
  %512 = vmatprep.subr.bf16.mxu0 0
  %513 = vmatpush1.bf16.msra.mxu0 0
  %514 = vmatprep.subr.bf16.mxu0 0
  %515 = vmatpush1.bf16.msra.mxu0 0
  %516 = vmatprep.subr.bf16.mxu0 0
  %517 = vmatpush1.bf16.msra.mxu0 0
  %518 = vmatprep.subr.bf16.mxu0 0
  %519 = vmatpush1.bf16.msra.mxu0 0
  %520 = vmatprep.subr.bf16.mxu0 %v386
  %521 = vmatpush1.bf16.msra.mxu0 %v385
  %522 = vmatprep.subr.bf16.mxu0 %v380
  %523 = vmatpush1.bf16.msra.mxu0 %v379
  %524 = vmatprep.subr.bf16.mxu0 %v374
  %525 = vmatpush1.bf16.msra.mxu0 %v373
  %526 = vmatprep.subr.bf16.mxu0 %v368
  %527 = vmatpush1.bf16.msra.mxu0 %v367
  %528 = vmatprep.subr.bf16.mxu0 0
  %529 = vmatpush2.bf16.msra.mxu0 0
  %530 = vmatprep.subr.bf16.mxu0 0
  %531 = vmatpush2.bf16.msra.mxu0 0
  %532 = vmatprep.subr.bf16.mxu0 0
  %533 = vmatpush2.bf16.msra.mxu0 0
  %534 = vmatprep.subr.bf16.mxu0 0
  %535 = vmatpush2.bf16.msra.mxu0 0
  %536 = vmatprep.subr.bf16.mxu0 0
  %537 = vmatpush2.bf16.msra.mxu0 0
  %538 = vmatprep.subr.bf16.mxu0 0
  %539 = vmatpush2.bf16.msra.mxu0 0
  %540 = vmatprep.subr.bf16.mxu0 0
  %541 = vmatpush2.bf16.msra.mxu0 0
  %542 = vmatprep.subr.bf16.mxu0 0
  %543 = vmatpush2.bf16.msra.mxu0 0
  %544 = vmatprep.mubr.bf16.mxu0 0
  %545 = vmatmul.mubr.bf16.gmra.mxu0 %v417
  %v546 = vpop.f32.mrf.mxu0
  %v547 = vadd.f32 %v108, %v546
  %v548 = vpop.f32.mrf.mxu0
  %v549 = vadd.f32 %v112, %v548
  %v550 = vpop.f32.mrf.mxu0
  %v551 = vadd.f32 %v108, %v550
  %v552 = vpop.f32.mrf.mxu0
  %v553 = vadd.f32 %v112, %v552
  %554 = vmatprep.mubr.bf16.mxu0 0
  %555 = vmatmul.mubr.bf16.gmra.mxu0 %v420
  %v556 = vpop.f32.mrf.mxu0
  %v557 = vadd.f32 %v108, %v556
  %v558 = vpop.f32.mrf.mxu0
  %v559 = vadd.f32 %v112, %v558
  %v560 = vpop.f32.mrf.mxu0
  %v561 = vadd.f32 %v108, %v560
  %v562 = vpop.f32.mrf.mxu0
  %v563 = vadd.f32 %v112, %v562
  %564 = vmatprep.mubr.bf16.mxu0 0
  %565 = vmatmul.mubr.bf16.gmra.mxu0 %v423
  %v566 = vpop.f32.mrf.mxu0
  %v567 = vadd.f32 %v108, %v566
  %v568 = vpop.f32.mrf.mxu0
  %v569 = vadd.f32 %v112, %v568
  %v570 = vpop.f32.mrf.mxu0
  %v571 = vadd.f32 %v108, %v570
  %v572 = vpop.f32.mrf.mxu0
  %v573 = vadd.f32 %v112, %v572
  %574 = vmatprep.mubr.bf16.mxu0 0
  %575 = vmatmul.mubr.bf16.gmra.mxu0 %v426
  %v576 = vpop.f32.mrf.mxu0
  %v577 = vadd.f32 %v108, %v576
  %v578 = vpop.f32.mrf.mxu0
  %v579 = vadd.f32 %v112, %v578
  %v580 = vpop.f32.mrf.mxu0
  %v581 = vadd.f32 %v108, %v580
  %v582 = vpop.f32.mrf.mxu0
  %v583 = vadd.f32 %v112, %v582
  %584 = vmatprep.mubr.bf16.mxu0 0
  %585 = vmatmul.mubr.bf16.gmra.mxu0 %v429
  %v586 = vpop.f32.mrf.mxu0
  %v587 = vadd.f32 %v108, %v586
  %v588 = vpop.f32.mrf.mxu0
  %v589 = vadd.f32 %v112, %v588
  %v590 = vpop.f32.mrf.mxu0
  %v591 = vadd.f32 %v108, %v590
  %v592 = vpop.f32.mrf.mxu0
  %v593 = vadd.f32 %v112, %v592
  %594 = vmatprep.mubr.bf16.mxu0 0
  %595 = vmatmul.mubr.bf16.gmra.mxu0 %v432
  %v596 = vpop.f32.mrf.mxu0
  %v597 = vadd.f32 %v108, %v596
  %v598 = vpop.f32.mrf.mxu0
  %v599 = vadd.f32 %v112, %v598
  %v600 = vpop.f32.mrf.mxu0
  %v601 = vadd.f32 %v108, %v600
  %v602 = vpop.f32.mrf.mxu0
  %v603 = vadd.f32 %v112, %v602
  %604 = vmatprep.mubr.bf16.mxu0 0
  %605 = vmatmul.mubr.bf16.gmra.mxu0 %v435
  %v606 = vpop.f32.mrf.mxu0
  %v607 = vadd.f32 %v108, %v606
  %v608 = vpop.f32.mrf.mxu0
  %v609 = vadd.f32 %v112, %v608
  %v610 = vpop.f32.mrf.mxu0
  %v611 = vadd.f32 %v108, %v610
  %v612 = vpop.f32.mrf.mxu0
  %v613 = vadd.f32 %v112, %v612
  %614 = vmatprep.mubr.bf16.mxu0 0
  %615 = vmatmul.mubr.bf16.gmra.mxu0 %v438
  %v616 = vpop.f32.mrf.mxu0
  %v617 = vadd.f32 %v108, %v616
  %v618 = vpop.f32.mrf.mxu0
  %v619 = vadd.f32 %v112, %v618
  %v620 = vpop.f32.mrf.mxu0
  %v621 = vadd.f32 %v108, %v620
  %v622 = vpop.f32.mrf.mxu0
  %v623 = vadd.f32 %v112, %v622
  %624 = vmatprep.mubr.bf16.mxu0 0
  %625 = vmatmul.mubr.bf16.gmra.mxu0 %v441
  %v626 = vpop.f32.mrf.mxu0
  %v627 = vadd.f32 %v108, %v626
  %v628 = vpop.f32.mrf.mxu0
  %v629 = vadd.f32 %v112, %v628
  %v630 = vpop.f32.mrf.mxu0
  %v631 = vadd.f32 %v108, %v630
  %v632 = vpop.f32.mrf.mxu0
  %v633 = vadd.f32 %v112, %v632
  %634 = vmatprep.mubr.bf16.mxu0 0
  %635 = vmatmul.mubr.bf16.gmra.mxu0 %v444
  %v636 = vpop.f32.mrf.mxu0
  %v637 = vadd.f32 %v108, %v636
  %v638 = vpop.f32.mrf.mxu0
  %v639 = vadd.f32 %v112, %v638
  %v640 = vpop.f32.mrf.mxu0
  %v641 = vadd.f32 %v108, %v640
  %v642 = vpop.f32.mrf.mxu0
  %v643 = vadd.f32 %v112, %v642
  %644 = vmatprep.mubr.bf16.mxu0 0
  %645 = vmatmul.mubr.bf16.gmra.mxu0 %v447
  %v646 = vpop.f32.mrf.mxu0
  %v647 = vadd.f32 %v108, %v646
  %v648 = vpop.f32.mrf.mxu0
  %v649 = vadd.f32 %v112, %v648
  %v650 = vpop.f32.mrf.mxu0
  %v651 = vadd.f32 %v108, %v650
  %v652 = vpop.f32.mrf.mxu0
  %v653 = vadd.f32 %v112, %v652
  %654 = vmatprep.mubr.bf16.mxu0 0
  %655 = vmatmul.mubr.bf16.gmra.mxu0 %v450
  %v656 = vpop.f32.mrf.mxu0
  %v657 = vadd.f32 %v108, %v656
  %v658 = vpop.f32.mrf.mxu0
  %v659 = vadd.f32 %v112, %v658
  %v660 = vpop.f32.mrf.mxu0
  %v661 = vadd.f32 %v108, %v660
  %v662 = vpop.f32.mrf.mxu0
  %v663 = vadd.f32 %v112, %v662
  %664 = vmatprep.mubr.bf16.mxu0 0
  %665 = vmatmul.mubr.bf16.gmra.mxu0 %v453
  %v666 = vpop.f32.mrf.mxu0
  %v667 = vadd.f32 %v108, %v666
  %v668 = vpop.f32.mrf.mxu0
  %v669 = vadd.f32 %v112, %v668
  %v670 = vpop.f32.mrf.mxu0
  %v671 = vadd.f32 %v108, %v670
  %v672 = vpop.f32.mrf.mxu0
  %v673 = vadd.f32 %v112, %v672
  %674 = vmatprep.mubr.bf16.mxu0 0
  %675 = vmatmul.mubr.bf16.gmra.mxu0 %v456
  %v676 = vpop.f32.mrf.mxu0
  %v677 = vadd.f32 %v108, %v676
  %v678 = vpop.f32.mrf.mxu0
  %v679 = vadd.f32 %v112, %v678
  %v680 = vpop.f32.mrf.mxu0
  %v681 = vadd.f32 %v108, %v680
  %v682 = vpop.f32.mrf.mxu0
  %v683 = vadd.f32 %v112, %v682
  %684 = vmatprep.mubr.bf16.mxu0 0
  %685 = vmatmul.mubr.bf16.gmra.mxu0 %v459
  %v686 = vpop.f32.mrf.mxu0
  %v687 = vadd.f32 %v108, %v686
  %v688 = vpop.f32.mrf.mxu0
  %v689 = vadd.f32 %v112, %v688
  %v690 = vpop.f32.mrf.mxu0
  %v691 = vadd.f32 %v108, %v690
  %v692 = vpop.f32.mrf.mxu0
  %v693 = vadd.f32 %v112, %v692
  %694 = vmatprep.mubr.bf16.mxu0 0
  %695 = vmatmul.mubr.bf16.gmra.mxu0 %v462
  %v696 = vpop.f32.mrf.mxu0
  %v697 = vadd.f32 %v108, %v696
  %v698 = vpop.f32.mrf.mxu0
  %v699 = vadd.f32 %v112, %v698
  %v700 = vpop.f32.mrf.mxu0
  %v701 = vadd.f32 %v108, %v700
  %v702 = vpop.f32.mrf.mxu0
  %v703 = vadd.f32 %v112, %v702
  %704 = vmatprep.mubr.bf16.mxu0 0
  %705 = vmatmul.mubr.bf16.gmra.mxu0 %v465
  %v706 = vpop.f32.mrf.mxu0
  %v707 = vadd.f32 %v108, %v706
  %v708 = vpop.f32.mrf.mxu0
  %v709 = vadd.f32 %v112, %v708
  %v710 = vpop.f32.mrf.mxu0
  %v711 = vadd.f32 %v108, %v710
  %v712 = vpop.f32.mrf.mxu0
  %v713 = vadd.f32 %v112, %v712
  %714 = vmatprep.mubr.bf16.mxu0 0
  %715 = vmatmul.mubr.bf16.gmra.mxu0 %v468
  %v716 = vpop.f32.mrf.mxu0
  %v717 = vadd.f32 %v108, %v716
  %v718 = vpop.f32.mrf.mxu0
  %v719 = vadd.f32 %v112, %v718
  %v720 = vpop.f32.mrf.mxu0
  %v721 = vadd.f32 %v108, %v720
  %v722 = vpop.f32.mrf.mxu0
  %v723 = vadd.f32 %v112, %v722
  %724 = vmatprep.mubr.bf16.mxu0 0
  %725 = vmatmul.mubr.bf16.gmra.mxu0 %v471
  %v726 = vpop.f32.mrf.mxu0
  %v727 = vadd.f32 %v108, %v726
  %v728 = vpop.f32.mrf.mxu0
  %v729 = vadd.f32 %v112, %v728
  %v730 = vpop.f32.mrf.mxu0
  %v731 = vadd.f32 %v108, %v730
  %v732 = vpop.f32.mrf.mxu0
  %v733 = vadd.f32 %v112, %v732
  %734 = vmatprep.mubr.bf16.mxu0 0
  %735 = vmatmul.mubr.bf16.gmra.mxu0 %v474
  %v736 = vpop.f32.mrf.mxu0
  %v737 = vadd.f32 %v108, %v736
  %v738 = vpop.f32.mrf.mxu0
  %v739 = vadd.f32 %v112, %v738
  %v740 = vpop.f32.mrf.mxu0
  %v741 = vadd.f32 %v108, %v740
  %v742 = vpop.f32.mrf.mxu0
  %v743 = vadd.f32 %v112, %v742
  %744 = vmatprep.mubr.bf16.mxu0 0
  %745 = vmatmul.mubr.bf16.gmra.mxu0 %v477
  %v746 = vpop.f32.mrf.mxu0
  %v747 = vadd.f32 %v108, %v746
  %v748 = vpop.f32.mrf.mxu0
  %v749 = vadd.f32 %v112, %v748
  %v750 = vpop.f32.mrf.mxu0
  %v751 = vadd.f32 %v108, %v750
  %v752 = vpop.f32.mrf.mxu0
  %v753 = vadd.f32 %v112, %v752
  %754 = vmatprep.mubr.bf16.mxu0 0
  %755 = vmatmul.mubr.bf16.gmra.mxu0 %v480
  %v756 = vpop.f32.mrf.mxu0
  %v757 = vadd.f32 %v108, %v756
  %v758 = vpop.f32.mrf.mxu0
  %v759 = vadd.f32 %v112, %v758
  %v760 = vpop.f32.mrf.mxu0
  %v761 = vadd.f32 %v108, %v760
  %v762 = vpop.f32.mrf.mxu0
  %v763 = vadd.f32 %v112, %v762
  %764 = vmatprep.mubr.bf16.mxu0 0
  %765 = vmatmul.mubr.bf16.gmra.mxu0 %v483
  %v766 = vpop.f32.mrf.mxu0
  %v767 = vadd.f32 %v108, %v766
  %v768 = vpop.f32.mrf.mxu0
  %v769 = vadd.f32 %v112, %v768
  %v770 = vpop.f32.mrf.mxu0
  %v771 = vadd.f32 %v108, %v770
  %v772 = vpop.f32.mrf.mxu0
  %v773 = vadd.f32 %v112, %v772
  %774 = vmatprep.mubr.bf16.mxu0 0
  %775 = vmatmul.mubr.bf16.gmra.mxu0 %v486
  %v776 = vpop.f32.mrf.mxu0
  %v777 = vadd.f32 %v108, %v776
  %v778 = vpop.f32.mrf.mxu0
  %v779 = vadd.f32 %v112, %v778
  %v780 = vpop.f32.mrf.mxu0
  %v781 = vadd.f32 %v108, %v780
  %v782 = vpop.f32.mrf.mxu0
  %v783 = vadd.f32 %v112, %v782
  %784 = vmatprep.mubr.bf16.mxu0 0
  %785 = vmatmul.mubr.bf16.gmra.mxu0 %v489
  %v786 = vpop.f32.mrf.mxu0
  %v787 = vadd.f32 %v108, %v786
  %v788 = vpop.f32.mrf.mxu0
  %v789 = vadd.f32 %v112, %v788
  %v790 = vpop.f32.mrf.mxu0
  %v791 = vadd.f32 %v108, %v790
  %v792 = vpop.f32.mrf.mxu0
  %v793 = vadd.f32 %v112, %v792
  %794 = vmatprep.mubr.bf16.mxu0 0
  %795 = vmatmul.mubr.bf16.gmra.mxu0 %v492
  %v796 = vpop.f32.mrf.mxu0
  %v797 = vadd.f32 %v108, %v796
  %v798 = vpop.f32.mrf.mxu0
  %v799 = vadd.f32 %v112, %v798
  %v800 = vpop.f32.mrf.mxu0
  %v801 = vadd.f32 %v108, %v800
  %v802 = vpop.f32.mrf.mxu0
  %v803 = vadd.f32 %v112, %v802
  %804 = vmatprep.mubr.bf16.mxu0 0
  %805 = vmatmul.mubr.bf16.gmra.mxu0 %v495
  %v806 = vpop.f32.mrf.mxu0
  %v807 = vadd.f32 %v108, %v806
  %v808 = vpop.f32.mrf.mxu0
  %v809 = vadd.f32 %v112, %v808
  %v810 = vpop.f32.mrf.mxu0
  %v811 = vadd.f32 %v108, %v810
  %v812 = vpop.f32.mrf.mxu0
  %v813 = vadd.f32 %v112, %v812
  %814 = vmatprep.mubr.bf16.mxu0 0
  %815 = vmatmul.mubr.bf16.gmra.mxu0 %v498
  %v816 = vpop.f32.mrf.mxu0
  %v817 = vadd.f32 %v108, %v816
  %v818 = vpop.f32.mrf.mxu0
  %v819 = vadd.f32 %v112, %v818
  %v820 = vpop.f32.mrf.mxu0
  %v821 = vadd.f32 %v108, %v820
  %v822 = vpop.f32.mrf.mxu0
  %v823 = vadd.f32 %v112, %v822
  %824 = vmatprep.mubr.bf16.mxu0 0
  %825 = vmatmul.mubr.bf16.gmra.mxu0 %v501
  %v826 = vpop.f32.mrf.mxu0
  %v827 = vadd.f32 %v108, %v826
  %v828 = vpop.f32.mrf.mxu0
  %v829 = vadd.f32 %v112, %v828
  %v830 = vpop.f32.mrf.mxu0
  %v831 = vadd.f32 %v108, %v830
  %v832 = vpop.f32.mrf.mxu0
  %v833 = vadd.f32 %v112, %v832
  %834 = vmatprep.mubr.bf16.mxu0 0
  %835 = vmatmul.mubr.bf16.gmra.mxu0 %v504
  %v836 = vpop.f32.mrf.mxu0
  %v837 = vadd.f32 %v108, %v836
  %v838 = vpop.f32.mrf.mxu0
  %v839 = vadd.f32 %v112, %v838
  %v840 = vpop.f32.mrf.mxu0
  %v841 = vadd.f32 %v108, %v840
  %v842 = vpop.f32.mrf.mxu0
  %v843 = vadd.f32 %v112, %v842
  %844 = vmatprep.mubr.bf16.mxu0 0
  %845 = vmatmul.mubr.bf16.gmra.mxu0 %v507
  %v846 = vpop.f32.mrf.mxu0
  %v847 = vadd.f32 %v108, %v846
  %v848 = vpop.f32.mrf.mxu0
  %v849 = vadd.f32 %v112, %v848
  %v850 = vpop.f32.mrf.mxu0
  %v851 = vadd.f32 %v108, %v850
  %v852 = vpop.f32.mrf.mxu0
  %v853 = vadd.f32 %v112, %v852
  %854 = vmatprep.mubr.bf16.mxu0 0
  %855 = vmatmul.mubr.bf16.gmra.mxu0 %v510
  %v856 = vpop.f32.mrf.mxu0
  %v857 = vadd.f32 %v108, %v856
  %v858 = vpop.f32.mrf.mxu0
  %v859 = vadd.f32 %v112, %v858
  %v860 = vpop.f32.mrf.mxu0
  %v861 = vadd.f32 %v108, %v860
  %v862 = vpop.f32.mrf.mxu0
  %v863 = vadd.f32 %v112, %v862
  %864 = vdwg.mxu0
  %865 = vmatprep.subr.bf16.mxu0 0
  %866 = vmatpush1.bf16.msra.mxu0 0
  %867 = vmatprep.subr.bf16.mxu0 0
  %868 = vmatpush1.bf16.msra.mxu0 0
  %869 = vmatprep.subr.bf16.mxu0 0
  %870 = vmatpush1.bf16.msra.mxu0 0
  %871 = vmatprep.subr.bf16.mxu0 0
  %872 = vmatpush1.bf16.msra.mxu0 0
  %873 = vmatprep.subr.bf16.mxu0 %v388
  %874 = vmatpush1.bf16.msra.mxu0 %v387
  %875 = vmatprep.subr.bf16.mxu0 %v382
  %876 = vmatpush1.bf16.msra.mxu0 %v381
  %877 = vmatprep.subr.bf16.mxu0 %v376
  %878 = vmatpush1.bf16.msra.mxu0 %v375
  %879 = vmatprep.subr.bf16.mxu0 %v370
  %880 = vmatpush1.bf16.msra.mxu0 %v369
  %881 = vmatprep.subr.bf16.mxu0 0
  %882 = vmatpush2.bf16.msra.mxu0 0
  %883 = vmatprep.subr.bf16.mxu0 0
  %884 = vmatpush2.bf16.msra.mxu0 0
  %885 = vmatprep.subr.bf16.mxu0 0
  %886 = vmatpush2.bf16.msra.mxu0 0
  %887 = vmatprep.subr.bf16.mxu0 0
  %888 = vmatpush2.bf16.msra.mxu0 0
  %889 = vmatprep.subr.bf16.mxu0 0
  %890 = vmatpush2.bf16.msra.mxu0 0
  %891 = vmatprep.subr.bf16.mxu0 0
  %892 = vmatpush2.bf16.msra.mxu0 0
  %893 = vmatprep.subr.bf16.mxu0 0
  %894 = vmatpush2.bf16.msra.mxu0 0
  %895 = vmatprep.subr.bf16.mxu0 0
  %896 = vmatpush2.bf16.msra.mxu0 0
  %897 = vmatprep.mubr.bf16.mxu0 0
  %898 = vmatmul.mubr.bf16.gmra.mxu0 %v417
  %v899 = vpop.f32.mrf.mxu0
  %v900 = vadd.f32 %v116, %v899
  %v901 = vpop.f32.mrf.mxu0
  %v902 = vadd.f32 %v120, %v901
  %v903 = vpop.f32.mrf.mxu0
  %v904 = vadd.f32 %v116, %v903
  %v905 = vpop.f32.mrf.mxu0
  %v906 = vadd.f32 %v120, %v905
  %907 = vmatprep.mubr.bf16.mxu0 0
  %908 = vmatmul.mubr.bf16.gmra.mxu0 %v420
  %v909 = vpop.f32.mrf.mxu0
  %v910 = vadd.f32 %v116, %v909
  %v911 = vpop.f32.mrf.mxu0
  %v912 = vadd.f32 %v120, %v911
  %v913 = vpop.f32.mrf.mxu0
  %v914 = vadd.f32 %v116, %v913
  %v915 = vpop.f32.mrf.mxu0
  %v916 = vadd.f32 %v120, %v915
  %917 = vmatprep.mubr.bf16.mxu0 0
  %918 = vmatmul.mubr.bf16.gmra.mxu0 %v423
  %v919 = vpop.f32.mrf.mxu0
  %v920 = vadd.f32 %v116, %v919
  %v921 = vpop.f32.mrf.mxu0
  %v922 = vadd.f32 %v120, %v921
  %v923 = vpop.f32.mrf.mxu0
  %v924 = vadd.f32 %v116, %v923
  %v925 = vpop.f32.mrf.mxu0
  %v926 = vadd.f32 %v120, %v925
  %927 = vmatprep.mubr.bf16.mxu0 0
  %928 = vmatmul.mubr.bf16.gmra.mxu0 %v426
  %v929 = vpop.f32.mrf.mxu0
  %v930 = vadd.f32 %v116, %v929
  %v931 = vpop.f32.mrf.mxu0
  %v932 = vadd.f32 %v120, %v931
  %v933 = vpop.f32.mrf.mxu0
  %v934 = vadd.f32 %v116, %v933
  %v935 = vpop.f32.mrf.mxu0
  %v936 = vadd.f32 %v120, %v935
  %937 = vmatprep.mubr.bf16.mxu0 0
  %938 = vmatmul.mubr.bf16.gmra.mxu0 %v429
  %v939 = vpop.f32.mrf.mxu0
  %v940 = vadd.f32 %v116, %v939
  %v941 = vpop.f32.mrf.mxu0
  %v942 = vadd.f32 %v120, %v941
  %v943 = vpop.f32.mrf.mxu0
  %v944 = vadd.f32 %v116, %v943
  %v945 = vpop.f32.mrf.mxu0
  %v946 = vadd.f32 %v120, %v945
  %947 = vmatprep.mubr.bf16.mxu0 0
  %948 = vmatmul.mubr.bf16.gmra.mxu0 %v432
  %v949 = vpop.f32.mrf.mxu0
  %v950 = vadd.f32 %v116, %v949
  %v951 = vpop.f32.mrf.mxu0
  %v952 = vadd.f32 %v120, %v951
  %v953 = vpop.f32.mrf.mxu0
  %v954 = vadd.f32 %v116, %v953
  %v955 = vpop.f32.mrf.mxu0
  %v956 = vadd.f32 %v120, %v955
  %957 = vmatprep.mubr.bf16.mxu0 0
  %958 = vmatmul.mubr.bf16.gmra.mxu0 %v435
  %v959 = vpop.f32.mrf.mxu0
  %v960 = vadd.f32 %v116, %v959
  %v961 = vpop.f32.mrf.mxu0
  %v962 = vadd.f32 %v120, %v961
  %v963 = vpop.f32.mrf.mxu0
  %v964 = vadd.f32 %v116, %v963
  %v965 = vpop.f32.mrf.mxu0
  %v966 = vadd.f32 %v120, %v965
  %967 = vmatprep.mubr.bf16.mxu0 0
  %968 = vmatmul.mubr.bf16.gmra.mxu0 %v438
  %v969 = vpop.f32.mrf.mxu0
  %v970 = vadd.f32 %v116, %v969
  %v971 = vpop.f32.mrf.mxu0
  %v972 = vadd.f32 %v120, %v971
  %v973 = vpop.f32.mrf.mxu0
  %v974 = vadd.f32 %v116, %v973
  %v975 = vpop.f32.mrf.mxu0
  %v976 = vadd.f32 %v120, %v975
  %977 = vmatprep.mubr.bf16.mxu0 0
  %978 = vmatmul.mubr.bf16.gmra.mxu0 %v441
  %v979 = vpop.f32.mrf.mxu0
  %v980 = vadd.f32 %v116, %v979
  %v981 = vpop.f32.mrf.mxu0
  %v982 = vadd.f32 %v120, %v981
  %v983 = vpop.f32.mrf.mxu0
  %v984 = vadd.f32 %v116, %v983
  %v985 = vpop.f32.mrf.mxu0
  %v986 = vadd.f32 %v120, %v985
  %987 = vmatprep.mubr.bf16.mxu0 0
  %988 = vmatmul.mubr.bf16.gmra.mxu0 %v444
  %v989 = vpop.f32.mrf.mxu0
  %v990 = vadd.f32 %v116, %v989
  %v991 = vpop.f32.mrf.mxu0
  %v992 = vadd.f32 %v120, %v991
  %v993 = vpop.f32.mrf.mxu0
  %v994 = vadd.f32 %v116, %v993
  %v995 = vpop.f32.mrf.mxu0
  %v996 = vadd.f32 %v120, %v995
  %997 = vmatprep.mubr.bf16.mxu0 0
  %998 = vmatmul.mubr.bf16.gmra.mxu0 %v447
  %v999 = vpop.f32.mrf.mxu0
  %v1000 = vadd.f32 %v116, %v999
  %v1001 = vpop.f32.mrf.mxu0
  %v1002 = vadd.f32 %v120, %v1001
  %v1003 = vpop.f32.mrf.mxu0
  %v1004 = vadd.f32 %v116, %v1003
  %v1005 = vpop.f32.mrf.mxu0
  %v1006 = vadd.f32 %v120, %v1005
  %1007 = vmatprep.mubr.bf16.mxu0 0
  %1008 = vmatmul.mubr.bf16.gmra.mxu0 %v450
  %v1009 = vpop.f32.mrf.mxu0
  %v1010 = vadd.f32 %v116, %v1009
  %v1011 = vpop.f32.mrf.mxu0
  %v1012 = vadd.f32 %v120, %v1011
  %v1013 = vpop.f32.mrf.mxu0
  %v1014 = vadd.f32 %v116, %v1013
  %v1015 = vpop.f32.mrf.mxu0
  %v1016 = vadd.f32 %v120, %v1015
  %1017 = vmatprep.mubr.bf16.mxu0 0
  %1018 = vmatmul.mubr.bf16.gmra.mxu0 %v453
  %v1019 = vpop.f32.mrf.mxu0
  %v1020 = vadd.f32 %v116, %v1019
  %v1021 = vpop.f32.mrf.mxu0
  %v1022 = vadd.f32 %v120, %v1021
  %v1023 = vpop.f32.mrf.mxu0
  %v1024 = vadd.f32 %v116, %v1023
  %v1025 = vpop.f32.mrf.mxu0
  %v1026 = vadd.f32 %v120, %v1025
  %1027 = vmatprep.mubr.bf16.mxu0 0
  %1028 = vmatmul.mubr.bf16.gmra.mxu0 %v456
  %v1029 = vpop.f32.mrf.mxu0
  %v1030 = vadd.f32 %v116, %v1029
  %v1031 = vpop.f32.mrf.mxu0
  %v1032 = vadd.f32 %v120, %v1031
  %v1033 = vpop.f32.mrf.mxu0
  %v1034 = vadd.f32 %v116, %v1033
  %v1035 = vpop.f32.mrf.mxu0
  %v1036 = vadd.f32 %v120, %v1035
  %1037 = vmatprep.mubr.bf16.mxu0 0
  %1038 = vmatmul.mubr.bf16.gmra.mxu0 %v459
  %v1039 = vpop.f32.mrf.mxu0
  %v1040 = vadd.f32 %v116, %v1039
  %v1041 = vpop.f32.mrf.mxu0
  %v1042 = vadd.f32 %v120, %v1041
  %v1043 = vpop.f32.mrf.mxu0
  %v1044 = vadd.f32 %v116, %v1043
  %v1045 = vpop.f32.mrf.mxu0
  %v1046 = vadd.f32 %v120, %v1045
  %1047 = vmatprep.mubr.bf16.mxu0 0
  %1048 = vmatmul.mubr.bf16.gmra.mxu0 %v462
  %v1049 = vpop.f32.mrf.mxu0
  %v1050 = vadd.f32 %v116, %v1049
  %v1051 = vpop.f32.mrf.mxu0
  %v1052 = vadd.f32 %v120, %v1051
  %v1053 = vpop.f32.mrf.mxu0
  %v1054 = vadd.f32 %v116, %v1053
  %v1055 = vpop.f32.mrf.mxu0
  %v1056 = vadd.f32 %v120, %v1055
  %1057 = vmatprep.mubr.bf16.mxu0 0
  %1058 = vmatmul.mubr.bf16.gmra.mxu0 %v465
  %v1059 = vpop.f32.mrf.mxu0
  %v1060 = vadd.f32 %v116, %v1059
  %v1061 = vpop.f32.mrf.mxu0
  %v1062 = vadd.f32 %v120, %v1061
  %v1063 = vpop.f32.mrf.mxu0
  %v1064 = vadd.f32 %v116, %v1063
  %v1065 = vpop.f32.mrf.mxu0
  %v1066 = vadd.f32 %v120, %v1065
  %1067 = vmatprep.mubr.bf16.mxu0 0
  %1068 = vmatmul.mubr.bf16.gmra.mxu0 %v468
  %v1069 = vpop.f32.mrf.mxu0
  %v1070 = vadd.f32 %v116, %v1069
  %v1071 = vpop.f32.mrf.mxu0
  %v1072 = vadd.f32 %v120, %v1071
  %v1073 = vpop.f32.mrf.mxu0
  %v1074 = vadd.f32 %v116, %v1073
  %v1075 = vpop.f32.mrf.mxu0
  %v1076 = vadd.f32 %v120, %v1075
  %1077 = vmatprep.mubr.bf16.mxu0 0
  %1078 = vmatmul.mubr.bf16.gmra.mxu0 %v471
  %v1079 = vpop.f32.mrf.mxu0
  %v1080 = vadd.f32 %v116, %v1079
  %v1081 = vpop.f32.mrf.mxu0
  %v1082 = vadd.f32 %v120, %v1081
  %v1083 = vpop.f32.mrf.mxu0
  %v1084 = vadd.f32 %v116, %v1083
  %v1085 = vpop.f32.mrf.mxu0
  %v1086 = vadd.f32 %v120, %v1085
  %1087 = vmatprep.mubr.bf16.mxu0 0
  %1088 = vmatmul.mubr.bf16.gmra.mxu0 %v474
  %v1089 = vpop.f32.mrf.mxu0
  %v1090 = vadd.f32 %v116, %v1089
  %v1091 = vpop.f32.mrf.mxu0
  %v1092 = vadd.f32 %v120, %v1091
  %v1093 = vpop.f32.mrf.mxu0
  %v1094 = vadd.f32 %v116, %v1093
  %v1095 = vpop.f32.mrf.mxu0
  %v1096 = vadd.f32 %v120, %v1095
  %1097 = vmatprep.mubr.bf16.mxu0 0
  %1098 = vmatmul.mubr.bf16.gmra.mxu0 %v477
  %v1099 = vpop.f32.mrf.mxu0
  %v1100 = vadd.f32 %v116, %v1099
  %v1101 = vpop.f32.mrf.mxu0
  %v1102 = vadd.f32 %v120, %v1101
  %v1103 = vpop.f32.mrf.mxu0
  %v1104 = vadd.f32 %v116, %v1103
  %v1105 = vpop.f32.mrf.mxu0
  %v1106 = vadd.f32 %v120, %v1105
  %1107 = vmatprep.mubr.bf16.mxu0 0
  %1108 = vmatmul.mubr.bf16.gmra.mxu0 %v480
  %v1109 = vpop.f32.mrf.mxu0
  %v1110 = vadd.f32 %v116, %v1109
  %v1111 = vpop.f32.mrf.mxu0
  %v1112 = vadd.f32 %v120, %v1111
  %v1113 = vpop.f32.mrf.mxu0
  %v1114 = vadd.f32 %v116, %v1113
  %v1115 = vpop.f32.mrf.mxu0
  %v1116 = vadd.f32 %v120, %v1115
  %1117 = vmatprep.mubr.bf16.mxu0 0
  %1118 = vmatmul.mubr.bf16.gmra.mxu0 %v483
  %v1119 = vpop.f32.mrf.mxu0
  %v1120 = vadd.f32 %v116, %v1119
  %v1121 = vpop.f32.mrf.mxu0
  %v1122 = vadd.f32 %v120, %v1121
  %v1123 = vpop.f32.mrf.mxu0
  %v1124 = vadd.f32 %v116, %v1123
  %v1125 = vpop.f32.mrf.mxu0
  %v1126 = vadd.f32 %v120, %v1125
  %1127 = vmatprep.mubr.bf16.mxu0 0
  %1128 = vmatmul.mubr.bf16.gmra.mxu0 %v486
  %v1129 = vpop.f32.mrf.mxu0
  %v1130 = vadd.f32 %v116, %v1129
  %v1131 = vpop.f32.mrf.mxu0
  %v1132 = vadd.f32 %v120, %v1131
  %v1133 = vpop.f32.mrf.mxu0
  %v1134 = vadd.f32 %v116, %v1133
  %v1135 = vpop.f32.mrf.mxu0
  %v1136 = vadd.f32 %v120, %v1135
  %1137 = vmatprep.mubr.bf16.mxu0 0
  %1138 = vmatmul.mubr.bf16.gmra.mxu0 %v489
  %v1139 = vpop.f32.mrf.mxu0
  %v1140 = vadd.f32 %v116, %v1139
  %v1141 = vpop.f32.mrf.mxu0
  %v1142 = vadd.f32 %v120, %v1141
  %v1143 = vpop.f32.mrf.mxu0
  %v1144 = vadd.f32 %v116, %v1143
  %v1145 = vpop.f32.mrf.mxu0
  %v1146 = vadd.f32 %v120, %v1145
  %1147 = vmatprep.mubr.bf16.mxu0 0
  %1148 = vmatmul.mubr.bf16.gmra.mxu0 %v492
  %v1149 = vpop.f32.mrf.mxu0
  %v1150 = vadd.f32 %v116, %v1149
  %v1151 = vpop.f32.mrf.mxu0
  %v1152 = vadd.f32 %v120, %v1151
  %v1153 = vpop.f32.mrf.mxu0
  %v1154 = vadd.f32 %v116, %v1153
  %v1155 = vpop.f32.mrf.mxu0
  %v1156 = vadd.f32 %v120, %v1155
  %1157 = vmatprep.mubr.bf16.mxu0 0
  %1158 = vmatmul.mubr.bf16.gmra.mxu0 %v495
  %v1159 = vpop.f32.mrf.mxu0
  %v1160 = vadd.f32 %v116, %v1159
  %v1161 = vpop.f32.mrf.mxu0
  %v1162 = vadd.f32 %v120, %v1161
  %v1163 = vpop.f32.mrf.mxu0
  %v1164 = vadd.f32 %v116, %v1163
  %v1165 = vpop.f32.mrf.mxu0
  %v1166 = vadd.f32 %v120, %v1165
  %1167 = vmatprep.mubr.bf16.mxu0 0
  %1168 = vmatmul.mubr.bf16.gmra.mxu0 %v498
  %v1169 = vpop.f32.mrf.mxu0
  %v1170 = vadd.f32 %v116, %v1169
  %v1171 = vpop.f32.mrf.mxu0
  %v1172 = vadd.f32 %v120, %v1171
  %v1173 = vpop.f32.mrf.mxu0
  %v1174 = vadd.f32 %v116, %v1173
  %v1175 = vpop.f32.mrf.mxu0
  %v1176 = vadd.f32 %v120, %v1175
  %1177 = vmatprep.mubr.bf16.mxu0 0
  %1178 = vmatmul.mubr.bf16.gmra.mxu0 %v501
  %v1179 = vpop.f32.mrf.mxu0
  %v1180 = vadd.f32 %v116, %v1179
  %v1181 = vpop.f32.mrf.mxu0
  %v1182 = vadd.f32 %v120, %v1181
  %v1183 = vpop.f32.mrf.mxu0
  %v1184 = vadd.f32 %v116, %v1183
  %v1185 = vpop.f32.mrf.mxu0
  %v1186 = vadd.f32 %v120, %v1185
  %1187 = vmatprep.mubr.bf16.mxu0 0
  %1188 = vmatmul.mubr.bf16.gmra.mxu0 %v504
  %v1189 = vpop.f32.mrf.mxu0
  %v1190 = vadd.f32 %v116, %v1189
  %v1191 = vpop.f32.mrf.mxu0
  %v1192 = vadd.f32 %v120, %v1191
  %v1193 = vpop.f32.mrf.mxu0
  %v1194 = vadd.f32 %v116, %v1193
  %v1195 = vpop.f32.mrf.mxu0
  %v1196 = vadd.f32 %v120, %v1195
  %1197 = vmatprep.mubr.bf16.mxu0 0
  %1198 = vmatmul.mubr.bf16.gmra.mxu0 %v507
  %v1199 = vpop.f32.mrf.mxu0
  %v1200 = vadd.f32 %v116, %v1199
  %v1201 = vpop.f32.mrf.mxu0
  %v1202 = vadd.f32 %v120, %v1201
  %v1203 = vpop.f32.mrf.mxu0
  %v1204 = vadd.f32 %v116, %v1203
  %v1205 = vpop.f32.mrf.mxu0
  %v1206 = vadd.f32 %v120, %v1205
  %1207 = vmatprep.mubr.bf16.mxu0 0
  %1208 = vmatmul.mubr.bf16.gmra.mxu0 %v510
  %v1209 = vpop.f32.mrf.mxu0
  %v1210 = vadd.f32 %v116, %v1209
  %v1211 = vpop.f32.mrf.mxu0
  %v1212 = vadd.f32 %v120, %v1211
  %v1213 = vpop.f32.mrf.mxu0
  %v1214 = vadd.f32 %v116, %v1213
  %v1215 = vpop.f32.mrf.mxu0
  %v1216 = vadd.f32 %v120, %v1215
  %1217 = vdwg.mxu0
  %1218 = vmatprep.subr.bf16.mxu0 0
  %1219 = vmatpush1.bf16.msra.mxu0 0
  %1220 = vmatprep.subr.bf16.mxu0 0
  %1221 = vmatpush1.bf16.msra.mxu0 0
  %1222 = vmatprep.subr.bf16.mxu0 0
  %1223 = vmatpush1.bf16.msra.mxu0 0
  %1224 = vmatprep.subr.bf16.mxu0 0
  %1225 = vmatpush1.bf16.msra.mxu0 0
  %1226 = vmatprep.subr.bf16.mxu0 %v390
  %1227 = vmatpush1.bf16.msra.mxu0 %v389
  %1228 = vmatprep.subr.bf16.mxu0 %v384
  %1229 = vmatpush1.bf16.msra.mxu0 %v383
  %1230 = vmatprep.subr.bf16.mxu0 %v378
  %1231 = vmatpush1.bf16.msra.mxu0 %v377
  %1232 = vmatprep.subr.bf16.mxu0 %v372
  %1233 = vmatpush1.bf16.msra.mxu0 %v371
  %1234 = vmatprep.subr.bf16.mxu0 0
  %1235 = vmatpush2.bf16.msra.mxu0 0
  %1236 = vmatprep.subr.bf16.mxu0 0
  %1237 = vmatpush2.bf16.msra.mxu0 0
  %1238 = vmatprep.subr.bf16.mxu0 0
  %1239 = vmatpush2.bf16.msra.mxu0 0
  %1240 = vmatprep.subr.bf16.mxu0 0
  %1241 = vmatpush2.bf16.msra.mxu0 0
  %1242 = vmatprep.subr.bf16.mxu0 0
  %1243 = vmatpush2.bf16.msra.mxu0 0
  %1244 = vmatprep.subr.bf16.mxu0 0
  %1245 = vmatpush2.bf16.msra.mxu0 0
  %1246 = vmatprep.subr.bf16.mxu0 0
  %1247 = vmatpush2.bf16.msra.mxu0 0
  %1248 = vmatprep.subr.bf16.mxu0 0
  %1249 = vmatpush2.bf16.msra.mxu0 0
  %1250 = vmatprep.mubr.bf16.mxu0 0
  %1251 = vmatmul.mubr.bf16.gmra.mxu0 %v417
  %v1252 = vpop.f32.mrf.mxu0
  %v1253 = vadd.f32 %v124, %v1252
  %v1254 = vpop.f32.mrf.mxu0
  %v1255 = vadd.f32 %v128, %v1254
  %v1256 = vpop.f32.mrf.mxu0
  %v1257 = vadd.f32 %v124, %v1256
  %v1258 = vpop.f32.mrf.mxu0
  %v1259 = vadd.f32 %v128, %v1258
  %1260 = vmatprep.mubr.bf16.mxu0 0
  %1261 = vmatmul.mubr.bf16.gmra.mxu0 %v420
  %v1262 = vpop.f32.mrf.mxu0
  %v1263 = vadd.f32 %v124, %v1262
  %v1264 = vpop.f32.mrf.mxu0
  %v1265 = vadd.f32 %v128, %v1264
  %v1266 = vpop.f32.mrf.mxu0
  %v1267 = vadd.f32 %v124, %v1266
  %v1268 = vpop.f32.mrf.mxu0
  %v1269 = vadd.f32 %v128, %v1268
  %1270 = vmatprep.mubr.bf16.mxu0 0
  %1271 = vmatmul.mubr.bf16.gmra.mxu0 %v423
  %v1272 = vpop.f32.mrf.mxu0
  %v1273 = vadd.f32 %v124, %v1272
  %v1274 = vpop.f32.mrf.mxu0
  %v1275 = vadd.f32 %v128, %v1274
  %v1276 = vpop.f32.mrf.mxu0
  %v1277 = vadd.f32 %v124, %v1276
  %v1278 = vpop.f32.mrf.mxu0
  %v1279 = vadd.f32 %v128, %v1278
  %1280 = vmatprep.mubr.bf16.mxu0 0
  %1281 = vmatmul.mubr.bf16.gmra.mxu0 %v426
  %v1282 = vpop.f32.mrf.mxu0
  %v1283 = vadd.f32 %v124, %v1282
  %v1284 = vpop.f32.mrf.mxu0
  %v1285 = vadd.f32 %v128, %v1284
  %v1286 = vpop.f32.mrf.mxu0
  %v1287 = vadd.f32 %v124, %v1286
  %v1288 = vpop.f32.mrf.mxu0
  %v1289 = vadd.f32 %v128, %v1288
  %1290 = vmatprep.mubr.bf16.mxu0 0
  %1291 = vmatmul.mubr.bf16.gmra.mxu0 %v429
  %v1292 = vpop.f32.mrf.mxu0
  %v1293 = vadd.f32 %v124, %v1292
  %v1294 = vpop.f32.mrf.mxu0
  %v1295 = vadd.f32 %v128, %v1294
  %v1296 = vpop.f32.mrf.mxu0
  %v1297 = vadd.f32 %v124, %v1296
  %v1298 = vpop.f32.mrf.mxu0
  %v1299 = vadd.f32 %v128, %v1298
  %1300 = vmatprep.mubr.bf16.mxu0 0
  %1301 = vmatmul.mubr.bf16.gmra.mxu0 %v432
  %v1302 = vpop.f32.mrf.mxu0
  %v1303 = vadd.f32 %v124, %v1302
  %v1304 = vpop.f32.mrf.mxu0
  %v1305 = vadd.f32 %v128, %v1304
  %v1306 = vpop.f32.mrf.mxu0
  %v1307 = vadd.f32 %v124, %v1306
  %v1308 = vpop.f32.mrf.mxu0
  %v1309 = vadd.f32 %v128, %v1308
  %1310 = vmatprep.mubr.bf16.mxu0 0
  %1311 = vmatmul.mubr.bf16.gmra.mxu0 %v435
  %v1312 = vpop.f32.mrf.mxu0
  %v1313 = vadd.f32 %v124, %v1312
  %v1314 = vpop.f32.mrf.mxu0
  %v1315 = vadd.f32 %v128, %v1314
  %v1316 = vpop.f32.mrf.mxu0
  %v1317 = vadd.f32 %v124, %v1316
  %v1318 = vpop.f32.mrf.mxu0
  %v1319 = vadd.f32 %v128, %v1318
  %1320 = vmatprep.mubr.bf16.mxu0 0
  %1321 = vmatmul.mubr.bf16.gmra.mxu0 %v438
  %v1322 = vpop.f32.mrf.mxu0
  %v1323 = vadd.f32 %v124, %v1322
  %v1324 = vpop.f32.mrf.mxu0
  %v1325 = vadd.f32 %v128, %v1324
  %v1326 = vpop.f32.mrf.mxu0
  %v1327 = vadd.f32 %v124, %v1326
  %v1328 = vpop.f32.mrf.mxu0
  %v1329 = vadd.f32 %v128, %v1328
  %1330 = vmatprep.mubr.bf16.mxu0 0
  %1331 = vmatmul.mubr.bf16.gmra.mxu0 %v441
  %v1332 = vpop.f32.mrf.mxu0
  %v1333 = vadd.f32 %v124, %v1332
  %v1334 = vpop.f32.mrf.mxu0
  %v1335 = vadd.f32 %v128, %v1334
  %v1336 = vpop.f32.mrf.mxu0
  %v1337 = vadd.f32 %v124, %v1336
  %v1338 = vpop.f32.mrf.mxu0
  %v1339 = vadd.f32 %v128, %v1338
  %1340 = vmatprep.mubr.bf16.mxu0 0
  %1341 = vmatmul.mubr.bf16.gmra.mxu0 %v444
  %v1342 = vpop.f32.mrf.mxu0
  %v1343 = vadd.f32 %v124, %v1342
  %v1344 = vpop.f32.mrf.mxu0
  %v1345 = vadd.f32 %v128, %v1344
  %v1346 = vpop.f32.mrf.mxu0
  %v1347 = vadd.f32 %v124, %v1346
  %v1348 = vpop.f32.mrf.mxu0
  %v1349 = vadd.f32 %v128, %v1348
  %1350 = vmatprep.mubr.bf16.mxu0 0
  %1351 = vmatmul.mubr.bf16.gmra.mxu0 %v447
  %v1352 = vpop.f32.mrf.mxu0
  %v1353 = vadd.f32 %v124, %v1352
  %v1354 = vpop.f32.mrf.mxu0
  %v1355 = vadd.f32 %v128, %v1354
  %v1356 = vpop.f32.mrf.mxu0
  %v1357 = vadd.f32 %v124, %v1356
  %v1358 = vpop.f32.mrf.mxu0
  %v1359 = vadd.f32 %v128, %v1358
  %1360 = vmatprep.mubr.bf16.mxu0 0
  %1361 = vmatmul.mubr.bf16.gmra.mxu0 %v450
  %v1362 = vpop.f32.mrf.mxu0
  %v1363 = vadd.f32 %v124, %v1362
  %v1364 = vpop.f32.mrf.mxu0
  %v1365 = vadd.f32 %v128, %v1364
  %v1366 = vpop.f32.mrf.mxu0
  %v1367 = vadd.f32 %v124, %v1366
  %v1368 = vpop.f32.mrf.mxu0
  %v1369 = vadd.f32 %v128, %v1368
  %1370 = vmatprep.mubr.bf16.mxu0 0
  %1371 = vmatmul.mubr.bf16.gmra.mxu0 %v453
  %v1372 = vpop.f32.mrf.mxu0
  %v1373 = vadd.f32 %v124, %v1372
  %v1374 = vpop.f32.mrf.mxu0
  %v1375 = vadd.f32 %v128, %v1374
  %v1376 = vpop.f32.mrf.mxu0
  %v1377 = vadd.f32 %v124, %v1376
  %v1378 = vpop.f32.mrf.mxu0
  %v1379 = vadd.f32 %v128, %v1378
  %1380 = vmatprep.mubr.bf16.mxu0 0
  %1381 = vmatmul.mubr.bf16.gmra.mxu0 %v456
  %v1382 = vpop.f32.mrf.mxu0
  %v1383 = vadd.f32 %v124, %v1382
  %v1384 = vpop.f32.mrf.mxu0
  %v1385 = vadd.f32 %v128, %v1384
  %v1386 = vpop.f32.mrf.mxu0
  %v1387 = vadd.f32 %v124, %v1386
  %v1388 = vpop.f32.mrf.mxu0
  %v1389 = vadd.f32 %v128, %v1388
  %1390 = vmatprep.mubr.bf16.mxu0 0
  %1391 = vmatmul.mubr.bf16.gmra.mxu0 %v459
  %v1392 = vpop.f32.mrf.mxu0
  %v1393 = vadd.f32 %v124, %v1392
  %v1394 = vpop.f32.mrf.mxu0
  %v1395 = vadd.f32 %v128, %v1394
  %v1396 = vpop.f32.mrf.mxu0
  %v1397 = vadd.f32 %v124, %v1396
  %v1398 = vpop.f32.mrf.mxu0
  %v1399 = vadd.f32 %v128, %v1398
  %1400 = vmatprep.mubr.bf16.mxu0 0
  %1401 = vmatmul.mubr.bf16.gmra.mxu0 %v462
  %v1402 = vpop.f32.mrf.mxu0
  %v1403 = vadd.f32 %v124, %v1402
  %v1404 = vpop.f32.mrf.mxu0
  %v1405 = vadd.f32 %v128, %v1404
  %v1406 = vpop.f32.mrf.mxu0
  %v1407 = vadd.f32 %v124, %v1406
  %v1408 = vpop.f32.mrf.mxu0
  %v1409 = vadd.f32 %v128, %v1408
  %1410 = vmatprep.mubr.bf16.mxu0 0
  %1411 = vmatmul.mubr.bf16.gmra.mxu0 %v465
  %v1412 = vpop.f32.mrf.mxu0
  %v1413 = vadd.f32 %v124, %v1412
  %v1414 = vpop.f32.mrf.mxu0
  %v1415 = vadd.f32 %v128, %v1414
  %v1416 = vpop.f32.mrf.mxu0
  %v1417 = vadd.f32 %v124, %v1416
  %v1418 = vpop.f32.mrf.mxu0
  %v1419 = vadd.f32 %v128, %v1418
  %1420 = vmatprep.mubr.bf16.mxu0 0
  %1421 = vmatmul.mubr.bf16.gmra.mxu0 %v468
  %v1422 = vpop.f32.mrf.mxu0
  %v1423 = vadd.f32 %v124, %v1422
  %v1424 = vpop.f32.mrf.mxu0
  %v1425 = vadd.f32 %v128, %v1424
  %v1426 = vpop.f32.mrf.mxu0
  %v1427 = vadd.f32 %v124, %v1426
  %v1428 = vpop.f32.mrf.mxu0
  %v1429 = vadd.f32 %v128, %v1428
  %1430 = vmatprep.mubr.bf16.mxu0 0
  %1431 = vmatmul.mubr.bf16.gmra.mxu0 %v471
  %v1432 = vpop.f32.mrf.mxu0
  %v1433 = vadd.f32 %v124, %v1432
  %v1434 = vpop.f32.mrf.mxu0
  %v1435 = vadd.f32 %v128, %v1434
  %v1436 = vpop.f32.mrf.mxu0
  %v1437 = vadd.f32 %v124, %v1436
  %v1438 = vpop.f32.mrf.mxu0
  %v1439 = vadd.f32 %v128, %v1438
  %1440 = vmatprep.mubr.bf16.mxu0 0
  %1441 = vmatmul.mubr.bf16.gmra.mxu0 %v474
  %v1442 = vpop.f32.mrf.mxu0
  %v1443 = vadd.f32 %v124, %v1442
  %v1444 = vpop.f32.mrf.mxu0
  %v1445 = vadd.f32 %v128, %v1444
  %v1446 = vpop.f32.mrf.mxu0
  %v1447 = vadd.f32 %v124, %v1446
  %v1448 = vpop.f32.mrf.mxu0
  %v1449 = vadd.f32 %v128, %v1448
  %1450 = vmatprep.mubr.bf16.mxu0 0
  %1451 = vmatmul.mubr.bf16.gmra.mxu0 %v477
  %v1452 = vpop.f32.mrf.mxu0
  %v1453 = vadd.f32 %v124, %v1452
  %v1454 = vpop.f32.mrf.mxu0
  %v1455 = vadd.f32 %v128, %v1454
  %v1456 = vpop.f32.mrf.mxu0
  %v1457 = vadd.f32 %v124, %v1456
  %v1458 = vpop.f32.mrf.mxu0
  %v1459 = vadd.f32 %v128, %v1458
  %1460 = vmatprep.mubr.bf16.mxu0 0
  %1461 = vmatmul.mubr.bf16.gmra.mxu0 %v480
  %v1462 = vpop.f32.mrf.mxu0
  %v1463 = vadd.f32 %v124, %v1462
  %v1464 = vpop.f32.mrf.mxu0
  %v1465 = vadd.f32 %v128, %v1464
  %v1466 = vpop.f32.mrf.mxu0
  %v1467 = vadd.f32 %v124, %v1466
  %v1468 = vpop.f32.mrf.mxu0
  %v1469 = vadd.f32 %v128, %v1468
  %1470 = vmatprep.mubr.bf16.mxu0 0
  %1471 = vmatmul.mubr.bf16.gmra.mxu0 %v483
  %v1472 = vpop.f32.mrf.mxu0
  %v1473 = vadd.f32 %v124, %v1472
  %v1474 = vpop.f32.mrf.mxu0
  %v1475 = vadd.f32 %v128, %v1474
  %v1476 = vpop.f32.mrf.mxu0
  %v1477 = vadd.f32 %v124, %v1476
  %v1478 = vpop.f32.mrf.mxu0
  %v1479 = vadd.f32 %v128, %v1478
  %1480 = vmatprep.mubr.bf16.mxu0 0
  %1481 = vmatmul.mubr.bf16.gmra.mxu0 %v486
  %v1482 = vpop.f32.mrf.mxu0
  %v1483 = vadd.f32 %v124, %v1482
  %v1484 = vpop.f32.mrf.mxu0
  %v1485 = vadd.f32 %v128, %v1484
  %v1486 = vpop.f32.mrf.mxu0
  %v1487 = vadd.f32 %v124, %v1486
  %v1488 = vpop.f32.mrf.mxu0
  %v1489 = vadd.f32 %v128, %v1488
  %1490 = vmatprep.mubr.bf16.mxu0 0
  %1491 = vmatmul.mubr.bf16.gmra.mxu0 %v489
  %v1492 = vpop.f32.mrf.mxu0
  %v1493 = vadd.f32 %v124, %v1492
  %v1494 = vpop.f32.mrf.mxu0
  %v1495 = vadd.f32 %v128, %v1494
  %v1496 = vpop.f32.mrf.mxu0
  %v1497 = vadd.f32 %v124, %v1496
  %v1498 = vpop.f32.mrf.mxu0
  %v1499 = vadd.f32 %v128, %v1498
  %1500 = vmatprep.mubr.bf16.mxu0 0
  %1501 = vmatmul.mubr.bf16.gmra.mxu0 %v492
  %v1502 = vpop.f32.mrf.mxu0
  %v1503 = vadd.f32 %v124, %v1502
  %v1504 = vpop.f32.mrf.mxu0
  %v1505 = vadd.f32 %v128, %v1504
  %v1506 = vpop.f32.mrf.mxu0
  %v1507 = vadd.f32 %v124, %v1506
  %v1508 = vpop.f32.mrf.mxu0
  %v1509 = vadd.f32 %v128, %v1508
  %1510 = vmatprep.mubr.bf16.mxu0 0
  %1511 = vmatmul.mubr.bf16.gmra.mxu0 %v495
  %v1512 = vpop.f32.mrf.mxu0
  %v1513 = vadd.f32 %v124, %v1512
  %v1514 = vpop.f32.mrf.mxu0
  %v1515 = vadd.f32 %v128, %v1514
  %v1516 = vpop.f32.mrf.mxu0
  %v1517 = vadd.f32 %v124, %v1516
  %v1518 = vpop.f32.mrf.mxu0
  %v1519 = vadd.f32 %v128, %v1518
  %1520 = vmatprep.mubr.bf16.mxu0 0
  %1521 = vmatmul.mubr.bf16.gmra.mxu0 %v498
  %v1522 = vpop.f32.mrf.mxu0
  %v1523 = vadd.f32 %v124, %v1522
  %v1524 = vpop.f32.mrf.mxu0
  %v1525 = vadd.f32 %v128, %v1524
  %v1526 = vpop.f32.mrf.mxu0
  %v1527 = vadd.f32 %v124, %v1526
  %v1528 = vpop.f32.mrf.mxu0
  %v1529 = vadd.f32 %v128, %v1528
  %1530 = vmatprep.mubr.bf16.mxu0 0
  %1531 = vmatmul.mubr.bf16.gmra.mxu0 %v501
  %v1532 = vpop.f32.mrf.mxu0
  %v1533 = vadd.f32 %v124, %v1532
  %v1534 = vpop.f32.mrf.mxu0
  %v1535 = vadd.f32 %v128, %v1534
  %v1536 = vpop.f32.mrf.mxu0
  %v1537 = vadd.f32 %v124, %v1536
  %v1538 = vpop.f32.mrf.mxu0
  %v1539 = vadd.f32 %v128, %v1538
  %1540 = vmatprep.mubr.bf16.mxu0 0
  %1541 = vmatmul.mubr.bf16.gmra.mxu0 %v504
  %v1542 = vpop.f32.mrf.mxu0
  %v1543 = vadd.f32 %v124, %v1542
  %v1544 = vpop.f32.mrf.mxu0
  %v1545 = vadd.f32 %v128, %v1544
  %v1546 = vpop.f32.mrf.mxu0
  %v1547 = vadd.f32 %v124, %v1546
  %v1548 = vpop.f32.mrf.mxu0
  %v1549 = vadd.f32 %v128, %v1548
  %1550 = vmatprep.mubr.bf16.mxu0 0
  %1551 = vmatmul.mubr.bf16.gmra.mxu0 %v507
  %v1552 = vpop.f32.mrf.mxu0
  %v1553 = vadd.f32 %v124, %v1552
  %v1554 = vpop.f32.mrf.mxu0
  %v1555 = vadd.f32 %v128, %v1554
  %v1556 = vpop.f32.mrf.mxu0
  %v1557 = vadd.f32 %v124, %v1556
  %v1558 = vpop.f32.mrf.mxu0
  %v1559 = vadd.f32 %v128, %v1558
  %1560 = vmatprep.mubr.bf16.mxu0 0
  %1561 = vmatmul.mubr.bf16.gmra.mxu0 %v510
  %v1562 = vpop.f32.mrf.mxu0
  %v1563 = vadd.f32 %v124, %v1562
  %v1564 = vpop.f32.mrf.mxu0
  %v1565 = vadd.f32 %v128, %v1564
  %v1566 = vpop.f32.mrf.mxu0
  %v1567 = vadd.f32 %v124, %v1566
  %v1568 = vpop.f32.mrf.mxu0
  %v1569 = vadd.f32 %v128, %v1568
  %1570 = vdwg.mxu0
  %1571 = vst [vmem:[%s3] sm:$0xff] %v547
  %1572 = vst [vmem:[%s3 + $0x8] sm:$0xff] %v549
  %1573 = vst [vmem:[%s3 + $0x10] sm:$0xff] %v900
  %1574 = vst [vmem:[%s3 + $0x18] sm:$0xff] %v902
  %1575 = vst [vmem:[%s3 + $0x20] sm:$0xff] %v1253
  %1576 = vst [vmem:[%s3 + $0x28] sm:$0xff] %v1255
  %1577 = vst [vmem:[%s3 + $0x30] sm:$0xff] %v551
  %1578 = vst [vmem:[%s3 + $0x38] sm:$0xff] %v553
  %1579 = vst [vmem:[%s3 + $0x40] sm:$0xff] %v904
  %1580 = vst [vmem:[%s3 + $0x48] sm:$0xff] %v906
  %1581 = vst [vmem:[%s3 + $0x50] sm:$0xff] %v1257
  %1582 = vst [vmem:[%s3 + $0x58] sm:$0xff] %v1259
  %1583 = vst [vmem:[%s3 + $0x60] sm:$0xff] %v557
  %1584 = vst [vmem:[%s3 + $0x68] sm:$0xff] %v559
  %1585 = vst [vmem:[%s3 + $0x70] sm:$0xff] %v910
  %1586 = vst [vmem:[%s3 + $0x78] sm:$0xff] %v912
  %1587 = vst [vmem:[%s3 + $0x80] sm:$0xff] %v1263
  %1588 = vst [vmem:[%s3 + $0x88] sm:$0xff] %v1265
  %1589 = vst [vmem:[%s3 + $0x90] sm:$0xff] %v561
  %1590 = vst [vmem:[%s3 + $0x98] sm:$0xff] %v563
  %1591 = vst [vmem:[%s3 + $0xa0] sm:$0xff] %v914
  %1592 = vst [vmem:[%s3 + $0xa8] sm:$0xff] %v916
  %1593 = vst [vmem:[%s3 + $0xb0] sm:$0xff] %v1267
  %1594 = vst [vmem:[%s3 + $0xb8] sm:$0xff] %v1269
  %1595 = vst [vmem:[%s3 + $0xc0] sm:$0xff] %v567
  %1596 = vst [vmem:[%s3 + $0xc8] sm:$0xff] %v569
  %1597 = vst [vmem:[%s3 + $0xd0] sm:$0xff] %v920
  %1598 = vst [vmem:[%s3 + $0xd8] sm:$0xff] %v922
  %1599 = vst [vmem:[%s3 + $0xe0] sm:$0xff] %v1273
  %1600 = vst [vmem:[%s3 + $0xe8] sm:$0xff] %v1275
  %1601 = vst [vmem:[%s3 + $0xf0] sm:$0xff] %v571
  %1602 = vst [vmem:[%s3 + $0xf8] sm:$0xff] %v573
  %1603 = vst [vmem:[%s3 + $0x100] sm:$0xff] %v924
  %1604 = vst [vmem:[%s3 + $0x108] sm:$0xff] %v926
  %1605 = vst [vmem:[%s3 + $0x110] sm:$0xff] %v1277
  %1606 = vst [vmem:[%s3 + $0x118] sm:$0xff] %v1279
  %1607 = vst [vmem:[%s3 + $0x120] sm:$0xff] %v577
  %1608 = vst [vmem:[%s3 + $0x128] sm:$0xff] %v579
  %1609 = vst [vmem:[%s3 + $0x130] sm:$0xff] %v930
  %1610 = vst [vmem:[%s3 + $0x138] sm:$0xff] %v932
  %1611 = vst [vmem:[%s3 + $0x140] sm:$0xff] %v1283
  %1612 = vst [vmem:[%s3 + $0x148] sm:$0xff] %v1285
  %1613 = vst [vmem:[%s3 + $0x150] sm:$0xff] %v581
  %1614 = vst [vmem:[%s3 + $0x158] sm:$0xff] %v583
  %1615 = vst [vmem:[%s3 + $0x160] sm:$0xff] %v934
  %1616 = vst [vmem:[%s3 + $0x168] sm:$0xff] %v936
  %1617 = vst [vmem:[%s3 + $0x170] sm:$0xff] %v1287
  %1618 = vst [vmem:[%s3 + $0x178] sm:$0xff] %v1289
  %1619 = vst [vmem:[%s3 + $0x180] sm:$0xff] %v587
  %1620 = vst [vmem:[%s3 + $0x188] sm:$0xff] %v589
  %1621 = vst [vmem:[%s3 + $0x190] sm:$0xff] %v940
  %1622 = vst [vmem:[%s3 + $0x198] sm:$0xff] %v942
  %1623 = vst [vmem:[%s3 + $0x1a0] sm:$0xff] %v1293
  %1624 = vst [vmem:[%s3 + $0x1a8] sm:$0xff] %v1295
  %1625 = vst [vmem:[%s3 + $0x1b0] sm:$0xff] %v591
  %1626 = vst [vmem:[%s3 + $0x1b8] sm:$0xff] %v593
  %1627 = vst [vmem:[%s3 + $0x1c0] sm:$0xff] %v944
  %1628 = vst [vmem:[%s3 + $0x1c8] sm:$0xff] %v946
  %1629 = vst [vmem:[%s3 + $0x1d0] sm:$0xff] %v1297
  %1630 = vst [vmem:[%s3 + $0x1d8] sm:$0xff] %v1299
  %1631 = vst [vmem:[%s3 + $0x1e0] sm:$0xff] %v597
  %1632 = vst [vmem:[%s3 + $0x1e8] sm:$0xff] %v599
  %1633 = vst [vmem:[%s3 + $0x1f0] sm:$0xff] %v950
  %1634 = vst [vmem:[%s3 + $0x1f8] sm:$0xff] %v952
  %1635 = vst [vmem:[%s3 + $0x200] sm:$0xff] %v1303
  %1636 = vst [vmem:[%s3 + $0x208] sm:$0xff] %v1305
  %1637 = vst [vmem:[%s3 + $0x210] sm:$0xff] %v601
  %1638 = vst [vmem:[%s3 + $0x218] sm:$0xff] %v603
  %1639 = vst [vmem:[%s3 + $0x220] sm:$0xff] %v954
  %1640 = vst [vmem:[%s3 + $0x228] sm:$0xff] %v956
  %1641 = vst [vmem:[%s3 + $0x230] sm:$0xff] %v1307
  %1642 = vst [vmem:[%s3 + $0x238] sm:$0xff] %v1309
  %1643 = vst [vmem:[%s3 + $0x240] sm:$0xff] %v607
  %1644 = vst [vmem:[%s3 + $0x248] sm:$0xff] %v609
  %1645 = vst [vmem:[%s3 + $0x250] sm:$0xff] %v960
  %1646 = vst [vmem:[%s3 + $0x258] sm:$0xff] %v962
  %1647 = vst [vmem:[%s3 + $0x260] sm:$0xff] %v1313
  %1648 = vst [vmem:[%s3 + $0x268] sm:$0xff] %v1315
  %1649 = vst [vmem:[%s3 + $0x270] sm:$0xff] %v611
  %1650 = vst [vmem:[%s3 + $0x278] sm:$0xff] %v613
  %1651 = vst [vmem:[%s3 + $0x280] sm:$0xff] %v964
  %1652 = vst [vmem:[%s3 + $0x288] sm:$0xff] %v966
  %1653 = vst [vmem:[%s3 + $0x290] sm:$0xff] %v1317
  %1654 = vst [vmem:[%s3 + $0x298] sm:$0xff] %v1319
  %1655 = vst [vmem:[%s3 + $0x2a0] sm:$0xff] %v617
  %1656 = vst [vmem:[%s3 + $0x2a8] sm:$0xff] %v619
  %1657 = vst [vmem:[%s3 + $0x2b0] sm:$0xff] %v970
  %1658 = vst [vmem:[%s3 + $0x2b8] sm:$0xff] %v972
  %1659 = vst [vmem:[%s3 + $0x2c0] sm:$0xff] %v1323
  %1660 = vst [vmem:[%s3 + $0x2c8] sm:$0xff] %v1325
  %1661 = vst [vmem:[%s3 + $0x2d0] sm:$0xff] %v621
  %1662 = vst [vmem:[%s3 + $0x2d8] sm:$0xff] %v623
  %1663 = vst [vmem:[%s3 + $0x2e0] sm:$0xff] %v974
  %1664 = vst [vmem:[%s3 + $0x2e8] sm:$0xff] %v976
  %1665 = vst [vmem:[%s3 + $0x2f0] sm:$0xff] %v1327
  %1666 = vst [vmem:[%s3 + $0x2f8] sm:$0xff] %v1329
  %1667 = vst [vmem:[%s3 + $0x300] sm:$0xff] %v627
  %1668 = vst [vmem:[%s3 + $0x308] sm:$0xff] %v629
  %1669 = vst [vmem:[%s3 + $0x310] sm:$0xff] %v980
  %1670 = vst [vmem:[%s3 + $0x318] sm:$0xff] %v982
  %1671 = vst [vmem:[%s3 + $0x320] sm:$0xff] %v1333
  %1672 = vst [vmem:[%s3 + $0x328] sm:$0xff] %v1335
  %1673 = vst [vmem:[%s3 + $0x330] sm:$0xff] %v631
  %1674 = vst [vmem:[%s3 + $0x338] sm:$0xff] %v633
  %1675 = vst [vmem:[%s3 + $0x340] sm:$0xff] %v984
  %1676 = vst [vmem:[%s3 + $0x348] sm:$0xff] %v986
  %1677 = vst [vmem:[%s3 + $0x350] sm:$0xff] %v1337
  %1678 = vst [vmem:[%s3 + $0x358] sm:$0xff] %v1339
  %1679 = vst [vmem:[%s3 + $0x360] sm:$0xff] %v637
  %1680 = vst [vmem:[%s3 + $0x368] sm:$0xff] %v639
  %1681 = vst [vmem:[%s3 + $0x370] sm:$0xff] %v990
  %1682 = vst [vmem:[%s3 + $0x378] sm:$0xff] %v992
  %1683 = vst [vmem:[%s3 + $0x380] sm:$0xff] %v1343
  %1684 = vst [vmem:[%s3 + $0x388] sm:$0xff] %v1345
  %1685 = vst [vmem:[%s3 + $0x390] sm:$0xff] %v641
  %1686 = vst [vmem:[%s3 + $0x398] sm:$0xff] %v643
  %1687 = vst [vmem:[%s3 + $0x3a0] sm:$0xff] %v994
  %1688 = vst [vmem:[%s3 + $0x3a8] sm:$0xff] %v996
  %1689 = vst [vmem:[%s3 + $0x3b0] sm:$0xff] %v1347
  %1690 = vst [vmem:[%s3 + $0x3b8] sm:$0xff] %v1349
  %1691 = vst [vmem:[%s3 + $0x3c0] sm:$0xff] %v647
  %1692 = vst [vmem:[%s3 + $0x3c8] sm:$0xff] %v649
  %1693 = vst [vmem:[%s3 + $0x3d0] sm:$0xff] %v1000
  %1694 = vst [vmem:[%s3 + $0x3d8] sm:$0xff] %v1002
  %1695 = vst [vmem:[%s3 + $0x3e0] sm:$0xff] %v1353
  %1696 = vst [vmem:[%s3 + $0x3e8] sm:$0xff] %v1355
  %1697 = vst [vmem:[%s3 + $0x3f0] sm:$0xff] %v651
  %1698 = vst [vmem:[%s3 + $0x3f8] sm:$0xff] %v653
  %1699 = vst [vmem:[%s3 + $0x400] sm:$0xff] %v1004
  %1700 = vst [vmem:[%s3 + $0x408] sm:$0xff] %v1006
  %1701 = vst [vmem:[%s3 + $0x410] sm:$0xff] %v1357
  %1702 = vst [vmem:[%s3 + $0x418] sm:$0xff] %v1359
  %1703 = vst [vmem:[%s3 + $0x420] sm:$0xff] %v657
  %1704 = vst [vmem:[%s3 + $0x428] sm:$0xff] %v659
  %1705 = vst [vmem:[%s3 + $0x430] sm:$0xff] %v1010
  %1706 = vst [vmem:[%s3 + $0x438] sm:$0xff] %v1012
  %1707 = vst [vmem:[%s3 + $0x440] sm:$0xff] %v1363
  %1708 = vst [vmem:[%s3 + $0x448] sm:$0xff] %v1365
  %1709 = vst [vmem:[%s3 + $0x450] sm:$0xff] %v661
  %1710 = vst [vmem:[%s3 + $0x458] sm:$0xff] %v663
  %1711 = vst [vmem:[%s3 + $0x460] sm:$0xff] %v1014
  %1712 = vst [vmem:[%s3 + $0x468] sm:$0xff] %v1016
  %1713 = vst [vmem:[%s3 + $0x470] sm:$0xff] %v1367
  %1714 = vst [vmem:[%s3 + $0x478] sm:$0xff] %v1369
  %1715 = vst [vmem:[%s3 + $0x480] sm:$0xff] %v667
  %1716 = vst [vmem:[%s3 + $0x488] sm:$0xff] %v669
  %1717 = vst [vmem:[%s3 + $0x490] sm:$0xff] %v1020
  %1718 = vst [vmem:[%s3 + $0x498] sm:$0xff] %v1022
  %1719 = vst [vmem:[%s3 + $0x4a0] sm:$0xff] %v1373
  %1720 = vst [vmem:[%s3 + $0x4a8] sm:$0xff] %v1375
  %1721 = vst [vmem:[%s3 + $0x4b0] sm:$0xff] %v671
  %1722 = vst [vmem:[%s3 + $0x4b8] sm:$0xff] %v673
  %1723 = vst [vmem:[%s3 + $0x4c0] sm:$0xff] %v1024
  %1724 = vst [vmem:[%s3 + $0x4c8] sm:$0xff] %v1026
  %1725 = vst [vmem:[%s3 + $0x4d0] sm:$0xff] %v1377
  %1726 = vst [vmem:[%s3 + $0x4d8] sm:$0xff] %v1379
  %1727 = vst [vmem:[%s3 + $0x4e0] sm:$0xff] %v677
  %1728 = vst [vmem:[%s3 + $0x4e8] sm:$0xff] %v679
  %1729 = vst [vmem:[%s3 + $0x4f0] sm:$0xff] %v1030
  %1730 = vst [vmem:[%s3 + $0x4f8] sm:$0xff] %v1032
  %1731 = vst [vmem:[%s3 + $0x500] sm:$0xff] %v1383
  %1732 = vst [vmem:[%s3 + $0x508] sm:$0xff] %v1385
  %1733 = vst [vmem:[%s3 + $0x510] sm:$0xff] %v681
  %1734 = vst [vmem:[%s3 + $0x518] sm:$0xff] %v683
  %1735 = vst [vmem:[%s3 + $0x520] sm:$0xff] %v1034
  %1736 = vst [vmem:[%s3 + $0x528] sm:$0xff] %v1036
  %1737 = vst [vmem:[%s3 + $0x530] sm:$0xff] %v1387
  %1738 = vst [vmem:[%s3 + $0x538] sm:$0xff] %v1389
  %1739 = vst [vmem:[%s3 + $0x540] sm:$0xff] %v687
  %1740 = vst [vmem:[%s3 + $0x548] sm:$0xff] %v689
  %1741 = vst [vmem:[%s3 + $0x550] sm:$0xff] %v1040
  %1742 = vst [vmem:[%s3 + $0x558] sm:$0xff] %v1042
  %1743 = vst [vmem:[%s3 + $0x560] sm:$0xff] %v1393
  %1744 = vst [vmem:[%s3 + $0x568] sm:$0xff] %v1395
  %1745 = vst [vmem:[%s3 + $0x570] sm:$0xff] %v691
  %1746 = vst [vmem:[%s3 + $0x578] sm:$0xff] %v693
  %1747 = vst [vmem:[%s3 + $0x580] sm:$0xff] %v1044
  %1748 = vst [vmem:[%s3 + $0x588] sm:$0xff] %v1046
  %1749 = vst [vmem:[%s3 + $0x590] sm:$0xff] %v1397
  %1750 = vst [vmem:[%s3 + $0x598] sm:$0xff] %v1399
  %1751 = vst [vmem:[%s3 + $0x5a0] sm:$0xff] %v697
  %1752 = vst [vmem:[%s3 + $0x5a8] sm:$0xff] %v699
  %1753 = vst [vmem:[%s3 + $0x5b0] sm:$0xff] %v1050
  %1754 = vst [vmem:[%s3 + $0x5b8] sm:$0xff] %v1052
  %1755 = vst [vmem:[%s3 + $0x5c0] sm:$0xff] %v1403
  %1756 = vst [vmem:[%s3 + $0x5c8] sm:$0xff] %v1405
  %1757 = vst [vmem:[%s3 + $0x5d0] sm:$0xff] %v701
  %1758 = vst [vmem:[%s3 + $0x5d8] sm:$0xff] %v703
  %1759 = vst [vmem:[%s3 + $0x5e0] sm:$0xff] %v1054
  %1760 = vst [vmem:[%s3 + $0x5e8] sm:$0xff] %v1056
  %1761 = vst [vmem:[%s3 + $0x5f0] sm:$0xff] %v1407
  %1762 = vst [vmem:[%s3 + $0x5f8] sm:$0xff] %v1409
  %1763 = vst [vmem:[%s3 + $0x600] sm:$0xff] %v707
  %1764 = vst [vmem:[%s3 + $0x608] sm:$0xff] %v709
  %1765 = vst [vmem:[%s3 + $0x610] sm:$0xff] %v1060
  %1766 = vst [vmem:[%s3 + $0x618] sm:$0xff] %v1062
  %1767 = vst [vmem:[%s3 + $0x620] sm:$0xff] %v1413
  %1768 = vst [vmem:[%s3 + $0x628] sm:$0xff] %v1415
  %1769 = vst [vmem:[%s3 + $0x630] sm:$0xff] %v711
  %1770 = vst [vmem:[%s3 + $0x638] sm:$0xff] %v713
  %1771 = vst [vmem:[%s3 + $0x640] sm:$0xff] %v1064
  %1772 = vst [vmem:[%s3 + $0x648] sm:$0xff] %v1066
  %1773 = vst [vmem:[%s3 + $0x650] sm:$0xff] %v1417
  %1774 = vst [vmem:[%s3 + $0x658] sm:$0xff] %v1419
  %1775 = vst [vmem:[%s3 + $0x660] sm:$0xff] %v717
  %1776 = vst [vmem:[%s3 + $0x668] sm:$0xff] %v719
  %1777 = vst [vmem:[%s3 + $0x670] sm:$0xff] %v1070
  %1778 = vst [vmem:[%s3 + $0x678] sm:$0xff] %v1072
  %1779 = vst [vmem:[%s3 + $0x680] sm:$0xff] %v1423
  %1780 = vst [vmem:[%s3 + $0x688] sm:$0xff] %v1425
  %1781 = vst [vmem:[%s3 + $0x690] sm:$0xff] %v721
  %1782 = vst [vmem:[%s3 + $0x698] sm:$0xff] %v723
  %1783 = vst [vmem:[%s3 + $0x6a0] sm:$0xff] %v1074
  %1784 = vst [vmem:[%s3 + $0x6a8] sm:$0xff] %v1076
  %1785 = vst [vmem:[%s3 + $0x6b0] sm:$0xff] %v1427
  %1786 = vst [vmem:[%s3 + $0x6b8] sm:$0xff] %v1429
  %1787 = vst [vmem:[%s3 + $0x6c0] sm:$0xff] %v727
  %1788 = vst [vmem:[%s3 + $0x6c8] sm:$0xff] %v729
  %1789 = vst [vmem:[%s3 + $0x6d0] sm:$0xff] %v1080
  %1790 = vst [vmem:[%s3 + $0x6d8] sm:$0xff] %v1082
  %1791 = vst [vmem:[%s3 + $0x6e0] sm:$0xff] %v1433
  %1792 = vst [vmem:[%s3 + $0x6e8] sm:$0xff] %v1435
  %1793 = vst [vmem:[%s3 + $0x6f0] sm:$0xff] %v731
  %1794 = vst [vmem:[%s3 + $0x6f8] sm:$0xff] %v733
  %1795 = vst [vmem:[%s3 + $0x700] sm:$0xff] %v1084
  %1796 = vst [vmem:[%s3 + $0x708] sm:$0xff] %v1086
  %1797 = vst [vmem:[%s3 + $0x710] sm:$0xff] %v1437
  %1798 = vst [vmem:[%s3 + $0x718] sm:$0xff] %v1439
  %1799 = vst [vmem:[%s3 + $0x720] sm:$0xff] %v737
  %1800 = vst [vmem:[%s3 + $0x728] sm:$0xff] %v739
  %1801 = vst [vmem:[%s3 + $0x730] sm:$0xff] %v1090
  %1802 = vst [vmem:[%s3 + $0x738] sm:$0xff] %v1092
  %1803 = vst [vmem:[%s3 + $0x740] sm:$0xff] %v1443
  %1804 = vst [vmem:[%s3 + $0x748] sm:$0xff] %v1445
  %1805 = vst [vmem:[%s3 + $0x750] sm:$0xff] %v741
  %1806 = vst [vmem:[%s3 + $0x758] sm:$0xff] %v743
  %1807 = vst [vmem:[%s3 + $0x760] sm:$0xff] %v1094
  %1808 = vst [vmem:[%s3 + $0x768] sm:$0xff] %v1096
  %1809 = vst [vmem:[%s3 + $0x770] sm:$0xff] %v1447
  %1810 = vst [vmem:[%s3 + $0x778] sm:$0xff] %v1449
  %1811 = vst [vmem:[%s3 + $0x780] sm:$0xff] %v747
  %1812 = vst [vmem:[%s3 + $0x788] sm:$0xff] %v749
  %1813 = vst [vmem:[%s3 + $0x790] sm:$0xff] %v1100
  %1814 = vst [vmem:[%s3 + $0x798] sm:$0xff] %v1102
  %1815 = vst [vmem:[%s3 + $0x7a0] sm:$0xff] %v1453
  %1816 = vst [vmem:[%s3 + $0x7a8] sm:$0xff] %v1455
  %1817 = vst [vmem:[%s3 + $0x7b0] sm:$0xff] %v751
  %1818 = vst [vmem:[%s3 + $0x7b8] sm:$0xff] %v753
  %1819 = vst [vmem:[%s3 + $0x7c0] sm:$0xff] %v1104
  %1820 = vst [vmem:[%s3 + $0x7c8] sm:$0xff] %v1106
  %1821 = vst [vmem:[%s3 + $0x7d0] sm:$0xff] %v1457
  %1822 = vst [vmem:[%s3 + $0x7d8] sm:$0xff] %v1459
  %1823 = vst [vmem:[%s3 + $0x7e0] sm:$0xff] %v757
  %1824 = vst [vmem:[%s3 + $0x7e8] sm:$0xff] %v759
  %1825 = vst [vmem:[%s3 + $0x7f0] sm:$0xff] %v1110
  %1826 = vst [vmem:[%s3 + $0x7f8] sm:$0xff] %v1112
  %1827 = vst [vmem:[%s3 + $0x800] sm:$0xff] %v1463
  %1828 = vst [vmem:[%s3 + $0x808] sm:$0xff] %v1465
  %1829 = vst [vmem:[%s3 + $0x810] sm:$0xff] %v761
  %1830 = vst [vmem:[%s3 + $0x818] sm:$0xff] %v763
  %1831 = vst [vmem:[%s3 + $0x820] sm:$0xff] %v1114
  %1832 = vst [vmem:[%s3 + $0x828] sm:$0xff] %v1116
  %1833 = vst [vmem:[%s3 + $0x830] sm:$0xff] %v1467
  %1834 = vst [vmem:[%s3 + $0x838] sm:$0xff] %v1469
  %1835 = vst [vmem:[%s3 + $0x840] sm:$0xff] %v767
  %1836 = vst [vmem:[%s3 + $0x848] sm:$0xff] %v769
  %1837 = vst [vmem:[%s3 + $0x850] sm:$0xff] %v1120
  %1838 = vst [vmem:[%s3 + $0x858] sm:$0xff] %v1122
  %1839 = vst [vmem:[%s3 + $0x860] sm:$0xff] %v1473
  %1840 = vst [vmem:[%s3 + $0x868] sm:$0xff] %v1475
  %1841 = vst [vmem:[%s3 + $0x870] sm:$0xff] %v771
  %1842 = vst [vmem:[%s3 + $0x878] sm:$0xff] %v773
  %1843 = vst [vmem:[%s3 + $0x880] sm:$0xff] %v1124
  %1844 = vst [vmem:[%s3 + $0x888] sm:$0xff] %v1126
  %1845 = vst [vmem:[%s3 + $0x890] sm:$0xff] %v1477
  %1846 = vst [vmem:[%s3 + $0x898] sm:$0xff] %v1479
  %1847 = vst [vmem:[%s3 + $0x8a0] sm:$0xff] %v777
  %1848 = vst [vmem:[%s3 + $0x8a8] sm:$0xff] %v779
  %1849 = vst [vmem:[%s3 + $0x8b0] sm:$0xff] %v1130
  %1850 = vst [vmem:[%s3 + $0x8b8] sm:$0xff] %v1132
  %1851 = vst [vmem:[%s3 + $0x8c0] sm:$0xff] %v1483
  %1852 = vst [vmem:[%s3 + $0x8c8] sm:$0xff] %v1485
  %1853 = vst [vmem:[%s3 + $0x8d0] sm:$0xff] %v781
  %1854 = vst [vmem:[%s3 + $0x8d8] sm:$0xff] %v783
  %1855 = vst [vmem:[%s3 + $0x8e0] sm:$0xff] %v1134
  %1856 = vst [vmem:[%s3 + $0x8e8] sm:$0xff] %v1136
  %1857 = vst [vmem:[%s3 + $0x8f0] sm:$0xff] %v1487
  %1858 = vst [vmem:[%s3 + $0x8f8] sm:$0xff] %v1489
  %1859 = vst [vmem:[%s3 + $0x900] sm:$0xff] %v787
  %1860 = vst [vmem:[%s3 + $0x908] sm:$0xff] %v789
  %1861 = vst [vmem:[%s3 + $0x910] sm:$0xff] %v1140
  %1862 = vst [vmem:[%s3 + $0x918] sm:$0xff] %v1142
  %1863 = vst [vmem:[%s3 + $0x920] sm:$0xff] %v1493
  %1864 = vst [vmem:[%s3 + $0x928] sm:$0xff] %v1495
  %1865 = vst [vmem:[%s3 + $0x930] sm:$0xff] %v791
  %1866 = vst [vmem:[%s3 + $0x938] sm:$0xff] %v793
  %1867 = vst [vmem:[%s3 + $0x940] sm:$0xff] %v1144
  %1868 = vst [vmem:[%s3 + $0x948] sm:$0xff] %v1146
  %1869 = vst [vmem:[%s3 + $0x950] sm:$0xff] %v1497
  %1870 = vst [vmem:[%s3 + $0x958] sm:$0xff] %v1499
  %1871 = vst [vmem:[%s3 + $0x960] sm:$0xff] %v797
  %1872 = vst [vmem:[%s3 + $0x968] sm:$0xff] %v799
  %1873 = vst [vmem:[%s3 + $0x970] sm:$0xff] %v1150
  %1874 = vst [vmem:[%s3 + $0x978] sm:$0xff] %v1152
  %1875 = vst [vmem:[%s3 + $0x980] sm:$0xff] %v1503
  %1876 = vst [vmem:[%s3 + $0x988] sm:$0xff] %v1505
  %1877 = vst [vmem:[%s3 + $0x990] sm:$0xff] %v801
  %1878 = vst [vmem:[%s3 + $0x998] sm:$0xff] %v803
  %1879 = vst [vmem:[%s3 + $0x9a0] sm:$0xff] %v1154
  %1880 = vst [vmem:[%s3 + $0x9a8] sm:$0xff] %v1156
  %1881 = vst [vmem:[%s3 + $0x9b0] sm:$0xff] %v1507
  %1882 = vst [vmem:[%s3 + $0x9b8] sm:$0xff] %v1509
  %1883 = vst [vmem:[%s3 + $0x9c0] sm:$0xff] %v807
  %1884 = vst [vmem:[%s3 + $0x9c8] sm:$0xff] %v809
  %1885 = vst [vmem:[%s3 + $0x9d0] sm:$0xff] %v1160
  %1886 = vst [vmem:[%s3 + $0x9d8] sm:$0xff] %v1162
  %1887 = vst [vmem:[%s3 + $0x9e0] sm:$0xff] %v1513
  %1888 = vst [vmem:[%s3 + $0x9e8] sm:$0xff] %v1515
  %1889 = vst [vmem:[%s3 + $0x9f0] sm:$0xff] %v811
  %1890 = vst [vmem:[%s3 + $0x9f8] sm:$0xff] %v813
  %1891 = vst [vmem:[%s3 + $0xa00] sm:$0xff] %v1164
  %1892 = vst [vmem:[%s3 + $0xa08] sm:$0xff] %v1166
  %1893 = vst [vmem:[%s3 + $0xa10] sm:$0xff] %v1517
  %1894 = vst [vmem:[%s3 + $0xa18] sm:$0xff] %v1519
  %1895 = vst [vmem:[%s3 + $0xa20] sm:$0xff] %v817
  %1896 = vst [vmem:[%s3 + $0xa28] sm:$0xff] %v819
  %1897 = vst [vmem:[%s3 + $0xa30] sm:$0xff] %v1170
  %1898 = vst [vmem:[%s3 + $0xa38] sm:$0xff] %v1172
  %1899 = vst [vmem:[%s3 + $0xa40] sm:$0xff] %v1523
  %1900 = vst [vmem:[%s3 + $0xa48] sm:$0xff] %v1525
  %1901 = vst [vmem:[%s3 + $0xa50] sm:$0xff] %v821
  %1902 = vst [vmem:[%s3 + $0xa58] sm:$0xff] %v823
  %1903 = vst [vmem:[%s3 + $0xa60] sm:$0xff] %v1174
  %1904 = vst [vmem:[%s3 + $0xa68] sm:$0xff] %v1176
  %1905 = vst [vmem:[%s3 + $0xa70] sm:$0xff] %v1527
  %1906 = vst [vmem:[%s3 + $0xa78] sm:$0xff] %v1529
  %1907 = vst [vmem:[%s3 + $0xa80] sm:$0xff] %v827
  %1908 = vst [vmem:[%s3 + $0xa88] sm:$0xff] %v829
  %1909 = vst [vmem:[%s3 + $0xa90] sm:$0xff] %v1180
  %1910 = vst [vmem:[%s3 + $0xa98] sm:$0xff] %v1182
  %1911 = vst [vmem:[%s3 + $0xaa0] sm:$0xff] %v1533
  %1912 = vst [vmem:[%s3 + $0xaa8] sm:$0xff] %v1535
  %1913 = vst [vmem:[%s3 + $0xab0] sm:$0xff] %v831
  %1914 = vst [vmem:[%s3 + $0xab8] sm:$0xff] %v833
  %1915 = vst [vmem:[%s3 + $0xac0] sm:$0xff] %v1184
  %1916 = vst [vmem:[%s3 + $0xac8] sm:$0xff] %v1186
  %1917 = vst [vmem:[%s3 + $0xad0] sm:$0xff] %v1537
  %1918 = vst [vmem:[%s3 + $0xad8] sm:$0xff] %v1539
  %1919 = vst [vmem:[%s3 + $0xae0] sm:$0xff] %v837
  %1920 = vst [vmem:[%s3 + $0xae8] sm:$0xff] %v839
  %1921 = vst [vmem:[%s3 + $0xaf0] sm:$0xff] %v1190
  %1922 = vst [vmem:[%s3 + $0xaf8] sm:$0xff] %v1192
  %1923 = vst [vmem:[%s3 + $0xb00] sm:$0xff] %v1543
  %1924 = vst [vmem:[%s3 + $0xb08] sm:$0xff] %v1545
  %1925 = vst [vmem:[%s3 + $0xb10] sm:$0xff] %v841
  %1926 = vst [vmem:[%s3 + $0xb18] sm:$0xff] %v843
  %1927 = vst [vmem:[%s3 + $0xb20] sm:$0xff] %v1194
  %1928 = vst [vmem:[%s3 + $0xb28] sm:$0xff] %v1196
  %1929 = vst [vmem:[%s3 + $0xb30] sm:$0xff] %v1547
  %1930 = vst [vmem:[%s3 + $0xb38] sm:$0xff] %v1549
  %1931 = vst [vmem:[%s3 + $0xb40] sm:$0xff] %v847
  %1932 = vst [vmem:[%s3 + $0xb48] sm:$0xff] %v849
  %1933 = vst [vmem:[%s3 + $0xb50] sm:$0xff] %v1200
  %1934 = vst [vmem:[%s3 + $0xb58] sm:$0xff] %v1202
  %1935 = vst [vmem:[%s3 + $0xb60] sm:$0xff] %v1553
  %1936 = vst [vmem:[%s3 + $0xb68] sm:$0xff] %v1555
  %1937 = vst [vmem:[%s3 + $0xb70] sm:$0xff] %v851
  %1938 = vst [vmem:[%s3 + $0xb78] sm:$0xff] %v853
  %1939 = vst [vmem:[%s3 + $0xb80] sm:$0xff] %v1204
  %1940 = vst [vmem:[%s3 + $0xb88] sm:$0xff] %v1206
  %1941 = vst [vmem:[%s3 + $0xb90] sm:$0xff] %v1557
  %1942 = vst [vmem:[%s3 + $0xb98] sm:$0xff] %v1559
  %1943 = vst [vmem:[%s3 + $0xba0] sm:$0xff] %v857
  %1944 = vst [vmem:[%s3 + $0xba8] sm:$0xff] %v859
  %1945 = vst [vmem:[%s3 + $0xbb0] sm:$0xff] %v1210
  %1946 = vst [vmem:[%s3 + $0xbb8] sm:$0xff] %v1212
  %1947 = vst [vmem:[%s3 + $0xbc0] sm:$0xff] %v1563
  %1948 = vst [vmem:[%s3 + $0xbc8] sm:$0xff] %v1565
  %1949 = vst [vmem:[%s3 + $0xbd0] sm:$0xff] %v861
  %1950 = vst [vmem:[%s3 + $0xbd8] sm:$0xff] %v863
  %1951 = vst [vmem:[%s3 + $0xbe0] sm:$0xff] %v1214
  %1952 = vst [vmem:[%s3 + $0xbe8] sm:$0xff] %v1216
  %1953 = vst [vmem:[%s3 + $0xbf0] sm:$0xff] %v1567
  %1954 = vst [vmem:[%s3 + $0xbf8] sm:$0xff] %v1569
  // Predicated region
  $region14: #{emotion_recognizer_forward.6} parent=0 // pred_check
    _
  $region15: #{emotion_recognizer_forward.6} parent=0 // pred_check_branch
    %1956 = sbr.rel (0) target = $region17
  $region16: #{emotion_recognizer_forward.6} parent=0 // pred_region
    _
  $region17: #{emotion_recognizer_forward.6} parent=0 // pred_fallthru
    _
  // Predicated region
  $region18: #{emotion_recognizer_forward.6} parent=0 // pred_check
    _
  $region19: #{emotion_recognizer_forward.6} parent=0 // pred_check_branch
    %1958 = sbr.rel (0) target = $region21
  $region20: #{emotion_recognizer_forward.6} parent=0 // pred_region
    _
  $region21: #{emotion_recognizer_forward.6} parent=0 // pred_fallthru
    _

// kernel: emotion_recognizer_forward.5
$region0: #{emotion_recognizer_forward.5}
  #allocation0 [shape = 'u32[]', space=smem, size = 0x4, offset = 0x4, fixed_abs, tag = 'smem constant byte address 0x4 - core index']
  #allocation1 [shape = 'u32[144,128]{1,0:T(1,128)}', space=vmem, size = 0x12000, scoped, tag = 'internal scratch']
  %s0 = inlined_call_operand.vmem [shape: bf16[512,1600], index: 0, kind: input, shape index: {}]
  %s1 = inlined_call_operand.vmem [shape: bf16[1600,64], index: 1, kind: input, shape index: {}]
  %s2 = inlined_call_operand.vmem [shape: f32[1,64], index: 2, kind: input, shape index: {}]
  %s3 = inlined_call_operand.vmem [shape: f32[512,64], index: 3, kind: output, shape index: {}]
  %s4 = sld [smem:[#allocation0]]
  $region22: #{emotion_recognizer_forward.5} parent=0
    _
  %s6 = ssub.s32 1, %s4
  %s7 = scalar_select 0, %s6, %s4
  // Predicated region
  $region2: #{emotion_recognizer_forward.5} parent=0 // pred_check
    _
  $region3: #{emotion_recognizer_forward.5} parent=0 // pred_check_branch
    %9 = sbr.rel (0) target = $region5
  $region4: #{emotion_recognizer_forward.5} parent=0 // pred_region
    _
  $region5: #{emotion_recognizer_forward.5} parent=0 // pred_fallthru
    _
  // Predicated region
  $region6: #{emotion_recognizer_forward.5} parent=0 // pred_check
    _
  $region7: #{emotion_recognizer_forward.5} parent=0 // pred_check_branch
    %11 = sbr.rel (0) target = $region9
  $region8: #{emotion_recognizer_forward.5} parent=0 // pred_region
    _
  $region9: #{emotion_recognizer_forward.5} parent=0 // pred_fallthru
    _
  // Predicated region
  $region10: #{emotion_recognizer_forward.5} parent=0 // pred_check
    _
  $region11: #{emotion_recognizer_forward.5} parent=0 // pred_check_branch
    %13 = sbr.rel (0) target = $region13
  $region12: #{emotion_recognizer_forward.5} parent=0 // pred_region
    _
  $region13: #{emotion_recognizer_forward.5} parent=0 // pred_fallthru
    _
  %v15 = vld [vmem:[%s0] sm:$0xff]
  %v16 = vld [vmem:[%s0 + $0x8] sm:$0xff]
  %v17 = vld [vmem:[%s0 + $0x10] sm:$0xff]
  %v18 = vld [vmem:[%s0 + $0x18] sm:$0xff]
  %v19 = vld [vmem:[%s0 + $0x20] sm:$0xff]
  %v20 = vld [vmem:[%s0 + $0x28] sm:$0xff]
  %v21 = vld [vmem:[%s0 + $0x30] sm:$0xf]
  %v22 = vld [vmem:[%s0 + $0x34] sm:$0xff]
  %v23 = vld [vmem:[%s0 + $0x3c] sm:$0xff]
  %v24 = vld [vmem:[%s0 + $0x44] sm:$0xff]
  %v25 = vld [vmem:[%s0 + $0x4c] sm:$0xff]
  %v26 = vld [vmem:[%s0 + $0x54] sm:$0xff]
  %v27 = vld [vmem:[%s0 + $0x5c] sm:$0xff]
  %v28 = vld [vmem:[%s0 + $0x64] sm:$0xf]
  %v29 = vld [vmem:[%s0 + $0x68] sm:$0xff]
  %v30 = vld [vmem:[%s0 + $0x70] sm:$0xff]
  %v31 = vld [vmem:[%s0 + $0x78] sm:$0xff]
  %v32 = vld [vmem:[%s0 + $0x80] sm:$0xff]
  %v33 = vld [vmem:[%s0 + $0x88] sm:$0xff]
  %v34 = vld [vmem:[%s0 + $0x90] sm:$0xff]
  %v35 = vld [vmem:[%s0 + $0x98] sm:$0xf]
  %v36 = vld [vmem:[%s0 + $0x9c] sm:$0xff]
  %v37 = vld [vmem:[%s0 + $0xa4] sm:$0xff]
  %v38 = vld [vmem:[%s0 + $0xac] sm:$0xff]
  %v39 = vld [vmem:[%s0 + $0xb4] sm:$0xff]
  %v40 = vld [vmem:[%s0 + $0xbc] sm:$0xff]
  %v41 = vld [vmem:[%s0 + $0xc4] sm:$0xff]
  %v42 = vld [vmem:[%s0 + $0xcc] sm:$0xf]
  %v43 = vld [vmem:[%s0 + $0xd0] sm:$0xff]
  %v44 = vld [vmem:[%s0 + $0xd8] sm:$0xff]
  %v45 = vld [vmem:[%s0 + $0xe0] sm:$0xff]
  %v46 = vld [vmem:[%s0 + $0xe8] sm:$0xff]
  %v47 = vld [vmem:[%s0 + $0xf0] sm:$0xff]
  %v48 = vld [vmem:[%s0 + $0xf8] sm:$0xff]
  %v49 = vld [vmem:[%s0 + $0x100] sm:$0xf]
  %v50 = vld [vmem:[%s0 + $0x104] sm:$0xff]
  %v51 = vld [vmem:[%s0 + $0x10c] sm:$0xff]
  %v52 = vld [vmem:[%s0 + $0x114] sm:$0xff]
  %v53 = vld [vmem:[%s0 + $0x11c] sm:$0xff]
  %v54 = vld [vmem:[%s0 + $0x124] sm:$0xff]
  %v55 = vld [vmem:[%s0 + $0x12c] sm:$0xff]
  %v56 = vld [vmem:[%s0 + $0x134] sm:$0xf]
  %v57 = vld [vmem:[%s0 + $0x138] sm:$0xff]
  %v58 = vld [vmem:[%s0 + $0x140] sm:$0xff]
  %v59 = vld [vmem:[%s0 + $0x148] sm:$0xff]
  %v60 = vld [vmem:[%s0 + $0x150] sm:$0xff]
  %v61 = vld [vmem:[%s0 + $0x158] sm:$0xff]
  %v62 = vld [vmem:[%s0 + $0x160] sm:$0xff]
  %v63 = vld [vmem:[%s0 + $0x168] sm:$0xf]
  %v64 = vld [vmem:[%s0 + $0x16c] sm:$0xff]
  %v65 = vld [vmem:[%s0 + $0x174] sm:$0xff]
  %v66 = vld [vmem:[%s0 + $0x17c] sm:$0xff]
  %v67 = vld [vmem:[%s0 + $0x184] sm:$0xff]
  %v68 = vld [vmem:[%s0 + $0x18c] sm:$0xff]
  %v69 = vld [vmem:[%s0 + $0x194] sm:$0xff]
  %v70 = vld [vmem:[%s0 + $0x19c] sm:$0xf]
  %v71 = vld [vmem:[%s0 + $0x1a0] sm:$0xff]
  %v72 = vld [vmem:[%s0 + $0x1a8] sm:$0xff]
  %v73 = vld [vmem:[%s0 + $0x1b0] sm:$0xff]
  %v74 = vld [vmem:[%s0 + $0x1b8] sm:$0xff]
  %v75 = vld [vmem:[%s0 + $0x1c0] sm:$0xff]
  %v76 = vld [vmem:[%s0 + $0x1c8] sm:$0xff]
  %v77 = vld [vmem:[%s0 + $0x1d0] sm:$0xf]
  %v78 = vld [vmem:[%s0 + $0x1d4] sm:$0xff]
  %v79 = vld [vmem:[%s0 + $0x1dc] sm:$0xff]
  %v80 = vld [vmem:[%s0 + $0x1e4] sm:$0xff]
  %v81 = vld [vmem:[%s0 + $0x1ec] sm:$0xff]
  %v82 = vld [vmem:[%s0 + $0x1f4] sm:$0xff]
  %v83 = vld [vmem:[%s0 + $0x1fc] sm:$0xff]
  %v84 = vld [vmem:[%s0 + $0x204] sm:$0xf]
  %v85 = vld [vmem:[%s0 + $0x208] sm:$0xff]
  %v86 = vld [vmem:[%s0 + $0x210] sm:$0xff]
  %v87 = vld [vmem:[%s0 + $0x218] sm:$0xff]
  %v88 = vld [vmem:[%s0 + $0x220] sm:$0xff]
  %v89 = vld [vmem:[%s0 + $0x228] sm:$0xff]
  %v90 = vld [vmem:[%s0 + $0x230] sm:$0xff]
  %v91 = vld [vmem:[%s0 + $0x238] sm:$0xf]
  %v92 = vld [vmem:[%s0 + $0x23c] sm:$0xff]
  %v93 = vld [vmem:[%s0 + $0x244] sm:$0xff]
  %v94 = vld [vmem:[%s0 + $0x24c] sm:$0xff]
  %v95 = vld [vmem:[%s0 + $0x254] sm:$0xff]
  %v96 = vld [vmem:[%s0 + $0x25c] sm:$0xff]
  %v97 = vld [vmem:[%s0 + $0x264] sm:$0xff]
  %v98 = vld [vmem:[%s0 + $0x26c] sm:$0xf]
  %v99 = vld [vmem:[%s0 + $0x270] sm:$0xff]
  %v100 = vld [vmem:[%s0 + $0x278] sm:$0xff]
  %v101 = vld [vmem:[%s0 + $0x280] sm:$0xff]
  %v102 = vld [vmem:[%s0 + $0x288] sm:$0xff]
  %v103 = vld [vmem:[%s0 + $0x290] sm:$0xff]
  %v104 = vld [vmem:[%s0 + $0x298] sm:$0xff]
  %v105 = vld [vmem:[%s0 + $0x2a0] sm:$0xf]
  %v106 = vld [vmem:[%s0 + $0x2a4] sm:$0xff]
  %v107 = vld [vmem:[%s0 + $0x2ac] sm:$0xff]
  %v108 = vld [vmem:[%s0 + $0x2b4] sm:$0xff]
  %v109 = vld [vmem:[%s0 + $0x2bc] sm:$0xff]
  %v110 = vld [vmem:[%s0 + $0x2c4] sm:$0xff]
  %v111 = vld [vmem:[%s0 + $0x2cc] sm:$0xff]
  %v112 = vld [vmem:[%s0 + $0x2d4] sm:$0xf]
  %v113 = vld [vmem:[%s0 + $0x2d8] sm:$0xff]
  %v114 = vld [vmem:[%s0 + $0x2e0] sm:$0xff]
  %v115 = vld [vmem:[%s0 + $0x2e8] sm:$0xff]
  %v116 = vld [vmem:[%s0 + $0x2f0] sm:$0xff]
  %v117 = vld [vmem:[%s0 + $0x2f8] sm:$0xff]
  %v118 = vld [vmem:[%s0 + $0x300] sm:$0xff]
  %v119 = vld [vmem:[%s0 + $0x308] sm:$0xf]
  %v120 = vld [vmem:[%s0 + $0x30c] sm:$0xff]
  %v121 = vld [vmem:[%s0 + $0x314] sm:$0xff]
  %v122 = vld [vmem:[%s0 + $0x31c] sm:$0xff]
  %v123 = vld [vmem:[%s0 + $0x324] sm:$0xff]
  %v124 = vld [vmem:[%s0 + $0x32c] sm:$0xff]
  %v125 = vld [vmem:[%s0 + $0x334] sm:$0xff]
  %v126 = vld [vmem:[%s0 + $0x33c] sm:$0xf]
  %v127 = vld [vmem:[%s0 + $0x340] sm:$0xff]
  %v128 = vld [vmem:[%s0 + $0x348] sm:$0xff]
  %v129 = vld [vmem:[%s0 + $0x350] sm:$0xff]
  %v130 = vld [vmem:[%s0 + $0x358] sm:$0xff]
  %v131 = vld [vmem:[%s0 + $0x360] sm:$0xff]
  %v132 = vld [vmem:[%s0 + $0x368] sm:$0xff]
  %v133 = vld [vmem:[%s0 + $0x370] sm:$0xf]
  %v134 = vld [vmem:[%s0 + $0x374] sm:$0xff]
  %v135 = vld [vmem:[%s0 + $0x37c] sm:$0xff]
  %v136 = vld [vmem:[%s0 + $0x384] sm:$0xff]
  %v137 = vld [vmem:[%s0 + $0x38c] sm:$0xff]
  %v138 = vld [vmem:[%s0 + $0x394] sm:$0xff]
  %v139 = vld [vmem:[%s0 + $0x39c] sm:$0xff]
  %v140 = vld [vmem:[%s0 + $0x3a4] sm:$0xf]
  %v141 = vld [vmem:[%s0 + $0x3a8] sm:$0xff]
  %v142 = vld [vmem:[%s0 + $0x3b0] sm:$0xff]
  %v143 = vld [vmem:[%s0 + $0x3b8] sm:$0xff]
  %v144 = vld [vmem:[%s0 + $0x3c0] sm:$0xff]
  %v145 = vld [vmem:[%s0 + $0x3c8] sm:$0xff]
  %v146 = vld [vmem:[%s0 + $0x3d0] sm:$0xff]
  %v147 = vld [vmem:[%s0 + $0x3d8] sm:$0xf]
  %v148 = vld [vmem:[%s0 + $0x3dc] sm:$0xff]
  %v149 = vld [vmem:[%s0 + $0x3e4] sm:$0xff]
  %v150 = vld [vmem:[%s0 + $0x3ec] sm:$0xff]
  %v151 = vld [vmem:[%s0 + $0x3f4] sm:$0xff]
  %v152 = vld [vmem:[%s0 + $0x3fc] sm:$0xff]
  %v153 = vld [vmem:[%s0 + $0x404] sm:$0xff]
  %v154 = vld [vmem:[%s0 + $0x40c] sm:$0xf]
  %v155 = vld [vmem:[%s0 + $0x410] sm:$0xff]
  %v156 = vld [vmem:[%s0 + $0x418] sm:$0xff]
  %v157 = vld [vmem:[%s0 + $0x420] sm:$0xff]
  %v158 = vld [vmem:[%s0 + $0x428] sm:$0xff]
  %v159 = vld [vmem:[%s0 + $0x430] sm:$0xff]
  %v160 = vld [vmem:[%s0 + $0x438] sm:$0xff]
  %v161 = vld [vmem:[%s0 + $0x440] sm:$0xf]
  %v162 = vld [vmem:[%s0 + $0x444] sm:$0xff]
  %v163 = vld [vmem:[%s0 + $0x44c] sm:$0xff]
  %v164 = vld [vmem:[%s0 + $0x454] sm:$0xff]
  %v165 = vld [vmem:[%s0 + $0x45c] sm:$0xff]
  %v166 = vld [vmem:[%s0 + $0x464] sm:$0xff]
  %v167 = vld [vmem:[%s0 + $0x46c] sm:$0xff]
  %v168 = vld [vmem:[%s0 + $0x474] sm:$0xf]
  %v169 = vld [vmem:[%s0 + $0x478] sm:$0xff]
  %v170 = vld [vmem:[%s0 + $0x480] sm:$0xff]
  %v171 = vld [vmem:[%s0 + $0x488] sm:$0xff]
  %v172 = vld [vmem:[%s0 + $0x490] sm:$0xff]
  %v173 = vld [vmem:[%s0 + $0x498] sm:$0xff]
  %v174 = vld [vmem:[%s0 + $0x4a0] sm:$0xff]
  %v175 = vld [vmem:[%s0 + $0x4a8] sm:$0xf]
  %v176 = vld [vmem:[%s0 + $0x4ac] sm:$0xff]
  %v177 = vld [vmem:[%s0 + $0x4b4] sm:$0xff]
  %v178 = vld [vmem:[%s0 + $0x4bc] sm:$0xff]
  %v179 = vld [vmem:[%s0 + $0x4c4] sm:$0xff]
  %v180 = vld [vmem:[%s0 + $0x4cc] sm:$0xff]
  %v181 = vld [vmem:[%s0 + $0x4d4] sm:$0xff]
  %v182 = vld [vmem:[%s0 + $0x4dc] sm:$0xf]
  %v183 = vld [vmem:[%s0 + $0x4e0] sm:$0xff]
  %v184 = vld [vmem:[%s0 + $0x4e8] sm:$0xff]
  %v185 = vld [vmem:[%s0 + $0x4f0] sm:$0xff]
  %v186 = vld [vmem:[%s0 + $0x4f8] sm:$0xff]
  %v187 = vld [vmem:[%s0 + $0x500] sm:$0xff]
  %v188 = vld [vmem:[%s0 + $0x508] sm:$0xff]
  %v189 = vld [vmem:[%s0 + $0x510] sm:$0xf]
  %v190 = vld [vmem:[%s0 + $0x514] sm:$0xff]
  %v191 = vld [vmem:[%s0 + $0x51c] sm:$0xff]
  %v192 = vld [vmem:[%s0 + $0x524] sm:$0xff]
  %v193 = vld [vmem:[%s0 + $0x52c] sm:$0xff]
  %v194 = vld [vmem:[%s0 + $0x534] sm:$0xff]
  %v195 = vld [vmem:[%s0 + $0x53c] sm:$0xff]
  %v196 = vld [vmem:[%s0 + $0x544] sm:$0xf]
  %v197 = vld [vmem:[%s0 + $0x548] sm:$0xff]
  %v198 = vld [vmem:[%s0 + $0x550] sm:$0xff]
  %v199 = vld [vmem:[%s0 + $0x558] sm:$0xff]
  %v200 = vld [vmem:[%s0 + $0x560] sm:$0xff]
  %v201 = vld [vmem:[%s0 + $0x568] sm:$0xff]
  %v202 = vld [vmem:[%s0 + $0x570] sm:$0xff]
  %v203 = vld [vmem:[%s0 + $0x578] sm:$0xf]
  %v204 = vld [vmem:[%s0 + $0x57c] sm:$0xff]
  %v205 = vld [vmem:[%s0 + $0x584] sm:$0xff]
  %v206 = vld [vmem:[%s0 + $0x58c] sm:$0xff]
  %v207 = vld [vmem:[%s0 + $0x594] sm:$0xff]
  %v208 = vld [vmem:[%s0 + $0x59c] sm:$0xff]
  %v209 = vld [vmem:[%s0 + $0x5a4] sm:$0xff]
  %v210 = vld [vmem:[%s0 + $0x5ac] sm:$0xf]
  %v211 = vld [vmem:[%s0 + $0x5b0] sm:$0xff]
  %v212 = vld [vmem:[%s0 + $0x5b8] sm:$0xff]
  %v213 = vld [vmem:[%s0 + $0x5c0] sm:$0xff]
  %v214 = vld [vmem:[%s0 + $0x5c8] sm:$0xff]
  %v215 = vld [vmem:[%s0 + $0x5d0] sm:$0xff]
  %v216 = vld [vmem:[%s0 + $0x5d8] sm:$0xff]
  %v217 = vld [vmem:[%s0 + $0x5e0] sm:$0xf]
  %v218 = vld [vmem:[%s0 + $0x5e4] sm:$0xff]
  %v219 = vld [vmem:[%s0 + $0x5ec] sm:$0xff]
  %v220 = vld [vmem:[%s0 + $0x5f4] sm:$0xff]
  %v221 = vld [vmem:[%s0 + $0x5fc] sm:$0xff]
  %v222 = vld [vmem:[%s0 + $0x604] sm:$0xff]
  %v223 = vld [vmem:[%s0 + $0x60c] sm:$0xff]
  %v224 = vld [vmem:[%s0 + $0x614] sm:$0xf]
  %v225 = vld [vmem:[%s0 + $0x618] sm:$0xff]
  %v226 = vld [vmem:[%s0 + $0x620] sm:$0xff]
  %v227 = vld [vmem:[%s0 + $0x628] sm:$0xff]
  %v228 = vld [vmem:[%s0 + $0x630] sm:$0xff]
  %v229 = vld [vmem:[%s0 + $0x638] sm:$0xff]
  %v230 = vld [vmem:[%s0 + $0x640] sm:$0xff]
  %v231 = vld [vmem:[%s0 + $0x648] sm:$0xf]
  %v232 = vld [vmem:[%s0 + $0x64c] sm:$0xff]
  %v233 = vld [vmem:[%s0 + $0x654] sm:$0xff]
  %v234 = vld [vmem:[%s0 + $0x65c] sm:$0xff]
  %v235 = vld [vmem:[%s0 + $0x664] sm:$0xff]
  %v236 = vld [vmem:[%s0 + $0x66c] sm:$0xff]
  %v237 = vld [vmem:[%s0 + $0x674] sm:$0xff]
  %v238 = vld [vmem:[%s0 + $0x67c] sm:$0xf]
  %v239 = vld [vmem:[%s0 + $0x680] sm:$0xff]
  %v240 = vld [vmem:[%s0 + $0x688] sm:$0xff]
  %v241 = vld [vmem:[%s0 + $0x690] sm:$0xff]
  %v242 = vld [vmem:[%s0 + $0x698] sm:$0xff]
  %v243 = vld [vmem:[%s0 + $0x6a0] sm:$0xff]
  %v244 = vld [vmem:[%s0 + $0x6a8] sm:$0xff]
  %v245 = vld [vmem:[%s0 + $0x6b0] sm:$0xf]
  %v246 = vld [vmem:[%s0 + $0x6b4] sm:$0xff]
  %v247 = vld [vmem:[%s0 + $0x6bc] sm:$0xff]
  %v248 = vld [vmem:[%s0 + $0x6c4] sm:$0xff]
  %v249 = vld [vmem:[%s0 + $0x6cc] sm:$0xff]
  %v250 = vld [vmem:[%s0 + $0x6d4] sm:$0xff]
  %v251 = vld [vmem:[%s0 + $0x6dc] sm:$0xff]
  %v252 = vld [vmem:[%s0 + $0x6e4] sm:$0xf]
  %v253 = vld [vmem:[%s0 + $0x6e8] sm:$0xff]
  %v254 = vld [vmem:[%s0 + $0x6f0] sm:$0xff]
  %v255 = vld [vmem:[%s0 + $0x6f8] sm:$0xff]
  %v256 = vld [vmem:[%s0 + $0x700] sm:$0xff]
  %v257 = vld [vmem:[%s0 + $0x708] sm:$0xff]
  %v258 = vld [vmem:[%s0 + $0x710] sm:$0xff]
  %v259 = vld [vmem:[%s0 + $0x718] sm:$0xf]
  %v260 = vld [vmem:[%s0 + $0x71c] sm:$0xff]
  %v261 = vld [vmem:[%s0 + $0x724] sm:$0xff]
  %v262 = vld [vmem:[%s0 + $0x72c] sm:$0xff]
  %v263 = vld [vmem:[%s0 + $0x734] sm:$0xff]
  %v264 = vld [vmem:[%s0 + $0x73c] sm:$0xff]
  %v265 = vld [vmem:[%s0 + $0x744] sm:$0xff]
  %v266 = vld [vmem:[%s0 + $0x74c] sm:$0xf]
  %v267 = vld [vmem:[%s0 + $0x750] sm:$0xff]
  %v268 = vld [vmem:[%s0 + $0x758] sm:$0xff]
  %v269 = vld [vmem:[%s0 + $0x760] sm:$0xff]
  %v270 = vld [vmem:[%s0 + $0x768] sm:$0xff]
  %v271 = vld [vmem:[%s0 + $0x770] sm:$0xff]
  %v272 = vld [vmem:[%s0 + $0x778] sm:$0xff]
  %v273 = vld [vmem:[%s0 + $0x780] sm:$0xf]
  %v274 = vld [vmem:[%s0 + $0x784] sm:$0xff]
  %v275 = vld [vmem:[%s0 + $0x78c] sm:$0xff]
  %v276 = vld [vmem:[%s0 + $0x794] sm:$0xff]
  %v277 = vld [vmem:[%s0 + $0x79c] sm:$0xff]
  %v278 = vld [vmem:[%s0 + $0x7a4] sm:$0xff]
  %v279 = vld [vmem:[%s0 + $0x7ac] sm:$0xff]
  %v280 = vld [vmem:[%s0 + $0x7b4] sm:$0xf]
  %v281 = vld [vmem:[%s0 + $0x7b8] sm:$0xff]
  %v282 = vld [vmem:[%s0 + $0x7c0] sm:$0xff]
  %v283 = vld [vmem:[%s0 + $0x7c8] sm:$0xff]
  %v284 = vld [vmem:[%s0 + $0x7d0] sm:$0xff]
  %v285 = vld [vmem:[%s0 + $0x7d8] sm:$0xff]
  %v286 = vld [vmem:[%s0 + $0x7e0] sm:$0xff]
  %v287 = vld [vmem:[%s0 + $0x7e8] sm:$0xf]
  %v288 = vld [vmem:[%s0 + $0x7ec] sm:$0xff]
  %v289 = vld [vmem:[%s0 + $0x7f4] sm:$0xff]
  %v290 = vld [vmem:[%s0 + $0x7fc] sm:$0xff]
  %v291 = vld [vmem:[%s0 + $0x804] sm:$0xff]
  %v292 = vld [vmem:[%s0 + $0x80c] sm:$0xff]
  %v293 = vld [vmem:[%s0 + $0x814] sm:$0xff]
  %v294 = vld [vmem:[%s0 + $0x81c] sm:$0xf]
  %v295 = vld [vmem:[%s0 + $0x820] sm:$0xff]
  %v296 = vld [vmem:[%s0 + $0x828] sm:$0xff]
  %v297 = vld [vmem:[%s0 + $0x830] sm:$0xff]
  %v298 = vld [vmem:[%s0 + $0x838] sm:$0xff]
  %v299 = vld [vmem:[%s0 + $0x840] sm:$0xff]
  %v300 = vld [vmem:[%s0 + $0x848] sm:$0xff]
  %v301 = vld [vmem:[%s0 + $0x850] sm:$0xf]
  %v302 = vld [vmem:[%s0 + $0x854] sm:$0xff]
  %v303 = vld [vmem:[%s0 + $0x85c] sm:$0xff]
  %v304 = vld [vmem:[%s0 + $0x864] sm:$0xff]
  %v305 = vld [vmem:[%s0 + $0x86c] sm:$0xff]
  %v306 = vld [vmem:[%s0 + $0x874] sm:$0xff]
  %v307 = vld [vmem:[%s0 + $0x87c] sm:$0xff]
  %v308 = vld [vmem:[%s0 + $0x884] sm:$0xf]
  %v309 = vld [vmem:[%s0 + $0x888] sm:$0xff]
  %v310 = vld [vmem:[%s0 + $0x890] sm:$0xff]
  %v311 = vld [vmem:[%s0 + $0x898] sm:$0xff]
  %v312 = vld [vmem:[%s0 + $0x8a0] sm:$0xff]
  %v313 = vld [vmem:[%s0 + $0x8a8] sm:$0xff]
  %v314 = vld [vmem:[%s0 + $0x8b0] sm:$0xff]
  %v315 = vld [vmem:[%s0 + $0x8b8] sm:$0xf]
  %v316 = vld [vmem:[%s0 + $0x8bc] sm:$0xff]
  %v317 = vld [vmem:[%s0 + $0x8c4] sm:$0xff]
  %v318 = vld [vmem:[%s0 + $0x8cc] sm:$0xff]
  %v319 = vld [vmem:[%s0 + $0x8d4] sm:$0xff]
  %v320 = vld [vmem:[%s0 + $0x8dc] sm:$0xff]
  %v321 = vld [vmem:[%s0 + $0x8e4] sm:$0xff]
  %v322 = vld [vmem:[%s0 + $0x8ec] sm:$0xf]
  %v323 = vld [vmem:[%s0 + $0x8f0] sm:$0xff]
  %v324 = vld [vmem:[%s0 + $0x8f8] sm:$0xff]
  %v325 = vld [vmem:[%s0 + $0x900] sm:$0xff]
  %v326 = vld [vmem:[%s0 + $0x908] sm:$0xff]
  %v327 = vld [vmem:[%s0 + $0x910] sm:$0xff]
  %v328 = vld [vmem:[%s0 + $0x918] sm:$0xff]
  %v329 = vld [vmem:[%s0 + $0x920] sm:$0xf]
  %v330 = vld [vmem:[%s0 + $0x924] sm:$0xff]
  %v331 = vld [vmem:[%s0 + $0x92c] sm:$0xff]
  %v332 = vld [vmem:[%s0 + $0x934] sm:$0xff]
  %v333 = vld [vmem:[%s0 + $0x93c] sm:$0xff]
  %v334 = vld [vmem:[%s0 + $0x944] sm:$0xff]
  %v335 = vld [vmem:[%s0 + $0x94c] sm:$0xff]
  %v336 = vld [vmem:[%s0 + $0x954] sm:$0xf]
  %v337 = vld [vmem:[%s0 + $0x958] sm:$0xff]
  %v338 = vld [vmem:[%s0 + $0x960] sm:$0xff]
  %v339 = vld [vmem:[%s0 + $0x968] sm:$0xff]
  %v340 = vld [vmem:[%s0 + $0x970] sm:$0xff]
  %v341 = vld [vmem:[%s0 + $0x978] sm:$0xff]
  %v342 = vld [vmem:[%s0 + $0x980] sm:$0xff]
  %v343 = vld [vmem:[%s0 + $0x988] sm:$0xf]
  %v344 = vld [vmem:[%s0 + $0x98c] sm:$0xff]
  %v345 = vld [vmem:[%s0 + $0x994] sm:$0xff]
  %v346 = vld [vmem:[%s0 + $0x99c] sm:$0xff]
  %v347 = vld [vmem:[%s0 + $0x9a4] sm:$0xff]
  %v348 = vld [vmem:[%s0 + $0x9ac] sm:$0xff]
  %v349 = vld [vmem:[%s0 + $0x9b4] sm:$0xff]
  %v350 = vld [vmem:[%s0 + $0x9bc] sm:$0xf]
  %v351 = vld [vmem:[%s0 + $0x9c0] sm:$0xff]
  %v352 = vld [vmem:[%s0 + $0x9c8] sm:$0xff]
  %v353 = vld [vmem:[%s0 + $0x9d0] sm:$0xff]
  %v354 = vld [vmem:[%s0 + $0x9d8] sm:$0xff]
  %v355 = vld [vmem:[%s0 + $0x9e0] sm:$0xff]
  %v356 = vld [vmem:[%s0 + $0x9e8] sm:$0xff]
  %v357 = vld [vmem:[%s0 + $0x9f0] sm:$0xf]
  %v358 = vld [vmem:[%s0 + $0x9f4] sm:$0xff]
  %v359 = vld [vmem:[%s0 + $0x9fc] sm:$0xff]
  %v360 = vld [vmem:[%s0 + $0xa04] sm:$0xff]
  %v361 = vld [vmem:[%s0 + $0xa0c] sm:$0xff]
  %v362 = vld [vmem:[%s0 + $0xa14] sm:$0xff]
  %v363 = vld [vmem:[%s0 + $0xa1c] sm:$0xff]
  %v364 = vld [vmem:[%s0 + $0xa24] sm:$0xf]
  %v365 = vld [vmem:[%s0 + $0xa28] sm:$0xff]
  %v366 = vld [vmem:[%s0 + $0xa30] sm:$0xff]
  %v367 = vld [vmem:[%s0 + $0xa38] sm:$0xff]
  %v368 = vld [vmem:[%s0 + $0xa40] sm:$0xff]
  %v369 = vld [vmem:[%s0 + $0xa48] sm:$0xff]
  %v370 = vld [vmem:[%s0 + $0xa50] sm:$0xff]
  %v371 = vld [vmem:[%s0 + $0xa58] sm:$0xf]
  %v372 = vld [vmem:[%s0 + $0xa5c] sm:$0xff]
  %v373 = vld [vmem:[%s0 + $0xa64] sm:$0xff]
  %v374 = vld [vmem:[%s0 + $0xa6c] sm:$0xff]
  %v375 = vld [vmem:[%s0 + $0xa74] sm:$0xff]
  %v376 = vld [vmem:[%s0 + $0xa7c] sm:$0xff]
  %v377 = vld [vmem:[%s0 + $0xa84] sm:$0xff]
  %v378 = vld [vmem:[%s0 + $0xa8c] sm:$0xf]
  %v379 = vld [vmem:[%s0 + $0xa90] sm:$0xff]
  %v380 = vld [vmem:[%s0 + $0xa98] sm:$0xff]
  %v381 = vld [vmem:[%s0 + $0xaa0] sm:$0xff]
  %v382 = vld [vmem:[%s0 + $0xaa8] sm:$0xff]
  %v383 = vld [vmem:[%s0 + $0xab0] sm:$0xff]
  %v384 = vld [vmem:[%s0 + $0xab8] sm:$0xff]
  %v385 = vld [vmem:[%s0 + $0xac0] sm:$0xf]
  %v386 = vld [vmem:[%s0 + $0xac4] sm:$0xff]
  %v387 = vld [vmem:[%s0 + $0xacc] sm:$0xff]
  %v388 = vld [vmem:[%s0 + $0xad4] sm:$0xff]
  %v389 = vld [vmem:[%s0 + $0xadc] sm:$0xff]
  %v390 = vld [vmem:[%s0 + $0xae4] sm:$0xff]
  %v391 = vld [vmem:[%s0 + $0xaec] sm:$0xff]
  %v392 = vld [vmem:[%s0 + $0xaf4] sm:$0xf]
  %v393 = vld [vmem:[%s0 + $0xaf8] sm:$0xff]
  %v394 = vld [vmem:[%s0 + $0xb00] sm:$0xff]
  %v395 = vld [vmem:[%s0 + $0xb08] sm:$0xff]
  %v396 = vld [vmem:[%s0 + $0xb10] sm:$0xff]
  %v397 = vld [vmem:[%s0 + $0xb18] sm:$0xff]
  %v398 = vld [vmem:[%s0 + $0xb20] sm:$0xff]
  %v399 = vld [vmem:[%s0 + $0xb28] sm:$0xf]
  %v400 = vld [vmem:[%s0 + $0xb2c] sm:$0xff]
  %v401 = vld [vmem:[%s0 + $0xb34] sm:$0xff]
  %v402 = vld [vmem:[%s0 + $0xb3c] sm:$0xff]
  %v403 = vld [vmem:[%s0 + $0xb44] sm:$0xff]
  %v404 = vld [vmem:[%s0 + $0xb4c] sm:$0xff]
  %v405 = vld [vmem:[%s0 + $0xb54] sm:$0xff]
  %v406 = vld [vmem:[%s0 + $0xb5c] sm:$0xf]
  %v407 = vld [vmem:[%s0 + $0xb60] sm:$0xff]
  %v408 = vld [vmem:[%s0 + $0xb68] sm:$0xff]
  %v409 = vld [vmem:[%s0 + $0xb70] sm:$0xff]
  %v410 = vld [vmem:[%s0 + $0xb78] sm:$0xff]
  %v411 = vld [vmem:[%s0 + $0xb80] sm:$0xff]
  %v412 = vld [vmem:[%s0 + $0xb88] sm:$0xff]
  %v413 = vld [vmem:[%s0 + $0xb90] sm:$0xf]
  %v414 = vld [vmem:[%s0 + $0xb94] sm:$0xff]
  %v415 = vld [vmem:[%s0 + $0xb9c] sm:$0xff]
  %v416 = vld [vmem:[%s0 + $0xba4] sm:$0xff]
  %v417 = vld [vmem:[%s0 + $0xbac] sm:$0xff]
  %v418 = vld [vmem:[%s0 + $0xbb4] sm:$0xff]
  %v419 = vld [vmem:[%s0 + $0xbbc] sm:$0xff]
  %v420 = vld [vmem:[%s0 + $0xbc4] sm:$0xf]
  %v421 = vld [vmem:[%s0 + $0xbc8] sm:$0xff]
  %v422 = vld [vmem:[%s0 + $0xbd0] sm:$0xff]
  %v423 = vld [vmem:[%s0 + $0xbd8] sm:$0xff]
  %v424 = vld [vmem:[%s0 + $0xbe0] sm:$0xff]
  %v425 = vld [vmem:[%s0 + $0xbe8] sm:$0xff]
  %v426 = vld [vmem:[%s0 + $0xbf0] sm:$0xff]
  %v427 = vld [vmem:[%s0 + $0xbf8] sm:$0xf]
  %v428 = vld [vmem:[%s0 + $0xbfc] sm:$0xff]
  %v429 = vld [vmem:[%s0 + $0xc04] sm:$0xff]
  %v430 = vld [vmem:[%s0 + $0xc0c] sm:$0xff]
  %v431 = vld [vmem:[%s0 + $0xc14] sm:$0xff]
  %v432 = vld [vmem:[%s0 + $0xc1c] sm:$0xff]
  %v433 = vld [vmem:[%s0 + $0xc24] sm:$0xff]
  %v434 = vld [vmem:[%s0 + $0xc2c] sm:$0xf]
  %v435 = vld [vmem:[%s0 + $0xc30] sm:$0xff]
  %v436 = vld [vmem:[%s0 + $0xc38] sm:$0xff]
  %v437 = vld [vmem:[%s0 + $0xc40] sm:$0xff]
  %v438 = vld [vmem:[%s0 + $0xc48] sm:$0xff]
  %v439 = vld [vmem:[%s0 + $0xc50] sm:$0xff]
  %v440 = vld [vmem:[%s0 + $0xc58] sm:$0xff]
  %v441 = vld [vmem:[%s0 + $0xc60] sm:$0xf]
  %v442 = vld [vmem:[%s0 + $0xc64] sm:$0xff]
  %v443 = vld [vmem:[%s0 + $0xc6c] sm:$0xff]
  %v444 = vld [vmem:[%s0 + $0xc74] sm:$0xff]
  %v445 = vld [vmem:[%s0 + $0xc7c] sm:$0xff]
  %v446 = vld [vmem:[%s0 + $0xc84] sm:$0xff]
  %v447 = vld [vmem:[%s0 + $0xc8c] sm:$0xff]
  %v448 = vld [vmem:[%s0 + $0xc94] sm:$0xf]
  %v449 = vld [vmem:[%s0 + $0xc98] sm:$0xff]
  %v450 = vld [vmem:[%s0 + $0xca0] sm:$0xff]
  %v451 = vld [vmem:[%s0 + $0xca8] sm:$0xff]
  %v452 = vld [vmem:[%s0 + $0xcb0] sm:$0xff]
  %v453 = vld [vmem:[%s0 + $0xcb8] sm:$0xff]
  %v454 = vld [vmem:[%s0 + $0xcc0] sm:$0xff]
  %v455 = vld [vmem:[%s0 + $0xcc8] sm:$0xf]
  %v456 = vld [vmem:[%s0 + $0xccc] sm:$0xff]
  %v457 = vld [vmem:[%s0 + $0xcd4] sm:$0xff]
  %v458 = vld [vmem:[%s0 + $0xcdc] sm:$0xff]
  %v459 = vld [vmem:[%s0 + $0xce4] sm:$0xff]
  %v460 = vld [vmem:[%s0 + $0xcec] sm:$0xff]
  %v461 = vld [vmem:[%s0 + $0xcf4] sm:$0xff]
  %v462 = vld [vmem:[%s0 + $0xcfc] sm:$0xf]
  %v463 = vld [vmem:[%s1] sm:$0xf]
  %v464 = vld [vmem:[%s1 + $0x4] sm:$0xf]
  %v465 = vld [vmem:[%s1 + $0x8] sm:$0xf]
  %v466 = vld [vmem:[%s1 + $0xc] sm:$0xf]
  %v467 = vld [vmem:[%s1 + $0x10] sm:$0xf]
  %v468 = vld [vmem:[%s1 + $0x14] sm:$0xf]
  %v469 = vld [vmem:[%s1 + $0x18] sm:$0xf]
  %v470 = vld [vmem:[%s1 + $0x1c] sm:$0xf]
  %v471 = vld [vmem:[%s1 + $0x20] sm:$0xf]
  %v472 = vld [vmem:[%s1 + $0x24] sm:$0xf]
  %v473 = vld [vmem:[%s1 + $0x28] sm:$0xf]
  %v474 = vld [vmem:[%s1 + $0x2c] sm:$0xf]
  %v475 = vld [vmem:[%s1 + $0x30] sm:$0xf]
  %v476 = vld [vmem:[%s1 + $0x34] sm:$0xf]
  %v477 = vld [vmem:[%s1 + $0x38] sm:$0xf]
  %v478 = vld [vmem:[%s1 + $0x3c] sm:$0xf]
  %v479 = vld [vmem:[%s1 + $0x40] sm:$0xf]
  %v480 = vld [vmem:[%s1 + $0x44] sm:$0xf]
  %v481 = vld [vmem:[%s1 + $0x48] sm:$0xf]
  %v482 = vld [vmem:[%s1 + $0x4c] sm:$0xf]
  %v483 = vld [vmem:[%s1 + $0x50] sm:$0xf]
  %v484 = vld [vmem:[%s1 + $0x54] sm:$0xf]
  %v485 = vld [vmem:[%s1 + $0x58] sm:$0xf]
  %v486 = vld [vmem:[%s1 + $0x5c] sm:$0xf]
  %v487 = vld [vmem:[%s1 + $0x60] sm:$0xf]
  %v488 = vld [vmem:[%s1 + $0x64] sm:$0xf]
  %v489 = vld [vmem:[%s1 + $0x68] sm:$0xf]
  %v490 = vld [vmem:[%s1 + $0x6c] sm:$0xf]
  %v491 = vld [vmem:[%s1 + $0x70] sm:$0xf]
  %v492 = vld [vmem:[%s1 + $0x74] sm:$0xf]
  %v493 = vld [vmem:[%s1 + $0x78] sm:$0xf]
  %v494 = vld [vmem:[%s1 + $0x7c] sm:$0xf]
  %v495 = vld [vmem:[%s1 + $0x80] sm:$0xf]
  %v496 = vld [vmem:[%s1 + $0x84] sm:$0xf]
  %v497 = vld [vmem:[%s1 + $0x88] sm:$0xf]
  %v498 = vld [vmem:[%s1 + $0x8c] sm:$0xf]
  %v499 = vld [vmem:[%s1 + $0x90] sm:$0xf]
  %v500 = vld [vmem:[%s1 + $0x94] sm:$0xf]
  %v501 = vld [vmem:[%s1 + $0x98] sm:$0xf]
  %v502 = vld [vmem:[%s1 + $0x9c] sm:$0xf]
  %v503 = vld [vmem:[%s1 + $0xa0] sm:$0xf]
  %v504 = vld [vmem:[%s1 + $0xa4] sm:$0xf]
  %v505 = vld [vmem:[%s1 + $0xa8] sm:$0xf]
  %v506 = vld [vmem:[%s1 + $0xac] sm:$0xf]
  %v507 = vld [vmem:[%s1 + $0xb0] sm:$0xf]
  %v508 = vld [vmem:[%s1 + $0xb4] sm:$0xf]
  %v509 = vld [vmem:[%s1 + $0xb8] sm:$0xf]
  %v510 = vld [vmem:[%s1 + $0xbc] sm:$0xf]
  %v511 = vld [vmem:[%s1 + $0xc0] sm:$0xf]
  %v512 = vld [vmem:[%s1 + $0xc4] sm:$0xf]
  %v513 = vld [vmem:[%s1 + $0xc8] sm:$0xf]
  %v514 = vld [vmem:[%s1 + $0xcc] sm:$0xf]
  %v515 = vld [vmem:[%s1 + $0xd0] sm:$0xf]
  %v516 = vld [vmem:[%s1 + $0xd4] sm:$0xf]
  %v517 = vld [vmem:[%s1 + $0xd8] sm:$0xf]
  %v518 = vld [vmem:[%s1 + $0xdc] sm:$0xf]
  %v519 = vld [vmem:[%s1 + $0xe0] sm:$0xf]
  %v520 = vld [vmem:[%s1 + $0xe4] sm:$0xf]
  %v521 = vld [vmem:[%s1 + $0xe8] sm:$0xf]
  %v522 = vld [vmem:[%s1 + $0xec] sm:$0xf]
  %v523 = vld [vmem:[%s1 + $0xf0] sm:$0xf]
  %v524 = vld [vmem:[%s1 + $0xf4] sm:$0xf]
  %v525 = vld [vmem:[%s1 + $0xf8] sm:$0xf]
  %v526 = vld [vmem:[%s1 + $0xfc] sm:$0xf]
  %v527 = vld [vmem:[%s1 + $0x100] sm:$0xf]
  %v528 = vld [vmem:[%s1 + $0x104] sm:$0xf]
  %v529 = vld [vmem:[%s1 + $0x108] sm:$0xf]
  %v530 = vld [vmem:[%s1 + $0x10c] sm:$0xf]
  %v531 = vld [vmem:[%s1 + $0x110] sm:$0xf]
  %v532 = vld [vmem:[%s1 + $0x114] sm:$0xf]
  %v533 = vld [vmem:[%s1 + $0x118] sm:$0xf]
  %v534 = vld [vmem:[%s1 + $0x11c] sm:$0xf]
  %v535 = vld [vmem:[%s1 + $0x120] sm:$0xf]
  %v536 = vld [vmem:[%s1 + $0x124] sm:$0xf]
  %v537 = vld [vmem:[%s1 + $0x128] sm:$0xf]
  %v538 = vld [vmem:[%s1 + $0x12c] sm:$0xf]
  %v539 = vld [vmem:[%s1 + $0x130] sm:$0xf]
  %v540 = vld [vmem:[%s1 + $0x134] sm:$0xf]
  %v541 = vld [vmem:[%s1 + $0x138] sm:$0xf]
  %v542 = vld [vmem:[%s1 + $0x13c] sm:$0xf]
  %v543 = vld [vmem:[%s1 + $0x140] sm:$0xf]
  %v544 = vld [vmem:[%s1 + $0x144] sm:$0xf]
  %v545 = vld [vmem:[%s1 + $0x148] sm:$0xf]
  %v546 = vld [vmem:[%s1 + $0x14c] sm:$0xf]
  %v547 = vld [vmem:[%s1 + $0x150] sm:$0xf]
  %v548 = vld [vmem:[%s1 + $0x154] sm:$0xf]
  %v549 = vld [vmem:[%s1 + $0x158] sm:$0xf]
  %v550 = vld [vmem:[%s1 + $0x15c] sm:$0xf]
  %v551 = vld [vmem:[%s1 + $0x160] sm:$0xf]
  %v552 = vld [vmem:[%s1 + $0x164] sm:$0xf]
  %v553 = vld [vmem:[%s1 + $0x168] sm:$0xf]
  %v554 = vld [vmem:[%s1 + $0x16c] sm:$0xf]
  %v555 = vld [vmem:[%s1 + $0x170] sm:$0xf]
  %v556 = vld [vmem:[%s1 + $0x174] sm:$0xf]
  %v557 = vld [vmem:[%s1 + $0x178] sm:$0xf]
  %v558 = vld [vmem:[%s1 + $0x17c] sm:$0xf]
  %v559 = vld [vmem:[%s1 + $0x180] sm:$0xf]
  %v560 = vld [vmem:[%s1 + $0x184] sm:$0xf]
  %v561 = vld [vmem:[%s1 + $0x188] sm:$0xf]
  %v562 = vld [vmem:[%s1 + $0x18c] sm:$0xf]
  %v563 = vld [vmem:[%s1 + $0x190] sm:$0xf]
  %v564 = vld [vmem:[%s1 + $0x194] sm:$0xf]
  %v565 = vld [vmem:[%s1 + $0x198] sm:$0xf]
  %v566 = vld [vmem:[%s1 + $0x19c] sm:$0xf]
  %v567 = vld [vmem:[%s1 + $0x1a0] sm:$0xf]
  %v568 = vld [vmem:[%s1 + $0x1a4] sm:$0xf]
  %v569 = vld [vmem:[%s1 + $0x1a8] sm:$0xf]
  %v570 = vld [vmem:[%s1 + $0x1ac] sm:$0xf]
  %v571 = vld [vmem:[%s1 + $0x1b0] sm:$0xf]
  %v572 = vld [vmem:[%s1 + $0x1b4] sm:$0xf]
  %v573 = vld [vmem:[%s1 + $0x1b8] sm:$0xf]
  %v574 = vld [vmem:[%s1 + $0x1bc] sm:$0xf]
  %v575 = vld [vmem:[%s1 + $0x1c0] sm:$0xf]
  %v576 = vld [vmem:[%s1 + $0x1c4] sm:$0xf]
  %v577 = vld [vmem:[%s1 + $0x1c8] sm:$0xf]
  %v578 = vld [vmem:[%s1 + $0x1cc] sm:$0xf]
  %v579 = vld [vmem:[%s1 + $0x1d0] sm:$0xf]
  %v580 = vld [vmem:[%s1 + $0x1d4] sm:$0xf]
  %v581 = vld [vmem:[%s1 + $0x1d8] sm:$0xf]
  %v582 = vld [vmem:[%s1 + $0x1dc] sm:$0xf]
  %v583 = vld [vmem:[%s1 + $0x1e0] sm:$0xf]
  %v584 = vld [vmem:[%s1 + $0x1e4] sm:$0xf]
  %v585 = vld [vmem:[%s1 + $0x1e8] sm:$0xf]
  %v586 = vld [vmem:[%s1 + $0x1ec] sm:$0xf]
  %v587 = vld [vmem:[%s1 + $0x1f0] sm:$0xf]
  %v588 = vld [vmem:[%s1 + $0x1f4] sm:$0xf]
  %v589 = vld [vmem:[%s1 + $0x1f8] sm:$0xf]
  %v590 = vld [vmem:[%s1 + $0x1fc] sm:$0xf]
  %v591 = vld [vmem:[%s1 + $0x200] sm:$0xf]
  %v592 = vld [vmem:[%s1 + $0x204] sm:$0xf]
  %v593 = vld [vmem:[%s1 + $0x208] sm:$0xf]
  %v594 = vld [vmem:[%s1 + $0x20c] sm:$0xf]
  %v595 = vld [vmem:[%s1 + $0x210] sm:$0xf]
  %v596 = vld [vmem:[%s1 + $0x214] sm:$0xf]
  %v597 = vld [vmem:[%s1 + $0x218] sm:$0xf]
  %v598 = vld [vmem:[%s1 + $0x21c] sm:$0xf]
  %v599 = vld [vmem:[%s1 + $0x220] sm:$0xf]
  %v600 = vld [vmem:[%s1 + $0x224] sm:$0xf]
  %v601 = vld [vmem:[%s1 + $0x228] sm:$0xf]
  %v602 = vld [vmem:[%s1 + $0x22c] sm:$0xf]
  %v603 = vld [vmem:[%s1 + $0x230] sm:$0xf]
  %v604 = vld [vmem:[%s1 + $0x234] sm:$0xf]
  %v605 = vld [vmem:[%s1 + $0x238] sm:$0xf]
  %v606 = vld [vmem:[%s1 + $0x23c] sm:$0xf]
  %v607 = vld [vmem:[%s1 + $0x240] sm:$0xf]
  %v608 = vld [vmem:[%s1 + $0x244] sm:$0xf]
  %v609 = vld [vmem:[%s1 + $0x248] sm:$0xf]
  %v610 = vld [vmem:[%s1 + $0x24c] sm:$0xf]
  %v611 = vld [vmem:[%s1 + $0x250] sm:$0xf]
  %v612 = vld [vmem:[%s1 + $0x254] sm:$0xf]
  %v613 = vld [vmem:[%s1 + $0x258] sm:$0xf]
  %v614 = vld [vmem:[%s1 + $0x25c] sm:$0xf]
  %v615 = vld [vmem:[%s1 + $0x260] sm:$0xf]
  %v616 = vld [vmem:[%s1 + $0x264] sm:$0xf]
  %v617 = vld [vmem:[%s1 + $0x268] sm:$0xf]
  %v618 = vld [vmem:[%s1 + $0x26c] sm:$0xf]
  %v619 = vld [vmem:[%s1 + $0x270] sm:$0xf]
  %v620 = vld [vmem:[%s1 + $0x274] sm:$0xf]
  %v621 = vld [vmem:[%s1 + $0x278] sm:$0xf]
  %v622 = vld [vmem:[%s1 + $0x27c] sm:$0xf]
  %v623 = vld [vmem:[%s1 + $0x280] sm:$0xf]
  %v624 = vld [vmem:[%s1 + $0x284] sm:$0xf]
  %v625 = vld [vmem:[%s1 + $0x288] sm:$0xf]
  %v626 = vld [vmem:[%s1 + $0x28c] sm:$0xf]
  %v627 = vld [vmem:[%s1 + $0x290] sm:$0xf]
  %v628 = vld [vmem:[%s1 + $0x294] sm:$0xf]
  %v629 = vld [vmem:[%s1 + $0x298] sm:$0xf]
  %v630 = vld [vmem:[%s1 + $0x29c] sm:$0xf]
  %v631 = vld [vmem:[%s1 + $0x2a0] sm:$0xf]
  %v632 = vld [vmem:[%s1 + $0x2a4] sm:$0xf]
  %v633 = vld [vmem:[%s1 + $0x2a8] sm:$0xf]
  %v634 = vld [vmem:[%s1 + $0x2ac] sm:$0xf]
  %v635 = vld [vmem:[%s1 + $0x2b0] sm:$0xf]
  %v636 = vld [vmem:[%s1 + $0x2b4] sm:$0xf]
  %v637 = vld [vmem:[%s1 + $0x2b8] sm:$0xf]
  %v638 = vld [vmem:[%s1 + $0x2bc] sm:$0xf]
  %v639 = vld [vmem:[%s1 + $0x2c0] sm:$0xf]
  %v640 = vld [vmem:[%s1 + $0x2c4] sm:$0xf]
  %v641 = vld [vmem:[%s1 + $0x2c8] sm:$0xf]
  %v642 = vld [vmem:[%s1 + $0x2cc] sm:$0xf]
  %v643 = vld [vmem:[%s1 + $0x2d0] sm:$0xf]
  %v644 = vld [vmem:[%s1 + $0x2d4] sm:$0xf]
  %v645 = vld [vmem:[%s1 + $0x2d8] sm:$0xf]
  %v646 = vld [vmem:[%s1 + $0x2dc] sm:$0xf]
  %v647 = vld [vmem:[%s1 + $0x2e0] sm:$0xf]
  %v648 = vld [vmem:[%s1 + $0x2e4] sm:$0xf]
  %v649 = vld [vmem:[%s1 + $0x2e8] sm:$0xf]
  %v650 = vld [vmem:[%s1 + $0x2ec] sm:$0xf]
  %v651 = vld [vmem:[%s1 + $0x2f0] sm:$0xf]
  %v652 = vld [vmem:[%s1 + $0x2f4] sm:$0xf]
  %v653 = vld [vmem:[%s1 + $0x2f8] sm:$0xf]
  %v654 = vld [vmem:[%s1 + $0x2fc] sm:$0xf]
  %v655 = vld [vmem:[%s1 + $0x300] sm:$0xf]
  %v656 = vld [vmem:[%s1 + $0x304] sm:$0xf]
  %v657 = vld [vmem:[%s1 + $0x308] sm:$0xf]
  %v658 = vld [vmem:[%s1 + $0x30c] sm:$0xf]
  %v659 = vld [vmem:[%s1 + $0x310] sm:$0xf]
  %v660 = vld [vmem:[%s1 + $0x314] sm:$0xf]
  %v661 = vld [vmem:[%s1 + $0x318] sm:$0xf]
  %v662 = vld [vmem:[%s1 + $0x31c] sm:$0xf]
  %v663 = vld [vmem:[%s2] sm:$0x1]
  %v665 = vlaneseq
  %v666 = vshrl.u32 %v665, 7
  %v667 = vsub.s32 0, %v666
  %v668 = vrot.slane %v663, %v667
  %v1118 = vunpack.c.l.b16 %v15
  %v1119 = vunpack.c.h.b16 %v15
  %v1120 = vunpack.c.l.b16 %v16
  %v1121 = vunpack.c.h.b16 %v16
  %v1122 = vunpack.c.l.b16 %v17
  %v1123 = vunpack.c.h.b16 %v17
  %v1124 = vunpack.c.l.b16 %v18
  %v1125 = vunpack.c.h.b16 %v18
  %v1126 = vunpack.c.l.b16 %v19
  %v1127 = vunpack.c.h.b16 %v19
  %v1128 = vunpack.c.l.b16 %v20
  %v1129 = vunpack.c.h.b16 %v20
  %v1130 = vunpack.c.l.b16 %v21
  %v1131 = vunpack.c.l.b16 %v22
  %v1132 = vunpack.c.h.b16 %v22
  %v1133 = vunpack.c.l.b16 %v23
  %v1134 = vunpack.c.h.b16 %v23
  %v1135 = vunpack.c.l.b16 %v24
  %v1136 = vunpack.c.h.b16 %v24
  %v1137 = vunpack.c.l.b16 %v25
  %v1138 = vunpack.c.h.b16 %v25
  %v1139 = vunpack.c.l.b16 %v26
  %v1140 = vunpack.c.h.b16 %v26
  %v1141 = vunpack.c.l.b16 %v27
  %v1142 = vunpack.c.h.b16 %v27
  %v1143 = vunpack.c.l.b16 %v28
  %v1144 = vunpack.c.l.b16 %v29
  %v1145 = vunpack.c.h.b16 %v29
  %v1146 = vunpack.c.l.b16 %v30
  %v1147 = vunpack.c.h.b16 %v30
  %v1148 = vunpack.c.l.b16 %v31
  %v1149 = vunpack.c.h.b16 %v31
  %v1150 = vunpack.c.l.b16 %v32
  %v1151 = vunpack.c.h.b16 %v32
  %v1152 = vunpack.c.l.b16 %v33
  %v1153 = vunpack.c.h.b16 %v33
  %v1154 = vunpack.c.l.b16 %v34
  %v1155 = vunpack.c.h.b16 %v34
  %v1156 = vunpack.c.l.b16 %v35
  %v1157 = vunpack.c.l.b16 %v36
  %v1158 = vunpack.c.h.b16 %v36
  %v1159 = vunpack.c.l.b16 %v37
  %v1160 = vunpack.c.h.b16 %v37
  %v1161 = vunpack.c.l.b16 %v38
  %v1162 = vunpack.c.h.b16 %v38
  %v1163 = vunpack.c.l.b16 %v39
  %v1164 = vunpack.c.h.b16 %v39
  %v1165 = vunpack.c.l.b16 %v40
  %v1166 = vunpack.c.h.b16 %v40
  %v1167 = vunpack.c.l.b16 %v41
  %v1168 = vunpack.c.h.b16 %v41
  %v1169 = vunpack.c.l.b16 %v42
  %v1170 = vunpack.c.l.b16 %v43
  %v1171 = vunpack.c.h.b16 %v43
  %v1172 = vunpack.c.l.b16 %v44
  %v1173 = vunpack.c.h.b16 %v44
  %v1174 = vunpack.c.l.b16 %v45
  %v1175 = vunpack.c.h.b16 %v45
  %v1176 = vunpack.c.l.b16 %v46
  %v1177 = vunpack.c.h.b16 %v46
  %v1178 = vunpack.c.l.b16 %v47
  %v1179 = vunpack.c.h.b16 %v47
  %v1180 = vunpack.c.l.b16 %v48
  %v1181 = vunpack.c.h.b16 %v48
  %v1182 = vunpack.c.l.b16 %v49
  %v1183 = vunpack.c.l.b16 %v50
  %v1184 = vunpack.c.h.b16 %v50
  %v1185 = vunpack.c.l.b16 %v51
  %v1186 = vunpack.c.h.b16 %v51
  %v1187 = vunpack.c.l.b16 %v52
  %v1188 = vunpack.c.h.b16 %v52
  %v1189 = vunpack.c.l.b16 %v53
  %v1190 = vunpack.c.h.b16 %v53
  %v1191 = vunpack.c.l.b16 %v54
  %v1192 = vunpack.c.h.b16 %v54
  %v1193 = vunpack.c.l.b16 %v55
  %v1194 = vunpack.c.h.b16 %v55
  %v1195 = vunpack.c.l.b16 %v56
  %v1196 = vunpack.c.l.b16 %v57
  %v1197 = vunpack.c.h.b16 %v57
  %v1198 = vunpack.c.l.b16 %v58
  %v1199 = vunpack.c.h.b16 %v58
  %v1200 = vunpack.c.l.b16 %v59
  %v1201 = vunpack.c.h.b16 %v59
  %v1202 = vunpack.c.l.b16 %v60
  %v1203 = vunpack.c.h.b16 %v60
  %v1204 = vunpack.c.l.b16 %v61
  %v1205 = vunpack.c.h.b16 %v61
  %v1206 = vunpack.c.l.b16 %v62
  %v1207 = vunpack.c.h.b16 %v62
  %v1208 = vunpack.c.l.b16 %v63
  %v1209 = vunpack.c.l.b16 %v64
  %v1210 = vunpack.c.h.b16 %v64
  %v1211 = vunpack.c.l.b16 %v65
  %v1212 = vunpack.c.h.b16 %v65
  %v1213 = vunpack.c.l.b16 %v66
  %v1214 = vunpack.c.h.b16 %v66
  %v1215 = vunpack.c.l.b16 %v67
  %v1216 = vunpack.c.h.b16 %v67
  %v1217 = vunpack.c.l.b16 %v68
  %v1218 = vunpack.c.h.b16 %v68
  %v1219 = vunpack.c.l.b16 %v69
  %v1220 = vunpack.c.h.b16 %v69
  %v1221 = vunpack.c.l.b16 %v70
  %v1222 = vunpack.c.l.b16 %v71
  %v1223 = vunpack.c.h.b16 %v71
  %v1224 = vunpack.c.l.b16 %v72
  %v1225 = vunpack.c.h.b16 %v72
  %v1226 = vunpack.c.l.b16 %v73
  %v1227 = vunpack.c.h.b16 %v73
  %v1228 = vunpack.c.l.b16 %v74
  %v1229 = vunpack.c.h.b16 %v74
  %v1230 = vunpack.c.l.b16 %v75
  %v1231 = vunpack.c.h.b16 %v75
  %v1232 = vunpack.c.l.b16 %v76
  %v1233 = vunpack.c.h.b16 %v76
  %v1234 = vunpack.c.l.b16 %v77
  %v1235 = vunpack.c.l.b16 %v78
  %v1236 = vunpack.c.h.b16 %v78
  %v1237 = vunpack.c.l.b16 %v79
  %v1238 = vunpack.c.h.b16 %v79
  %v1239 = vunpack.c.l.b16 %v80
  %v1240 = vunpack.c.h.b16 %v80
  %v1241 = vunpack.c.l.b16 %v81
  %v1242 = vunpack.c.h.b16 %v81
  %v1243 = vunpack.c.l.b16 %v82
  %v1244 = vunpack.c.h.b16 %v82
  %v1245 = vunpack.c.l.b16 %v83
  %v1246 = vunpack.c.h.b16 %v83
  %v1247 = vunpack.c.l.b16 %v84
  %v1248 = vunpack.c.l.b16 %v85
  %v1249 = vunpack.c.h.b16 %v85
  %v1250 = vunpack.c.l.b16 %v86
  %v1251 = vunpack.c.h.b16 %v86
  %v1252 = vunpack.c.l.b16 %v87
  %v1253 = vunpack.c.h.b16 %v87
  %v1254 = vunpack.c.l.b16 %v88
  %v1255 = vunpack.c.h.b16 %v88
  %v1256 = vunpack.c.l.b16 %v89
  %v1257 = vunpack.c.h.b16 %v89
  %v1258 = vunpack.c.l.b16 %v90
  %v1259 = vunpack.c.h.b16 %v90
  %v1260 = vunpack.c.l.b16 %v91
  %v1261 = vunpack.c.l.b16 %v92
  %v1262 = vunpack.c.h.b16 %v92
  %v1263 = vunpack.c.l.b16 %v93
  %v1264 = vunpack.c.h.b16 %v93
  %v1265 = vunpack.c.l.b16 %v94
  %v1266 = vunpack.c.h.b16 %v94
  %v1267 = vunpack.c.l.b16 %v95
  %v1268 = vunpack.c.h.b16 %v95
  %v1269 = vunpack.c.l.b16 %v96
  %v1270 = vunpack.c.h.b16 %v96
  %v1271 = vunpack.c.l.b16 %v97
  %v1272 = vunpack.c.h.b16 %v97
  %v1273 = vunpack.c.l.b16 %v98
  %v1274 = vunpack.c.l.b16 %v99
  %v1275 = vunpack.c.h.b16 %v99
  %v1276 = vunpack.c.l.b16 %v100
  %v1277 = vunpack.c.h.b16 %v100
  %v1278 = vunpack.c.l.b16 %v101
  %v1279 = vunpack.c.h.b16 %v101
  %v1280 = vunpack.c.l.b16 %v102
  %v1281 = vunpack.c.h.b16 %v102
  %v1282 = vunpack.c.l.b16 %v103
  %v1283 = vunpack.c.h.b16 %v103
  %v1284 = vunpack.c.l.b16 %v104
  %v1285 = vunpack.c.h.b16 %v104
  %v1286 = vunpack.c.l.b16 %v105
  %v1287 = vunpack.c.l.b16 %v106
  %v1288 = vunpack.c.h.b16 %v106
  %v1289 = vunpack.c.l.b16 %v107
  %v1290 = vunpack.c.h.b16 %v107
  %v1291 = vunpack.c.l.b16 %v108
  %v1292 = vunpack.c.h.b16 %v108
  %v1293 = vunpack.c.l.b16 %v109
  %v1294 = vunpack.c.h.b16 %v109
  %v1295 = vunpack.c.l.b16 %v110
  %v1296 = vunpack.c.h.b16 %v110
  %v1297 = vunpack.c.l.b16 %v111
  %v1298 = vunpack.c.h.b16 %v111
  %v1299 = vunpack.c.l.b16 %v112
  %v1300 = vunpack.c.l.b16 %v113
  %v1301 = vunpack.c.h.b16 %v113
  %v1302 = vunpack.c.l.b16 %v114
  %v1303 = vunpack.c.h.b16 %v114
  %v1304 = vunpack.c.l.b16 %v115
  %v1305 = vunpack.c.h.b16 %v115
  %v1306 = vunpack.c.l.b16 %v116
  %v1307 = vunpack.c.h.b16 %v116
  %v1308 = vunpack.c.l.b16 %v117
  %v1309 = vunpack.c.h.b16 %v117
  %v1310 = vunpack.c.l.b16 %v118
  %v1311 = vunpack.c.h.b16 %v118
  %v1312 = vunpack.c.l.b16 %v119
  %v1313 = vunpack.c.l.b16 %v120
  %v1314 = vunpack.c.h.b16 %v120
  %v1315 = vunpack.c.l.b16 %v121
  %v1316 = vunpack.c.h.b16 %v121
  %v1317 = vunpack.c.l.b16 %v122
  %v1318 = vunpack.c.h.b16 %v122
  %v1319 = vunpack.c.l.b16 %v123
  %v1320 = vunpack.c.h.b16 %v123
  %v1321 = vunpack.c.l.b16 %v124
  %v1322 = vunpack.c.h.b16 %v124
  %v1323 = vunpack.c.l.b16 %v125
  %v1324 = vunpack.c.h.b16 %v125
  %v1325 = vunpack.c.l.b16 %v126
  %v1326 = vunpack.c.l.b16 %v127
  %v1327 = vunpack.c.h.b16 %v127
  %v1328 = vunpack.c.l.b16 %v128
  %v1329 = vunpack.c.h.b16 %v128
  %v1330 = vunpack.c.l.b16 %v129
  %v1331 = vunpack.c.h.b16 %v129
  %v1332 = vunpack.c.l.b16 %v130
  %v1333 = vunpack.c.h.b16 %v130
  %v1334 = vunpack.c.l.b16 %v131
  %v1335 = vunpack.c.h.b16 %v131
  %v1336 = vunpack.c.l.b16 %v132
  %v1337 = vunpack.c.h.b16 %v132
  %v1338 = vunpack.c.l.b16 %v133
  %v1339 = vunpack.c.l.b16 %v134
  %v1340 = vunpack.c.h.b16 %v134
  %v1341 = vunpack.c.l.b16 %v135
  %v1342 = vunpack.c.h.b16 %v135
  %v1343 = vunpack.c.l.b16 %v136
  %v1344 = vunpack.c.h.b16 %v136
  %v1345 = vunpack.c.l.b16 %v137
  %v1346 = vunpack.c.h.b16 %v137
  %v1347 = vunpack.c.l.b16 %v138
  %v1348 = vunpack.c.h.b16 %v138
  %v1349 = vunpack.c.l.b16 %v139
  %v1350 = vunpack.c.h.b16 %v139
  %v1351 = vunpack.c.l.b16 %v140
  %v1352 = vunpack.c.l.b16 %v141
  %v1353 = vunpack.c.h.b16 %v141
  %v1354 = vunpack.c.l.b16 %v142
  %v1355 = vunpack.c.h.b16 %v142
  %v1356 = vunpack.c.l.b16 %v143
  %v1357 = vunpack.c.h.b16 %v143
  %v1358 = vunpack.c.l.b16 %v144
  %v1359 = vunpack.c.h.b16 %v144
  %v1360 = vunpack.c.l.b16 %v145
  %v1361 = vunpack.c.h.b16 %v145
  %v1362 = vunpack.c.l.b16 %v146
  %v1363 = vunpack.c.h.b16 %v146
  %v1364 = vunpack.c.l.b16 %v147
  %v1365 = vunpack.c.l.b16 %v148
  %v1366 = vunpack.c.h.b16 %v148
  %v1367 = vunpack.c.l.b16 %v149
  %v1368 = vunpack.c.h.b16 %v149
  %v1369 = vunpack.c.l.b16 %v150
  %v1370 = vunpack.c.h.b16 %v150
  %v1371 = vunpack.c.l.b16 %v151
  %v1372 = vunpack.c.h.b16 %v151
  %v1373 = vunpack.c.l.b16 %v152
  %v1374 = vunpack.c.h.b16 %v152
  %v1375 = vunpack.c.l.b16 %v153
  %v1376 = vunpack.c.h.b16 %v153
  %v1377 = vunpack.c.l.b16 %v154
  %v1378 = vunpack.c.l.b16 %v155
  %v1379 = vunpack.c.h.b16 %v155
  %v1380 = vunpack.c.l.b16 %v156
  %v1381 = vunpack.c.h.b16 %v156
  %v1382 = vunpack.c.l.b16 %v157
  %v1383 = vunpack.c.h.b16 %v157
  %v1384 = vunpack.c.l.b16 %v158
  %v1385 = vunpack.c.h.b16 %v158
  %v1386 = vunpack.c.l.b16 %v159
  %v1387 = vunpack.c.h.b16 %v159
  %v1388 = vunpack.c.l.b16 %v160
  %v1389 = vunpack.c.h.b16 %v160
  %v1390 = vunpack.c.l.b16 %v161
  %v1391 = vunpack.c.l.b16 %v162
  %v1392 = vunpack.c.h.b16 %v162
  %v1393 = vunpack.c.l.b16 %v163
  %v1394 = vunpack.c.h.b16 %v163
  %v1395 = vunpack.c.l.b16 %v164
  %v1396 = vunpack.c.h.b16 %v164
  %v1397 = vunpack.c.l.b16 %v165
  %v1398 = vunpack.c.h.b16 %v165
  %v1399 = vunpack.c.l.b16 %v166
  %v1400 = vunpack.c.h.b16 %v166
  %v1401 = vunpack.c.l.b16 %v167
  %v1402 = vunpack.c.h.b16 %v167
  %v1403 = vunpack.c.l.b16 %v168
  %v1404 = vunpack.c.l.b16 %v169
  %v1405 = vunpack.c.h.b16 %v169
  %v1406 = vunpack.c.l.b16 %v170
  %v1407 = vunpack.c.h.b16 %v170
  %v1408 = vunpack.c.l.b16 %v171
  %v1409 = vunpack.c.h.b16 %v171
  %v1410 = vunpack.c.l.b16 %v172
  %v1411 = vunpack.c.h.b16 %v172
  %v1412 = vunpack.c.l.b16 %v173
  %v1413 = vunpack.c.h.b16 %v173
  %v1414 = vunpack.c.l.b16 %v174
  %v1415 = vunpack.c.h.b16 %v174
  %v1416 = vunpack.c.l.b16 %v175
  %v1417 = vunpack.c.l.b16 %v176
  %v1418 = vunpack.c.h.b16 %v176
  %v1419 = vunpack.c.l.b16 %v177
  %v1420 = vunpack.c.h.b16 %v177
  %v1421 = vunpack.c.l.b16 %v178
  %v1422 = vunpack.c.h.b16 %v178
  %v1423 = vunpack.c.l.b16 %v179
  %v1424 = vunpack.c.h.b16 %v179
  %v1425 = vunpack.c.l.b16 %v180
  %v1426 = vunpack.c.h.b16 %v180
  %v1427 = vunpack.c.l.b16 %v181
  %v1428 = vunpack.c.h.b16 %v181
  %v1429 = vunpack.c.l.b16 %v182
  %v1430 = vunpack.c.l.b16 %v183
  %v1431 = vunpack.c.h.b16 %v183
  %v1432 = vunpack.c.l.b16 %v184
  %v1433 = vunpack.c.h.b16 %v184
  %v1434 = vunpack.c.l.b16 %v185
  %v1435 = vunpack.c.h.b16 %v185
  %v1436 = vunpack.c.l.b16 %v186
  %v1437 = vunpack.c.h.b16 %v186
  %v1438 = vunpack.c.l.b16 %v187
  %v1439 = vunpack.c.h.b16 %v187
  %v1440 = vunpack.c.l.b16 %v188
  %v1441 = vunpack.c.h.b16 %v188
  %v1442 = vunpack.c.l.b16 %v189
  %v1443 = vunpack.c.l.b16 %v190
  %v1444 = vunpack.c.h.b16 %v190
  %v1445 = vunpack.c.l.b16 %v191
  %v1446 = vunpack.c.h.b16 %v191
  %v1447 = vunpack.c.l.b16 %v192
  %v1448 = vunpack.c.h.b16 %v192
  %v1449 = vunpack.c.l.b16 %v193
  %v1450 = vunpack.c.h.b16 %v193
  %v1451 = vunpack.c.l.b16 %v194
  %v1452 = vunpack.c.h.b16 %v194
  %v1453 = vunpack.c.l.b16 %v195
  %v1454 = vunpack.c.h.b16 %v195
  %v1455 = vunpack.c.l.b16 %v196
  %v1456 = vunpack.c.l.b16 %v197
  %v1457 = vunpack.c.h.b16 %v197
  %v1458 = vunpack.c.l.b16 %v198
  %v1459 = vunpack.c.h.b16 %v198
  %v1460 = vunpack.c.l.b16 %v199
  %v1461 = vunpack.c.h.b16 %v199
  %v1462 = vunpack.c.l.b16 %v200
  %v1463 = vunpack.c.h.b16 %v200
  %v1464 = vunpack.c.l.b16 %v201
  %v1465 = vunpack.c.h.b16 %v201
  %v1466 = vunpack.c.l.b16 %v202
  %v1467 = vunpack.c.h.b16 %v202
  %v1468 = vunpack.c.l.b16 %v203
  %v1469 = vunpack.c.l.b16 %v204
  %v1470 = vunpack.c.h.b16 %v204
  %v1471 = vunpack.c.l.b16 %v205
  %v1472 = vunpack.c.h.b16 %v205
  %v1473 = vunpack.c.l.b16 %v206
  %v1474 = vunpack.c.h.b16 %v206
  %v1475 = vunpack.c.l.b16 %v207
  %v1476 = vunpack.c.h.b16 %v207
  %v1477 = vunpack.c.l.b16 %v208
  %v1478 = vunpack.c.h.b16 %v208
  %v1479 = vunpack.c.l.b16 %v209
  %v1480 = vunpack.c.h.b16 %v209
  %v1481 = vunpack.c.l.b16 %v210
  %v1482 = vunpack.c.l.b16 %v211
  %v1483 = vunpack.c.h.b16 %v211
  %v1484 = vunpack.c.l.b16 %v212
  %v1485 = vunpack.c.h.b16 %v212
  %v1486 = vunpack.c.l.b16 %v213
  %v1487 = vunpack.c.h.b16 %v213
  %v1488 = vunpack.c.l.b16 %v214
  %v1489 = vunpack.c.h.b16 %v214
  %v1490 = vunpack.c.l.b16 %v215
  %v1491 = vunpack.c.h.b16 %v215
  %v1492 = vunpack.c.l.b16 %v216
  %v1493 = vunpack.c.h.b16 %v216
  %v1494 = vunpack.c.l.b16 %v217
  %v1495 = vunpack.c.l.b16 %v218
  %v1496 = vunpack.c.h.b16 %v218
  %v1497 = vunpack.c.l.b16 %v219
  %v1498 = vunpack.c.h.b16 %v219
  %v1499 = vunpack.c.l.b16 %v220
  %v1500 = vunpack.c.h.b16 %v220
  %v1501 = vunpack.c.l.b16 %v221
  %v1502 = vunpack.c.h.b16 %v221
  %v1503 = vunpack.c.l.b16 %v222
  %v1504 = vunpack.c.h.b16 %v222
  %v1505 = vunpack.c.l.b16 %v223
  %v1506 = vunpack.c.h.b16 %v223
  %v1507 = vunpack.c.l.b16 %v224
  %v1508 = vunpack.c.l.b16 %v225
  %v1509 = vunpack.c.h.b16 %v225
  %v1510 = vunpack.c.l.b16 %v226
  %v1511 = vunpack.c.h.b16 %v226
  %v1512 = vunpack.c.l.b16 %v227
  %v1513 = vunpack.c.h.b16 %v227
  %v1514 = vunpack.c.l.b16 %v228
  %v1515 = vunpack.c.h.b16 %v228
  %v1516 = vunpack.c.l.b16 %v229
  %v1517 = vunpack.c.h.b16 %v229
  %v1518 = vunpack.c.l.b16 %v230
  %v1519 = vunpack.c.h.b16 %v230
  %v1520 = vunpack.c.l.b16 %v231
  %v1521 = vunpack.c.l.b16 %v232
  %v1522 = vunpack.c.h.b16 %v232
  %v1523 = vunpack.c.l.b16 %v233
  %v1524 = vunpack.c.h.b16 %v233
  %v1525 = vunpack.c.l.b16 %v234
  %v1526 = vunpack.c.h.b16 %v234
  %v1527 = vunpack.c.l.b16 %v235
  %v1528 = vunpack.c.h.b16 %v235
  %v1529 = vunpack.c.l.b16 %v236
  %v1530 = vunpack.c.h.b16 %v236
  %v1531 = vunpack.c.l.b16 %v237
  %v1532 = vunpack.c.h.b16 %v237
  %v1533 = vunpack.c.l.b16 %v238
  %v1534 = vunpack.c.l.b16 %v239
  %v1535 = vunpack.c.h.b16 %v239
  %v1536 = vunpack.c.l.b16 %v240
  %v1537 = vunpack.c.h.b16 %v240
  %v1538 = vunpack.c.l.b16 %v241
  %v1539 = vunpack.c.h.b16 %v241
  %v1540 = vunpack.c.l.b16 %v242
  %v1541 = vunpack.c.h.b16 %v242
  %v1542 = vunpack.c.l.b16 %v243
  %v1543 = vunpack.c.h.b16 %v243
  %v1544 = vunpack.c.l.b16 %v244
  %v1545 = vunpack.c.h.b16 %v244
  %v1546 = vunpack.c.l.b16 %v245
  %v1547 = vunpack.c.l.b16 %v246
  %v1548 = vunpack.c.h.b16 %v246
  %v1549 = vunpack.c.l.b16 %v247
  %v1550 = vunpack.c.h.b16 %v247
  %v1551 = vunpack.c.l.b16 %v248
  %v1552 = vunpack.c.h.b16 %v248
  %v1553 = vunpack.c.l.b16 %v249
  %v1554 = vunpack.c.h.b16 %v249
  %v1555 = vunpack.c.l.b16 %v250
  %v1556 = vunpack.c.h.b16 %v250
  %v1557 = vunpack.c.l.b16 %v251
  %v1558 = vunpack.c.h.b16 %v251
  %v1559 = vunpack.c.l.b16 %v252
  %v1560 = vunpack.c.l.b16 %v253
  %v1561 = vunpack.c.h.b16 %v253
  %v1562 = vunpack.c.l.b16 %v254
  %v1563 = vunpack.c.h.b16 %v254
  %v1564 = vunpack.c.l.b16 %v255
  %v1565 = vunpack.c.h.b16 %v255
  %v1566 = vunpack.c.l.b16 %v256
  %v1567 = vunpack.c.h.b16 %v256
  %v1568 = vunpack.c.l.b16 %v257
  %v1569 = vunpack.c.h.b16 %v257
  %v1570 = vunpack.c.l.b16 %v258
  %v1571 = vunpack.c.h.b16 %v258
  %v1572 = vunpack.c.l.b16 %v259
  %v1573 = vunpack.c.l.b16 %v260
  %v1574 = vunpack.c.h.b16 %v260
  %v1575 = vunpack.c.l.b16 %v261
  %v1576 = vunpack.c.h.b16 %v261
  %v1577 = vunpack.c.l.b16 %v262
  %v1578 = vunpack.c.h.b16 %v262
  %v1579 = vunpack.c.l.b16 %v263
  %v1580 = vunpack.c.h.b16 %v263
  %v1581 = vunpack.c.l.b16 %v264
  %v1582 = vunpack.c.h.b16 %v264
  %v1583 = vunpack.c.l.b16 %v265
  %v1584 = vunpack.c.h.b16 %v265
  %v1585 = vunpack.c.l.b16 %v266
  %v1586 = vunpack.c.l.b16 %v267
  %v1587 = vunpack.c.h.b16 %v267
  %v1588 = vunpack.c.l.b16 %v268
  %v1589 = vunpack.c.h.b16 %v268
  %v1590 = vunpack.c.l.b16 %v269
  %v1591 = vunpack.c.h.b16 %v269
  %v1592 = vunpack.c.l.b16 %v270
  %v1593 = vunpack.c.h.b16 %v270
  %v1594 = vunpack.c.l.b16 %v271
  %v1595 = vunpack.c.h.b16 %v271
  %v1596 = vunpack.c.l.b16 %v272
  %v1597 = vunpack.c.h.b16 %v272
  %v1598 = vunpack.c.l.b16 %v273
  %v1599 = vunpack.c.l.b16 %v274
  %v1600 = vunpack.c.h.b16 %v274
  %v1601 = vunpack.c.l.b16 %v275
  %v1602 = vunpack.c.h.b16 %v275
  %v1603 = vunpack.c.l.b16 %v276
  %v1604 = vunpack.c.h.b16 %v276
  %v1605 = vunpack.c.l.b16 %v277
  %v1606 = vunpack.c.h.b16 %v277
  %v1607 = vunpack.c.l.b16 %v278
  %v1608 = vunpack.c.h.b16 %v278
  %v1609 = vunpack.c.l.b16 %v279
  %v1610 = vunpack.c.h.b16 %v279
  %v1611 = vunpack.c.l.b16 %v280
  %v1612 = vunpack.c.l.b16 %v281
  %v1613 = vunpack.c.h.b16 %v281
  %v1614 = vunpack.c.l.b16 %v282
  %v1615 = vunpack.c.h.b16 %v282
  %v1616 = vunpack.c.l.b16 %v283
  %v1617 = vunpack.c.h.b16 %v283
  %v1618 = vunpack.c.l.b16 %v284
  %v1619 = vunpack.c.h.b16 %v284
  %v1620 = vunpack.c.l.b16 %v285
  %v1621 = vunpack.c.h.b16 %v285
  %v1622 = vunpack.c.l.b16 %v286
  %v1623 = vunpack.c.h.b16 %v286
  %v1624 = vunpack.c.l.b16 %v287
  %v1625 = vunpack.c.l.b16 %v288
  %v1626 = vunpack.c.h.b16 %v288
  %v1627 = vunpack.c.l.b16 %v289
  %v1628 = vunpack.c.h.b16 %v289
  %v1629 = vunpack.c.l.b16 %v290
  %v1630 = vunpack.c.h.b16 %v290
  %v1631 = vunpack.c.l.b16 %v291
  %v1632 = vunpack.c.h.b16 %v291
  %v1633 = vunpack.c.l.b16 %v292
  %v1634 = vunpack.c.h.b16 %v292
  %v1635 = vunpack.c.l.b16 %v293
  %v1636 = vunpack.c.h.b16 %v293
  %v1637 = vunpack.c.l.b16 %v294
  %v1638 = vunpack.c.l.b16 %v295
  %v1639 = vunpack.c.h.b16 %v295
  %v1640 = vunpack.c.l.b16 %v296
  %v1641 = vunpack.c.h.b16 %v296
  %v1642 = vunpack.c.l.b16 %v297
  %v1643 = vunpack.c.h.b16 %v297
  %v1644 = vunpack.c.l.b16 %v298
  %v1645 = vunpack.c.h.b16 %v298
  %v1646 = vunpack.c.l.b16 %v299
  %v1647 = vunpack.c.h.b16 %v299
  %v1648 = vunpack.c.l.b16 %v300
  %v1649 = vunpack.c.h.b16 %v300
  %v1650 = vunpack.c.l.b16 %v301
  %v1651 = vunpack.c.l.b16 %v302
  %v1652 = vunpack.c.h.b16 %v302
  %v1653 = vunpack.c.l.b16 %v303
  %v1654 = vunpack.c.h.b16 %v303
  %v1655 = vunpack.c.l.b16 %v304
  %v1656 = vunpack.c.h.b16 %v304
  %v1657 = vunpack.c.l.b16 %v305
  %v1658 = vunpack.c.h.b16 %v305
  %v1659 = vunpack.c.l.b16 %v306
  %v1660 = vunpack.c.h.b16 %v306
  %v1661 = vunpack.c.l.b16 %v307
  %v1662 = vunpack.c.h.b16 %v307
  %v1663 = vunpack.c.l.b16 %v308
  %v1664 = vunpack.c.l.b16 %v309
  %v1665 = vunpack.c.h.b16 %v309
  %v1666 = vunpack.c.l.b16 %v310
  %v1667 = vunpack.c.h.b16 %v310
  %v1668 = vunpack.c.l.b16 %v311
  %v1669 = vunpack.c.h.b16 %v311
  %v1670 = vunpack.c.l.b16 %v312
  %v1671 = vunpack.c.h.b16 %v312
  %v1672 = vunpack.c.l.b16 %v313
  %v1673 = vunpack.c.h.b16 %v313
  %v1674 = vunpack.c.l.b16 %v314
  %v1675 = vunpack.c.h.b16 %v314
  %v1676 = vunpack.c.l.b16 %v315
  %v1677 = vunpack.c.l.b16 %v316
  %v1678 = vunpack.c.h.b16 %v316
  %v1679 = vunpack.c.l.b16 %v317
  %v1680 = vunpack.c.h.b16 %v317
  %v1681 = vunpack.c.l.b16 %v318
  %v1682 = vunpack.c.h.b16 %v318
  %v1683 = vunpack.c.l.b16 %v319
  %v1684 = vunpack.c.h.b16 %v319
  %v1685 = vunpack.c.l.b16 %v320
  %v1686 = vunpack.c.h.b16 %v320
  %v1687 = vunpack.c.l.b16 %v321
  %v1688 = vunpack.c.h.b16 %v321
  %v1689 = vunpack.c.l.b16 %v322
  %v1690 = vunpack.c.l.b16 %v323
  %v1691 = vunpack.c.h.b16 %v323
  %v1692 = vunpack.c.l.b16 %v324
  %v1693 = vunpack.c.h.b16 %v324
  %v1694 = vunpack.c.l.b16 %v325
  %v1695 = vunpack.c.h.b16 %v325
  %v1696 = vunpack.c.l.b16 %v326
  %v1697 = vunpack.c.h.b16 %v326
  %v1698 = vunpack.c.l.b16 %v327
  %v1699 = vunpack.c.h.b16 %v327
  %v1700 = vunpack.c.l.b16 %v328
  %v1701 = vunpack.c.h.b16 %v328
  %v1702 = vunpack.c.l.b16 %v329
  %v1703 = vunpack.c.l.b16 %v330
  %v1704 = vunpack.c.h.b16 %v330
  %v1705 = vunpack.c.l.b16 %v331
  %v1706 = vunpack.c.h.b16 %v331
  %v1707 = vunpack.c.l.b16 %v332
  %v1708 = vunpack.c.h.b16 %v332
  %v1709 = vunpack.c.l.b16 %v333
  %v1710 = vunpack.c.h.b16 %v333
  %v1711 = vunpack.c.l.b16 %v334
  %v1712 = vunpack.c.h.b16 %v334
  %v1713 = vunpack.c.l.b16 %v335
  %v1714 = vunpack.c.h.b16 %v335
  %v1715 = vunpack.c.l.b16 %v336
  %v1716 = vunpack.c.l.b16 %v337
  %v1717 = vunpack.c.h.b16 %v337
  %v1718 = vunpack.c.l.b16 %v338
  %v1719 = vunpack.c.h.b16 %v338
  %v1720 = vunpack.c.l.b16 %v339
  %v1721 = vunpack.c.h.b16 %v339
  %v1722 = vunpack.c.l.b16 %v340
  %v1723 = vunpack.c.h.b16 %v340
  %v1724 = vunpack.c.l.b16 %v341
  %v1725 = vunpack.c.h.b16 %v341
  %v1726 = vunpack.c.l.b16 %v342
  %v1727 = vunpack.c.h.b16 %v342
  %v1728 = vunpack.c.l.b16 %v343
  %v1729 = vunpack.c.l.b16 %v344
  %v1730 = vunpack.c.h.b16 %v344
  %v1731 = vunpack.c.l.b16 %v345
  %v1732 = vunpack.c.h.b16 %v345
  %v1733 = vunpack.c.l.b16 %v346
  %v1734 = vunpack.c.h.b16 %v346
  %v1735 = vunpack.c.l.b16 %v347
  %v1736 = vunpack.c.h.b16 %v347
  %v1737 = vunpack.c.l.b16 %v348
  %v1738 = vunpack.c.h.b16 %v348
  %v1739 = vunpack.c.l.b16 %v349
  %v1740 = vunpack.c.h.b16 %v349
  %v1741 = vunpack.c.l.b16 %v350
  %v1742 = vunpack.c.l.b16 %v351
  %v1743 = vunpack.c.h.b16 %v351
  %v1744 = vunpack.c.l.b16 %v352
  %v1745 = vunpack.c.h.b16 %v352
  %v1746 = vunpack.c.l.b16 %v353
  %v1747 = vunpack.c.h.b16 %v353
  %v1748 = vunpack.c.l.b16 %v354
  %v1749 = vunpack.c.h.b16 %v354
  %v1750 = vunpack.c.l.b16 %v355
  %v1751 = vunpack.c.h.b16 %v355
  %v1752 = vunpack.c.l.b16 %v356
  %v1753 = vunpack.c.h.b16 %v356
  %v1754 = vunpack.c.l.b16 %v357
  %v1755 = vunpack.c.l.b16 %v358
  %v1756 = vunpack.c.h.b16 %v358
  %v1757 = vunpack.c.l.b16 %v359
  %v1758 = vunpack.c.h.b16 %v359
  %v1759 = vunpack.c.l.b16 %v360
  %v1760 = vunpack.c.h.b16 %v360
  %v1761 = vunpack.c.l.b16 %v361
  %v1762 = vunpack.c.h.b16 %v361
  %v1763 = vunpack.c.l.b16 %v362
  %v1764 = vunpack.c.h.b16 %v362
  %v1765 = vunpack.c.l.b16 %v363
  %v1766 = vunpack.c.h.b16 %v363
  %v1767 = vunpack.c.l.b16 %v364
  %v1768 = vunpack.c.l.b16 %v365
  %v1769 = vunpack.c.h.b16 %v365
  %v1770 = vunpack.c.l.b16 %v366
  %v1771 = vunpack.c.h.b16 %v366
  %v1772 = vunpack.c.l.b16 %v367
  %v1773 = vunpack.c.h.b16 %v367
  %v1774 = vunpack.c.l.b16 %v368
  %v1775 = vunpack.c.h.b16 %v368
  %v1776 = vunpack.c.l.b16 %v369
  %v1777 = vunpack.c.h.b16 %v369
  %v1778 = vunpack.c.l.b16 %v370
  %v1779 = vunpack.c.h.b16 %v370
  %v1780 = vunpack.c.l.b16 %v371
  %v1781 = vunpack.c.l.b16 %v372
  %v1782 = vunpack.c.h.b16 %v372
  %v1783 = vunpack.c.l.b16 %v373
  %v1784 = vunpack.c.h.b16 %v373
  %v1785 = vunpack.c.l.b16 %v374
  %v1786 = vunpack.c.h.b16 %v374
  %v1787 = vunpack.c.l.b16 %v375
  %v1788 = vunpack.c.h.b16 %v375
  %v1789 = vunpack.c.l.b16 %v376
  %v1790 = vunpack.c.h.b16 %v376
  %v1791 = vunpack.c.l.b16 %v377
  %v1792 = vunpack.c.h.b16 %v377
  %v1793 = vunpack.c.l.b16 %v378
  %v1794 = vunpack.c.l.b16 %v379
  %v1795 = vunpack.c.h.b16 %v379
  %v1796 = vunpack.c.l.b16 %v380
  %v1797 = vunpack.c.h.b16 %v380
  %v1798 = vunpack.c.l.b16 %v381
  %v1799 = vunpack.c.h.b16 %v381
  %v1800 = vunpack.c.l.b16 %v382
  %v1801 = vunpack.c.h.b16 %v382
  %v1802 = vunpack.c.l.b16 %v383
  %v1803 = vunpack.c.h.b16 %v383
  %v1804 = vunpack.c.l.b16 %v384
  %v1805 = vunpack.c.h.b16 %v384
  %v1806 = vunpack.c.l.b16 %v385
  %v1807 = vunpack.c.l.b16 %v386
  %v1808 = vunpack.c.h.b16 %v386
  %v1809 = vunpack.c.l.b16 %v387
  %v1810 = vunpack.c.h.b16 %v387
  %v1811 = vunpack.c.l.b16 %v388
  %v1812 = vunpack.c.h.b16 %v388
  %v1813 = vunpack.c.l.b16 %v389
  %v1814 = vunpack.c.h.b16 %v389
  %v1815 = vunpack.c.l.b16 %v390
  %v1816 = vunpack.c.h.b16 %v390
  %v1817 = vunpack.c.l.b16 %v391
  %v1818 = vunpack.c.h.b16 %v391
  %v1819 = vunpack.c.l.b16 %v392
  %v1820 = vunpack.c.l.b16 %v393
  %v1821 = vunpack.c.h.b16 %v393
  %v1822 = vunpack.c.l.b16 %v394
  %v1823 = vunpack.c.h.b16 %v394
  %v1824 = vunpack.c.l.b16 %v395
  %v1825 = vunpack.c.h.b16 %v395
  %v1826 = vunpack.c.l.b16 %v396
  %v1827 = vunpack.c.h.b16 %v396
  %v1828 = vunpack.c.l.b16 %v397
  %v1829 = vunpack.c.h.b16 %v397
  %v1830 = vunpack.c.l.b16 %v398
  %v1831 = vunpack.c.h.b16 %v398
  %v1832 = vunpack.c.l.b16 %v399
  %v1833 = vunpack.c.l.b16 %v400
  %v1834 = vunpack.c.h.b16 %v400
  %v1835 = vunpack.c.l.b16 %v401
  %v1836 = vunpack.c.h.b16 %v401
  %v1837 = vunpack.c.l.b16 %v402
  %v1838 = vunpack.c.h.b16 %v402
  %v1839 = vunpack.c.l.b16 %v403
  %v1840 = vunpack.c.h.b16 %v403
  %v1841 = vunpack.c.l.b16 %v404
  %v1842 = vunpack.c.h.b16 %v404
  %v1843 = vunpack.c.l.b16 %v405
  %v1844 = vunpack.c.h.b16 %v405
  %v1845 = vunpack.c.l.b16 %v406
  %v1846 = vunpack.c.l.b16 %v407
  %v1847 = vunpack.c.h.b16 %v407
  %v1848 = vunpack.c.l.b16 %v408
  %v1849 = vunpack.c.h.b16 %v408
  %v1850 = vunpack.c.l.b16 %v409
  %v1851 = vunpack.c.h.b16 %v409
  %v1852 = vunpack.c.l.b16 %v410
  %v1853 = vunpack.c.h.b16 %v410
  %v1854 = vunpack.c.l.b16 %v411
  %v1855 = vunpack.c.h.b16 %v411
  %v1856 = vunpack.c.l.b16 %v412
  %v1857 = vunpack.c.h.b16 %v412
  %v1858 = vunpack.c.l.b16 %v413
  %v1859 = vunpack.c.l.b16 %v414
  %v1860 = vunpack.c.h.b16 %v414
  %v1861 = vunpack.c.l.b16 %v415
  %v1862 = vunpack.c.h.b16 %v415
  %v1863 = vunpack.c.l.b16 %v416
  %v1864 = vunpack.c.h.b16 %v416
  %v1865 = vunpack.c.l.b16 %v417
  %v1866 = vunpack.c.h.b16 %v417
  %v1867 = vunpack.c.l.b16 %v418
  %v1868 = vunpack.c.h.b16 %v418
  %v1869 = vunpack.c.l.b16 %v419
  %v1870 = vunpack.c.h.b16 %v419
  %v1871 = vunpack.c.l.b16 %v420
  %v1872 = vunpack.c.l.b16 %v421
  %v1873 = vunpack.c.h.b16 %v421
  %v1874 = vunpack.c.l.b16 %v422
  %v1875 = vunpack.c.h.b16 %v422
  %v1876 = vunpack.c.l.b16 %v423
  %v1877 = vunpack.c.h.b16 %v423
  %v1878 = vunpack.c.l.b16 %v424
  %v1879 = vunpack.c.h.b16 %v424
  %v1880 = vunpack.c.l.b16 %v425
  %v1881 = vunpack.c.h.b16 %v425
  %v1882 = vunpack.c.l.b16 %v426
  %v1883 = vunpack.c.h.b16 %v426
  %v1884 = vunpack.c.l.b16 %v427
  %v1885 = vunpack.c.l.b16 %v428
  %v1886 = vunpack.c.h.b16 %v428
  %v1887 = vunpack.c.l.b16 %v429
  %v1888 = vunpack.c.h.b16 %v429
  %v1889 = vunpack.c.l.b16 %v430
  %v1890 = vunpack.c.h.b16 %v430
  %v1891 = vunpack.c.l.b16 %v431
  %v1892 = vunpack.c.h.b16 %v431
  %v1893 = vunpack.c.l.b16 %v432
  %v1894 = vunpack.c.h.b16 %v432
  %v1895 = vunpack.c.l.b16 %v433
  %v1896 = vunpack.c.h.b16 %v433
  %v1897 = vunpack.c.l.b16 %v434
  %v1898 = vunpack.c.l.b16 %v435
  %v1899 = vunpack.c.h.b16 %v435
  %v1900 = vunpack.c.l.b16 %v436
  %v1901 = vunpack.c.h.b16 %v436
  %v1902 = vunpack.c.l.b16 %v437
  %v1903 = vunpack.c.h.b16 %v437
  %v1904 = vunpack.c.l.b16 %v438
  %v1905 = vunpack.c.h.b16 %v438
  %v1906 = vunpack.c.l.b16 %v439
  %v1907 = vunpack.c.h.b16 %v439
  %v1908 = vunpack.c.l.b16 %v440
  %v1909 = vunpack.c.h.b16 %v440
  %v1910 = vunpack.c.l.b16 %v441
  %v1911 = vunpack.c.l.b16 %v442
  %v1912 = vunpack.c.h.b16 %v442
  %v1913 = vunpack.c.l.b16 %v443
  %v1914 = vunpack.c.h.b16 %v443
  %v1915 = vunpack.c.l.b16 %v444
  %v1916 = vunpack.c.h.b16 %v444
  %v1917 = vunpack.c.l.b16 %v445
  %v1918 = vunpack.c.h.b16 %v445
  %v1919 = vunpack.c.l.b16 %v446
  %v1920 = vunpack.c.h.b16 %v446
  %v1921 = vunpack.c.l.b16 %v447
  %v1922 = vunpack.c.h.b16 %v447
  %v1923 = vunpack.c.l.b16 %v448
  %v1924 = vunpack.c.l.b16 %v449
  %v1925 = vunpack.c.h.b16 %v449
  %v1926 = vunpack.c.l.b16 %v450
  %v1927 = vunpack.c.h.b16 %v450
  %v1928 = vunpack.c.l.b16 %v451
  %v1929 = vunpack.c.h.b16 %v451
  %v1930 = vunpack.c.l.b16 %v452
  %v1931 = vunpack.c.h.b16 %v452
  %v1932 = vunpack.c.l.b16 %v453
  %v1933 = vunpack.c.h.b16 %v453
  %v1934 = vunpack.c.l.b16 %v454
  %v1935 = vunpack.c.h.b16 %v454
  %v1936 = vunpack.c.l.b16 %v455
  %v1937 = vunpack.c.l.b16 %v456
  %v1938 = vunpack.c.h.b16 %v456
  %v1939 = vunpack.c.l.b16 %v457
  %v1940 = vunpack.c.h.b16 %v457
  %v1941 = vunpack.c.l.b16 %v458
  %v1942 = vunpack.c.h.b16 %v458
  %v1943 = vunpack.c.l.b16 %v459
  %v1944 = vunpack.c.h.b16 %v459
  %v1945 = vunpack.c.l.b16 %v460
  %v1946 = vunpack.c.h.b16 %v460
  %v1947 = vunpack.c.l.b16 %v461
  %v1948 = vunpack.c.h.b16 %v461
  %v1949 = vunpack.c.l.b16 %v462
  %v1950 = vpack.c.b16 %v1131, %v1118
  %v1951 = vpack.c.b16 %v1132, %v1119
  %v1952 = vpack.c.b16 %v1133, %v1120
  %v1953 = vpack.c.b16 %v1134, %v1121
  %v1954 = vpack.c.b16 %v1135, %v1122
  %v1955 = vpack.c.b16 %v1136, %v1123
  %v1956 = vpack.c.b16 %v1137, %v1124
  %v1957 = vpack.c.b16 %v1138, %v1125
  %v1958 = vpack.c.b16 %v1139, %v1126
  %v1959 = vpack.c.b16 %v1140, %v1127
  %v1960 = vpack.c.b16 %v1141, %v1128
  %v1961 = vpack.c.b16 %v1142, %v1129
  %v1962 = vpack.c.b16 %v1143, %v1130
  %v1963 = vpack.c.b16 %v1157, %v1144
  %v1964 = vpack.c.b16 %v1158, %v1145
  %v1965 = vpack.c.b16 %v1159, %v1146
  %v1966 = vpack.c.b16 %v1160, %v1147
  %v1967 = vpack.c.b16 %v1161, %v1148
  %v1968 = vpack.c.b16 %v1162, %v1149
  %v1969 = vpack.c.b16 %v1163, %v1150
  %v1970 = vpack.c.b16 %v1164, %v1151
  %v1971 = vpack.c.b16 %v1165, %v1152
  %v1972 = vpack.c.b16 %v1166, %v1153
  %v1973 = vpack.c.b16 %v1167, %v1154
  %v1974 = vpack.c.b16 %v1168, %v1155
  %v1975 = vpack.c.b16 %v1169, %v1156
  %v1976 = vpack.c.b16 %v1183, %v1170
  %v1977 = vpack.c.b16 %v1184, %v1171
  %v1978 = vpack.c.b16 %v1185, %v1172
  %v1979 = vpack.c.b16 %v1186, %v1173
  %v1980 = vpack.c.b16 %v1187, %v1174
  %v1981 = vpack.c.b16 %v1188, %v1175
  %v1982 = vpack.c.b16 %v1189, %v1176
  %v1983 = vpack.c.b16 %v1190, %v1177
  %v1984 = vpack.c.b16 %v1191, %v1178
  %v1985 = vpack.c.b16 %v1192, %v1179
  %v1986 = vpack.c.b16 %v1193, %v1180
  %v1987 = vpack.c.b16 %v1194, %v1181
  %v1988 = vpack.c.b16 %v1195, %v1182
  %v1989 = vpack.c.b16 %v1209, %v1196
  %v1990 = vpack.c.b16 %v1210, %v1197
  %v1991 = vpack.c.b16 %v1211, %v1198
  %v1992 = vpack.c.b16 %v1212, %v1199
  %v1993 = vpack.c.b16 %v1213, %v1200
  %v1994 = vpack.c.b16 %v1214, %v1201
  %v1995 = vpack.c.b16 %v1215, %v1202
  %v1996 = vpack.c.b16 %v1216, %v1203
  %v1997 = vpack.c.b16 %v1217, %v1204
  %v1998 = vpack.c.b16 %v1218, %v1205
  %v1999 = vpack.c.b16 %v1219, %v1206
  %v2000 = vpack.c.b16 %v1220, %v1207
  %v2001 = vpack.c.b16 %v1221, %v1208
  %v2002 = vpack.c.b16 %v1235, %v1222
  %v2003 = vpack.c.b16 %v1236, %v1223
  %v2004 = vpack.c.b16 %v1237, %v1224
  %v2005 = vpack.c.b16 %v1238, %v1225
  %v2006 = vpack.c.b16 %v1239, %v1226
  %v2007 = vpack.c.b16 %v1240, %v1227
  %v2008 = vpack.c.b16 %v1241, %v1228
  %v2009 = vpack.c.b16 %v1242, %v1229
  %v2010 = vpack.c.b16 %v1243, %v1230
  %v2011 = vpack.c.b16 %v1244, %v1231
  %v2012 = vpack.c.b16 %v1245, %v1232
  %v2013 = vpack.c.b16 %v1246, %v1233
  %v2014 = vpack.c.b16 %v1247, %v1234
  %v2015 = vpack.c.b16 %v1261, %v1248
  %v2016 = vpack.c.b16 %v1262, %v1249
  %v2017 = vpack.c.b16 %v1263, %v1250
  %v2018 = vpack.c.b16 %v1264, %v1251
  %v2019 = vpack.c.b16 %v1265, %v1252
  %v2020 = vpack.c.b16 %v1266, %v1253
  %v2021 = vpack.c.b16 %v1267, %v1254
  %v2022 = vpack.c.b16 %v1268, %v1255
  %v2023 = vpack.c.b16 %v1269, %v1256
  %v2024 = vpack.c.b16 %v1270, %v1257
  %v2025 = vpack.c.b16 %v1271, %v1258
  %v2026 = vpack.c.b16 %v1272, %v1259
  %v2027 = vpack.c.b16 %v1273, %v1260
  %v2028 = vpack.c.b16 %v1287, %v1274
  %v2029 = vpack.c.b16 %v1288, %v1275
  %v2030 = vpack.c.b16 %v1289, %v1276
  %v2031 = vpack.c.b16 %v1290, %v1277
  %v2032 = vpack.c.b16 %v1291, %v1278
  %v2033 = vpack.c.b16 %v1292, %v1279
  %v2034 = vpack.c.b16 %v1293, %v1280
  %v2035 = vpack.c.b16 %v1294, %v1281
  %v2036 = vpack.c.b16 %v1295, %v1282
  %v2037 = vpack.c.b16 %v1296, %v1283
  %v2038 = vpack.c.b16 %v1297, %v1284
  %v2039 = vpack.c.b16 %v1298, %v1285
  %v2040 = vpack.c.b16 %v1299, %v1286
  %v2041 = vpack.c.b16 %v1313, %v1300
  %v2042 = vpack.c.b16 %v1314, %v1301
  %v2043 = vpack.c.b16 %v1315, %v1302
  %v2044 = vpack.c.b16 %v1316, %v1303
  %v2045 = vpack.c.b16 %v1317, %v1304
  %v2046 = vpack.c.b16 %v1318, %v1305
  %v2047 = vpack.c.b16 %v1319, %v1306
  %v2048 = vpack.c.b16 %v1320, %v1307
  %v2049 = vpack.c.b16 %v1321, %v1308
  %v2050 = vpack.c.b16 %v1322, %v1309
  %v2051 = vpack.c.b16 %v1323, %v1310
  %v2052 = vpack.c.b16 %v1324, %v1311
  %v2053 = vpack.c.b16 %v1325, %v1312
  %v2054 = vpack.c.b16 %v1339, %v1326
  %v2055 = vpack.c.b16 %v1340, %v1327
  %v2056 = vpack.c.b16 %v1341, %v1328
  %v2057 = vpack.c.b16 %v1342, %v1329
  %v2058 = vpack.c.b16 %v1343, %v1330
  %v2059 = vpack.c.b16 %v1344, %v1331
  %v2060 = vpack.c.b16 %v1345, %v1332
  %v2061 = vpack.c.b16 %v1346, %v1333
  %v2062 = vpack.c.b16 %v1347, %v1334
  %v2063 = vpack.c.b16 %v1348, %v1335
  %v2064 = vpack.c.b16 %v1349, %v1336
  %v2065 = vpack.c.b16 %v1350, %v1337
  %v2066 = vpack.c.b16 %v1351, %v1338
  %v2067 = vpack.c.b16 %v1365, %v1352
  %v2068 = vpack.c.b16 %v1366, %v1353
  %v2069 = vpack.c.b16 %v1367, %v1354
  %v2070 = vpack.c.b16 %v1368, %v1355
  %v2071 = vpack.c.b16 %v1369, %v1356
  %v2072 = vpack.c.b16 %v1370, %v1357
  %v2073 = vpack.c.b16 %v1371, %v1358
  %v2074 = vpack.c.b16 %v1372, %v1359
  %v2075 = vpack.c.b16 %v1373, %v1360
  %v2076 = vpack.c.b16 %v1374, %v1361
  %v2077 = vpack.c.b16 %v1375, %v1362
  %v2078 = vpack.c.b16 %v1376, %v1363
  %v2079 = vpack.c.b16 %v1377, %v1364
  %v2080 = vpack.c.b16 %v1391, %v1378
  %v2081 = vpack.c.b16 %v1392, %v1379
  %v2082 = vpack.c.b16 %v1393, %v1380
  %v2083 = vpack.c.b16 %v1394, %v1381
  %v2084 = vpack.c.b16 %v1395, %v1382
  %v2085 = vpack.c.b16 %v1396, %v1383
  %v2086 = vpack.c.b16 %v1397, %v1384
  %v2087 = vpack.c.b16 %v1398, %v1385
  %v2088 = vpack.c.b16 %v1399, %v1386
  %v2089 = vpack.c.b16 %v1400, %v1387
  %v2090 = vpack.c.b16 %v1401, %v1388
  %v2091 = vpack.c.b16 %v1402, %v1389
  %v2092 = vpack.c.b16 %v1403, %v1390
  %v2093 = vpack.c.b16 %v1417, %v1404
  %v2094 = vpack.c.b16 %v1418, %v1405
  %v2095 = vpack.c.b16 %v1419, %v1406
  %v2096 = vpack.c.b16 %v1420, %v1407
  %v2097 = vpack.c.b16 %v1421, %v1408
  %v2098 = vpack.c.b16 %v1422, %v1409
  %v2099 = vpack.c.b16 %v1423, %v1410
  %v2100 = vpack.c.b16 %v1424, %v1411
  %v2101 = vpack.c.b16 %v1425, %v1412
  %v2102 = vpack.c.b16 %v1426, %v1413
  %v2103 = vpack.c.b16 %v1427, %v1414
  %v2104 = vpack.c.b16 %v1428, %v1415
  %v2105 = vpack.c.b16 %v1429, %v1416
  %v2106 = vpack.c.b16 %v1443, %v1430
  %v2107 = vpack.c.b16 %v1444, %v1431
  %v2108 = vpack.c.b16 %v1445, %v1432
  %v2109 = vpack.c.b16 %v1446, %v1433
  %v2110 = vpack.c.b16 %v1447, %v1434
  %v2111 = vpack.c.b16 %v1448, %v1435
  %v2112 = vpack.c.b16 %v1449, %v1436
  %v2113 = vpack.c.b16 %v1450, %v1437
  %v2114 = vpack.c.b16 %v1451, %v1438
  %v2115 = vpack.c.b16 %v1452, %v1439
  %v2116 = vpack.c.b16 %v1453, %v1440
  %v2117 = vpack.c.b16 %v1454, %v1441
  %v2118 = vpack.c.b16 %v1455, %v1442
  %v2119 = vpack.c.b16 %v1469, %v1456
  %v2120 = vpack.c.b16 %v1470, %v1457
  %v2121 = vpack.c.b16 %v1471, %v1458
  %v2122 = vpack.c.b16 %v1472, %v1459
  %v2123 = vpack.c.b16 %v1473, %v1460
  %v2124 = vpack.c.b16 %v1474, %v1461
  %v2125 = vpack.c.b16 %v1475, %v1462
  %v2126 = vpack.c.b16 %v1476, %v1463
  %v2127 = vpack.c.b16 %v1477, %v1464
  %v2128 = vpack.c.b16 %v1478, %v1465
  %v2129 = vpack.c.b16 %v1479, %v1466
  %v2130 = vpack.c.b16 %v1480, %v1467
  %v2131 = vpack.c.b16 %v1481, %v1468
  %v2132 = vpack.c.b16 %v1495, %v1482
  %v2133 = vpack.c.b16 %v1496, %v1483
  %v2134 = vpack.c.b16 %v1497, %v1484
  %v2135 = vpack.c.b16 %v1498, %v1485
  %v2136 = vpack.c.b16 %v1499, %v1486
  %v2137 = vpack.c.b16 %v1500, %v1487
  %v2138 = vpack.c.b16 %v1501, %v1488
  %v2139 = vpack.c.b16 %v1502, %v1489
  %v2140 = vpack.c.b16 %v1503, %v1490
  %v2141 = vpack.c.b16 %v1504, %v1491
  %v2142 = vpack.c.b16 %v1505, %v1492
  %v2143 = vpack.c.b16 %v1506, %v1493
  %v2144 = vpack.c.b16 %v1507, %v1494
  %v2145 = vpack.c.b16 %v1521, %v1508
  %v2146 = vpack.c.b16 %v1522, %v1509
  %v2147 = vpack.c.b16 %v1523, %v1510
  %v2148 = vpack.c.b16 %v1524, %v1511
  %v2149 = vpack.c.b16 %v1525, %v1512
  %v2150 = vpack.c.b16 %v1526, %v1513
  %v2151 = vpack.c.b16 %v1527, %v1514
  %v2152 = vpack.c.b16 %v1528, %v1515
  %v2153 = vpack.c.b16 %v1529, %v1516
  %v2154 = vpack.c.b16 %v1530, %v1517
  %v2155 = vpack.c.b16 %v1531, %v1518
  %v2156 = vpack.c.b16 %v1532, %v1519
  %v2157 = vpack.c.b16 %v1533, %v1520
  %v2158 = vpack.c.b16 %v1547, %v1534
  %v2159 = vpack.c.b16 %v1548, %v1535
  %v2160 = vpack.c.b16 %v1549, %v1536
  %v2161 = vpack.c.b16 %v1550, %v1537
  %v2162 = vpack.c.b16 %v1551, %v1538
  %v2163 = vpack.c.b16 %v1552, %v1539
  %v2164 = vpack.c.b16 %v1553, %v1540
  %v2165 = vpack.c.b16 %v1554, %v1541
  %v2166 = vpack.c.b16 %v1555, %v1542
  %v2167 = vpack.c.b16 %v1556, %v1543
  %v2168 = vpack.c.b16 %v1557, %v1544
  %v2169 = vpack.c.b16 %v1558, %v1545
  %v2170 = vpack.c.b16 %v1559, %v1546
  %v2171 = vpack.c.b16 %v1573, %v1560
  %v2172 = vpack.c.b16 %v1574, %v1561
  %v2173 = vpack.c.b16 %v1575, %v1562
  %v2174 = vpack.c.b16 %v1576, %v1563
  %v2175 = vpack.c.b16 %v1577, %v1564
  %v2176 = vpack.c.b16 %v1578, %v1565
  %v2177 = vpack.c.b16 %v1579, %v1566
  %v2178 = vpack.c.b16 %v1580, %v1567
  %v2179 = vpack.c.b16 %v1581, %v1568
  %v2180 = vpack.c.b16 %v1582, %v1569
  %v2181 = vpack.c.b16 %v1583, %v1570
  %v2182 = vpack.c.b16 %v1584, %v1571
  %v2183 = vpack.c.b16 %v1585, %v1572
  %v2184 = vpack.c.b16 %v1599, %v1586
  %v2185 = vpack.c.b16 %v1600, %v1587
  %v2186 = vpack.c.b16 %v1601, %v1588
  %v2187 = vpack.c.b16 %v1602, %v1589
  %v2188 = vpack.c.b16 %v1603, %v1590
  %v2189 = vpack.c.b16 %v1604, %v1591
  %v2190 = vpack.c.b16 %v1605, %v1592
  %v2191 = vpack.c.b16 %v1606, %v1593
  %v2192 = vpack.c.b16 %v1607, %v1594
  %v2193 = vpack.c.b16 %v1608, %v1595
  %v2194 = vpack.c.b16 %v1609, %v1596
  %v2195 = vpack.c.b16 %v1610, %v1597
  %v2196 = vpack.c.b16 %v1611, %v1598
  %v2197 = vpack.c.b16 %v1625, %v1612
  %v2198 = vpack.c.b16 %v1626, %v1613
  %v2199 = vpack.c.b16 %v1627, %v1614
  %v2200 = vpack.c.b16 %v1628, %v1615
  %v2201 = vpack.c.b16 %v1629, %v1616
  %v2202 = vpack.c.b16 %v1630, %v1617
  %v2203 = vpack.c.b16 %v1631, %v1618
  %v2204 = vpack.c.b16 %v1632, %v1619
  %v2205 = vpack.c.b16 %v1633, %v1620
  %v2206 = vpack.c.b16 %v1634, %v1621
  %v2207 = vpack.c.b16 %v1635, %v1622
  %v2208 = vpack.c.b16 %v1636, %v1623
  %v2209 = vpack.c.b16 %v1637, %v1624
  %v2210 = vpack.c.b16 %v1651, %v1638
  %v2211 = vpack.c.b16 %v1652, %v1639
  %v2212 = vpack.c.b16 %v1653, %v1640
  %v2213 = vpack.c.b16 %v1654, %v1641
  %v2214 = vpack.c.b16 %v1655, %v1642
  %v2215 = vpack.c.b16 %v1656, %v1643
  %v2216 = vpack.c.b16 %v1657, %v1644
  %v2217 = vpack.c.b16 %v1658, %v1645
  %v2218 = vpack.c.b16 %v1659, %v1646
  %v2219 = vpack.c.b16 %v1660, %v1647
  %v2220 = vpack.c.b16 %v1661, %v1648
  %v2221 = vpack.c.b16 %v1662, %v1649
  %v2222 = vpack.c.b16 %v1663, %v1650
  %v2223 = vpack.c.b16 %v1677, %v1664
  %v2224 = vpack.c.b16 %v1678, %v1665
  %v2225 = vpack.c.b16 %v1679, %v1666
  %v2226 = vpack.c.b16 %v1680, %v1667
  %v2227 = vpack.c.b16 %v1681, %v1668
  %v2228 = vpack.c.b16 %v1682, %v1669
  %v2229 = vpack.c.b16 %v1683, %v1670
  %v2230 = vpack.c.b16 %v1684, %v1671
  %v2231 = vpack.c.b16 %v1685, %v1672
  %v2232 = vpack.c.b16 %v1686, %v1673
  %v2233 = vpack.c.b16 %v1687, %v1674
  %v2234 = vpack.c.b16 %v1688, %v1675
  %v2235 = vpack.c.b16 %v1689, %v1676
  %v2236 = vpack.c.b16 %v1703, %v1690
  %v2237 = vpack.c.b16 %v1704, %v1691
  %v2238 = vpack.c.b16 %v1705, %v1692
  %v2239 = vpack.c.b16 %v1706, %v1693
  %v2240 = vpack.c.b16 %v1707, %v1694
  %v2241 = vpack.c.b16 %v1708, %v1695
  %v2242 = vpack.c.b16 %v1709, %v1696
  %v2243 = vpack.c.b16 %v1710, %v1697
  %v2244 = vpack.c.b16 %v1711, %v1698
  %v2245 = vpack.c.b16 %v1712, %v1699
  %v2246 = vpack.c.b16 %v1713, %v1700
  %v2247 = vpack.c.b16 %v1714, %v1701
  %v2248 = vpack.c.b16 %v1715, %v1702
  %v2249 = vpack.c.b16 %v1729, %v1716
  %v2250 = vpack.c.b16 %v1730, %v1717
  %v2251 = vpack.c.b16 %v1731, %v1718
  %v2252 = vpack.c.b16 %v1732, %v1719
  %v2253 = vpack.c.b16 %v1733, %v1720
  %v2254 = vpack.c.b16 %v1734, %v1721
  %v2255 = vpack.c.b16 %v1735, %v1722
  %v2256 = vpack.c.b16 %v1736, %v1723
  %v2257 = vpack.c.b16 %v1737, %v1724
  %v2258 = vpack.c.b16 %v1738, %v1725
  %v2259 = vpack.c.b16 %v1739, %v1726
  %v2260 = vpack.c.b16 %v1740, %v1727
  %v2261 = vpack.c.b16 %v1741, %v1728
  %v2262 = vpack.c.b16 %v1755, %v1742
  %v2263 = vpack.c.b16 %v1756, %v1743
  %v2264 = vpack.c.b16 %v1757, %v1744
  %v2265 = vpack.c.b16 %v1758, %v1745
  %v2266 = vpack.c.b16 %v1759, %v1746
  %v2267 = vpack.c.b16 %v1760, %v1747
  %v2268 = vpack.c.b16 %v1761, %v1748
  %v2269 = vpack.c.b16 %v1762, %v1749
  %v2270 = vpack.c.b16 %v1763, %v1750
  %v2271 = vpack.c.b16 %v1764, %v1751
  %v2272 = vpack.c.b16 %v1765, %v1752
  %v2273 = vpack.c.b16 %v1766, %v1753
  %v2274 = vpack.c.b16 %v1767, %v1754
  %v2275 = vpack.c.b16 %v1781, %v1768
  %v2276 = vpack.c.b16 %v1782, %v1769
  %v2277 = vpack.c.b16 %v1783, %v1770
  %v2278 = vpack.c.b16 %v1784, %v1771
  %v2279 = vpack.c.b16 %v1785, %v1772
  %v2280 = vpack.c.b16 %v1786, %v1773
  %v2281 = vpack.c.b16 %v1787, %v1774
  %v2282 = vpack.c.b16 %v1788, %v1775
  %v2283 = vpack.c.b16 %v1789, %v1776
  %v2284 = vpack.c.b16 %v1790, %v1777
  %v2285 = vpack.c.b16 %v1791, %v1778
  %v2286 = vpack.c.b16 %v1792, %v1779
  %v2287 = vpack.c.b16 %v1793, %v1780
  %v2288 = vpack.c.b16 %v1807, %v1794
  %v2289 = vpack.c.b16 %v1808, %v1795
  %v2290 = vpack.c.b16 %v1809, %v1796
  %v2291 = vpack.c.b16 %v1810, %v1797
  %v2292 = vpack.c.b16 %v1811, %v1798
  %v2293 = vpack.c.b16 %v1812, %v1799
  %v2294 = vpack.c.b16 %v1813, %v1800
  %v2295 = vpack.c.b16 %v1814, %v1801
  %v2296 = vpack.c.b16 %v1815, %v1802
  %v2297 = vpack.c.b16 %v1816, %v1803
  %v2298 = vpack.c.b16 %v1817, %v1804
  %v2299 = vpack.c.b16 %v1818, %v1805
  %v2300 = vpack.c.b16 %v1819, %v1806
  %v2301 = vpack.c.b16 %v1833, %v1820
  %v2302 = vpack.c.b16 %v1834, %v1821
  %v2303 = vpack.c.b16 %v1835, %v1822
  %v2304 = vpack.c.b16 %v1836, %v1823
  %v2305 = vpack.c.b16 %v1837, %v1824
  %v2306 = vpack.c.b16 %v1838, %v1825
  %v2307 = vpack.c.b16 %v1839, %v1826
  %v2308 = vpack.c.b16 %v1840, %v1827
  %v2309 = vpack.c.b16 %v1841, %v1828
  %v2310 = vpack.c.b16 %v1842, %v1829
  %v2311 = vpack.c.b16 %v1843, %v1830
  %v2312 = vpack.c.b16 %v1844, %v1831
  %v2313 = vpack.c.b16 %v1845, %v1832
  %v2314 = vpack.c.b16 %v1859, %v1846
  %v2315 = vpack.c.b16 %v1860, %v1847
  %v2316 = vpack.c.b16 %v1861, %v1848
  %v2317 = vpack.c.b16 %v1862, %v1849
  %v2318 = vpack.c.b16 %v1863, %v1850
  %v2319 = vpack.c.b16 %v1864, %v1851
  %v2320 = vpack.c.b16 %v1865, %v1852
  %v2321 = vpack.c.b16 %v1866, %v1853
  %v2322 = vpack.c.b16 %v1867, %v1854
  %v2323 = vpack.c.b16 %v1868, %v1855
  %v2324 = vpack.c.b16 %v1869, %v1856
  %v2325 = vpack.c.b16 %v1870, %v1857
  %v2326 = vpack.c.b16 %v1871, %v1858
  %v2327 = vpack.c.b16 %v1885, %v1872
  %v2328 = vpack.c.b16 %v1886, %v1873
  %v2329 = vpack.c.b16 %v1887, %v1874
  %v2330 = vpack.c.b16 %v1888, %v1875
  %v2331 = vpack.c.b16 %v1889, %v1876
  %v2332 = vpack.c.b16 %v1890, %v1877
  %v2333 = vpack.c.b16 %v1891, %v1878
  %v2334 = vpack.c.b16 %v1892, %v1879
  %v2335 = vpack.c.b16 %v1893, %v1880
  %v2336 = vpack.c.b16 %v1894, %v1881
  %v2337 = vpack.c.b16 %v1895, %v1882
  %v2338 = vpack.c.b16 %v1896, %v1883
  %v2339 = vpack.c.b16 %v1897, %v1884
  %v2340 = vpack.c.b16 %v1911, %v1898
  %v2341 = vpack.c.b16 %v1912, %v1899
  %v2342 = vpack.c.b16 %v1913, %v1900
  %v2343 = vpack.c.b16 %v1914, %v1901
  %v2344 = vpack.c.b16 %v1915, %v1902
  %v2345 = vpack.c.b16 %v1916, %v1903
  %v2346 = vpack.c.b16 %v1917, %v1904
  %v2347 = vpack.c.b16 %v1918, %v1905
  %v2348 = vpack.c.b16 %v1919, %v1906
  %v2349 = vpack.c.b16 %v1920, %v1907
  %v2350 = vpack.c.b16 %v1921, %v1908
  %v2351 = vpack.c.b16 %v1922, %v1909
  %v2352 = vpack.c.b16 %v1923, %v1910
  %v2353 = vpack.c.b16 %v1937, %v1924
  %v2354 = vpack.c.b16 %v1938, %v1925
  %v2355 = vpack.c.b16 %v1939, %v1926
  %v2356 = vpack.c.b16 %v1940, %v1927
  %v2357 = vpack.c.b16 %v1941, %v1928
  %v2358 = vpack.c.b16 %v1942, %v1929
  %v2359 = vpack.c.b16 %v1943, %v1930
  %v2360 = vpack.c.b16 %v1944, %v1931
  %v2361 = vpack.c.b16 %v1945, %v1932
  %v2362 = vpack.c.b16 %v1946, %v1933
  %v2363 = vpack.c.b16 %v1947, %v1934
  %v2364 = vpack.c.b16 %v1948, %v1935
  %v2365 = vpack.c.b16 %v1949, %v1936
  %v2950 = vunpack.c.l.b16 %v463
  %v2951 = vunpack.c.l.b16 %v464
  %v2952 = vunpack.c.l.b16 %v465
  %v2953 = vunpack.c.l.b16 %v466
  %v2954 = vunpack.c.l.b16 %v467
  %v2955 = vunpack.c.l.b16 %v468
  %v2956 = vunpack.c.l.b16 %v469
  %v2957 = vunpack.c.l.b16 %v470
  %v2958 = vunpack.c.l.b16 %v471
  %v2959 = vunpack.c.l.b16 %v472
  %v2960 = vunpack.c.l.b16 %v473
  %v2961 = vunpack.c.l.b16 %v474
  %v2962 = vunpack.c.l.b16 %v475
  %v2963 = vunpack.c.l.b16 %v476
  %v2964 = vunpack.c.l.b16 %v477
  %v2965 = vunpack.c.l.b16 %v478
  %v2966 = vunpack.c.l.b16 %v479
  %v2967 = vunpack.c.l.b16 %v480
  %v2968 = vunpack.c.l.b16 %v481
  %v2969 = vunpack.c.l.b16 %v482
  %v2970 = vunpack.c.l.b16 %v483
  %v2971 = vunpack.c.l.b16 %v484
  %v2972 = vunpack.c.l.b16 %v485
  %v2973 = vunpack.c.l.b16 %v486
  %v2974 = vunpack.c.l.b16 %v487
  %v2975 = vunpack.c.l.b16 %v488
  %v2976 = vunpack.c.l.b16 %v489
  %v2977 = vunpack.c.l.b16 %v490
  %v2978 = vunpack.c.l.b16 %v491
  %v2979 = vunpack.c.l.b16 %v492
  %v2980 = vunpack.c.l.b16 %v493
  %v2981 = vunpack.c.l.b16 %v494
  %v2982 = vunpack.c.l.b16 %v495
  %v2983 = vunpack.c.l.b16 %v496
  %v2984 = vunpack.c.l.b16 %v497
  %v2985 = vunpack.c.l.b16 %v498
  %v2986 = vunpack.c.l.b16 %v499
  %v2987 = vunpack.c.l.b16 %v500
  %v2988 = vunpack.c.l.b16 %v501
  %v2989 = vunpack.c.l.b16 %v502
  %v2990 = vunpack.c.l.b16 %v503
  %v2991 = vunpack.c.l.b16 %v504
  %v2992 = vunpack.c.l.b16 %v505
  %v2993 = vunpack.c.l.b16 %v506
  %v2994 = vunpack.c.l.b16 %v507
  %v2995 = vunpack.c.l.b16 %v508
  %v2996 = vunpack.c.l.b16 %v509
  %v2997 = vunpack.c.l.b16 %v510
  %v2998 = vunpack.c.l.b16 %v511
  %v2999 = vunpack.c.l.b16 %v512
  %v3000 = vunpack.c.l.b16 %v513
  %v3001 = vunpack.c.l.b16 %v514
  %v3002 = vunpack.c.l.b16 %v515
  %v3003 = vunpack.c.l.b16 %v516
  %v3004 = vunpack.c.l.b16 %v517
  %v3005 = vunpack.c.l.b16 %v518
  %v3006 = vunpack.c.l.b16 %v519
  %v3007 = vunpack.c.l.b16 %v520
  %v3008 = vunpack.c.l.b16 %v521
  %v3009 = vunpack.c.l.b16 %v522
  %v3010 = vunpack.c.l.b16 %v523
  %v3011 = vunpack.c.l.b16 %v524
  %v3012 = vunpack.c.l.b16 %v525
  %v3013 = vunpack.c.l.b16 %v526
  %v3014 = vunpack.c.l.b16 %v527
  %v3015 = vunpack.c.l.b16 %v528
  %v3016 = vunpack.c.l.b16 %v529
  %v3017 = vunpack.c.l.b16 %v530
  %v3018 = vunpack.c.l.b16 %v531
  %v3019 = vunpack.c.l.b16 %v532
  %v3020 = vunpack.c.l.b16 %v533
  %v3021 = vunpack.c.l.b16 %v534
  %v3022 = vunpack.c.l.b16 %v535
  %v3023 = vunpack.c.l.b16 %v536
  %v3024 = vunpack.c.l.b16 %v537
  %v3025 = vunpack.c.l.b16 %v538
  %v3026 = vunpack.c.l.b16 %v539
  %v3027 = vunpack.c.l.b16 %v540
  %v3028 = vunpack.c.l.b16 %v541
  %v3029 = vunpack.c.l.b16 %v542
  %v3030 = vunpack.c.l.b16 %v543
  %v3031 = vunpack.c.l.b16 %v544
  %v3032 = vunpack.c.l.b16 %v545
  %v3033 = vunpack.c.l.b16 %v546
  %v3034 = vunpack.c.l.b16 %v547
  %v3035 = vunpack.c.l.b16 %v548
  %v3036 = vunpack.c.l.b16 %v549
  %v3037 = vunpack.c.l.b16 %v550
  %v3038 = vunpack.c.l.b16 %v551
  %v3039 = vunpack.c.l.b16 %v552
  %v3040 = vunpack.c.l.b16 %v553
  %v3041 = vunpack.c.l.b16 %v554
  %v3042 = vunpack.c.l.b16 %v555
  %v3043 = vunpack.c.l.b16 %v556
  %v3044 = vunpack.c.l.b16 %v557
  %v3045 = vunpack.c.l.b16 %v558
  %v3046 = vunpack.c.l.b16 %v559
  %v3047 = vunpack.c.l.b16 %v560
  %v3048 = vunpack.c.l.b16 %v561
  %v3049 = vunpack.c.l.b16 %v562
  %v3050 = vunpack.c.l.b16 %v563
  %v3051 = vunpack.c.l.b16 %v564
  %v3052 = vunpack.c.l.b16 %v565
  %v3053 = vunpack.c.l.b16 %v566
  %v3054 = vunpack.c.l.b16 %v567
  %v3055 = vunpack.c.l.b16 %v568
  %v3056 = vunpack.c.l.b16 %v569
  %v3057 = vunpack.c.l.b16 %v570
  %v3058 = vunpack.c.l.b16 %v571
  %v3059 = vunpack.c.l.b16 %v572
  %v3060 = vunpack.c.l.b16 %v573
  %v3061 = vunpack.c.l.b16 %v574
  %v3062 = vunpack.c.l.b16 %v575
  %v3063 = vunpack.c.l.b16 %v576
  %v3064 = vunpack.c.l.b16 %v577
  %v3065 = vunpack.c.l.b16 %v578
  %v3066 = vunpack.c.l.b16 %v579
  %v3067 = vunpack.c.l.b16 %v580
  %v3068 = vunpack.c.l.b16 %v581
  %v3069 = vunpack.c.l.b16 %v582
  %v3070 = vunpack.c.l.b16 %v583
  %v3071 = vunpack.c.l.b16 %v584
  %v3072 = vunpack.c.l.b16 %v585
  %v3073 = vunpack.c.l.b16 %v586
  %v3074 = vunpack.c.l.b16 %v587
  %v3075 = vunpack.c.l.b16 %v588
  %v3076 = vunpack.c.l.b16 %v589
  %v3077 = vunpack.c.l.b16 %v590
  %v3078 = vunpack.c.l.b16 %v591
  %v3079 = vunpack.c.l.b16 %v592
  %v3080 = vunpack.c.l.b16 %v593
  %v3081 = vunpack.c.l.b16 %v594
  %v3082 = vunpack.c.l.b16 %v595
  %v3083 = vunpack.c.l.b16 %v596
  %v3084 = vunpack.c.l.b16 %v597
  %v3085 = vunpack.c.l.b16 %v598
  %v3086 = vunpack.c.l.b16 %v599
  %v3087 = vunpack.c.l.b16 %v600
  %v3088 = vunpack.c.l.b16 %v601
  %v3089 = vunpack.c.l.b16 %v602
  %v3090 = vunpack.c.l.b16 %v603
  %v3091 = vunpack.c.l.b16 %v604
  %v3092 = vunpack.c.l.b16 %v605
  %v3093 = vunpack.c.l.b16 %v606
  %v3094 = vunpack.c.l.b16 %v607
  %v3095 = vunpack.c.l.b16 %v608
  %v3096 = vunpack.c.l.b16 %v609
  %v3097 = vunpack.c.l.b16 %v610
  %v3098 = vunpack.c.l.b16 %v611
  %v3099 = vunpack.c.l.b16 %v612
  %v3100 = vunpack.c.l.b16 %v613
  %v3101 = vunpack.c.l.b16 %v614
  %v3102 = vunpack.c.l.b16 %v615
  %v3103 = vunpack.c.l.b16 %v616
  %v3104 = vunpack.c.l.b16 %v617
  %v3105 = vunpack.c.l.b16 %v618
  %v3106 = vunpack.c.l.b16 %v619
  %v3107 = vunpack.c.l.b16 %v620
  %v3108 = vunpack.c.l.b16 %v621
  %v3109 = vunpack.c.l.b16 %v622
  %v3110 = vunpack.c.l.b16 %v623
  %v3111 = vunpack.c.l.b16 %v624
  %v3112 = vunpack.c.l.b16 %v625
  %v3113 = vunpack.c.l.b16 %v626
  %v3114 = vunpack.c.l.b16 %v627
  %v3115 = vunpack.c.l.b16 %v628
  %v3116 = vunpack.c.l.b16 %v629
  %v3117 = vunpack.c.l.b16 %v630
  %v3118 = vunpack.c.l.b16 %v631
  %v3119 = vunpack.c.l.b16 %v632
  %v3120 = vunpack.c.l.b16 %v633
  %v3121 = vunpack.c.l.b16 %v634
  %v3122 = vunpack.c.l.b16 %v635
  %v3123 = vunpack.c.l.b16 %v636
  %v3124 = vunpack.c.l.b16 %v637
  %v3125 = vunpack.c.l.b16 %v638
  %v3126 = vunpack.c.l.b16 %v639
  %v3127 = vunpack.c.l.b16 %v640
  %v3128 = vunpack.c.l.b16 %v641
  %v3129 = vunpack.c.l.b16 %v642
  %v3130 = vunpack.c.l.b16 %v643
  %v3131 = vunpack.c.l.b16 %v644
  %v3132 = vunpack.c.l.b16 %v645
  %v3133 = vunpack.c.l.b16 %v646
  %v3134 = vunpack.c.l.b16 %v647
  %v3135 = vunpack.c.l.b16 %v648
  %v3136 = vunpack.c.l.b16 %v649
  %v3137 = vunpack.c.l.b16 %v650
  %v3138 = vunpack.c.l.b16 %v651
  %v3139 = vunpack.c.l.b16 %v652
  %v3140 = vunpack.c.l.b16 %v653
  %v3141 = vunpack.c.l.b16 %v654
  %v3142 = vunpack.c.l.b16 %v655
  %v3143 = vunpack.c.l.b16 %v656
  %v3144 = vunpack.c.l.b16 %v657
  %v3145 = vunpack.c.l.b16 %v658
  %v3146 = vunpack.c.l.b16 %v659
  %v3147 = vunpack.c.l.b16 %v660
  %v3148 = vunpack.c.l.b16 %v661
  %v3149 = vunpack.c.l.b16 %v662
  %v3150 = vpack.c.b16 %v2951, %v2950
  %v3151 = vpack.c.b16 %v2953, %v2952
  %v3152 = vpack.c.b16 %v2955, %v2954
  %v3153 = vpack.c.b16 %v2957, %v2956
  %v3154 = vpack.c.b16 %v2959, %v2958
  %v3155 = vpack.c.b16 %v2961, %v2960
  %v3156 = vpack.c.b16 %v2963, %v2962
  %v3157 = vpack.c.b16 %v2965, %v2964
  %v3158 = vpack.c.b16 %v2967, %v2966
  %v3159 = vpack.c.b16 %v2969, %v2968
  %v3160 = vpack.c.b16 %v2971, %v2970
  %v3161 = vpack.c.b16 %v2973, %v2972
  %v3162 = vpack.c.b16 %v2975, %v2974
  %v3163 = vpack.c.b16 %v2977, %v2976
  %v3164 = vpack.c.b16 %v2979, %v2978
  %v3165 = vpack.c.b16 %v2981, %v2980
  %v3166 = vpack.c.b16 %v2983, %v2982
  %v3167 = vpack.c.b16 %v2985, %v2984
  %v3168 = vpack.c.b16 %v2987, %v2986
  %v3169 = vpack.c.b16 %v2989, %v2988
  %v3170 = vpack.c.b16 %v2991, %v2990
  %v3171 = vpack.c.b16 %v2993, %v2992
  %v3172 = vpack.c.b16 %v2995, %v2994
  %v3173 = vpack.c.b16 %v2997, %v2996
  %v3174 = vpack.c.b16 %v2999, %v2998
  %v3175 = vpack.c.b16 %v3001, %v3000
  %v3176 = vpack.c.b16 %v3003, %v3002
  %v3177 = vpack.c.b16 %v3005, %v3004
  %v3178 = vpack.c.b16 %v3007, %v3006
  %v3179 = vpack.c.b16 %v3009, %v3008
  %v3180 = vpack.c.b16 %v3011, %v3010
  %v3181 = vpack.c.b16 %v3013, %v3012
  %v3182 = vpack.c.b16 %v3015, %v3014
  %v3183 = vpack.c.b16 %v3017, %v3016
  %v3184 = vpack.c.b16 %v3019, %v3018
  %v3185 = vpack.c.b16 %v3021, %v3020
  %v3186 = vpack.c.b16 %v3023, %v3022
  %v3187 = vpack.c.b16 %v3025, %v3024
  %v3188 = vpack.c.b16 %v3027, %v3026
  %v3189 = vpack.c.b16 %v3029, %v3028
  %v3190 = vpack.c.b16 %v3031, %v3030
  %v3191 = vpack.c.b16 %v3033, %v3032
  %v3192 = vpack.c.b16 %v3035, %v3034
  %v3193 = vpack.c.b16 %v3037, %v3036
  %v3194 = vpack.c.b16 %v3039, %v3038
  %v3195 = vpack.c.b16 %v3041, %v3040
  %v3196 = vpack.c.b16 %v3043, %v3042
  %v3197 = vpack.c.b16 %v3045, %v3044
  %v3198 = vpack.c.b16 %v3047, %v3046
  %v3199 = vpack.c.b16 %v3049, %v3048
  %v3200 = vpack.c.b16 %v3051, %v3050
  %v3201 = vpack.c.b16 %v3053, %v3052
  %v3202 = vpack.c.b16 %v3055, %v3054
  %v3203 = vpack.c.b16 %v3057, %v3056
  %v3204 = vpack.c.b16 %v3059, %v3058
  %v3205 = vpack.c.b16 %v3061, %v3060
  %v3206 = vpack.c.b16 %v3063, %v3062
  %v3207 = vpack.c.b16 %v3065, %v3064
  %v3208 = vpack.c.b16 %v3067, %v3066
  %v3209 = vpack.c.b16 %v3069, %v3068
  %v3210 = vpack.c.b16 %v3071, %v3070
  %v3211 = vpack.c.b16 %v3073, %v3072
  %v3212 = vpack.c.b16 %v3075, %v3074
  %v3213 = vpack.c.b16 %v3077, %v3076
  %v3214 = vpack.c.b16 %v3079, %v3078
  %v3215 = vpack.c.b16 %v3081, %v3080
  %v3216 = vpack.c.b16 %v3083, %v3082
  %v3217 = vpack.c.b16 %v3085, %v3084
  %v3218 = vpack.c.b16 %v3087, %v3086
  %v3219 = vpack.c.b16 %v3089, %v3088
  %v3220 = vpack.c.b16 %v3091, %v3090
  %v3221 = vpack.c.b16 %v3093, %v3092
  %v3222 = vpack.c.b16 %v3095, %v3094
  %v3223 = vpack.c.b16 %v3097, %v3096
  %v3224 = vpack.c.b16 %v3099, %v3098
  %v3225 = vpack.c.b16 %v3101, %v3100
  %v3226 = vpack.c.b16 %v3103, %v3102
  %v3227 = vpack.c.b16 %v3105, %v3104
  %v3228 = vpack.c.b16 %v3107, %v3106
  %v3229 = vpack.c.b16 %v3109, %v3108
  %v3230 = vpack.c.b16 %v3111, %v3110
  %v3231 = vpack.c.b16 %v3113, %v3112
  %v3232 = vpack.c.b16 %v3115, %v3114
  %v3233 = vpack.c.b16 %v3117, %v3116
  %v3234 = vpack.c.b16 %v3119, %v3118
  %v3235 = vpack.c.b16 %v3121, %v3120
  %v3236 = vpack.c.b16 %v3123, %v3122
  %v3237 = vpack.c.b16 %v3125, %v3124
  %v3238 = vpack.c.b16 %v3127, %v3126
  %v3239 = vpack.c.b16 %v3129, %v3128
  %v3240 = vpack.c.b16 %v3131, %v3130
  %v3241 = vpack.c.b16 %v3133, %v3132
  %v3242 = vpack.c.b16 %v3135, %v3134
  %v3243 = vpack.c.b16 %v3137, %v3136
  %v3244 = vpack.c.b16 %v3139, %v3138
  %v3245 = vpack.c.b16 %v3141, %v3140
  %v3246 = vpack.c.b16 %v3143, %v3142
  %v3247 = vpack.c.b16 %v3145, %v3144
  %v3248 = vpack.c.b16 %v3147, %v3146
  %v3249 = vpack.c.b16 %v3149, %v3148
  %vm3350 = vcmask 523264
  %v3352 = vsel %vm3350, %v1962, 0
  %v3355 = vsel %vm3350, %v1975, 0
  %v3358 = vsel %vm3350, %v1988, 0
  %v3361 = vsel %vm3350, %v2001, 0
  %v3364 = vsel %vm3350, %v2014, 0
  %v3367 = vsel %vm3350, %v2027, 0
  %v3370 = vsel %vm3350, %v2040, 0
  %v3373 = vsel %vm3350, %v2053, 0
  %v3376 = vsel %vm3350, %v2066, 0
  %v3379 = vsel %vm3350, %v2079, 0
  %v3382 = vsel %vm3350, %v2092, 0
  %v3385 = vsel %vm3350, %v2105, 0
  %v3388 = vsel %vm3350, %v2118, 0
  %v3391 = vsel %vm3350, %v2131, 0
  %v3394 = vsel %vm3350, %v2144, 0
  %v3397 = vsel %vm3350, %v2157, 0
  %v3400 = vsel %vm3350, %v2170, 0
  %v3403 = vsel %vm3350, %v2183, 0
  %v3406 = vsel %vm3350, %v2196, 0
  %v3409 = vsel %vm3350, %v2209, 0
  %v3412 = vsel %vm3350, %v2222, 0
  %v3415 = vsel %vm3350, %v2235, 0
  %v3418 = vsel %vm3350, %v2248, 0
  %v3421 = vsel %vm3350, %v2261, 0
  %v3424 = vsel %vm3350, %v2274, 0
  %v3427 = vsel %vm3350, %v2287, 0
  %v3430 = vsel %vm3350, %v2300, 0
  %v3433 = vsel %vm3350, %v2313, 0
  %v3436 = vsel %vm3350, %v2326, 0
  %v3439 = vsel %vm3350, %v2339, 0
  %v3442 = vsel %vm3350, %v2352, 0
  %v3445 = vsel %vm3350, %v2365, 0
  %3447 = vmatprep.subr.bf16.mxu0 0
  %3448 = vmatpush1.bf16.msra.mxu0 %v3157
  %3449 = vmatprep.subr.bf16.mxu0 0
  %3450 = vmatpush1.bf16.msra.mxu0 %v3156
  %3451 = vmatprep.subr.bf16.mxu0 0
  %3452 = vmatpush1.bf16.msra.mxu0 %v3155
  %3453 = vmatprep.subr.bf16.mxu0 0
  %3454 = vmatpush1.bf16.msra.mxu0 %v3154
  %3455 = vmatprep.subr.bf16.mxu0 0
  %3456 = vmatpush1.bf16.msra.mxu0 %v3153
  %3457 = vmatprep.subr.bf16.mxu0 0
  %3458 = vmatpush1.bf16.msra.mxu0 %v3152
  %3459 = vmatprep.subr.bf16.mxu0 0
  %3460 = vmatpush1.bf16.msra.mxu0 %v3151
  %3461 = vmatprep.subr.bf16.mxu0 0
  %3462 = vmatpush1.bf16.msra.mxu0 %v3150
  %3463 = vmatprep.subr.bf16.mxu0 0
  %3464 = vmatpush2.bf16.msra.mxu0 %v3165
  %3465 = vmatprep.subr.bf16.mxu0 0
  %3466 = vmatpush2.bf16.msra.mxu0 %v3164
  %3467 = vmatprep.subr.bf16.mxu0 0
  %3468 = vmatpush2.bf16.msra.mxu0 %v3163
  %3469 = vmatprep.subr.bf16.mxu0 0
  %3470 = vmatpush2.bf16.msra.mxu0 %v3162
  %3471 = vmatprep.subr.bf16.mxu0 0
  %3472 = vmatpush2.bf16.msra.mxu0 %v3161
  %3473 = vmatprep.subr.bf16.mxu0 0
  %3474 = vmatpush2.bf16.msra.mxu0 %v3160
  %3475 = vmatprep.subr.bf16.mxu0 0
  %3476 = vmatpush2.bf16.msra.mxu0 %v3159
  %3477 = vmatprep.subr.bf16.mxu0 0
  %3478 = vmatpush2.bf16.msra.mxu0 %v3158
  %3479 = vmatprep.mubr.bf16.mxu0 %v1951
  %3480 = vmatmul.mubr.bf16.gmra.mxu0 %v1950
  %v3481 = vpop.f32.mrf.mxu0
  %v3482 = vadd.f32 %v668, %v3481
  %v3483 = vpop.f32.mrf.mxu0
  %v3484 = vpop.f32.mrf.mxu0
  %v3485 = vadd.f32 %v668, %v3484
  %v3486 = vpop.f32.mrf.mxu0
  %3487 = vmatprep.mubr.bf16.mxu0 %v1964
  %3488 = vmatmul.mubr.bf16.gmra.mxu0 %v1963
  %v3489 = vpop.f32.mrf.mxu0
  %v3490 = vadd.f32 %v668, %v3489
  %v3491 = vpop.f32.mrf.mxu0
  %v3492 = vpop.f32.mrf.mxu0
  %v3493 = vadd.f32 %v668, %v3492
  %v3494 = vpop.f32.mrf.mxu0
  %3495 = vmatprep.mubr.bf16.mxu0 %v1977
  %3496 = vmatmul.mubr.bf16.gmra.mxu0 %v1976
  %v3497 = vpop.f32.mrf.mxu0
  %v3498 = vadd.f32 %v668, %v3497
  %v3499 = vpop.f32.mrf.mxu0
  %v3500 = vpop.f32.mrf.mxu0
  %v3501 = vadd.f32 %v668, %v3500
  %v3502 = vpop.f32.mrf.mxu0
  %3503 = vmatprep.mubr.bf16.mxu0 %v1990
  %3504 = vmatmul.mubr.bf16.gmra.mxu0 %v1989
  %v3505 = vpop.f32.mrf.mxu0
  %v3506 = vadd.f32 %v668, %v3505
  %v3507 = vpop.f32.mrf.mxu0
  %v3508 = vpop.f32.mrf.mxu0
  %v3509 = vadd.f32 %v668, %v3508
  %v3510 = vpop.f32.mrf.mxu0
  %3511 = vmatprep.mubr.bf16.mxu0 %v2003
  %3512 = vmatmul.mubr.bf16.gmra.mxu0 %v2002
  %v3513 = vpop.f32.mrf.mxu0
  %v3514 = vadd.f32 %v668, %v3513
  %v3515 = vpop.f32.mrf.mxu0
  %v3516 = vpop.f32.mrf.mxu0
  %v3517 = vadd.f32 %v668, %v3516
  %v3518 = vpop.f32.mrf.mxu0
  %3519 = vmatprep.mubr.bf16.mxu0 %v2016
  %3520 = vmatmul.mubr.bf16.gmra.mxu0 %v2015
  %v3521 = vpop.f32.mrf.mxu0
  %v3522 = vadd.f32 %v668, %v3521
  %v3523 = vpop.f32.mrf.mxu0
  %v3524 = vpop.f32.mrf.mxu0
  %v3525 = vadd.f32 %v668, %v3524
  %v3526 = vpop.f32.mrf.mxu0
  %3527 = vmatprep.mubr.bf16.mxu0 %v2029
  %3528 = vmatmul.mubr.bf16.gmra.mxu0 %v2028
  %v3529 = vpop.f32.mrf.mxu0
  %v3530 = vadd.f32 %v668, %v3529
  %v3531 = vpop.f32.mrf.mxu0
  %v3532 = vpop.f32.mrf.mxu0
  %v3533 = vadd.f32 %v668, %v3532
  %v3534 = vpop.f32.mrf.mxu0
  %3535 = vmatprep.mubr.bf16.mxu0 %v2042
  %3536 = vmatmul.mubr.bf16.gmra.mxu0 %v2041
  %v3537 = vpop.f32.mrf.mxu0
  %v3538 = vadd.f32 %v668, %v3537
  %v3539 = vpop.f32.mrf.mxu0
  %v3540 = vpop.f32.mrf.mxu0
  %v3541 = vadd.f32 %v668, %v3540
  %v3542 = vpop.f32.mrf.mxu0
  %3543 = vmatprep.mubr.bf16.mxu0 %v2055
  %3544 = vmatmul.mubr.bf16.gmra.mxu0 %v2054
  %v3545 = vpop.f32.mrf.mxu0
  %v3546 = vadd.f32 %v668, %v3545
  %v3547 = vpop.f32.mrf.mxu0
  %v3548 = vpop.f32.mrf.mxu0
  %v3549 = vadd.f32 %v668, %v3548
  %v3550 = vpop.f32.mrf.mxu0
  %3551 = vmatprep.mubr.bf16.mxu0 %v2068
  %3552 = vmatmul.mubr.bf16.gmra.mxu0 %v2067
  %v3553 = vpop.f32.mrf.mxu0
  %v3554 = vadd.f32 %v668, %v3553
  %v3555 = vpop.f32.mrf.mxu0
  %v3556 = vpop.f32.mrf.mxu0
  %v3557 = vadd.f32 %v668, %v3556
  %v3558 = vpop.f32.mrf.mxu0
  %3559 = vmatprep.mubr.bf16.mxu0 %v2081
  %3560 = vmatmul.mubr.bf16.gmra.mxu0 %v2080
  %v3561 = vpop.f32.mrf.mxu0
  %v3562 = vadd.f32 %v668, %v3561
  %v3563 = vpop.f32.mrf.mxu0
  %v3564 = vpop.f32.mrf.mxu0
  %v3565 = vadd.f32 %v668, %v3564
  %v3566 = vpop.f32.mrf.mxu0
  %3567 = vmatprep.mubr.bf16.mxu0 %v2094
  %3568 = vmatmul.mubr.bf16.gmra.mxu0 %v2093
  %v3569 = vpop.f32.mrf.mxu0
  %v3570 = vadd.f32 %v668, %v3569
  %v3571 = vpop.f32.mrf.mxu0
  %v3572 = vpop.f32.mrf.mxu0
  %v3573 = vadd.f32 %v668, %v3572
  %v3574 = vpop.f32.mrf.mxu0
  %3575 = vmatprep.mubr.bf16.mxu0 %v2107
  %3576 = vmatmul.mubr.bf16.gmra.mxu0 %v2106
  %v3577 = vpop.f32.mrf.mxu0
  %v3578 = vadd.f32 %v668, %v3577
  %v3579 = vpop.f32.mrf.mxu0
  %v3580 = vpop.f32.mrf.mxu0
  %v3581 = vadd.f32 %v668, %v3580
  %v3582 = vpop.f32.mrf.mxu0
  %3583 = vmatprep.mubr.bf16.mxu0 %v2120
  %3584 = vmatmul.mubr.bf16.gmra.mxu0 %v2119
  %v3585 = vpop.f32.mrf.mxu0
  %v3586 = vadd.f32 %v668, %v3585
  %v3587 = vpop.f32.mrf.mxu0
  %v3588 = vpop.f32.mrf.mxu0
  %v3589 = vadd.f32 %v668, %v3588
  %v3590 = vpop.f32.mrf.mxu0
  %3591 = vmatprep.mubr.bf16.mxu0 %v2133
  %3592 = vmatmul.mubr.bf16.gmra.mxu0 %v2132
  %v3593 = vpop.f32.mrf.mxu0
  %v3594 = vadd.f32 %v668, %v3593
  %v3595 = vpop.f32.mrf.mxu0
  %v3596 = vpop.f32.mrf.mxu0
  %v3597 = vadd.f32 %v668, %v3596
  %v3598 = vpop.f32.mrf.mxu0
  %3599 = vmatprep.mubr.bf16.mxu0 %v2146
  %3600 = vmatmul.mubr.bf16.gmra.mxu0 %v2145
  %v3601 = vpop.f32.mrf.mxu0
  %v3602 = vadd.f32 %v668, %v3601
  %v3603 = vpop.f32.mrf.mxu0
  %v3604 = vpop.f32.mrf.mxu0
  %v3605 = vadd.f32 %v668, %v3604
  %v3606 = vpop.f32.mrf.mxu0
  %3607 = vmatprep.mubr.bf16.mxu0 %v2159
  %3608 = vmatmul.mubr.bf16.gmra.mxu0 %v2158
  %v3609 = vpop.f32.mrf.mxu0
  %v3610 = vadd.f32 %v668, %v3609
  %v3611 = vpop.f32.mrf.mxu0
  %v3612 = vpop.f32.mrf.mxu0
  %v3613 = vadd.f32 %v668, %v3612
  %v3614 = vpop.f32.mrf.mxu0
  %3615 = vmatprep.mubr.bf16.mxu0 %v2172
  %3616 = vmatmul.mubr.bf16.gmra.mxu0 %v2171
  %v3617 = vpop.f32.mrf.mxu0
  %v3618 = vadd.f32 %v668, %v3617
  %v3619 = vpop.f32.mrf.mxu0
  %v3620 = vpop.f32.mrf.mxu0
  %v3621 = vadd.f32 %v668, %v3620
  %v3622 = vpop.f32.mrf.mxu0
  %3623 = vmatprep.mubr.bf16.mxu0 %v2185
  %3624 = vmatmul.mubr.bf16.gmra.mxu0 %v2184
  %v3625 = vpop.f32.mrf.mxu0
  %v3626 = vadd.f32 %v668, %v3625
  %v3627 = vpop.f32.mrf.mxu0
  %v3628 = vpop.f32.mrf.mxu0
  %v3629 = vadd.f32 %v668, %v3628
  %v3630 = vpop.f32.mrf.mxu0
  %3631 = vmatprep.mubr.bf16.mxu0 %v2198
  %3632 = vmatmul.mubr.bf16.gmra.mxu0 %v2197
  %v3633 = vpop.f32.mrf.mxu0
  %v3634 = vadd.f32 %v668, %v3633
  %v3635 = vpop.f32.mrf.mxu0
  %v3636 = vpop.f32.mrf.mxu0
  %v3637 = vadd.f32 %v668, %v3636
  %v3638 = vpop.f32.mrf.mxu0
  %3639 = vmatprep.mubr.bf16.mxu0 %v2211
  %3640 = vmatmul.mubr.bf16.gmra.mxu0 %v2210
  %v3641 = vpop.f32.mrf.mxu0
  %v3642 = vadd.f32 %v668, %v3641
  %v3643 = vpop.f32.mrf.mxu0
  %v3644 = vpop.f32.mrf.mxu0
  %v3645 = vadd.f32 %v668, %v3644
  %v3646 = vpop.f32.mrf.mxu0
  %3647 = vmatprep.mubr.bf16.mxu0 %v2224
  %3648 = vmatmul.mubr.bf16.gmra.mxu0 %v2223
  %v3649 = vpop.f32.mrf.mxu0
  %v3650 = vadd.f32 %v668, %v3649
  %v3651 = vpop.f32.mrf.mxu0
  %v3652 = vpop.f32.mrf.mxu0
  %v3653 = vadd.f32 %v668, %v3652
  %v3654 = vpop.f32.mrf.mxu0
  %3655 = vmatprep.mubr.bf16.mxu0 %v2237
  %3656 = vmatmul.mubr.bf16.gmra.mxu0 %v2236
  %v3657 = vpop.f32.mrf.mxu0
  %v3658 = vadd.f32 %v668, %v3657
  %v3659 = vpop.f32.mrf.mxu0
  %v3660 = vpop.f32.mrf.mxu0
  %v3661 = vadd.f32 %v668, %v3660
  %v3662 = vpop.f32.mrf.mxu0
  %3663 = vmatprep.mubr.bf16.mxu0 %v2250
  %3664 = vmatmul.mubr.bf16.gmra.mxu0 %v2249
  %v3665 = vpop.f32.mrf.mxu0
  %v3666 = vadd.f32 %v668, %v3665
  %v3667 = vpop.f32.mrf.mxu0
  %v3668 = vpop.f32.mrf.mxu0
  %v3669 = vadd.f32 %v668, %v3668
  %v3670 = vpop.f32.mrf.mxu0
  %3671 = vmatprep.mubr.bf16.mxu0 %v2263
  %3672 = vmatmul.mubr.bf16.gmra.mxu0 %v2262
  %v3673 = vpop.f32.mrf.mxu0
  %v3674 = vadd.f32 %v668, %v3673
  %v3675 = vpop.f32.mrf.mxu0
  %v3676 = vpop.f32.mrf.mxu0
  %v3677 = vadd.f32 %v668, %v3676
  %v3678 = vpop.f32.mrf.mxu0
  %3679 = vmatprep.mubr.bf16.mxu0 %v2276
  %3680 = vmatmul.mubr.bf16.gmra.mxu0 %v2275
  %v3681 = vpop.f32.mrf.mxu0
  %v3682 = vadd.f32 %v668, %v3681
  %v3683 = vpop.f32.mrf.mxu0
  %v3684 = vpop.f32.mrf.mxu0
  %v3685 = vadd.f32 %v668, %v3684
  %v3686 = vpop.f32.mrf.mxu0
  %3687 = vmatprep.mubr.bf16.mxu0 %v2289
  %3688 = vmatmul.mubr.bf16.gmra.mxu0 %v2288
  %v3689 = vpop.f32.mrf.mxu0
  %v3690 = vadd.f32 %v668, %v3689
  %v3691 = vpop.f32.mrf.mxu0
  %v3692 = vpop.f32.mrf.mxu0
  %v3693 = vadd.f32 %v668, %v3692
  %v3694 = vpop.f32.mrf.mxu0
  %3695 = vmatprep.mubr.bf16.mxu0 %v2302
  %3696 = vmatmul.mubr.bf16.gmra.mxu0 %v2301
  %v3697 = vpop.f32.mrf.mxu0
  %v3698 = vadd.f32 %v668, %v3697
  %v3699 = vpop.f32.mrf.mxu0
  %v3700 = vpop.f32.mrf.mxu0
  %v3701 = vadd.f32 %v668, %v3700
  %v3702 = vpop.f32.mrf.mxu0
  %3703 = vmatprep.mubr.bf16.mxu0 %v2315
  %3704 = vmatmul.mubr.bf16.gmra.mxu0 %v2314
  %v3705 = vpop.f32.mrf.mxu0
  %v3706 = vadd.f32 %v668, %v3705
  %v3707 = vpop.f32.mrf.mxu0
  %v3708 = vpop.f32.mrf.mxu0
  %v3709 = vadd.f32 %v668, %v3708
  %v3710 = vpop.f32.mrf.mxu0
  %3711 = vmatprep.mubr.bf16.mxu0 %v2328
  %3712 = vmatmul.mubr.bf16.gmra.mxu0 %v2327
  %v3713 = vpop.f32.mrf.mxu0
  %v3714 = vadd.f32 %v668, %v3713
  %v3715 = vpop.f32.mrf.mxu0
  %v3716 = vpop.f32.mrf.mxu0
  %v3717 = vadd.f32 %v668, %v3716
  %v3718 = vpop.f32.mrf.mxu0
  %3719 = vmatprep.mubr.bf16.mxu0 %v2341
  %3720 = vmatmul.mubr.bf16.gmra.mxu0 %v2340
  %v3721 = vpop.f32.mrf.mxu0
  %v3722 = vadd.f32 %v668, %v3721
  %v3723 = vpop.f32.mrf.mxu0
  %v3724 = vpop.f32.mrf.mxu0
  %v3725 = vadd.f32 %v668, %v3724
  %v3726 = vpop.f32.mrf.mxu0
  %3727 = vmatprep.mubr.bf16.mxu0 %v2354
  %3728 = vmatmul.mubr.bf16.gmra.mxu0 %v2353
  %v3729 = vpop.f32.mrf.mxu0
  %v3730 = vadd.f32 %v668, %v3729
  %v3731 = vpop.f32.mrf.mxu0
  %v3732 = vpop.f32.mrf.mxu0
  %v3733 = vadd.f32 %v668, %v3732
  %v3734 = vpop.f32.mrf.mxu0
  %3735 = vdwg.mxu0
  %3736 = vmatprep.subr.bf16.mxu0 0
  %3737 = vmatpush1.bf16.msra.mxu0 %v3173
  %3738 = vmatprep.subr.bf16.mxu0 0
  %3739 = vmatpush1.bf16.msra.mxu0 %v3172
  %3740 = vmatprep.subr.bf16.mxu0 0
  %3741 = vmatpush1.bf16.msra.mxu0 %v3171
  %3742 = vmatprep.subr.bf16.mxu0 0
  %3743 = vmatpush1.bf16.msra.mxu0 %v3170
  %3744 = vmatprep.subr.bf16.mxu0 0
  %3745 = vmatpush1.bf16.msra.mxu0 %v3169
  %3746 = vmatprep.subr.bf16.mxu0 0
  %3747 = vmatpush1.bf16.msra.mxu0 %v3168
  %3748 = vmatprep.subr.bf16.mxu0 0
  %3749 = vmatpush1.bf16.msra.mxu0 %v3167
  %3750 = vmatprep.subr.bf16.mxu0 0
  %3751 = vmatpush1.bf16.msra.mxu0 %v3166
  %3752 = vmatprep.subr.bf16.mxu0 0
  %3753 = vmatpush2.bf16.msra.mxu0 %v3181
  %3754 = vmatprep.subr.bf16.mxu0 0
  %3755 = vmatpush2.bf16.msra.mxu0 %v3180
  %3756 = vmatprep.subr.bf16.mxu0 0
  %3757 = vmatpush2.bf16.msra.mxu0 %v3179
  %3758 = vmatprep.subr.bf16.mxu0 0
  %3759 = vmatpush2.bf16.msra.mxu0 %v3178
  %3760 = vmatprep.subr.bf16.mxu0 0
  %3761 = vmatpush2.bf16.msra.mxu0 %v3177
  %3762 = vmatprep.subr.bf16.mxu0 0
  %3763 = vmatpush2.bf16.msra.mxu0 %v3176
  %3764 = vmatprep.subr.bf16.mxu0 0
  %3765 = vmatpush2.bf16.msra.mxu0 %v3175
  %3766 = vmatprep.subr.bf16.mxu0 0
  %3767 = vmatpush2.bf16.msra.mxu0 %v3174
  %3768 = vmatprep.mubr.bf16.mxu0 %v1953
  %3769 = vmatmul.mubr.bf16.gmra.mxu0 %v1952
  %v3770 = vpop.f32.mrf.mxu0
  %v3771 = vadd.f32 %v3482, %v3770
  %v3772 = vpop.f32.mrf.mxu0
  %v3773 = vpop.f32.mrf.mxu0
  %v3774 = vadd.f32 %v3485, %v3773
  %v3775 = vpop.f32.mrf.mxu0
  %3776 = vmatprep.mubr.bf16.mxu0 %v1966
  %3777 = vmatmul.mubr.bf16.gmra.mxu0 %v1965
  %v3778 = vpop.f32.mrf.mxu0
  %v3779 = vadd.f32 %v3490, %v3778
  %v3780 = vpop.f32.mrf.mxu0
  %v3781 = vpop.f32.mrf.mxu0
  %v3782 = vadd.f32 %v3493, %v3781
  %v3783 = vpop.f32.mrf.mxu0
  %3784 = vmatprep.mubr.bf16.mxu0 %v1979
  %3785 = vmatmul.mubr.bf16.gmra.mxu0 %v1978
  %v3786 = vpop.f32.mrf.mxu0
  %v3787 = vadd.f32 %v3498, %v3786
  %v3788 = vpop.f32.mrf.mxu0
  %v3789 = vpop.f32.mrf.mxu0
  %v3790 = vadd.f32 %v3501, %v3789
  %v3791 = vpop.f32.mrf.mxu0
  %3792 = vmatprep.mubr.bf16.mxu0 %v1992
  %3793 = vmatmul.mubr.bf16.gmra.mxu0 %v1991
  %v3794 = vpop.f32.mrf.mxu0
  %v3795 = vadd.f32 %v3506, %v3794
  %v3796 = vpop.f32.mrf.mxu0
  %v3797 = vpop.f32.mrf.mxu0
  %v3798 = vadd.f32 %v3509, %v3797
  %v3799 = vpop.f32.mrf.mxu0
  %3800 = vmatprep.mubr.bf16.mxu0 %v2005
  %3801 = vmatmul.mubr.bf16.gmra.mxu0 %v2004
  %v3802 = vpop.f32.mrf.mxu0
  %v3803 = vadd.f32 %v3514, %v3802
  %v3804 = vpop.f32.mrf.mxu0
  %v3805 = vpop.f32.mrf.mxu0
  %v3806 = vadd.f32 %v3517, %v3805
  %v3807 = vpop.f32.mrf.mxu0
  %3808 = vmatprep.mubr.bf16.mxu0 %v2018
  %3809 = vmatmul.mubr.bf16.gmra.mxu0 %v2017
  %v3810 = vpop.f32.mrf.mxu0
  %v3811 = vadd.f32 %v3522, %v3810
  %v3812 = vpop.f32.mrf.mxu0
  %v3813 = vpop.f32.mrf.mxu0
  %v3814 = vadd.f32 %v3525, %v3813
  %v3815 = vpop.f32.mrf.mxu0
  %3816 = vmatprep.mubr.bf16.mxu0 %v2031
  %3817 = vmatmul.mubr.bf16.gmra.mxu0 %v2030
  %v3818 = vpop.f32.mrf.mxu0
  %v3819 = vadd.f32 %v3530, %v3818
  %v3820 = vpop.f32.mrf.mxu0
  %v3821 = vpop.f32.mrf.mxu0
  %v3822 = vadd.f32 %v3533, %v3821
  %v3823 = vpop.f32.mrf.mxu0
  %3824 = vmatprep.mubr.bf16.mxu0 %v2044
  %3825 = vmatmul.mubr.bf16.gmra.mxu0 %v2043
  %v3826 = vpop.f32.mrf.mxu0
  %v3827 = vadd.f32 %v3538, %v3826
  %v3828 = vpop.f32.mrf.mxu0
  %v3829 = vpop.f32.mrf.mxu0
  %v3830 = vadd.f32 %v3541, %v3829
  %v3831 = vpop.f32.mrf.mxu0
  %3832 = vmatprep.mubr.bf16.mxu0 %v2057
  %3833 = vmatmul.mubr.bf16.gmra.mxu0 %v2056
  %v3834 = vpop.f32.mrf.mxu0
  %v3835 = vadd.f32 %v3546, %v3834
  %v3836 = vpop.f32.mrf.mxu0
  %v3837 = vpop.f32.mrf.mxu0
  %v3838 = vadd.f32 %v3549, %v3837
  %v3839 = vpop.f32.mrf.mxu0
  %3840 = vmatprep.mubr.bf16.mxu0 %v2070
  %3841 = vmatmul.mubr.bf16.gmra.mxu0 %v2069
  %v3842 = vpop.f32.mrf.mxu0
  %v3843 = vadd.f32 %v3554, %v3842
  %v3844 = vpop.f32.mrf.mxu0
  %v3845 = vpop.f32.mrf.mxu0
  %v3846 = vadd.f32 %v3557, %v3845
  %v3847 = vpop.f32.mrf.mxu0
  %3848 = vmatprep.mubr.bf16.mxu0 %v2083
  %3849 = vmatmul.mubr.bf16.gmra.mxu0 %v2082
  %v3850 = vpop.f32.mrf.mxu0
  %v3851 = vadd.f32 %v3562, %v3850
  %v3852 = vpop.f32.mrf.mxu0
  %v3853 = vpop.f32.mrf.mxu0
  %v3854 = vadd.f32 %v3565, %v3853
  %v3855 = vpop.f32.mrf.mxu0
  %3856 = vmatprep.mubr.bf16.mxu0 %v2096
  %3857 = vmatmul.mubr.bf16.gmra.mxu0 %v2095
  %v3858 = vpop.f32.mrf.mxu0
  %v3859 = vadd.f32 %v3570, %v3858
  %v3860 = vpop.f32.mrf.mxu0
  %v3861 = vpop.f32.mrf.mxu0
  %v3862 = vadd.f32 %v3573, %v3861
  %v3863 = vpop.f32.mrf.mxu0
  %3864 = vmatprep.mubr.bf16.mxu0 %v2109
  %3865 = vmatmul.mubr.bf16.gmra.mxu0 %v2108
  %v3866 = vpop.f32.mrf.mxu0
  %v3867 = vadd.f32 %v3578, %v3866
  %v3868 = vpop.f32.mrf.mxu0
  %v3869 = vpop.f32.mrf.mxu0
  %v3870 = vadd.f32 %v3581, %v3869
  %v3871 = vpop.f32.mrf.mxu0
  %3872 = vmatprep.mubr.bf16.mxu0 %v2122
  %3873 = vmatmul.mubr.bf16.gmra.mxu0 %v2121
  %v3874 = vpop.f32.mrf.mxu0
  %v3875 = vadd.f32 %v3586, %v3874
  %v3876 = vpop.f32.mrf.mxu0
  %v3877 = vpop.f32.mrf.mxu0
  %v3878 = vadd.f32 %v3589, %v3877
  %v3879 = vpop.f32.mrf.mxu0
  %3880 = vmatprep.mubr.bf16.mxu0 %v2135
  %3881 = vmatmul.mubr.bf16.gmra.mxu0 %v2134
  %v3882 = vpop.f32.mrf.mxu0
  %v3883 = vadd.f32 %v3594, %v3882
  %v3884 = vpop.f32.mrf.mxu0
  %v3885 = vpop.f32.mrf.mxu0
  %v3886 = vadd.f32 %v3597, %v3885
  %v3887 = vpop.f32.mrf.mxu0
  %3888 = vmatprep.mubr.bf16.mxu0 %v2148
  %3889 = vmatmul.mubr.bf16.gmra.mxu0 %v2147
  %v3890 = vpop.f32.mrf.mxu0
  %v3891 = vadd.f32 %v3602, %v3890
  %v3892 = vpop.f32.mrf.mxu0
  %v3893 = vpop.f32.mrf.mxu0
  %v3894 = vadd.f32 %v3605, %v3893
  %v3895 = vpop.f32.mrf.mxu0
  %3896 = vmatprep.mubr.bf16.mxu0 %v2161
  %3897 = vmatmul.mubr.bf16.gmra.mxu0 %v2160
  %v3898 = vpop.f32.mrf.mxu0
  %v3899 = vadd.f32 %v3610, %v3898
  %v3900 = vpop.f32.mrf.mxu0
  %v3901 = vpop.f32.mrf.mxu0
  %v3902 = vadd.f32 %v3613, %v3901
  %v3903 = vpop.f32.mrf.mxu0
  %3904 = vmatprep.mubr.bf16.mxu0 %v2174
  %3905 = vmatmul.mubr.bf16.gmra.mxu0 %v2173
  %v3906 = vpop.f32.mrf.mxu0
  %v3907 = vadd.f32 %v3618, %v3906
  %v3908 = vpop.f32.mrf.mxu0
  %v3909 = vpop.f32.mrf.mxu0
  %v3910 = vadd.f32 %v3621, %v3909
  %v3911 = vpop.f32.mrf.mxu0
  %3912 = vmatprep.mubr.bf16.mxu0 %v2187
  %3913 = vmatmul.mubr.bf16.gmra.mxu0 %v2186
  %v3914 = vpop.f32.mrf.mxu0
  %v3915 = vadd.f32 %v3626, %v3914
  %v3916 = vpop.f32.mrf.mxu0
  %v3917 = vpop.f32.mrf.mxu0
  %v3918 = vadd.f32 %v3629, %v3917
  %v3919 = vpop.f32.mrf.mxu0
  %3920 = vmatprep.mubr.bf16.mxu0 %v2200
  %3921 = vmatmul.mubr.bf16.gmra.mxu0 %v2199
  %v3922 = vpop.f32.mrf.mxu0
  %v3923 = vadd.f32 %v3634, %v3922
  %v3924 = vpop.f32.mrf.mxu0
  %v3925 = vpop.f32.mrf.mxu0
  %v3926 = vadd.f32 %v3637, %v3925
  %v3927 = vpop.f32.mrf.mxu0
  %3928 = vmatprep.mubr.bf16.mxu0 %v2213
  %3929 = vmatmul.mubr.bf16.gmra.mxu0 %v2212
  %v3930 = vpop.f32.mrf.mxu0
  %v3931 = vadd.f32 %v3642, %v3930
  %v3932 = vpop.f32.mrf.mxu0
  %v3933 = vpop.f32.mrf.mxu0
  %v3934 = vadd.f32 %v3645, %v3933
  %v3935 = vpop.f32.mrf.mxu0
  %3936 = vmatprep.mubr.bf16.mxu0 %v2226
  %3937 = vmatmul.mubr.bf16.gmra.mxu0 %v2225
  %v3938 = vpop.f32.mrf.mxu0
  %v3939 = vadd.f32 %v3650, %v3938
  %v3940 = vpop.f32.mrf.mxu0
  %v3941 = vpop.f32.mrf.mxu0
  %v3942 = vadd.f32 %v3653, %v3941
  %v3943 = vpop.f32.mrf.mxu0
  %3944 = vmatprep.mubr.bf16.mxu0 %v2239
  %3945 = vmatmul.mubr.bf16.gmra.mxu0 %v2238
  %v3946 = vpop.f32.mrf.mxu0
  %v3947 = vadd.f32 %v3658, %v3946
  %v3948 = vpop.f32.mrf.mxu0
  %v3949 = vpop.f32.mrf.mxu0
  %v3950 = vadd.f32 %v3661, %v3949
  %v3951 = vpop.f32.mrf.mxu0
  %3952 = vmatprep.mubr.bf16.mxu0 %v2252
  %3953 = vmatmul.mubr.bf16.gmra.mxu0 %v2251
  %v3954 = vpop.f32.mrf.mxu0
  %v3955 = vadd.f32 %v3666, %v3954
  %v3956 = vpop.f32.mrf.mxu0
  %v3957 = vpop.f32.mrf.mxu0
  %v3958 = vadd.f32 %v3669, %v3957
  %v3959 = vpop.f32.mrf.mxu0
  %3960 = vmatprep.mubr.bf16.mxu0 %v2265
  %3961 = vmatmul.mubr.bf16.gmra.mxu0 %v2264
  %v3962 = vpop.f32.mrf.mxu0
  %v3963 = vadd.f32 %v3674, %v3962
  %v3964 = vpop.f32.mrf.mxu0
  %v3965 = vpop.f32.mrf.mxu0
  %v3966 = vadd.f32 %v3677, %v3965
  %v3967 = vpop.f32.mrf.mxu0
  %3968 = vmatprep.mubr.bf16.mxu0 %v2278
  %3969 = vmatmul.mubr.bf16.gmra.mxu0 %v2277
  %v3970 = vpop.f32.mrf.mxu0
  %v3971 = vadd.f32 %v3682, %v3970
  %v3972 = vpop.f32.mrf.mxu0
  %v3973 = vpop.f32.mrf.mxu0
  %v3974 = vadd.f32 %v3685, %v3973
  %v3975 = vpop.f32.mrf.mxu0
  %3976 = vmatprep.mubr.bf16.mxu0 %v2291
  %3977 = vmatmul.mubr.bf16.gmra.mxu0 %v2290
  %v3978 = vpop.f32.mrf.mxu0
  %v3979 = vadd.f32 %v3690, %v3978
  %v3980 = vpop.f32.mrf.mxu0
  %v3981 = vpop.f32.mrf.mxu0
  %v3982 = vadd.f32 %v3693, %v3981
  %v3983 = vpop.f32.mrf.mxu0
  %3984 = vmatprep.mubr.bf16.mxu0 %v2304
  %3985 = vmatmul.mubr.bf16.gmra.mxu0 %v2303
  %v3986 = vpop.f32.mrf.mxu0
  %v3987 = vadd.f32 %v3698, %v3986
  %v3988 = vpop.f32.mrf.mxu0
  %v3989 = vpop.f32.mrf.mxu0
  %v3990 = vadd.f32 %v3701, %v3989
  %v3991 = vpop.f32.mrf.mxu0
  %3992 = vmatprep.mubr.bf16.mxu0 %v2317
  %3993 = vmatmul.mubr.bf16.gmra.mxu0 %v2316
  %v3994 = vpop.f32.mrf.mxu0
  %v3995 = vadd.f32 %v3706, %v3994
  %v3996 = vpop.f32.mrf.mxu0
  %v3997 = vpop.f32.mrf.mxu0
  %v3998 = vadd.f32 %v3709, %v3997
  %v3999 = vpop.f32.mrf.mxu0
  %4000 = vmatprep.mubr.bf16.mxu0 %v2330
  %4001 = vmatmul.mubr.bf16.gmra.mxu0 %v2329
  %v4002 = vpop.f32.mrf.mxu0
  %v4003 = vadd.f32 %v3714, %v4002
  %v4004 = vpop.f32.mrf.mxu0
  %v4005 = vpop.f32.mrf.mxu0
  %v4006 = vadd.f32 %v3717, %v4005
  %v4007 = vpop.f32.mrf.mxu0
  %4008 = vmatprep.mubr.bf16.mxu0 %v2343
  %4009 = vmatmul.mubr.bf16.gmra.mxu0 %v2342
  %v4010 = vpop.f32.mrf.mxu0
  %v4011 = vadd.f32 %v3722, %v4010
  %v4012 = vpop.f32.mrf.mxu0
  %v4013 = vpop.f32.mrf.mxu0
  %v4014 = vadd.f32 %v3725, %v4013
  %v4015 = vpop.f32.mrf.mxu0
  %4016 = vmatprep.mubr.bf16.mxu0 %v2356
  %4017 = vmatmul.mubr.bf16.gmra.mxu0 %v2355
  %v4018 = vpop.f32.mrf.mxu0
  %v4019 = vadd.f32 %v3730, %v4018
  %v4020 = vpop.f32.mrf.mxu0
  %v4021 = vpop.f32.mrf.mxu0
  %v4022 = vadd.f32 %v3733, %v4021
  %v4023 = vpop.f32.mrf.mxu0
  %4024 = vdwg.mxu0
  %4025 = vmatprep.subr.bf16.mxu0 0
  %4026 = vmatpush1.bf16.msra.mxu0 %v3189
  %4027 = vmatprep.subr.bf16.mxu0 0
  %4028 = vmatpush1.bf16.msra.mxu0 %v3188
  %4029 = vmatprep.subr.bf16.mxu0 0
  %4030 = vmatpush1.bf16.msra.mxu0 %v3187
  %4031 = vmatprep.subr.bf16.mxu0 0
  %4032 = vmatpush1.bf16.msra.mxu0 %v3186
  %4033 = vmatprep.subr.bf16.mxu0 0
  %4034 = vmatpush1.bf16.msra.mxu0 %v3185
  %4035 = vmatprep.subr.bf16.mxu0 0
  %4036 = vmatpush1.bf16.msra.mxu0 %v3184
  %4037 = vmatprep.subr.bf16.mxu0 0
  %4038 = vmatpush1.bf16.msra.mxu0 %v3183
  %4039 = vmatprep.subr.bf16.mxu0 0
  %4040 = vmatpush1.bf16.msra.mxu0 %v3182
  %4041 = vmatprep.subr.bf16.mxu0 0
  %4042 = vmatpush2.bf16.msra.mxu0 %v3197
  %4043 = vmatprep.subr.bf16.mxu0 0
  %4044 = vmatpush2.bf16.msra.mxu0 %v3196
  %4045 = vmatprep.subr.bf16.mxu0 0
  %4046 = vmatpush2.bf16.msra.mxu0 %v3195
  %4047 = vmatprep.subr.bf16.mxu0 0
  %4048 = vmatpush2.bf16.msra.mxu0 %v3194
  %4049 = vmatprep.subr.bf16.mxu0 0
  %4050 = vmatpush2.bf16.msra.mxu0 %v3193
  %4051 = vmatprep.subr.bf16.mxu0 0
  %4052 = vmatpush2.bf16.msra.mxu0 %v3192
  %4053 = vmatprep.subr.bf16.mxu0 0
  %4054 = vmatpush2.bf16.msra.mxu0 %v3191
  %4055 = vmatprep.subr.bf16.mxu0 0
  %4056 = vmatpush2.bf16.msra.mxu0 %v3190
  %4057 = vmatprep.mubr.bf16.mxu0 %v1955
  %4058 = vmatmul.mubr.bf16.gmra.mxu0 %v1954
  %v4059 = vpop.f32.mrf.mxu0
  %v4060 = vadd.f32 %v3771, %v4059
  %v4061 = vpop.f32.mrf.mxu0
  %v4062 = vpop.f32.mrf.mxu0
  %v4063 = vadd.f32 %v3774, %v4062
  %v4064 = vpop.f32.mrf.mxu0
  %4065 = vmatprep.mubr.bf16.mxu0 %v1968
  %4066 = vmatmul.mubr.bf16.gmra.mxu0 %v1967
  %v4067 = vpop.f32.mrf.mxu0
  %v4068 = vadd.f32 %v3779, %v4067
  %v4069 = vpop.f32.mrf.mxu0
  %v4070 = vpop.f32.mrf.mxu0
  %v4071 = vadd.f32 %v3782, %v4070
  %v4072 = vpop.f32.mrf.mxu0
  %4073 = vmatprep.mubr.bf16.mxu0 %v1981
  %4074 = vmatmul.mubr.bf16.gmra.mxu0 %v1980
  %v4075 = vpop.f32.mrf.mxu0
  %v4076 = vadd.f32 %v3787, %v4075
  %v4077 = vpop.f32.mrf.mxu0
  %v4078 = vpop.f32.mrf.mxu0
  %v4079 = vadd.f32 %v3790, %v4078
  %v4080 = vpop.f32.mrf.mxu0
  %4081 = vmatprep.mubr.bf16.mxu0 %v1994
  %4082 = vmatmul.mubr.bf16.gmra.mxu0 %v1993
  %v4083 = vpop.f32.mrf.mxu0
  %v4084 = vadd.f32 %v3795, %v4083
  %v4085 = vpop.f32.mrf.mxu0
  %v4086 = vpop.f32.mrf.mxu0
  %v4087 = vadd.f32 %v3798, %v4086
  %v4088 = vpop.f32.mrf.mxu0
  %4089 = vmatprep.mubr.bf16.mxu0 %v2007
  %4090 = vmatmul.mubr.bf16.gmra.mxu0 %v2006
  %v4091 = vpop.f32.mrf.mxu0
  %v4092 = vadd.f32 %v3803, %v4091
  %v4093 = vpop.f32.mrf.mxu0
  %v4094 = vpop.f32.mrf.mxu0
  %v4095 = vadd.f32 %v3806, %v4094
  %v4096 = vpop.f32.mrf.mxu0
  %4097 = vmatprep.mubr.bf16.mxu0 %v2020
  %4098 = vmatmul.mubr.bf16.gmra.mxu0 %v2019
  %v4099 = vpop.f32.mrf.mxu0
  %v4100 = vadd.f32 %v3811, %v4099
  %v4101 = vpop.f32.mrf.mxu0
  %v4102 = vpop.f32.mrf.mxu0
  %v4103 = vadd.f32 %v3814, %v4102
  %v4104 = vpop.f32.mrf.mxu0
  %4105 = vmatprep.mubr.bf16.mxu0 %v2033
  %4106 = vmatmul.mubr.bf16.gmra.mxu0 %v2032
  %v4107 = vpop.f32.mrf.mxu0
  %v4108 = vadd.f32 %v3819, %v4107
  %v4109 = vpop.f32.mrf.mxu0
  %v4110 = vpop.f32.mrf.mxu0
  %v4111 = vadd.f32 %v3822, %v4110
  %v4112 = vpop.f32.mrf.mxu0
  %4113 = vmatprep.mubr.bf16.mxu0 %v2046
  %4114 = vmatmul.mubr.bf16.gmra.mxu0 %v2045
  %v4115 = vpop.f32.mrf.mxu0
  %v4116 = vadd.f32 %v3827, %v4115
  %v4117 = vpop.f32.mrf.mxu0
  %v4118 = vpop.f32.mrf.mxu0
  %v4119 = vadd.f32 %v3830, %v4118
  %v4120 = vpop.f32.mrf.mxu0
  %4121 = vmatprep.mubr.bf16.mxu0 %v2059
  %4122 = vmatmul.mubr.bf16.gmra.mxu0 %v2058
  %v4123 = vpop.f32.mrf.mxu0
  %v4124 = vadd.f32 %v3835, %v4123
  %v4125 = vpop.f32.mrf.mxu0
  %v4126 = vpop.f32.mrf.mxu0
  %v4127 = vadd.f32 %v3838, %v4126
  %v4128 = vpop.f32.mrf.mxu0
  %4129 = vmatprep.mubr.bf16.mxu0 %v2072
  %4130 = vmatmul.mubr.bf16.gmra.mxu0 %v2071
  %v4131 = vpop.f32.mrf.mxu0
  %v4132 = vadd.f32 %v3843, %v4131
  %v4133 = vpop.f32.mrf.mxu0
  %v4134 = vpop.f32.mrf.mxu0
  %v4135 = vadd.f32 %v3846, %v4134
  %v4136 = vpop.f32.mrf.mxu0
  %4137 = vmatprep.mubr.bf16.mxu0 %v2085
  %4138 = vmatmul.mubr.bf16.gmra.mxu0 %v2084
  %v4139 = vpop.f32.mrf.mxu0
  %v4140 = vadd.f32 %v3851, %v4139
  %v4141 = vpop.f32.mrf.mxu0
  %v4142 = vpop.f32.mrf.mxu0
  %v4143 = vadd.f32 %v3854, %v4142
  %v4144 = vpop.f32.mrf.mxu0
  %4145 = vmatprep.mubr.bf16.mxu0 %v2098
  %4146 = vmatmul.mubr.bf16.gmra.mxu0 %v2097
  %v4147 = vpop.f32.mrf.mxu0
  %v4148 = vadd.f32 %v3859, %v4147
  %v4149 = vpop.f32.mrf.mxu0
  %v4150 = vpop.f32.mrf.mxu0
  %v4151 = vadd.f32 %v3862, %v4150
  %v4152 = vpop.f32.mrf.mxu0
  %4153 = vmatprep.mubr.bf16.mxu0 %v2111
  %4154 = vmatmul.mubr.bf16.gmra.mxu0 %v2110
  %v4155 = vpop.f32.mrf.mxu0
  %v4156 = vadd.f32 %v3867, %v4155
  %v4157 = vpop.f32.mrf.mxu0
  %v4158 = vpop.f32.mrf.mxu0
  %v4159 = vadd.f32 %v3870, %v4158
  %v4160 = vpop.f32.mrf.mxu0
  %4161 = vmatprep.mubr.bf16.mxu0 %v2124
  %4162 = vmatmul.mubr.bf16.gmra.mxu0 %v2123
  %v4163 = vpop.f32.mrf.mxu0
  %v4164 = vadd.f32 %v3875, %v4163
  %v4165 = vpop.f32.mrf.mxu0
  %v4166 = vpop.f32.mrf.mxu0
  %v4167 = vadd.f32 %v3878, %v4166
  %v4168 = vpop.f32.mrf.mxu0
  %4169 = vmatprep.mubr.bf16.mxu0 %v2137
  %4170 = vmatmul.mubr.bf16.gmra.mxu0 %v2136
  %v4171 = vpop.f32.mrf.mxu0
  %v4172 = vadd.f32 %v3883, %v4171
  %v4173 = vpop.f32.mrf.mxu0
  %v4174 = vpop.f32.mrf.mxu0
  %v4175 = vadd.f32 %v3886, %v4174
  %v4176 = vpop.f32.mrf.mxu0
  %4177 = vmatprep.mubr.bf16.mxu0 %v2150
  %4178 = vmatmul.mubr.bf16.gmra.mxu0 %v2149
  %v4179 = vpop.f32.mrf.mxu0
  %v4180 = vadd.f32 %v3891, %v4179
  %v4181 = vpop.f32.mrf.mxu0
  %v4182 = vpop.f32.mrf.mxu0
  %v4183 = vadd.f32 %v3894, %v4182
  %v4184 = vpop.f32.mrf.mxu0
  %4185 = vmatprep.mubr.bf16.mxu0 %v2163
  %4186 = vmatmul.mubr.bf16.gmra.mxu0 %v2162
  %v4187 = vpop.f32.mrf.mxu0
  %v4188 = vadd.f32 %v3899, %v4187
  %v4189 = vpop.f32.mrf.mxu0
  %v4190 = vpop.f32.mrf.mxu0
  %v4191 = vadd.f32 %v3902, %v4190
  %v4192 = vpop.f32.mrf.mxu0
  %4193 = vmatprep.mubr.bf16.mxu0 %v2176
  %4194 = vmatmul.mubr.bf16.gmra.mxu0 %v2175
  %v4195 = vpop.f32.mrf.mxu0
  %v4196 = vadd.f32 %v3907, %v4195
  %v4197 = vpop.f32.mrf.mxu0
  %v4198 = vpop.f32.mrf.mxu0
  %v4199 = vadd.f32 %v3910, %v4198
  %v4200 = vpop.f32.mrf.mxu0
  %4201 = vmatprep.mubr.bf16.mxu0 %v2189
  %4202 = vmatmul.mubr.bf16.gmra.mxu0 %v2188
  %v4203 = vpop.f32.mrf.mxu0
  %v4204 = vadd.f32 %v3915, %v4203
  %v4205 = vpop.f32.mrf.mxu0
  %v4206 = vpop.f32.mrf.mxu0
  %v4207 = vadd.f32 %v3918, %v4206
  %v4208 = vpop.f32.mrf.mxu0
  %4209 = vmatprep.mubr.bf16.mxu0 %v2202
  %4210 = vmatmul.mubr.bf16.gmra.mxu0 %v2201
  %v4211 = vpop.f32.mrf.mxu0
  %v4212 = vadd.f32 %v3923, %v4211
  %v4213 = vpop.f32.mrf.mxu0
  %v4214 = vpop.f32.mrf.mxu0
  %v4215 = vadd.f32 %v3926, %v4214
  %v4216 = vpop.f32.mrf.mxu0
  %4217 = vmatprep.mubr.bf16.mxu0 %v2215
  %4218 = vmatmul.mubr.bf16.gmra.mxu0 %v2214
  %v4219 = vpop.f32.mrf.mxu0
  %v4220 = vadd.f32 %v3931, %v4219
  %v4221 = vpop.f32.mrf.mxu0
  %v4222 = vpop.f32.mrf.mxu0
  %v4223 = vadd.f32 %v3934, %v4222
  %v4224 = vpop.f32.mrf.mxu0
  %4225 = vmatprep.mubr.bf16.mxu0 %v2228
  %4226 = vmatmul.mubr.bf16.gmra.mxu0 %v2227
  %v4227 = vpop.f32.mrf.mxu0
  %v4228 = vadd.f32 %v3939, %v4227
  %v4229 = vpop.f32.mrf.mxu0
  %v4230 = vpop.f32.mrf.mxu0
  %v4231 = vadd.f32 %v3942, %v4230
  %v4232 = vpop.f32.mrf.mxu0
  %4233 = vmatprep.mubr.bf16.mxu0 %v2241
  %4234 = vmatmul.mubr.bf16.gmra.mxu0 %v2240
  %v4235 = vpop.f32.mrf.mxu0
  %v4236 = vadd.f32 %v3947, %v4235
  %v4237 = vpop.f32.mrf.mxu0
  %v4238 = vpop.f32.mrf.mxu0
  %v4239 = vadd.f32 %v3950, %v4238
  %v4240 = vpop.f32.mrf.mxu0
  %4241 = vmatprep.mubr.bf16.mxu0 %v2254
  %4242 = vmatmul.mubr.bf16.gmra.mxu0 %v2253
  %v4243 = vpop.f32.mrf.mxu0
  %v4244 = vadd.f32 %v3955, %v4243
  %v4245 = vpop.f32.mrf.mxu0
  %v4246 = vpop.f32.mrf.mxu0
  %v4247 = vadd.f32 %v3958, %v4246
  %v4248 = vpop.f32.mrf.mxu0
  %4249 = vmatprep.mubr.bf16.mxu0 %v2267
  %4250 = vmatmul.mubr.bf16.gmra.mxu0 %v2266
  %v4251 = vpop.f32.mrf.mxu0
  %v4252 = vadd.f32 %v3963, %v4251
  %v4253 = vpop.f32.mrf.mxu0
  %v4254 = vpop.f32.mrf.mxu0
  %v4255 = vadd.f32 %v3966, %v4254
  %v4256 = vpop.f32.mrf.mxu0
  %4257 = vmatprep.mubr.bf16.mxu0 %v2280
  %4258 = vmatmul.mubr.bf16.gmra.mxu0 %v2279
  %v4259 = vpop.f32.mrf.mxu0
  %v4260 = vadd.f32 %v3971, %v4259
  %v4261 = vpop.f32.mrf.mxu0
  %v4262 = vpop.f32.mrf.mxu0
  %v4263 = vadd.f32 %v3974, %v4262
  %v4264 = vpop.f32.mrf.mxu0
  %4265 = vmatprep.mubr.bf16.mxu0 %v2293
  %4266 = vmatmul.mubr.bf16.gmra.mxu0 %v2292
  %v4267 = vpop.f32.mrf.mxu0
  %v4268 = vadd.f32 %v3979, %v4267
  %v4269 = vpop.f32.mrf.mxu0
  %v4270 = vpop.f32.mrf.mxu0
  %v4271 = vadd.f32 %v3982, %v4270
  %v4272 = vpop.f32.mrf.mxu0
  %4273 = vmatprep.mubr.bf16.mxu0 %v2306
  %4274 = vmatmul.mubr.bf16.gmra.mxu0 %v2305
  %v4275 = vpop.f32.mrf.mxu0
  %v4276 = vadd.f32 %v3987, %v4275
  %v4277 = vpop.f32.mrf.mxu0
  %v4278 = vpop.f32.mrf.mxu0
  %v4279 = vadd.f32 %v3990, %v4278
  %v4280 = vpop.f32.mrf.mxu0
  %4281 = vmatprep.mubr.bf16.mxu0 %v2319
  %4282 = vmatmul.mubr.bf16.gmra.mxu0 %v2318
  %v4283 = vpop.f32.mrf.mxu0
  %v4284 = vadd.f32 %v3995, %v4283
  %v4285 = vpop.f32.mrf.mxu0
  %v4286 = vpop.f32.mrf.mxu0
  %v4287 = vadd.f32 %v3998, %v4286
  %v4288 = vpop.f32.mrf.mxu0
  %4289 = vmatprep.mubr.bf16.mxu0 %v2332
  %4290 = vmatmul.mubr.bf16.gmra.mxu0 %v2331
  %v4291 = vpop.f32.mrf.mxu0
  %v4292 = vadd.f32 %v4003, %v4291
  %v4293 = vpop.f32.mrf.mxu0
  %v4294 = vpop.f32.mrf.mxu0
  %v4295 = vadd.f32 %v4006, %v4294
  %v4296 = vpop.f32.mrf.mxu0
  %4297 = vmatprep.mubr.bf16.mxu0 %v2345
  %4298 = vmatmul.mubr.bf16.gmra.mxu0 %v2344
  %v4299 = vpop.f32.mrf.mxu0
  %v4300 = vadd.f32 %v4011, %v4299
  %v4301 = vpop.f32.mrf.mxu0
  %v4302 = vpop.f32.mrf.mxu0
  %v4303 = vadd.f32 %v4014, %v4302
  %v4304 = vpop.f32.mrf.mxu0
  %4305 = vmatprep.mubr.bf16.mxu0 %v2358
  %4306 = vmatmul.mubr.bf16.gmra.mxu0 %v2357
  %v4307 = vpop.f32.mrf.mxu0
  %v4308 = vadd.f32 %v4019, %v4307
  %v4309 = vpop.f32.mrf.mxu0
  %v4310 = vpop.f32.mrf.mxu0
  %v4311 = vadd.f32 %v4022, %v4310
  %v4312 = vpop.f32.mrf.mxu0
  %4313 = vdwg.mxu0
  %4314 = vmatprep.subr.bf16.mxu0 0
  %4315 = vmatpush1.bf16.msra.mxu0 %v3205
  %4316 = vmatprep.subr.bf16.mxu0 0
  %4317 = vmatpush1.bf16.msra.mxu0 %v3204
  %4318 = vmatprep.subr.bf16.mxu0 0
  %4319 = vmatpush1.bf16.msra.mxu0 %v3203
  %4320 = vmatprep.subr.bf16.mxu0 0
  %4321 = vmatpush1.bf16.msra.mxu0 %v3202
  %4322 = vmatprep.subr.bf16.mxu0 0
  %4323 = vmatpush1.bf16.msra.mxu0 %v3201
  %4324 = vmatprep.subr.bf16.mxu0 0
  %4325 = vmatpush1.bf16.msra.mxu0 %v3200
  %4326 = vmatprep.subr.bf16.mxu0 0
  %4327 = vmatpush1.bf16.msra.mxu0 %v3199
  %4328 = vmatprep.subr.bf16.mxu0 0
  %4329 = vmatpush1.bf16.msra.mxu0 %v3198
  %4330 = vmatprep.subr.bf16.mxu0 0
  %4331 = vmatpush2.bf16.msra.mxu0 %v3213
  %4332 = vmatprep.subr.bf16.mxu0 0
  %4333 = vmatpush2.bf16.msra.mxu0 %v3212
  %4334 = vmatprep.subr.bf16.mxu0 0
  %4335 = vmatpush2.bf16.msra.mxu0 %v3211
  %4336 = vmatprep.subr.bf16.mxu0 0
  %4337 = vmatpush2.bf16.msra.mxu0 %v3210
  %4338 = vmatprep.subr.bf16.mxu0 0
  %4339 = vmatpush2.bf16.msra.mxu0 %v3209
  %4340 = vmatprep.subr.bf16.mxu0 0
  %4341 = vmatpush2.bf16.msra.mxu0 %v3208
  %4342 = vmatprep.subr.bf16.mxu0 0
  %4343 = vmatpush2.bf16.msra.mxu0 %v3207
  %4344 = vmatprep.subr.bf16.mxu0 0
  %4345 = vmatpush2.bf16.msra.mxu0 %v3206
  %4346 = vmatprep.mubr.bf16.mxu0 %v1957
  %4347 = vmatmul.mubr.bf16.gmra.mxu0 %v1956
  %v4348 = vpop.f32.mrf.mxu0
  %v4349 = vadd.f32 %v4060, %v4348
  %v4350 = vpop.f32.mrf.mxu0
  %v4351 = vpop.f32.mrf.mxu0
  %v4352 = vadd.f32 %v4063, %v4351
  %v4353 = vpop.f32.mrf.mxu0
  %4354 = vmatprep.mubr.bf16.mxu0 %v1970
  %4355 = vmatmul.mubr.bf16.gmra.mxu0 %v1969
  %v4356 = vpop.f32.mrf.mxu0
  %v4357 = vadd.f32 %v4068, %v4356
  %v4358 = vpop.f32.mrf.mxu0
  %v4359 = vpop.f32.mrf.mxu0
  %v4360 = vadd.f32 %v4071, %v4359
  %v4361 = vpop.f32.mrf.mxu0
  %4362 = vmatprep.mubr.bf16.mxu0 %v1983
  %4363 = vmatmul.mubr.bf16.gmra.mxu0 %v1982
  %v4364 = vpop.f32.mrf.mxu0
  %v4365 = vadd.f32 %v4076, %v4364
  %v4366 = vpop.f32.mrf.mxu0
  %v4367 = vpop.f32.mrf.mxu0
  %v4368 = vadd.f32 %v4079, %v4367
  %v4369 = vpop.f32.mrf.mxu0
  %4370 = vmatprep.mubr.bf16.mxu0 %v1996
  %4371 = vmatmul.mubr.bf16.gmra.mxu0 %v1995
  %v4372 = vpop.f32.mrf.mxu0
  %v4373 = vadd.f32 %v4084, %v4372
  %v4374 = vpop.f32.mrf.mxu0
  %v4375 = vpop.f32.mrf.mxu0
  %v4376 = vadd.f32 %v4087, %v4375
  %v4377 = vpop.f32.mrf.mxu0
  %4378 = vmatprep.mubr.bf16.mxu0 %v2009
  %4379 = vmatmul.mubr.bf16.gmra.mxu0 %v2008
  %v4380 = vpop.f32.mrf.mxu0
  %v4381 = vadd.f32 %v4092, %v4380
  %v4382 = vpop.f32.mrf.mxu0
  %v4383 = vpop.f32.mrf.mxu0
  %v4384 = vadd.f32 %v4095, %v4383
  %v4385 = vpop.f32.mrf.mxu0
  %4386 = vmatprep.mubr.bf16.mxu0 %v2022
  %4387 = vmatmul.mubr.bf16.gmra.mxu0 %v2021
  %v4388 = vpop.f32.mrf.mxu0
  %v4389 = vadd.f32 %v4100, %v4388
  %v4390 = vpop.f32.mrf.mxu0
  %v4391 = vpop.f32.mrf.mxu0
  %v4392 = vadd.f32 %v4103, %v4391
  %v4393 = vpop.f32.mrf.mxu0
  %4394 = vmatprep.mubr.bf16.mxu0 %v2035
  %4395 = vmatmul.mubr.bf16.gmra.mxu0 %v2034
  %v4396 = vpop.f32.mrf.mxu0
  %v4397 = vadd.f32 %v4108, %v4396
  %v4398 = vpop.f32.mrf.mxu0
  %v4399 = vpop.f32.mrf.mxu0
  %v4400 = vadd.f32 %v4111, %v4399
  %v4401 = vpop.f32.mrf.mxu0
  %4402 = vmatprep.mubr.bf16.mxu0 %v2048
  %4403 = vmatmul.mubr.bf16.gmra.mxu0 %v2047
  %v4404 = vpop.f32.mrf.mxu0
  %v4405 = vadd.f32 %v4116, %v4404
  %v4406 = vpop.f32.mrf.mxu0
  %v4407 = vpop.f32.mrf.mxu0
  %v4408 = vadd.f32 %v4119, %v4407
  %v4409 = vpop.f32.mrf.mxu0
  %4410 = vmatprep.mubr.bf16.mxu0 %v2061
  %4411 = vmatmul.mubr.bf16.gmra.mxu0 %v2060
  %v4412 = vpop.f32.mrf.mxu0
  %v4413 = vadd.f32 %v4124, %v4412
  %v4414 = vpop.f32.mrf.mxu0
  %v4415 = vpop.f32.mrf.mxu0
  %v4416 = vadd.f32 %v4127, %v4415
  %v4417 = vpop.f32.mrf.mxu0
  %4418 = vmatprep.mubr.bf16.mxu0 %v2074
  %4419 = vmatmul.mubr.bf16.gmra.mxu0 %v2073
  %v4420 = vpop.f32.mrf.mxu0
  %v4421 = vadd.f32 %v4132, %v4420
  %v4422 = vpop.f32.mrf.mxu0
  %v4423 = vpop.f32.mrf.mxu0
  %v4424 = vadd.f32 %v4135, %v4423
  %v4425 = vpop.f32.mrf.mxu0
  %4426 = vmatprep.mubr.bf16.mxu0 %v2087
  %4427 = vmatmul.mubr.bf16.gmra.mxu0 %v2086
  %v4428 = vpop.f32.mrf.mxu0
  %v4429 = vadd.f32 %v4140, %v4428
  %v4430 = vpop.f32.mrf.mxu0
  %v4431 = vpop.f32.mrf.mxu0
  %v4432 = vadd.f32 %v4143, %v4431
  %v4433 = vpop.f32.mrf.mxu0
  %4434 = vmatprep.mubr.bf16.mxu0 %v2100
  %4435 = vmatmul.mubr.bf16.gmra.mxu0 %v2099
  %v4436 = vpop.f32.mrf.mxu0
  %v4437 = vadd.f32 %v4148, %v4436
  %v4438 = vpop.f32.mrf.mxu0
  %v4439 = vpop.f32.mrf.mxu0
  %v4440 = vadd.f32 %v4151, %v4439
  %v4441 = vpop.f32.mrf.mxu0
  %4442 = vmatprep.mubr.bf16.mxu0 %v2113
  %4443 = vmatmul.mubr.bf16.gmra.mxu0 %v2112
  %v4444 = vpop.f32.mrf.mxu0
  %v4445 = vadd.f32 %v4156, %v4444
  %v4446 = vpop.f32.mrf.mxu0
  %v4447 = vpop.f32.mrf.mxu0
  %v4448 = vadd.f32 %v4159, %v4447
  %v4449 = vpop.f32.mrf.mxu0
  %4450 = vmatprep.mubr.bf16.mxu0 %v2126
  %4451 = vmatmul.mubr.bf16.gmra.mxu0 %v2125
  %v4452 = vpop.f32.mrf.mxu0
  %v4453 = vadd.f32 %v4164, %v4452
  %v4454 = vpop.f32.mrf.mxu0
  %v4455 = vpop.f32.mrf.mxu0
  %v4456 = vadd.f32 %v4167, %v4455
  %v4457 = vpop.f32.mrf.mxu0
  %4458 = vmatprep.mubr.bf16.mxu0 %v2139
  %4459 = vmatmul.mubr.bf16.gmra.mxu0 %v2138
  %v4460 = vpop.f32.mrf.mxu0
  %v4461 = vadd.f32 %v4172, %v4460
  %v4462 = vpop.f32.mrf.mxu0
  %v4463 = vpop.f32.mrf.mxu0
  %v4464 = vadd.f32 %v4175, %v4463
  %v4465 = vpop.f32.mrf.mxu0
  %4466 = vmatprep.mubr.bf16.mxu0 %v2152
  %4467 = vmatmul.mubr.bf16.gmra.mxu0 %v2151
  %v4468 = vpop.f32.mrf.mxu0
  %v4469 = vadd.f32 %v4180, %v4468
  %v4470 = vpop.f32.mrf.mxu0
  %v4471 = vpop.f32.mrf.mxu0
  %v4472 = vadd.f32 %v4183, %v4471
  %v4473 = vpop.f32.mrf.mxu0
  %4474 = vmatprep.mubr.bf16.mxu0 %v2165
  %4475 = vmatmul.mubr.bf16.gmra.mxu0 %v2164
  %v4476 = vpop.f32.mrf.mxu0
  %v4477 = vadd.f32 %v4188, %v4476
  %v4478 = vpop.f32.mrf.mxu0
  %v4479 = vpop.f32.mrf.mxu0
  %v4480 = vadd.f32 %v4191, %v4479
  %v4481 = vpop.f32.mrf.mxu0
  %4482 = vmatprep.mubr.bf16.mxu0 %v2178
  %4483 = vmatmul.mubr.bf16.gmra.mxu0 %v2177
  %v4484 = vpop.f32.mrf.mxu0
  %v4485 = vadd.f32 %v4196, %v4484
  %v4486 = vpop.f32.mrf.mxu0
  %v4487 = vpop.f32.mrf.mxu0
  %v4488 = vadd.f32 %v4199, %v4487
  %v4489 = vpop.f32.mrf.mxu0
  %4490 = vmatprep.mubr.bf16.mxu0 %v2191
  %4491 = vmatmul.mubr.bf16.gmra.mxu0 %v2190
  %v4492 = vpop.f32.mrf.mxu0
  %v4493 = vadd.f32 %v4204, %v4492
  %v4494 = vpop.f32.mrf.mxu0
  %v4495 = vpop.f32.mrf.mxu0
  %v4496 = vadd.f32 %v4207, %v4495
  %v4497 = vpop.f32.mrf.mxu0
  %4498 = vmatprep.mubr.bf16.mxu0 %v2204
  %4499 = vmatmul.mubr.bf16.gmra.mxu0 %v2203
  %v4500 = vpop.f32.mrf.mxu0
  %v4501 = vadd.f32 %v4212, %v4500
  %v4502 = vpop.f32.mrf.mxu0
  %v4503 = vpop.f32.mrf.mxu0
  %v4504 = vadd.f32 %v4215, %v4503
  %v4505 = vpop.f32.mrf.mxu0
  %4506 = vmatprep.mubr.bf16.mxu0 %v2217
  %4507 = vmatmul.mubr.bf16.gmra.mxu0 %v2216
  %v4508 = vpop.f32.mrf.mxu0
  %v4509 = vadd.f32 %v4220, %v4508
  %v4510 = vpop.f32.mrf.mxu0
  %v4511 = vpop.f32.mrf.mxu0
  %v4512 = vadd.f32 %v4223, %v4511
  %v4513 = vpop.f32.mrf.mxu0
  %4514 = vmatprep.mubr.bf16.mxu0 %v2230
  %4515 = vmatmul.mubr.bf16.gmra.mxu0 %v2229
  %v4516 = vpop.f32.mrf.mxu0
  %v4517 = vadd.f32 %v4228, %v4516
  %v4518 = vpop.f32.mrf.mxu0
  %v4519 = vpop.f32.mrf.mxu0
  %v4520 = vadd.f32 %v4231, %v4519
  %v4521 = vpop.f32.mrf.mxu0
  %4522 = vmatprep.mubr.bf16.mxu0 %v2243
  %4523 = vmatmul.mubr.bf16.gmra.mxu0 %v2242
  %v4524 = vpop.f32.mrf.mxu0
  %v4525 = vadd.f32 %v4236, %v4524
  %v4526 = vpop.f32.mrf.mxu0
  %v4527 = vpop.f32.mrf.mxu0
  %v4528 = vadd.f32 %v4239, %v4527
  %v4529 = vpop.f32.mrf.mxu0
  %4530 = vmatprep.mubr.bf16.mxu0 %v2256
  %4531 = vmatmul.mubr.bf16.gmra.mxu0 %v2255
  %v4532 = vpop.f32.mrf.mxu0
  %v4533 = vadd.f32 %v4244, %v4532
  %v4534 = vpop.f32.mrf.mxu0
  %v4535 = vpop.f32.mrf.mxu0
  %v4536 = vadd.f32 %v4247, %v4535
  %v4537 = vpop.f32.mrf.mxu0
  %4538 = vmatprep.mubr.bf16.mxu0 %v2269
  %4539 = vmatmul.mubr.bf16.gmra.mxu0 %v2268
  %v4540 = vpop.f32.mrf.mxu0
  %v4541 = vadd.f32 %v4252, %v4540
  %v4542 = vpop.f32.mrf.mxu0
  %v4543 = vpop.f32.mrf.mxu0
  %v4544 = vadd.f32 %v4255, %v4543
  %v4545 = vpop.f32.mrf.mxu0
  %4546 = vmatprep.mubr.bf16.mxu0 %v2282
  %4547 = vmatmul.mubr.bf16.gmra.mxu0 %v2281
  %v4548 = vpop.f32.mrf.mxu0
  %v4549 = vadd.f32 %v4260, %v4548
  %v4550 = vpop.f32.mrf.mxu0
  %v4551 = vpop.f32.mrf.mxu0
  %v4552 = vadd.f32 %v4263, %v4551
  %v4553 = vpop.f32.mrf.mxu0
  %4554 = vmatprep.mubr.bf16.mxu0 %v2295
  %4555 = vmatmul.mubr.bf16.gmra.mxu0 %v2294
  %v4556 = vpop.f32.mrf.mxu0
  %v4557 = vadd.f32 %v4268, %v4556
  %v4558 = vpop.f32.mrf.mxu0
  %v4559 = vpop.f32.mrf.mxu0
  %v4560 = vadd.f32 %v4271, %v4559
  %v4561 = vpop.f32.mrf.mxu0
  %4562 = vmatprep.mubr.bf16.mxu0 %v2308
  %4563 = vmatmul.mubr.bf16.gmra.mxu0 %v2307
  %v4564 = vpop.f32.mrf.mxu0
  %v4565 = vadd.f32 %v4276, %v4564
  %v4566 = vpop.f32.mrf.mxu0
  %v4567 = vpop.f32.mrf.mxu0
  %v4568 = vadd.f32 %v4279, %v4567
  %v4569 = vpop.f32.mrf.mxu0
  %4570 = vmatprep.mubr.bf16.mxu0 %v2321
  %4571 = vmatmul.mubr.bf16.gmra.mxu0 %v2320
  %v4572 = vpop.f32.mrf.mxu0
  %v4573 = vadd.f32 %v4284, %v4572
  %v4574 = vpop.f32.mrf.mxu0
  %v4575 = vpop.f32.mrf.mxu0
  %v4576 = vadd.f32 %v4287, %v4575
  %v4577 = vpop.f32.mrf.mxu0
  %4578 = vmatprep.mubr.bf16.mxu0 %v2334
  %4579 = vmatmul.mubr.bf16.gmra.mxu0 %v2333
  %v4580 = vpop.f32.mrf.mxu0
  %v4581 = vadd.f32 %v4292, %v4580
  %v4582 = vpop.f32.mrf.mxu0
  %v4583 = vpop.f32.mrf.mxu0
  %v4584 = vadd.f32 %v4295, %v4583
  %v4585 = vpop.f32.mrf.mxu0
  %4586 = vmatprep.mubr.bf16.mxu0 %v2347
  %4587 = vmatmul.mubr.bf16.gmra.mxu0 %v2346
  %v4588 = vpop.f32.mrf.mxu0
  %v4589 = vadd.f32 %v4300, %v4588
  %v4590 = vpop.f32.mrf.mxu0
  %v4591 = vpop.f32.mrf.mxu0
  %v4592 = vadd.f32 %v4303, %v4591
  %v4593 = vpop.f32.mrf.mxu0
  %4594 = vmatprep.mubr.bf16.mxu0 %v2360
  %4595 = vmatmul.mubr.bf16.gmra.mxu0 %v2359
  %v4596 = vpop.f32.mrf.mxu0
  %v4597 = vadd.f32 %v4308, %v4596
  %v4598 = vpop.f32.mrf.mxu0
  %v4599 = vpop.f32.mrf.mxu0
  %v4600 = vadd.f32 %v4311, %v4599
  %v4601 = vpop.f32.mrf.mxu0
  %4602 = vdwg.mxu0
  %4603 = vmatprep.subr.bf16.mxu0 0
  %4604 = vmatpush1.bf16.msra.mxu0 %v3221
  %4605 = vmatprep.subr.bf16.mxu0 0
  %4606 = vmatpush1.bf16.msra.mxu0 %v3220
  %4607 = vmatprep.subr.bf16.mxu0 0
  %4608 = vmatpush1.bf16.msra.mxu0 %v3219
  %4609 = vmatprep.subr.bf16.mxu0 0
  %4610 = vmatpush1.bf16.msra.mxu0 %v3218
  %4611 = vmatprep.subr.bf16.mxu0 0
  %4612 = vmatpush1.bf16.msra.mxu0 %v3217
  %4613 = vmatprep.subr.bf16.mxu0 0
  %4614 = vmatpush1.bf16.msra.mxu0 %v3216
  %4615 = vmatprep.subr.bf16.mxu0 0
  %4616 = vmatpush1.bf16.msra.mxu0 %v3215
  %4617 = vmatprep.subr.bf16.mxu0 0
  %4618 = vmatpush1.bf16.msra.mxu0 %v3214
  %4619 = vmatprep.subr.bf16.mxu0 0
  %4620 = vmatpush2.bf16.msra.mxu0 %v3229
  %4621 = vmatprep.subr.bf16.mxu0 0
  %4622 = vmatpush2.bf16.msra.mxu0 %v3228
  %4623 = vmatprep.subr.bf16.mxu0 0
  %4624 = vmatpush2.bf16.msra.mxu0 %v3227
  %4625 = vmatprep.subr.bf16.mxu0 0
  %4626 = vmatpush2.bf16.msra.mxu0 %v3226
  %4627 = vmatprep.subr.bf16.mxu0 0
  %4628 = vmatpush2.bf16.msra.mxu0 %v3225
  %4629 = vmatprep.subr.bf16.mxu0 0
  %4630 = vmatpush2.bf16.msra.mxu0 %v3224
  %4631 = vmatprep.subr.bf16.mxu0 0
  %4632 = vmatpush2.bf16.msra.mxu0 %v3223
  %4633 = vmatprep.subr.bf16.mxu0 0
  %4634 = vmatpush2.bf16.msra.mxu0 %v3222
  %4635 = vmatprep.mubr.bf16.mxu0 %v1959
  %4636 = vmatmul.mubr.bf16.gmra.mxu0 %v1958
  %v4637 = vpop.f32.mrf.mxu0
  %v4638 = vadd.f32 %v4349, %v4637
  %v4639 = vpop.f32.mrf.mxu0
  %v4640 = vpop.f32.mrf.mxu0
  %v4641 = vadd.f32 %v4352, %v4640
  %v4642 = vpop.f32.mrf.mxu0
  %4643 = vmatprep.mubr.bf16.mxu0 %v1972
  %4644 = vmatmul.mubr.bf16.gmra.mxu0 %v1971
  %v4645 = vpop.f32.mrf.mxu0
  %v4646 = vadd.f32 %v4357, %v4645
  %v4647 = vpop.f32.mrf.mxu0
  %v4648 = vpop.f32.mrf.mxu0
  %v4649 = vadd.f32 %v4360, %v4648
  %v4650 = vpop.f32.mrf.mxu0
  %4651 = vmatprep.mubr.bf16.mxu0 %v1985
  %4652 = vmatmul.mubr.bf16.gmra.mxu0 %v1984
  %v4653 = vpop.f32.mrf.mxu0
  %v4654 = vadd.f32 %v4365, %v4653
  %v4655 = vpop.f32.mrf.mxu0
  %v4656 = vpop.f32.mrf.mxu0
  %v4657 = vadd.f32 %v4368, %v4656
  %v4658 = vpop.f32.mrf.mxu0
  %4659 = vmatprep.mubr.bf16.mxu0 %v1998
  %4660 = vmatmul.mubr.bf16.gmra.mxu0 %v1997
  %v4661 = vpop.f32.mrf.mxu0
  %v4662 = vadd.f32 %v4373, %v4661
  %v4663 = vpop.f32.mrf.mxu0
  %v4664 = vpop.f32.mrf.mxu0
  %v4665 = vadd.f32 %v4376, %v4664
  %v4666 = vpop.f32.mrf.mxu0
  %4667 = vmatprep.mubr.bf16.mxu0 %v2011
  %4668 = vmatmul.mubr.bf16.gmra.mxu0 %v2010
  %v4669 = vpop.f32.mrf.mxu0
  %v4670 = vadd.f32 %v4381, %v4669
  %v4671 = vpop.f32.mrf.mxu0
  %v4672 = vpop.f32.mrf.mxu0
  %v4673 = vadd.f32 %v4384, %v4672
  %v4674 = vpop.f32.mrf.mxu0
  %4675 = vmatprep.mubr.bf16.mxu0 %v2024
  %4676 = vmatmul.mubr.bf16.gmra.mxu0 %v2023
  %v4677 = vpop.f32.mrf.mxu0
  %v4678 = vadd.f32 %v4389, %v4677
  %v4679 = vpop.f32.mrf.mxu0
  %v4680 = vpop.f32.mrf.mxu0
  %v4681 = vadd.f32 %v4392, %v4680
  %v4682 = vpop.f32.mrf.mxu0
  %4683 = vmatprep.mubr.bf16.mxu0 %v2037
  %4684 = vmatmul.mubr.bf16.gmra.mxu0 %v2036
  %v4685 = vpop.f32.mrf.mxu0
  %v4686 = vadd.f32 %v4397, %v4685
  %v4687 = vpop.f32.mrf.mxu0
  %v4688 = vpop.f32.mrf.mxu0
  %v4689 = vadd.f32 %v4400, %v4688
  %v4690 = vpop.f32.mrf.mxu0
  %4691 = vmatprep.mubr.bf16.mxu0 %v2050
  %4692 = vmatmul.mubr.bf16.gmra.mxu0 %v2049
  %v4693 = vpop.f32.mrf.mxu0
  %v4694 = vadd.f32 %v4405, %v4693
  %v4695 = vpop.f32.mrf.mxu0
  %v4696 = vpop.f32.mrf.mxu0
  %v4697 = vadd.f32 %v4408, %v4696
  %v4698 = vpop.f32.mrf.mxu0
  %4699 = vmatprep.mubr.bf16.mxu0 %v2063
  %4700 = vmatmul.mubr.bf16.gmra.mxu0 %v2062
  %v4701 = vpop.f32.mrf.mxu0
  %v4702 = vadd.f32 %v4413, %v4701
  %v4703 = vpop.f32.mrf.mxu0
  %v4704 = vpop.f32.mrf.mxu0
  %v4705 = vadd.f32 %v4416, %v4704
  %v4706 = vpop.f32.mrf.mxu0
  %4707 = vmatprep.mubr.bf16.mxu0 %v2076
  %4708 = vmatmul.mubr.bf16.gmra.mxu0 %v2075
  %v4709 = vpop.f32.mrf.mxu0
  %v4710 = vadd.f32 %v4421, %v4709
  %v4711 = vpop.f32.mrf.mxu0
  %v4712 = vpop.f32.mrf.mxu0
  %v4713 = vadd.f32 %v4424, %v4712
  %v4714 = vpop.f32.mrf.mxu0
  %4715 = vmatprep.mubr.bf16.mxu0 %v2089
  %4716 = vmatmul.mubr.bf16.gmra.mxu0 %v2088
  %v4717 = vpop.f32.mrf.mxu0
  %v4718 = vadd.f32 %v4429, %v4717
  %v4719 = vpop.f32.mrf.mxu0
  %v4720 = vpop.f32.mrf.mxu0
  %v4721 = vadd.f32 %v4432, %v4720
  %v4722 = vpop.f32.mrf.mxu0
  %4723 = vmatprep.mubr.bf16.mxu0 %v2102
  %4724 = vmatmul.mubr.bf16.gmra.mxu0 %v2101
  %v4725 = vpop.f32.mrf.mxu0
  %v4726 = vadd.f32 %v4437, %v4725
  %v4727 = vpop.f32.mrf.mxu0
  %v4728 = vpop.f32.mrf.mxu0
  %v4729 = vadd.f32 %v4440, %v4728
  %v4730 = vpop.f32.mrf.mxu0
  %4731 = vmatprep.mubr.bf16.mxu0 %v2115
  %4732 = vmatmul.mubr.bf16.gmra.mxu0 %v2114
  %v4733 = vpop.f32.mrf.mxu0
  %v4734 = vadd.f32 %v4445, %v4733
  %v4735 = vpop.f32.mrf.mxu0
  %v4736 = vpop.f32.mrf.mxu0
  %v4737 = vadd.f32 %v4448, %v4736
  %v4738 = vpop.f32.mrf.mxu0
  %4739 = vmatprep.mubr.bf16.mxu0 %v2128
  %4740 = vmatmul.mubr.bf16.gmra.mxu0 %v2127
  %v4741 = vpop.f32.mrf.mxu0
  %v4742 = vadd.f32 %v4453, %v4741
  %v4743 = vpop.f32.mrf.mxu0
  %v4744 = vpop.f32.mrf.mxu0
  %v4745 = vadd.f32 %v4456, %v4744
  %v4746 = vpop.f32.mrf.mxu0
  %4747 = vmatprep.mubr.bf16.mxu0 %v2141
  %4748 = vmatmul.mubr.bf16.gmra.mxu0 %v2140
  %v4749 = vpop.f32.mrf.mxu0
  %v4750 = vadd.f32 %v4461, %v4749
  %v4751 = vpop.f32.mrf.mxu0
  %v4752 = vpop.f32.mrf.mxu0
  %v4753 = vadd.f32 %v4464, %v4752
  %v4754 = vpop.f32.mrf.mxu0
  %4755 = vmatprep.mubr.bf16.mxu0 %v2154
  %4756 = vmatmul.mubr.bf16.gmra.mxu0 %v2153
  %v4757 = vpop.f32.mrf.mxu0
  %v4758 = vadd.f32 %v4469, %v4757
  %v4759 = vpop.f32.mrf.mxu0
  %v4760 = vpop.f32.mrf.mxu0
  %v4761 = vadd.f32 %v4472, %v4760
  %v4762 = vpop.f32.mrf.mxu0
  %4763 = vmatprep.mubr.bf16.mxu0 %v2167
  %4764 = vmatmul.mubr.bf16.gmra.mxu0 %v2166
  %v4765 = vpop.f32.mrf.mxu0
  %v4766 = vadd.f32 %v4477, %v4765
  %v4767 = vpop.f32.mrf.mxu0
  %v4768 = vpop.f32.mrf.mxu0
  %v4769 = vadd.f32 %v4480, %v4768
  %v4770 = vpop.f32.mrf.mxu0
  %4771 = vmatprep.mubr.bf16.mxu0 %v2180
  %4772 = vmatmul.mubr.bf16.gmra.mxu0 %v2179
  %v4773 = vpop.f32.mrf.mxu0
  %v4774 = vadd.f32 %v4485, %v4773
  %v4775 = vpop.f32.mrf.mxu0
  %v4776 = vpop.f32.mrf.mxu0
  %v4777 = vadd.f32 %v4488, %v4776
  %v4778 = vpop.f32.mrf.mxu0
  %4779 = vmatprep.mubr.bf16.mxu0 %v2193
  %4780 = vmatmul.mubr.bf16.gmra.mxu0 %v2192
  %v4781 = vpop.f32.mrf.mxu0
  %v4782 = vadd.f32 %v4493, %v4781
  %v4783 = vpop.f32.mrf.mxu0
  %v4784 = vpop.f32.mrf.mxu0
  %v4785 = vadd.f32 %v4496, %v4784
  %v4786 = vpop.f32.mrf.mxu0
  %4787 = vmatprep.mubr.bf16.mxu0 %v2206
  %4788 = vmatmul.mubr.bf16.gmra.mxu0 %v2205
  %v4789 = vpop.f32.mrf.mxu0
  %v4790 = vadd.f32 %v4501, %v4789
  %v4791 = vpop.f32.mrf.mxu0
  %v4792 = vpop.f32.mrf.mxu0
  %v4793 = vadd.f32 %v4504, %v4792
  %v4794 = vpop.f32.mrf.mxu0
  %4795 = vmatprep.mubr.bf16.mxu0 %v2219
  %4796 = vmatmul.mubr.bf16.gmra.mxu0 %v2218
  %v4797 = vpop.f32.mrf.mxu0
  %v4798 = vadd.f32 %v4509, %v4797
  %v4799 = vpop.f32.mrf.mxu0
  %v4800 = vpop.f32.mrf.mxu0
  %v4801 = vadd.f32 %v4512, %v4800
  %v4802 = vpop.f32.mrf.mxu0
  %4803 = vmatprep.mubr.bf16.mxu0 %v2232
  %4804 = vmatmul.mubr.bf16.gmra.mxu0 %v2231
  %v4805 = vpop.f32.mrf.mxu0
  %v4806 = vadd.f32 %v4517, %v4805
  %v4807 = vpop.f32.mrf.mxu0
  %v4808 = vpop.f32.mrf.mxu0
  %v4809 = vadd.f32 %v4520, %v4808
  %v4810 = vpop.f32.mrf.mxu0
  %4811 = vmatprep.mubr.bf16.mxu0 %v2245
  %4812 = vmatmul.mubr.bf16.gmra.mxu0 %v2244
  %v4813 = vpop.f32.mrf.mxu0
  %v4814 = vadd.f32 %v4525, %v4813
  %v4815 = vpop.f32.mrf.mxu0
  %v4816 = vpop.f32.mrf.mxu0
  %v4817 = vadd.f32 %v4528, %v4816
  %v4818 = vpop.f32.mrf.mxu0
  %4819 = vmatprep.mubr.bf16.mxu0 %v2258
  %4820 = vmatmul.mubr.bf16.gmra.mxu0 %v2257
  %v4821 = vpop.f32.mrf.mxu0
  %v4822 = vadd.f32 %v4533, %v4821
  %v4823 = vpop.f32.mrf.mxu0
  %v4824 = vpop.f32.mrf.mxu0
  %v4825 = vadd.f32 %v4536, %v4824
  %v4826 = vpop.f32.mrf.mxu0
  %4827 = vmatprep.mubr.bf16.mxu0 %v2271
  %4828 = vmatmul.mubr.bf16.gmra.mxu0 %v2270
  %v4829 = vpop.f32.mrf.mxu0
  %v4830 = vadd.f32 %v4541, %v4829
  %v4831 = vpop.f32.mrf.mxu0
  %v4832 = vpop.f32.mrf.mxu0
  %v4833 = vadd.f32 %v4544, %v4832
  %v4834 = vpop.f32.mrf.mxu0
  %4835 = vmatprep.mubr.bf16.mxu0 %v2284
  %4836 = vmatmul.mubr.bf16.gmra.mxu0 %v2283
  %v4837 = vpop.f32.mrf.mxu0
  %v4838 = vadd.f32 %v4549, %v4837
  %v4839 = vpop.f32.mrf.mxu0
  %v4840 = vpop.f32.mrf.mxu0
  %v4841 = vadd.f32 %v4552, %v4840
  %v4842 = vpop.f32.mrf.mxu0
  %4843 = vmatprep.mubr.bf16.mxu0 %v2297
  %4844 = vmatmul.mubr.bf16.gmra.mxu0 %v2296
  %v4845 = vpop.f32.mrf.mxu0
  %v4846 = vadd.f32 %v4557, %v4845
  %v4847 = vpop.f32.mrf.mxu0
  %v4848 = vpop.f32.mrf.mxu0
  %v4849 = vadd.f32 %v4560, %v4848
  %v4850 = vpop.f32.mrf.mxu0
  %4851 = vmatprep.mubr.bf16.mxu0 %v2310
  %4852 = vmatmul.mubr.bf16.gmra.mxu0 %v2309
  %v4853 = vpop.f32.mrf.mxu0
  %v4854 = vadd.f32 %v4565, %v4853
  %v4855 = vpop.f32.mrf.mxu0
  %v4856 = vpop.f32.mrf.mxu0
  %v4857 = vadd.f32 %v4568, %v4856
  %v4858 = vpop.f32.mrf.mxu0
  %4859 = vmatprep.mubr.bf16.mxu0 %v2323
  %4860 = vmatmul.mubr.bf16.gmra.mxu0 %v2322
  %v4861 = vpop.f32.mrf.mxu0
  %v4862 = vadd.f32 %v4573, %v4861
  %v4863 = vpop.f32.mrf.mxu0
  %v4864 = vpop.f32.mrf.mxu0
  %v4865 = vadd.f32 %v4576, %v4864
  %v4866 = vpop.f32.mrf.mxu0
  %4867 = vmatprep.mubr.bf16.mxu0 %v2336
  %4868 = vmatmul.mubr.bf16.gmra.mxu0 %v2335
  %v4869 = vpop.f32.mrf.mxu0
  %v4870 = vadd.f32 %v4581, %v4869
  %v4871 = vpop.f32.mrf.mxu0
  %v4872 = vpop.f32.mrf.mxu0
  %v4873 = vadd.f32 %v4584, %v4872
  %v4874 = vpop.f32.mrf.mxu0
  %4875 = vmatprep.mubr.bf16.mxu0 %v2349
  %4876 = vmatmul.mubr.bf16.gmra.mxu0 %v2348
  %v4877 = vpop.f32.mrf.mxu0
  %v4878 = vadd.f32 %v4589, %v4877
  %v4879 = vpop.f32.mrf.mxu0
  %v4880 = vpop.f32.mrf.mxu0
  %v4881 = vadd.f32 %v4592, %v4880
  %v4882 = vpop.f32.mrf.mxu0
  %4883 = vmatprep.mubr.bf16.mxu0 %v2362
  %4884 = vmatmul.mubr.bf16.gmra.mxu0 %v2361
  %v4885 = vpop.f32.mrf.mxu0
  %v4886 = vadd.f32 %v4597, %v4885
  %v4887 = vpop.f32.mrf.mxu0
  %v4888 = vpop.f32.mrf.mxu0
  %v4889 = vadd.f32 %v4600, %v4888
  %v4890 = vpop.f32.mrf.mxu0
  %4891 = vdwg.mxu0
  %4892 = vmatprep.subr.bf16.mxu0 0
  %4893 = vmatpush1.bf16.msra.mxu0 %v3237
  %4894 = vmatprep.subr.bf16.mxu0 0
  %4895 = vmatpush1.bf16.msra.mxu0 %v3236
  %4896 = vmatprep.subr.bf16.mxu0 0
  %4897 = vmatpush1.bf16.msra.mxu0 %v3235
  %4898 = vmatprep.subr.bf16.mxu0 0
  %4899 = vmatpush1.bf16.msra.mxu0 %v3234
  %4900 = vmatprep.subr.bf16.mxu0 0
  %4901 = vmatpush1.bf16.msra.mxu0 %v3233
  %4902 = vmatprep.subr.bf16.mxu0 0
  %4903 = vmatpush1.bf16.msra.mxu0 %v3232
  %4904 = vmatprep.subr.bf16.mxu0 0
  %4905 = vmatpush1.bf16.msra.mxu0 %v3231
  %4906 = vmatprep.subr.bf16.mxu0 0
  %4907 = vmatpush1.bf16.msra.mxu0 %v3230
  %4908 = vmatprep.subr.bf16.mxu0 0
  %4909 = vmatpush2.bf16.msra.mxu0 %v3245
  %4910 = vmatprep.subr.bf16.mxu0 0
  %4911 = vmatpush2.bf16.msra.mxu0 %v3244
  %4912 = vmatprep.subr.bf16.mxu0 0
  %4913 = vmatpush2.bf16.msra.mxu0 %v3243
  %4914 = vmatprep.subr.bf16.mxu0 0
  %4915 = vmatpush2.bf16.msra.mxu0 %v3242
  %4916 = vmatprep.subr.bf16.mxu0 0
  %4917 = vmatpush2.bf16.msra.mxu0 %v3241
  %4918 = vmatprep.subr.bf16.mxu0 0
  %4919 = vmatpush2.bf16.msra.mxu0 %v3240
  %4920 = vmatprep.subr.bf16.mxu0 0
  %4921 = vmatpush2.bf16.msra.mxu0 %v3239
  %4922 = vmatprep.subr.bf16.mxu0 0
  %4923 = vmatpush2.bf16.msra.mxu0 %v3238
  %4924 = vmatprep.mubr.bf16.mxu0 %v1961
  %4925 = vmatmul.mubr.bf16.gmra.mxu0 %v1960
  %v4926 = vpop.f32.mrf.mxu0
  %v4927 = vadd.f32 %v4638, %v4926
  %v4928 = vpop.f32.mrf.mxu0
  %v4929 = vpop.f32.mrf.mxu0
  %v4930 = vadd.f32 %v4641, %v4929
  %v4931 = vpop.f32.mrf.mxu0
  %4932 = vmatprep.mubr.bf16.mxu0 %v1974
  %4933 = vmatmul.mubr.bf16.gmra.mxu0 %v1973
  %v4934 = vpop.f32.mrf.mxu0
  %v4935 = vadd.f32 %v4646, %v4934
  %v4936 = vpop.f32.mrf.mxu0
  %v4937 = vpop.f32.mrf.mxu0
  %v4938 = vadd.f32 %v4649, %v4937
  %v4939 = vpop.f32.mrf.mxu0
  %4940 = vmatprep.mubr.bf16.mxu0 %v1987
  %4941 = vmatmul.mubr.bf16.gmra.mxu0 %v1986
  %v4942 = vpop.f32.mrf.mxu0
  %v4943 = vadd.f32 %v4654, %v4942
  %v4944 = vpop.f32.mrf.mxu0
  %v4945 = vpop.f32.mrf.mxu0
  %v4946 = vadd.f32 %v4657, %v4945
  %v4947 = vpop.f32.mrf.mxu0
  %4948 = vmatprep.mubr.bf16.mxu0 %v2000
  %4949 = vmatmul.mubr.bf16.gmra.mxu0 %v1999
  %v4950 = vpop.f32.mrf.mxu0
  %v4951 = vadd.f32 %v4662, %v4950
  %v4952 = vpop.f32.mrf.mxu0
  %v4953 = vpop.f32.mrf.mxu0
  %v4954 = vadd.f32 %v4665, %v4953
  %v4955 = vpop.f32.mrf.mxu0
  %4956 = vmatprep.mubr.bf16.mxu0 %v2013
  %4957 = vmatmul.mubr.bf16.gmra.mxu0 %v2012
  %v4958 = vpop.f32.mrf.mxu0
  %v4959 = vadd.f32 %v4670, %v4958
  %v4960 = vpop.f32.mrf.mxu0
  %v4961 = vpop.f32.mrf.mxu0
  %v4962 = vadd.f32 %v4673, %v4961
  %v4963 = vpop.f32.mrf.mxu0
  %4964 = vmatprep.mubr.bf16.mxu0 %v2026
  %4965 = vmatmul.mubr.bf16.gmra.mxu0 %v2025
  %v4966 = vpop.f32.mrf.mxu0
  %v4967 = vadd.f32 %v4678, %v4966
  %v4968 = vpop.f32.mrf.mxu0
  %v4969 = vpop.f32.mrf.mxu0
  %v4970 = vadd.f32 %v4681, %v4969
  %v4971 = vpop.f32.mrf.mxu0
  %4972 = vmatprep.mubr.bf16.mxu0 %v2039
  %4973 = vmatmul.mubr.bf16.gmra.mxu0 %v2038
  %v4974 = vpop.f32.mrf.mxu0
  %v4975 = vadd.f32 %v4686, %v4974
  %v4976 = vpop.f32.mrf.mxu0
  %v4977 = vpop.f32.mrf.mxu0
  %v4978 = vadd.f32 %v4689, %v4977
  %v4979 = vpop.f32.mrf.mxu0
  %4980 = vmatprep.mubr.bf16.mxu0 %v2052
  %4981 = vmatmul.mubr.bf16.gmra.mxu0 %v2051
  %v4982 = vpop.f32.mrf.mxu0
  %v4983 = vadd.f32 %v4694, %v4982
  %v4984 = vpop.f32.mrf.mxu0
  %v4985 = vpop.f32.mrf.mxu0
  %v4986 = vadd.f32 %v4697, %v4985
  %v4987 = vpop.f32.mrf.mxu0
  %4988 = vmatprep.mubr.bf16.mxu0 %v2065
  %4989 = vmatmul.mubr.bf16.gmra.mxu0 %v2064
  %v4990 = vpop.f32.mrf.mxu0
  %v4991 = vadd.f32 %v4702, %v4990
  %v4992 = vpop.f32.mrf.mxu0
  %v4993 = vpop.f32.mrf.mxu0
  %v4994 = vadd.f32 %v4705, %v4993
  %v4995 = vpop.f32.mrf.mxu0
  %4996 = vmatprep.mubr.bf16.mxu0 %v2078
  %4997 = vmatmul.mubr.bf16.gmra.mxu0 %v2077
  %v4998 = vpop.f32.mrf.mxu0
  %v4999 = vadd.f32 %v4710, %v4998
  %v5000 = vpop.f32.mrf.mxu0
  %v5001 = vpop.f32.mrf.mxu0
  %v5002 = vadd.f32 %v4713, %v5001
  %v5003 = vpop.f32.mrf.mxu0
  %5004 = vmatprep.mubr.bf16.mxu0 %v2091
  %5005 = vmatmul.mubr.bf16.gmra.mxu0 %v2090
  %v5006 = vpop.f32.mrf.mxu0
  %v5007 = vadd.f32 %v4718, %v5006
  %v5008 = vpop.f32.mrf.mxu0
  %v5009 = vpop.f32.mrf.mxu0
  %v5010 = vadd.f32 %v4721, %v5009
  %v5011 = vpop.f32.mrf.mxu0
  %5012 = vmatprep.mubr.bf16.mxu0 %v2104
  %5013 = vmatmul.mubr.bf16.gmra.mxu0 %v2103
  %v5014 = vpop.f32.mrf.mxu0
  %v5015 = vadd.f32 %v4726, %v5014
  %v5016 = vpop.f32.mrf.mxu0
  %v5017 = vpop.f32.mrf.mxu0
  %v5018 = vadd.f32 %v4729, %v5017
  %v5019 = vpop.f32.mrf.mxu0
  %5020 = vmatprep.mubr.bf16.mxu0 %v2117
  %5021 = vmatmul.mubr.bf16.gmra.mxu0 %v2116
  %v5022 = vpop.f32.mrf.mxu0
  %v5023 = vadd.f32 %v4734, %v5022
  %v5024 = vpop.f32.mrf.mxu0
  %v5025 = vpop.f32.mrf.mxu0
  %v5026 = vadd.f32 %v4737, %v5025
  %v5027 = vpop.f32.mrf.mxu0
  %5028 = vmatprep.mubr.bf16.mxu0 %v2130
  %5029 = vmatmul.mubr.bf16.gmra.mxu0 %v2129
  %v5030 = vpop.f32.mrf.mxu0
  %v5031 = vadd.f32 %v4742, %v5030
  %v5032 = vpop.f32.mrf.mxu0
  %v5033 = vpop.f32.mrf.mxu0
  %v5034 = vadd.f32 %v4745, %v5033
  %v5035 = vpop.f32.mrf.mxu0
  %5036 = vmatprep.mubr.bf16.mxu0 %v2143
  %5037 = vmatmul.mubr.bf16.gmra.mxu0 %v2142
  %v5038 = vpop.f32.mrf.mxu0
  %v5039 = vadd.f32 %v4750, %v5038
  %v5040 = vpop.f32.mrf.mxu0
  %v5041 = vpop.f32.mrf.mxu0
  %v5042 = vadd.f32 %v4753, %v5041
  %v5043 = vpop.f32.mrf.mxu0
  %5044 = vmatprep.mubr.bf16.mxu0 %v2156
  %5045 = vmatmul.mubr.bf16.gmra.mxu0 %v2155
  %v5046 = vpop.f32.mrf.mxu0
  %v5047 = vadd.f32 %v4758, %v5046
  %v5048 = vpop.f32.mrf.mxu0
  %v5049 = vpop.f32.mrf.mxu0
  %v5050 = vadd.f32 %v4761, %v5049
  %v5051 = vpop.f32.mrf.mxu0
  %5052 = vmatprep.mubr.bf16.mxu0 %v2169
  %5053 = vmatmul.mubr.bf16.gmra.mxu0 %v2168
  %v5054 = vpop.f32.mrf.mxu0
  %v5055 = vadd.f32 %v4766, %v5054
  %v5056 = vpop.f32.mrf.mxu0
  %v5057 = vpop.f32.mrf.mxu0
  %v5058 = vadd.f32 %v4769, %v5057
  %v5059 = vpop.f32.mrf.mxu0
  %5060 = vmatprep.mubr.bf16.mxu0 %v2182
  %5061 = vmatmul.mubr.bf16.gmra.mxu0 %v2181
  %v5062 = vpop.f32.mrf.mxu0
  %v5063 = vadd.f32 %v4774, %v5062
  %v5064 = vpop.f32.mrf.mxu0
  %v5065 = vpop.f32.mrf.mxu0
  %v5066 = vadd.f32 %v4777, %v5065
  %v5067 = vpop.f32.mrf.mxu0
  %5068 = vmatprep.mubr.bf16.mxu0 %v2195
  %5069 = vmatmul.mubr.bf16.gmra.mxu0 %v2194
  %v5070 = vpop.f32.mrf.mxu0
  %v5071 = vadd.f32 %v4782, %v5070
  %v5072 = vpop.f32.mrf.mxu0
  %v5073 = vpop.f32.mrf.mxu0
  %v5074 = vadd.f32 %v4785, %v5073
  %v5075 = vpop.f32.mrf.mxu0
  %5076 = vmatprep.mubr.bf16.mxu0 %v2208
  %5077 = vmatmul.mubr.bf16.gmra.mxu0 %v2207
  %v5078 = vpop.f32.mrf.mxu0
  %v5079 = vadd.f32 %v4790, %v5078
  %v5080 = vpop.f32.mrf.mxu0
  %v5081 = vpop.f32.mrf.mxu0
  %v5082 = vadd.f32 %v4793, %v5081
  %v5083 = vpop.f32.mrf.mxu0
  %5084 = vmatprep.mubr.bf16.mxu0 %v2221
  %5085 = vmatmul.mubr.bf16.gmra.mxu0 %v2220
  %v5086 = vpop.f32.mrf.mxu0
  %v5087 = vadd.f32 %v4798, %v5086
  %v5088 = vpop.f32.mrf.mxu0
  %v5089 = vpop.f32.mrf.mxu0
  %v5090 = vadd.f32 %v4801, %v5089
  %v5091 = vpop.f32.mrf.mxu0
  %5092 = vmatprep.mubr.bf16.mxu0 %v2234
  %5093 = vmatmul.mubr.bf16.gmra.mxu0 %v2233
  %v5094 = vpop.f32.mrf.mxu0
  %v5095 = vadd.f32 %v4806, %v5094
  %v5096 = vpop.f32.mrf.mxu0
  %v5097 = vpop.f32.mrf.mxu0
  %v5098 = vadd.f32 %v4809, %v5097
  %v5099 = vpop.f32.mrf.mxu0
  %5100 = vmatprep.mubr.bf16.mxu0 %v2247
  %5101 = vmatmul.mubr.bf16.gmra.mxu0 %v2246
  %v5102 = vpop.f32.mrf.mxu0
  %v5103 = vadd.f32 %v4814, %v5102
  %v5104 = vpop.f32.mrf.mxu0
  %v5105 = vpop.f32.mrf.mxu0
  %v5106 = vadd.f32 %v4817, %v5105
  %v5107 = vpop.f32.mrf.mxu0
  %5108 = vmatprep.mubr.bf16.mxu0 %v2260
  %5109 = vmatmul.mubr.bf16.gmra.mxu0 %v2259
  %v5110 = vpop.f32.mrf.mxu0
  %v5111 = vadd.f32 %v4822, %v5110
  %v5112 = vpop.f32.mrf.mxu0
  %v5113 = vpop.f32.mrf.mxu0
  %v5114 = vadd.f32 %v4825, %v5113
  %v5115 = vpop.f32.mrf.mxu0
  %5116 = vmatprep.mubr.bf16.mxu0 %v2273
  %5117 = vmatmul.mubr.bf16.gmra.mxu0 %v2272
  %v5118 = vpop.f32.mrf.mxu0
  %v5119 = vadd.f32 %v4830, %v5118
  %v5120 = vpop.f32.mrf.mxu0
  %v5121 = vpop.f32.mrf.mxu0
  %v5122 = vadd.f32 %v4833, %v5121
  %v5123 = vpop.f32.mrf.mxu0
  %5124 = vmatprep.mubr.bf16.mxu0 %v2286
  %5125 = vmatmul.mubr.bf16.gmra.mxu0 %v2285
  %v5126 = vpop.f32.mrf.mxu0
  %v5127 = vadd.f32 %v4838, %v5126
  %v5128 = vpop.f32.mrf.mxu0
  %v5129 = vpop.f32.mrf.mxu0
  %v5130 = vadd.f32 %v4841, %v5129
  %v5131 = vpop.f32.mrf.mxu0
  %5132 = vmatprep.mubr.bf16.mxu0 %v2299
  %5133 = vmatmul.mubr.bf16.gmra.mxu0 %v2298
  %v5134 = vpop.f32.mrf.mxu0
  %v5135 = vadd.f32 %v4846, %v5134
  %v5136 = vpop.f32.mrf.mxu0
  %v5137 = vpop.f32.mrf.mxu0
  %v5138 = vadd.f32 %v4849, %v5137
  %v5139 = vpop.f32.mrf.mxu0
  %5140 = vmatprep.mubr.bf16.mxu0 %v2312
  %5141 = vmatmul.mubr.bf16.gmra.mxu0 %v2311
  %v5142 = vpop.f32.mrf.mxu0
  %v5143 = vadd.f32 %v4854, %v5142
  %v5144 = vpop.f32.mrf.mxu0
  %v5145 = vpop.f32.mrf.mxu0
  %v5146 = vadd.f32 %v4857, %v5145
  %v5147 = vpop.f32.mrf.mxu0
  %5148 = vmatprep.mubr.bf16.mxu0 %v2325
  %5149 = vmatmul.mubr.bf16.gmra.mxu0 %v2324
  %v5150 = vpop.f32.mrf.mxu0
  %v5151 = vadd.f32 %v4862, %v5150
  %v5152 = vpop.f32.mrf.mxu0
  %v5153 = vpop.f32.mrf.mxu0
  %v5154 = vadd.f32 %v4865, %v5153
  %v5155 = vpop.f32.mrf.mxu0
  %5156 = vmatprep.mubr.bf16.mxu0 %v2338
  %5157 = vmatmul.mubr.bf16.gmra.mxu0 %v2337
  %v5158 = vpop.f32.mrf.mxu0
  %v5159 = vadd.f32 %v4870, %v5158
  %v5160 = vpop.f32.mrf.mxu0
  %v5161 = vpop.f32.mrf.mxu0
  %v5162 = vadd.f32 %v4873, %v5161
  %v5163 = vpop.f32.mrf.mxu0
  %5164 = vmatprep.mubr.bf16.mxu0 %v2351
  %5165 = vmatmul.mubr.bf16.gmra.mxu0 %v2350
  %v5166 = vpop.f32.mrf.mxu0
  %v5167 = vadd.f32 %v4878, %v5166
  %v5168 = vpop.f32.mrf.mxu0
  %v5169 = vpop.f32.mrf.mxu0
  %v5170 = vadd.f32 %v4881, %v5169
  %v5171 = vpop.f32.mrf.mxu0
  %5172 = vmatprep.mubr.bf16.mxu0 %v2364
  %5173 = vmatmul.mubr.bf16.gmra.mxu0 %v2363
  %v5174 = vpop.f32.mrf.mxu0
  %v5175 = vadd.f32 %v4886, %v5174
  %v5176 = vpop.f32.mrf.mxu0
  %v5177 = vpop.f32.mrf.mxu0
  %v5178 = vadd.f32 %v4889, %v5177
  %v5179 = vpop.f32.mrf.mxu0
  %5180 = vdwg.mxu0
  %5181 = vmatprep.subr.bf16.mxu0 0
  %5182 = vmatpush1.bf16.msra.mxu0 0
  %5183 = vmatprep.subr.bf16.mxu0 0
  %5184 = vmatpush1.bf16.msra.mxu0 0
  %5185 = vmatprep.subr.bf16.mxu0 0
  %5186 = vmatpush1.bf16.msra.mxu0 0
  %5187 = vmatprep.subr.bf16.mxu0 0
  %5188 = vmatpush1.bf16.msra.mxu0 0
  %5189 = vmatprep.subr.bf16.mxu0 0
  %5190 = vmatpush1.bf16.msra.mxu0 %v3249
  %5191 = vmatprep.subr.bf16.mxu0 0
  %5192 = vmatpush1.bf16.msra.mxu0 %v3248
  %5193 = vmatprep.subr.bf16.mxu0 0
  %5194 = vmatpush1.bf16.msra.mxu0 %v3247
  %5195 = vmatprep.subr.bf16.mxu0 0
  %5196 = vmatpush1.bf16.msra.mxu0 %v3246
  %5197 = vmatprep.subr.bf16.mxu0 0
  %5198 = vmatpush2.bf16.msra.mxu0 0
  %5199 = vmatprep.subr.bf16.mxu0 0
  %5200 = vmatpush2.bf16.msra.mxu0 0
  %5201 = vmatprep.subr.bf16.mxu0 0
  %5202 = vmatpush2.bf16.msra.mxu0 0
  %5203 = vmatprep.subr.bf16.mxu0 0
  %5204 = vmatpush2.bf16.msra.mxu0 0
  %5205 = vmatprep.subr.bf16.mxu0 0
  %5206 = vmatpush2.bf16.msra.mxu0 0
  %5207 = vmatprep.subr.bf16.mxu0 0
  %5208 = vmatpush2.bf16.msra.mxu0 0
  %5209 = vmatprep.subr.bf16.mxu0 0
  %5210 = vmatpush2.bf16.msra.mxu0 0
  %5211 = vmatprep.subr.bf16.mxu0 0
  %5212 = vmatpush2.bf16.msra.mxu0 0
  %5213 = vmatprep.mubr.bf16.mxu0 0
  %5214 = vmatmul.mubr.bf16.gmra.mxu0 %v3352
  %v5215 = vpop.f32.mrf.mxu0
  %v5216 = vadd.f32 %v4927, %v5215
  %v5217 = vpop.f32.mrf.mxu0
  %v5218 = vpop.f32.mrf.mxu0
  %v5219 = vadd.f32 %v4930, %v5218
  %v5220 = vpop.f32.mrf.mxu0
  %5221 = vmatprep.mubr.bf16.mxu0 0
  %5222 = vmatmul.mubr.bf16.gmra.mxu0 %v3355
  %v5223 = vpop.f32.mrf.mxu0
  %v5224 = vadd.f32 %v4935, %v5223
  %v5225 = vpop.f32.mrf.mxu0
  %v5226 = vpop.f32.mrf.mxu0
  %v5227 = vadd.f32 %v4938, %v5226
  %v5228 = vpop.f32.mrf.mxu0
  %5229 = vmatprep.mubr.bf16.mxu0 0
  %5230 = vmatmul.mubr.bf16.gmra.mxu0 %v3358
  %v5231 = vpop.f32.mrf.mxu0
  %v5232 = vadd.f32 %v4943, %v5231
  %v5233 = vpop.f32.mrf.mxu0
  %v5234 = vpop.f32.mrf.mxu0
  %v5235 = vadd.f32 %v4946, %v5234
  %v5236 = vpop.f32.mrf.mxu0
  %5237 = vmatprep.mubr.bf16.mxu0 0
  %5238 = vmatmul.mubr.bf16.gmra.mxu0 %v3361
  %v5239 = vpop.f32.mrf.mxu0
  %v5240 = vadd.f32 %v4951, %v5239
  %v5241 = vpop.f32.mrf.mxu0
  %v5242 = vpop.f32.mrf.mxu0
  %v5243 = vadd.f32 %v4954, %v5242
  %v5244 = vpop.f32.mrf.mxu0
  %5245 = vmatprep.mubr.bf16.mxu0 0
  %5246 = vmatmul.mubr.bf16.gmra.mxu0 %v3364
  %v5247 = vpop.f32.mrf.mxu0
  %v5248 = vadd.f32 %v4959, %v5247
  %v5249 = vpop.f32.mrf.mxu0
  %v5250 = vpop.f32.mrf.mxu0
  %v5251 = vadd.f32 %v4962, %v5250
  %v5252 = vpop.f32.mrf.mxu0
  %5253 = vmatprep.mubr.bf16.mxu0 0
  %5254 = vmatmul.mubr.bf16.gmra.mxu0 %v3367
  %v5255 = vpop.f32.mrf.mxu0
  %v5256 = vadd.f32 %v4967, %v5255
  %v5257 = vpop.f32.mrf.mxu0
  %v5258 = vpop.f32.mrf.mxu0
  %v5259 = vadd.f32 %v4970, %v5258
  %v5260 = vpop.f32.mrf.mxu0
  %5261 = vmatprep.mubr.bf16.mxu0 0
  %5262 = vmatmul.mubr.bf16.gmra.mxu0 %v3370
  %v5263 = vpop.f32.mrf.mxu0
  %v5264 = vadd.f32 %v4975, %v5263
  %v5265 = vpop.f32.mrf.mxu0
  %v5266 = vpop.f32.mrf.mxu0
  %v5267 = vadd.f32 %v4978, %v5266
  %v5268 = vpop.f32.mrf.mxu0
  %5269 = vmatprep.mubr.bf16.mxu0 0
  %5270 = vmatmul.mubr.bf16.gmra.mxu0 %v3373
  %v5271 = vpop.f32.mrf.mxu0
  %v5272 = vadd.f32 %v4983, %v5271
  %v5273 = vpop.f32.mrf.mxu0
  %v5274 = vpop.f32.mrf.mxu0
  %v5275 = vadd.f32 %v4986, %v5274
  %v5276 = vpop.f32.mrf.mxu0
  %5277 = vmatprep.mubr.bf16.mxu0 0
  %5278 = vmatmul.mubr.bf16.gmra.mxu0 %v3376
  %v5279 = vpop.f32.mrf.mxu0
  %v5280 = vadd.f32 %v4991, %v5279
  %v5281 = vpop.f32.mrf.mxu0
  %v5282 = vpop.f32.mrf.mxu0
  %v5283 = vadd.f32 %v4994, %v5282
  %v5284 = vpop.f32.mrf.mxu0
  %5285 = vmatprep.mubr.bf16.mxu0 0
  %5286 = vmatmul.mubr.bf16.gmra.mxu0 %v3379
  %v5287 = vpop.f32.mrf.mxu0
  %v5288 = vadd.f32 %v4999, %v5287
  %v5289 = vpop.f32.mrf.mxu0
  %v5290 = vpop.f32.mrf.mxu0
  %v5291 = vadd.f32 %v5002, %v5290
  %v5292 = vpop.f32.mrf.mxu0
  %5293 = vmatprep.mubr.bf16.mxu0 0
  %5294 = vmatmul.mubr.bf16.gmra.mxu0 %v3382
  %v5295 = vpop.f32.mrf.mxu0
  %v5296 = vadd.f32 %v5007, %v5295
  %v5297 = vpop.f32.mrf.mxu0
  %v5298 = vpop.f32.mrf.mxu0
  %v5299 = vadd.f32 %v5010, %v5298
  %v5300 = vpop.f32.mrf.mxu0
  %5301 = vmatprep.mubr.bf16.mxu0 0
  %5302 = vmatmul.mubr.bf16.gmra.mxu0 %v3385
  %v5303 = vpop.f32.mrf.mxu0
  %v5304 = vadd.f32 %v5015, %v5303
  %v5305 = vpop.f32.mrf.mxu0
  %v5306 = vpop.f32.mrf.mxu0
  %v5307 = vadd.f32 %v5018, %v5306
  %v5308 = vpop.f32.mrf.mxu0
  %5309 = vmatprep.mubr.bf16.mxu0 0
  %5310 = vmatmul.mubr.bf16.gmra.mxu0 %v3388
  %v5311 = vpop.f32.mrf.mxu0
  %v5312 = vadd.f32 %v5023, %v5311
  %v5313 = vpop.f32.mrf.mxu0
  %v5314 = vpop.f32.mrf.mxu0
  %v5315 = vadd.f32 %v5026, %v5314
  %v5316 = vpop.f32.mrf.mxu0
  %5317 = vmatprep.mubr.bf16.mxu0 0
  %5318 = vmatmul.mubr.bf16.gmra.mxu0 %v3391
  %v5319 = vpop.f32.mrf.mxu0
  %v5320 = vadd.f32 %v5031, %v5319
  %v5321 = vpop.f32.mrf.mxu0
  %v5322 = vpop.f32.mrf.mxu0
  %v5323 = vadd.f32 %v5034, %v5322
  %v5324 = vpop.f32.mrf.mxu0
  %5325 = vmatprep.mubr.bf16.mxu0 0
  %5326 = vmatmul.mubr.bf16.gmra.mxu0 %v3394
  %v5327 = vpop.f32.mrf.mxu0
  %v5328 = vadd.f32 %v5039, %v5327
  %v5329 = vpop.f32.mrf.mxu0
  %v5330 = vpop.f32.mrf.mxu0
  %v5331 = vadd.f32 %v5042, %v5330
  %v5332 = vpop.f32.mrf.mxu0
  %5333 = vmatprep.mubr.bf16.mxu0 0
  %5334 = vmatmul.mubr.bf16.gmra.mxu0 %v3397
  %v5335 = vpop.f32.mrf.mxu0
  %v5336 = vadd.f32 %v5047, %v5335
  %v5337 = vpop.f32.mrf.mxu0
  %v5338 = vpop.f32.mrf.mxu0
  %v5339 = vadd.f32 %v5050, %v5338
  %v5340 = vpop.f32.mrf.mxu0
  %5341 = vmatprep.mubr.bf16.mxu0 0
  %5342 = vmatmul.mubr.bf16.gmra.mxu0 %v3400
  %v5343 = vpop.f32.mrf.mxu0
  %v5344 = vadd.f32 %v5055, %v5343
  %v5345 = vpop.f32.mrf.mxu0
  %v5346 = vpop.f32.mrf.mxu0
  %v5347 = vadd.f32 %v5058, %v5346
  %v5348 = vpop.f32.mrf.mxu0
  %5349 = vmatprep.mubr.bf16.mxu0 0
  %5350 = vmatmul.mubr.bf16.gmra.mxu0 %v3403
  %v5351 = vpop.f32.mrf.mxu0
  %v5352 = vadd.f32 %v5063, %v5351
  %v5353 = vpop.f32.mrf.mxu0
  %v5354 = vpop.f32.mrf.mxu0
  %v5355 = vadd.f32 %v5066, %v5354
  %v5356 = vpop.f32.mrf.mxu0
  %5357 = vmatprep.mubr.bf16.mxu0 0
  %5358 = vmatmul.mubr.bf16.gmra.mxu0 %v3406
  %v5359 = vpop.f32.mrf.mxu0
  %v5360 = vadd.f32 %v5071, %v5359
  %v5361 = vpop.f32.mrf.mxu0
  %v5362 = vpop.f32.mrf.mxu0
  %v5363 = vadd.f32 %v5074, %v5362
  %v5364 = vpop.f32.mrf.mxu0
  %5365 = vmatprep.mubr.bf16.mxu0 0
  %5366 = vmatmul.mubr.bf16.gmra.mxu0 %v3409
  %v5367 = vpop.f32.mrf.mxu0
  %v5368 = vadd.f32 %v5079, %v5367
  %v5369 = vpop.f32.mrf.mxu0
  %v5370 = vpop.f32.mrf.mxu0
  %v5371 = vadd.f32 %v5082, %v5370
  %v5372 = vpop.f32.mrf.mxu0
  %5373 = vmatprep.mubr.bf16.mxu0 0
  %5374 = vmatmul.mubr.bf16.gmra.mxu0 %v3412
  %v5375 = vpop.f32.mrf.mxu0
  %v5376 = vadd.f32 %v5087, %v5375
  %v5377 = vpop.f32.mrf.mxu0
  %v5378 = vpop.f32.mrf.mxu0
  %v5379 = vadd.f32 %v5090, %v5378
  %v5380 = vpop.f32.mrf.mxu0
  %5381 = vmatprep.mubr.bf16.mxu0 0
  %5382 = vmatmul.mubr.bf16.gmra.mxu0 %v3415
  %v5383 = vpop.f32.mrf.mxu0
  %v5384 = vadd.f32 %v5095, %v5383
  %v5385 = vpop.f32.mrf.mxu0
  %v5386 = vpop.f32.mrf.mxu0
  %v5387 = vadd.f32 %v5098, %v5386
  %v5388 = vpop.f32.mrf.mxu0
  %5389 = vmatprep.mubr.bf16.mxu0 0
  %5390 = vmatmul.mubr.bf16.gmra.mxu0 %v3418
  %v5391 = vpop.f32.mrf.mxu0
  %v5392 = vadd.f32 %v5103, %v5391
  %v5393 = vpop.f32.mrf.mxu0
  %v5394 = vpop.f32.mrf.mxu0
  %v5395 = vadd.f32 %v5106, %v5394
  %v5396 = vpop.f32.mrf.mxu0
  %5397 = vmatprep.mubr.bf16.mxu0 0
  %5398 = vmatmul.mubr.bf16.gmra.mxu0 %v3421
  %v5399 = vpop.f32.mrf.mxu0
  %v5400 = vadd.f32 %v5111, %v5399
  %v5401 = vpop.f32.mrf.mxu0
  %v5402 = vpop.f32.mrf.mxu0
  %v5403 = vadd.f32 %v5114, %v5402
  %v5404 = vpop.f32.mrf.mxu0
  %5405 = vmatprep.mubr.bf16.mxu0 0
  %5406 = vmatmul.mubr.bf16.gmra.mxu0 %v3424
  %v5407 = vpop.f32.mrf.mxu0
  %v5408 = vadd.f32 %v5119, %v5407
  %v5409 = vpop.f32.mrf.mxu0
  %v5410 = vpop.f32.mrf.mxu0
  %v5411 = vadd.f32 %v5122, %v5410
  %v5412 = vpop.f32.mrf.mxu0
  %5413 = vmatprep.mubr.bf16.mxu0 0
  %5414 = vmatmul.mubr.bf16.gmra.mxu0 %v3427
  %v5415 = vpop.f32.mrf.mxu0
  %v5416 = vadd.f32 %v5127, %v5415
  %v5417 = vpop.f32.mrf.mxu0
  %v5418 = vpop.f32.mrf.mxu0
  %v5419 = vadd.f32 %v5130, %v5418
  %v5420 = vpop.f32.mrf.mxu0
  %5421 = vmatprep.mubr.bf16.mxu0 0
  %5422 = vmatmul.mubr.bf16.gmra.mxu0 %v3430
  %v5423 = vpop.f32.mrf.mxu0
  %v5424 = vadd.f32 %v5135, %v5423
  %v5425 = vpop.f32.mrf.mxu0
  %v5426 = vpop.f32.mrf.mxu0
  %v5427 = vadd.f32 %v5138, %v5426
  %v5428 = vpop.f32.mrf.mxu0
  %5429 = vmatprep.mubr.bf16.mxu0 0
  %5430 = vmatmul.mubr.bf16.gmra.mxu0 %v3433
  %v5431 = vpop.f32.mrf.mxu0
  %v5432 = vadd.f32 %v5143, %v5431
  %v5433 = vpop.f32.mrf.mxu0
  %v5434 = vpop.f32.mrf.mxu0
  %v5435 = vadd.f32 %v5146, %v5434
  %v5436 = vpop.f32.mrf.mxu0
  %5437 = vmatprep.mubr.bf16.mxu0 0
  %5438 = vmatmul.mubr.bf16.gmra.mxu0 %v3436
  %v5439 = vpop.f32.mrf.mxu0
  %v5440 = vadd.f32 %v5151, %v5439
  %v5441 = vpop.f32.mrf.mxu0
  %v5442 = vpop.f32.mrf.mxu0
  %v5443 = vadd.f32 %v5154, %v5442
  %v5444 = vpop.f32.mrf.mxu0
  %5445 = vmatprep.mubr.bf16.mxu0 0
  %5446 = vmatmul.mubr.bf16.gmra.mxu0 %v3439
  %v5447 = vpop.f32.mrf.mxu0
  %v5448 = vadd.f32 %v5159, %v5447
  %v5449 = vpop.f32.mrf.mxu0
  %v5450 = vpop.f32.mrf.mxu0
  %v5451 = vadd.f32 %v5162, %v5450
  %v5452 = vpop.f32.mrf.mxu0
  %5453 = vmatprep.mubr.bf16.mxu0 0
  %5454 = vmatmul.mubr.bf16.gmra.mxu0 %v3442
  %v5455 = vpop.f32.mrf.mxu0
  %v5456 = vadd.f32 %v5167, %v5455
  %v5457 = vpop.f32.mrf.mxu0
  %v5458 = vpop.f32.mrf.mxu0
  %v5459 = vadd.f32 %v5170, %v5458
  %v5460 = vpop.f32.mrf.mxu0
  %5461 = vmatprep.mubr.bf16.mxu0 0
  %5462 = vmatmul.mubr.bf16.gmra.mxu0 %v3445
  %v5463 = vpop.f32.mrf.mxu0
  %v5464 = vadd.f32 %v5175, %v5463
  %v5465 = vpop.f32.mrf.mxu0
  %v5466 = vpop.f32.mrf.mxu0
  %v5467 = vadd.f32 %v5178, %v5466
  %v5468 = vpop.f32.mrf.mxu0
  %5469 = vdwg.mxu0
  %v5470 = vmax.f32 %v5216, 0.0
  %v5471 = vmax.f32 %v5219, 0.0
  %v5472 = vmax.f32 %v5224, 0.0
  %v5473 = vmax.f32 %v5227, 0.0
  %v5474 = vmax.f32 %v5232, 0.0
  %v5475 = vmax.f32 %v5235, 0.0
  %v5476 = vmax.f32 %v5240, 0.0
  %v5477 = vmax.f32 %v5243, 0.0
  %v5478 = vmax.f32 %v5248, 0.0
  %v5479 = vmax.f32 %v5251, 0.0
  %v5480 = vmax.f32 %v5256, 0.0
  %v5481 = vmax.f32 %v5259, 0.0
  %v5482 = vmax.f32 %v5264, 0.0
  %v5483 = vmax.f32 %v5267, 0.0
  %v5484 = vmax.f32 %v5272, 0.0
  %v5485 = vmax.f32 %v5275, 0.0
  %v5486 = vmax.f32 %v5280, 0.0
  %v5487 = vmax.f32 %v5283, 0.0
  %v5488 = vmax.f32 %v5288, 0.0
  %v5489 = vmax.f32 %v5291, 0.0
  %v5490 = vmax.f32 %v5296, 0.0
  %v5491 = vmax.f32 %v5299, 0.0
  %v5492 = vmax.f32 %v5304, 0.0
  %v5493 = vmax.f32 %v5307, 0.0
  %v5494 = vmax.f32 %v5312, 0.0
  %v5495 = vmax.f32 %v5315, 0.0
  %v5496 = vmax.f32 %v5320, 0.0
  %v5497 = vmax.f32 %v5323, 0.0
  %v5498 = vmax.f32 %v5328, 0.0
  %v5499 = vmax.f32 %v5331, 0.0
  %v5500 = vmax.f32 %v5336, 0.0
  %v5501 = vmax.f32 %v5339, 0.0
  %v5502 = vmax.f32 %v5344, 0.0
  %v5503 = vmax.f32 %v5347, 0.0
  %v5504 = vmax.f32 %v5352, 0.0
  %v5505 = vmax.f32 %v5355, 0.0
  %v5506 = vmax.f32 %v5360, 0.0
  %v5507 = vmax.f32 %v5363, 0.0
  %v5508 = vmax.f32 %v5368, 0.0
  %v5509 = vmax.f32 %v5371, 0.0
  %v5510 = vmax.f32 %v5376, 0.0
  %v5511 = vmax.f32 %v5379, 0.0
  %v5512 = vmax.f32 %v5384, 0.0
  %v5513 = vmax.f32 %v5387, 0.0
  %v5514 = vmax.f32 %v5392, 0.0
  %v5515 = vmax.f32 %v5395, 0.0
  %v5516 = vmax.f32 %v5400, 0.0
  %v5517 = vmax.f32 %v5403, 0.0
  %v5518 = vmax.f32 %v5408, 0.0
  %v5519 = vmax.f32 %v5411, 0.0
  %v5520 = vmax.f32 %v5416, 0.0
  %v5521 = vmax.f32 %v5419, 0.0
  %v5522 = vmax.f32 %v5424, 0.0
  %v5523 = vmax.f32 %v5427, 0.0
  %v5524 = vmax.f32 %v5432, 0.0
  %v5525 = vmax.f32 %v5435, 0.0
  %v5526 = vmax.f32 %v5440, 0.0
  %v5527 = vmax.f32 %v5443, 0.0
  %v5528 = vmax.f32 %v5448, 0.0
  %v5529 = vmax.f32 %v5451, 0.0
  %v5530 = vmax.f32 %v5456, 0.0
  %v5531 = vmax.f32 %v5459, 0.0
  %v5532 = vmax.f32 %v5464, 0.0
  %v5533 = vmax.f32 %v5467, 0.0
  %5534 = vst.msk [vmem:[%s3] sm:$0xff] %vm3350, %v5470
  %5535 = vst.msk [vmem:[%s3 + $0x8] sm:$0xff] %vm3350, %v5471
  %5536 = vst.msk [vmem:[%s3 + $0x10] sm:$0xff] %vm3350, %v5472
  %5537 = vst.msk [vmem:[%s3 + $0x18] sm:$0xff] %vm3350, %v5473
  %5538 = vst.msk [vmem:[%s3 + $0x20] sm:$0xff] %vm3350, %v5474
  %5539 = vst.msk [vmem:[%s3 + $0x28] sm:$0xff] %vm3350, %v5475
  %5540 = vst.msk [vmem:[%s3 + $0x30] sm:$0xff] %vm3350, %v5476
  %5541 = vst.msk [vmem:[%s3 + $0x38] sm:$0xff] %vm3350, %v5477
  %5542 = vst.msk [vmem:[%s3 + $0x40] sm:$0xff] %vm3350, %v5478
  %5543 = vst.msk [vmem:[%s3 + $0x48] sm:$0xff] %vm3350, %v5479
  %5544 = vst.msk [vmem:[%s3 + $0x50] sm:$0xff] %vm3350, %v5480
  %5545 = vst.msk [vmem:[%s3 + $0x58] sm:$0xff] %vm3350, %v5481
  %5546 = vst.msk [vmem:[%s3 + $0x60] sm:$0xff] %vm3350, %v5482
  %5547 = vst.msk [vmem:[%s3 + $0x68] sm:$0xff] %vm3350, %v5483
  %5548 = vst.msk [vmem:[%s3 + $0x70] sm:$0xff] %vm3350, %v5484
  %5549 = vst.msk [vmem:[%s3 + $0x78] sm:$0xff] %vm3350, %v5485
  %5550 = vst.msk [vmem:[%s3 + $0x80] sm:$0xff] %vm3350, %v5486
  %5551 = vst.msk [vmem:[%s3 + $0x88] sm:$0xff] %vm3350, %v5487
  %5552 = vst.msk [vmem:[%s3 + $0x90] sm:$0xff] %vm3350, %v5488
  %5553 = vst.msk [vmem:[%s3 + $0x98] sm:$0xff] %vm3350, %v5489
  %5554 = vst.msk [vmem:[%s3 + $0xa0] sm:$0xff] %vm3350, %v5490
  %5555 = vst.msk [vmem:[%s3 + $0xa8] sm:$0xff] %vm3350, %v5491
  %5556 = vst.msk [vmem:[%s3 + $0xb0] sm:$0xff] %vm3350, %v5492
  %5557 = vst.msk [vmem:[%s3 + $0xb8] sm:$0xff] %vm3350, %v5493
  %5558 = vst.msk [vmem:[%s3 + $0xc0] sm:$0xff] %vm3350, %v5494
  %5559 = vst.msk [vmem:[%s3 + $0xc8] sm:$0xff] %vm3350, %v5495
  %5560 = vst.msk [vmem:[%s3 + $0xd0] sm:$0xff] %vm3350, %v5496
  %5561 = vst.msk [vmem:[%s3 + $0xd8] sm:$0xff] %vm3350, %v5497
  %5562 = vst.msk [vmem:[%s3 + $0xe0] sm:$0xff] %vm3350, %v5498
  %5563 = vst.msk [vmem:[%s3 + $0xe8] sm:$0xff] %vm3350, %v5499
  %5564 = vst.msk [vmem:[%s3 + $0xf0] sm:$0xff] %vm3350, %v5500
  %5565 = vst.msk [vmem:[%s3 + $0xf8] sm:$0xff] %vm3350, %v5501
  %5566 = vst.msk [vmem:[%s3 + $0x100] sm:$0xff] %vm3350, %v5502
  %5567 = vst.msk [vmem:[%s3 + $0x108] sm:$0xff] %vm3350, %v5503
  %5568 = vst.msk [vmem:[%s3 + $0x110] sm:$0xff] %vm3350, %v5504
  %5569 = vst.msk [vmem:[%s3 + $0x118] sm:$0xff] %vm3350, %v5505
  %5570 = vst.msk [vmem:[%s3 + $0x120] sm:$0xff] %vm3350, %v5506
  %5571 = vst.msk [vmem:[%s3 + $0x128] sm:$0xff] %vm3350, %v5507
  %5572 = vst.msk [vmem:[%s3 + $0x130] sm:$0xff] %vm3350, %v5508
  %5573 = vst.msk [vmem:[%s3 + $0x138] sm:$0xff] %vm3350, %v5509
  %5574 = vst.msk [vmem:[%s3 + $0x140] sm:$0xff] %vm3350, %v5510
  %5575 = vst.msk [vmem:[%s3 + $0x148] sm:$0xff] %vm3350, %v5511
  %5576 = vst.msk [vmem:[%s3 + $0x150] sm:$0xff] %vm3350, %v5512
  %5577 = vst.msk [vmem:[%s3 + $0x158] sm:$0xff] %vm3350, %v5513
  %5578 = vst.msk [vmem:[%s3 + $0x160] sm:$0xff] %vm3350, %v5514
  %5579 = vst.msk [vmem:[%s3 + $0x168] sm:$0xff] %vm3350, %v5515
  %5580 = vst.msk [vmem:[%s3 + $0x170] sm:$0xff] %vm3350, %v5516
  %5581 = vst.msk [vmem:[%s3 + $0x178] sm:$0xff] %vm3350, %v5517
  %5582 = vst.msk [vmem:[%s3 + $0x180] sm:$0xff] %vm3350, %v5518
  %5583 = vst.msk [vmem:[%s3 + $0x188] sm:$0xff] %vm3350, %v5519
  %5584 = vst.msk [vmem:[%s3 + $0x190] sm:$0xff] %vm3350, %v5520
  %5585 = vst.msk [vmem:[%s3 + $0x198] sm:$0xff] %vm3350, %v5521
  %5586 = vst.msk [vmem:[%s3 + $0x1a0] sm:$0xff] %vm3350, %v5522
  %5587 = vst.msk [vmem:[%s3 + $0x1a8] sm:$0xff] %vm3350, %v5523
  %5588 = vst.msk [vmem:[%s3 + $0x1b0] sm:$0xff] %vm3350, %v5524
  %5589 = vst.msk [vmem:[%s3 + $0x1b8] sm:$0xff] %vm3350, %v5525
  %5590 = vst.msk [vmem:[%s3 + $0x1c0] sm:$0xff] %vm3350, %v5526
  %5591 = vst.msk [vmem:[%s3 + $0x1c8] sm:$0xff] %vm3350, %v5527
  %5592 = vst.msk [vmem:[%s3 + $0x1d0] sm:$0xff] %vm3350, %v5528
  %5593 = vst.msk [vmem:[%s3 + $0x1d8] sm:$0xff] %vm3350, %v5529
  %5594 = vst.msk [vmem:[%s3 + $0x1e0] sm:$0xff] %vm3350, %v5530
  %5595 = vst.msk [vmem:[%s3 + $0x1e8] sm:$0xff] %vm3350, %v5531
  %5596 = vst.msk [vmem:[%s3 + $0x1f0] sm:$0xff] %vm3350, %v5532
  %5597 = vst.msk [vmem:[%s3 + $0x1f8] sm:$0xff] %vm3350, %v5533
  // Predicated region
  $region14: #{emotion_recognizer_forward.5} parent=0 // pred_check
    _
  $region15: #{emotion_recognizer_forward.5} parent=0 // pred_check_branch
    %5599 = sbr.rel (0) target = $region17
  $region16: #{emotion_recognizer_forward.5} parent=0 // pred_region
    _
  $region17: #{emotion_recognizer_forward.5} parent=0 // pred_fallthru
    _
  // Predicated region
  $region18: #{emotion_recognizer_forward.5} parent=0 // pred_check
    _
  $region19: #{emotion_recognizer_forward.5} parent=0 // pred_check_branch
    %5601 = sbr.rel (0) target = $region21
  $region20: #{emotion_recognizer_forward.5} parent=0 // pred_region
    _
  $region21: #{emotion_recognizer_forward.5} parent=0 // pred_fallthru
    _

// kernel: emotion_recognizer_forward.7
$region0: #{emotion_recognizer_forward.7}
  #allocation0 [shape = 'u32[]', space=smem, size = 0x4, offset = 0x4, fixed_abs, tag = 'smem constant byte address 0x4 - core index']
  #allocation1 [shape = 'u32[144,128]{1,0:T(1,128)}', space=vmem, size = 0x12000, scoped, tag = 'internal scratch']
  %s0 = inlined_call_operand.vmem [shape: f32[256,2,768], index: 0, kind: input, shape index: {}]
  %s1 = inlined_call_operand.vmem [shape: bf16[256,768], index: 1, kind: input, shape index: {}]
  %s2 = inlined_call_operand.vmem [shape: f32[1,768], index: 2, kind: input, shape index: {}]
  %s3 = inlined_call_operand.vmem [shape: bf16[256,8], index: 3, kind: input, shape index: {}]
  %s4 = inlined_call_operand.vmem [shape: f32[1,8], index: 4, kind: input, shape index: {}]
  %s5 = inlined_call_operand.vmem [shape: f32[256,2,8], index: 5, kind: output, shape index: {}]
  %s6 = sld [smem:[#allocation0]]
  $region37: #{emotion_recognizer_forward.7} parent=0
    _
  %s8 = ssub.s32 1, %s6
  %s9 = scalar_select 0, %s8, %s6
  // Predicated region
  $region2: #{emotion_recognizer_forward.7} parent=0 // pred_check
    _
  $region3: #{emotion_recognizer_forward.7} parent=0 // pred_check_branch
    %11 = sbr.rel (0) target = $region5
  $region4: #{emotion_recognizer_forward.7} parent=0 // pred_region
    _
  $region5: #{emotion_recognizer_forward.7} parent=0 // pred_fallthru
    _
  // Predicated region
  $region6: #{emotion_recognizer_forward.7} parent=0 // pred_check
    _
  $region7: #{emotion_recognizer_forward.7} parent=0 // pred_check_branch
    %13 = sbr.rel (0) target = $region9
  $region8: #{emotion_recognizer_forward.7} parent=0 // pred_region
    _
  $region9: #{emotion_recognizer_forward.7} parent=0 // pred_fallthru
    _
  // Predicated region
  $region10: #{emotion_recognizer_forward.7} parent=0 // pred_check
    _
  $region11: #{emotion_recognizer_forward.7} parent=0 // pred_check_branch
    %15 = sbr.rel (0) target = $region13
  $region12: #{emotion_recognizer_forward.7} parent=0 // pred_region
    _
  $region13: #{emotion_recognizer_forward.7} parent=0 // pred_fallthru
    _
  // Predicated region
  $region14: #{emotion_recognizer_forward.7} parent=0 // pred_check
    _
  $region15: #{emotion_recognizer_forward.7} parent=0 // pred_check_branch
    %17 = sbr.rel (0) target = $region17
  $region16: #{emotion_recognizer_forward.7} parent=0 // pred_region
    _
  $region17: #{emotion_recognizer_forward.7} parent=0 // pred_fallthru
    _
  // Predicated region
  $region18: #{emotion_recognizer_forward.7} parent=0 // pred_check
    _
  $region19: #{emotion_recognizer_forward.7} parent=0 // pred_check_branch
    %19 = sbr.rel (0) target = $region21
  $region20: #{emotion_recognizer_forward.7} parent=0 // pred_region
    _
  $region21: #{emotion_recognizer_forward.7} parent=0 // pred_fallthru
    _
  %v21 = vld [vmem:[%s2] sm:$0x3f]
  %v22 = vld [vmem:[%s4] sm:$0x1]
  loop: start=0, step=1, limit=256
  $region22: #{emotion_recognizer_forward.7} parent=0 // loop_pre_header
    _
  $region23: #{emotion_recognizer_forward.7} parent=0 // loop_header
    %s24 = sphi 0, %s28
    %p25 = scmp.ge.s32.totalorder %s24, 256
    %v29 = vphi 0.0, %v834
  $region24: #{emotion_recognizer_forward.7} parent=0 // loop_header_branch
    %27 = sbr.rel (%p25) target = $region28
  $region25: #{emotion_recognizer_forward.7} parent=0 // loop_body
    %s30 = smul.u32 %s24, 6
    %s31 = smul.addr %s30, 2
    %s32 = scalar_lea.vmem %s0, %s31
    %v33 = vld [vmem:[%s32] sm:$0xff]
    %v34 = vld [vmem:[%s32 + $0x8] sm:$0xf]
    %v37 = vunpack.c.l.s4 1983009808
    %v38 = vunpack.c.0.s8 %v37
    %v39 = vlaneseq
    %v40 = vshrl.u32 %v39, 7
    %v41 = vsub.s32 %v38, %v40
    %v42 = vrot.slane %v29, %v41
    %v43 = vcombine.high %v42, %v42
    %v46 = vpack.c.bf16 %v42, %v42
    %v47 = vpack.c.bf16 %v43, %v43
    %v48 = vld [vmem:[%s1] sm:$0xff]
    %v49 = vld [vmem:[%s1 + $0x8] sm:$0xff]
    %v50 = vld [vmem:[%s1 + $0x10] sm:$0xff]
    %v51 = vld [vmem:[%s1 + $0x18] sm:$0xff]
    %v52 = vld [vmem:[%s1 + $0x20] sm:$0xff]
    %v53 = vld [vmem:[%s1 + $0x28] sm:$0xff]
    %v54 = vld [vmem:[%s1 + $0x30] sm:$0xff]
    %v55 = vld [vmem:[%s1 + $0x38] sm:$0xff]
    %v56 = vld [vmem:[%s1 + $0x40] sm:$0xff]
    %v57 = vld [vmem:[%s1 + $0x48] sm:$0xff]
    %v58 = vld [vmem:[%s1 + $0x50] sm:$0xff]
    %v59 = vld [vmem:[%s1 + $0x58] sm:$0xff]
    %v60 = vld [vmem:[%s1 + $0x60] sm:$0xff]
    %v61 = vld [vmem:[%s1 + $0x68] sm:$0xff]
    %v62 = vld [vmem:[%s1 + $0x70] sm:$0xff]
    %v63 = vld [vmem:[%s1 + $0x78] sm:$0xff]
    %v64 = vld [vmem:[%s1 + $0x80] sm:$0xff]
    %v65 = vld [vmem:[%s1 + $0x88] sm:$0xff]
    %v66 = vld [vmem:[%s1 + $0x90] sm:$0xff]
    %v67 = vld [vmem:[%s1 + $0x98] sm:$0xff]
    %v68 = vld [vmem:[%s1 + $0xa0] sm:$0xff]
    %v69 = vld [vmem:[%s1 + $0xa8] sm:$0xff]
    %v70 = vld [vmem:[%s1 + $0xb0] sm:$0xff]
    %v71 = vld [vmem:[%s1 + $0xb8] sm:$0xff]
    %v72 = vld [vmem:[%s1 + $0xc0] sm:$0xff]
    %v73 = vld [vmem:[%s1 + $0xc8] sm:$0xff]
    %v74 = vld [vmem:[%s1 + $0xd0] sm:$0xff]
    %v75 = vld [vmem:[%s1 + $0xd8] sm:$0xff]
    %v76 = vld [vmem:[%s1 + $0xe0] sm:$0xff]
    %v77 = vld [vmem:[%s1 + $0xe8] sm:$0xff]
    %v78 = vld [vmem:[%s1 + $0xf0] sm:$0xff]
    %v79 = vld [vmem:[%s1 + $0xf8] sm:$0xff]
    %v80 = vld [vmem:[%s1 + $0x100] sm:$0xff]
    %v81 = vld [vmem:[%s1 + $0x108] sm:$0xff]
    %v82 = vld [vmem:[%s1 + $0x110] sm:$0xff]
    %v83 = vld [vmem:[%s1 + $0x118] sm:$0xff]
    %v84 = vld [vmem:[%s1 + $0x120] sm:$0xff]
    %v85 = vld [vmem:[%s1 + $0x128] sm:$0xff]
    %v86 = vld [vmem:[%s1 + $0x130] sm:$0xff]
    %v87 = vld [vmem:[%s1 + $0x138] sm:$0xff]
    %v88 = vld [vmem:[%s1 + $0x140] sm:$0xff]
    %v89 = vld [vmem:[%s1 + $0x148] sm:$0xff]
    %v90 = vld [vmem:[%s1 + $0x150] sm:$0xff]
    %v91 = vld [vmem:[%s1 + $0x158] sm:$0xff]
    %v92 = vld [vmem:[%s1 + $0x160] sm:$0xff]
    %v93 = vld [vmem:[%s1 + $0x168] sm:$0xff]
    %v94 = vld [vmem:[%s1 + $0x170] sm:$0xff]
    %v95 = vld [vmem:[%s1 + $0x178] sm:$0xff]
    %v96 = vld [vmem:[%s1 + $0x180] sm:$0xff]
    %v97 = vld [vmem:[%s1 + $0x188] sm:$0xff]
    %v98 = vld [vmem:[%s1 + $0x190] sm:$0xff]
    %v99 = vld [vmem:[%s1 + $0x198] sm:$0xff]
    %v100 = vld [vmem:[%s1 + $0x1a0] sm:$0xff]
    %v101 = vld [vmem:[%s1 + $0x1a8] sm:$0xff]
    %v102 = vld [vmem:[%s1 + $0x1b0] sm:$0xff]
    %v103 = vld [vmem:[%s1 + $0x1b8] sm:$0xff]
    %v104 = vld [vmem:[%s1 + $0x1c0] sm:$0xff]
    %v105 = vld [vmem:[%s1 + $0x1c8] sm:$0xff]
    %v106 = vld [vmem:[%s1 + $0x1d0] sm:$0xff]
    %v107 = vld [vmem:[%s1 + $0x1d8] sm:$0xff]
    %v108 = vld [vmem:[%s1 + $0x1e0] sm:$0xff]
    %v109 = vld [vmem:[%s1 + $0x1e8] sm:$0xff]
    %v110 = vld [vmem:[%s1 + $0x1f0] sm:$0xff]
    %v111 = vld [vmem:[%s1 + $0x1f8] sm:$0xff]
    %v112 = vld [vmem:[%s1 + $0x200] sm:$0xff]
    %v113 = vld [vmem:[%s1 + $0x208] sm:$0xff]
    %v114 = vld [vmem:[%s1 + $0x210] sm:$0xff]
    %v115 = vld [vmem:[%s1 + $0x218] sm:$0xff]
    %v116 = vld [vmem:[%s1 + $0x220] sm:$0xff]
    %v117 = vld [vmem:[%s1 + $0x228] sm:$0xff]
    %v118 = vld [vmem:[%s1 + $0x230] sm:$0xff]
    %v119 = vld [vmem:[%s1 + $0x238] sm:$0xff]
    %v120 = vld [vmem:[%s1 + $0x240] sm:$0xff]
    %v121 = vld [vmem:[%s1 + $0x248] sm:$0xff]
    %v122 = vld [vmem:[%s1 + $0x250] sm:$0xff]
    %v123 = vld [vmem:[%s1 + $0x258] sm:$0xff]
    %v124 = vld [vmem:[%s1 + $0x260] sm:$0xff]
    %v125 = vld [vmem:[%s1 + $0x268] sm:$0xff]
    %v126 = vld [vmem:[%s1 + $0x270] sm:$0xff]
    %v127 = vld [vmem:[%s1 + $0x278] sm:$0xff]
    %v128 = vld [vmem:[%s1 + $0x280] sm:$0xff]
    %v129 = vld [vmem:[%s1 + $0x288] sm:$0xff]
    %v130 = vld [vmem:[%s1 + $0x290] sm:$0xff]
    %v131 = vld [vmem:[%s1 + $0x298] sm:$0xff]
    %v132 = vld [vmem:[%s1 + $0x2a0] sm:$0xff]
    %v133 = vld [vmem:[%s1 + $0x2a8] sm:$0xff]
    %v134 = vld [vmem:[%s1 + $0x2b0] sm:$0xff]
    %v135 = vld [vmem:[%s1 + $0x2b8] sm:$0xff]
    %v136 = vld [vmem:[%s1 + $0x2c0] sm:$0xff]
    %v137 = vld [vmem:[%s1 + $0x2c8] sm:$0xff]
    %v138 = vld [vmem:[%s1 + $0x2d0] sm:$0xff]
    %v139 = vld [vmem:[%s1 + $0x2d8] sm:$0xff]
    %v140 = vld [vmem:[%s1 + $0x2e0] sm:$0xff]
    %v141 = vld [vmem:[%s1 + $0x2e8] sm:$0xff]
    %v142 = vld [vmem:[%s1 + $0x2f0] sm:$0xff]
    %v143 = vld [vmem:[%s1 + $0x2f8] sm:$0xff]
    %v145 = vlaneseq
    %v146 = vshrl.u32 %v145, 7
    %v147 = vsub.s32 0, %v146
    %v148 = vrot.slane %v21, %v147
    %v149 = vlaneseq
    %v150 = vshrl.u32 %v149, 7
    %v151 = vsub.s32 1, %v150
    %v152 = vrot.slane %v21, %v151
    %v153 = vlaneseq
    %v154 = vshrl.u32 %v153, 7
    %v155 = vsub.s32 2, %v154
    %v156 = vrot.slane %v21, %v155
    %v157 = vlaneseq
    %v158 = vshrl.u32 %v157, 7
    %v159 = vsub.s32 3, %v158
    %v160 = vrot.slane %v21, %v159
    %v161 = vlaneseq
    %v162 = vshrl.u32 %v161, 7
    %v163 = vsub.s32 4, %v162
    %v164 = vrot.slane %v21, %v163
    %v165 = vlaneseq
    %v166 = vshrl.u32 %v165, 7
    %v167 = vsub.s32 5, %v166
    %v168 = vrot.slane %v21, %v167
    %v271 = vunpack.c.l.b16 %v48
    %v272 = vunpack.c.h.b16 %v48
    %v273 = vunpack.c.l.b16 %v49
    %v274 = vunpack.c.h.b16 %v49
    %v275 = vunpack.c.l.b16 %v50
    %v276 = vunpack.c.h.b16 %v50
    %v277 = vunpack.c.l.b16 %v51
    %v278 = vunpack.c.h.b16 %v51
    %v279 = vunpack.c.l.b16 %v52
    %v280 = vunpack.c.h.b16 %v52
    %v281 = vunpack.c.l.b16 %v53
    %v282 = vunpack.c.h.b16 %v53
    %v283 = vunpack.c.l.b16 %v54
    %v284 = vunpack.c.h.b16 %v54
    %v285 = vunpack.c.l.b16 %v55
    %v286 = vunpack.c.h.b16 %v55
    %v287 = vunpack.c.l.b16 %v56
    %v288 = vunpack.c.h.b16 %v56
    %v289 = vunpack.c.l.b16 %v57
    %v290 = vunpack.c.h.b16 %v57
    %v291 = vunpack.c.l.b16 %v58
    %v292 = vunpack.c.h.b16 %v58
    %v293 = vunpack.c.l.b16 %v59
    %v294 = vunpack.c.h.b16 %v59
    %v295 = vunpack.c.l.b16 %v60
    %v296 = vunpack.c.h.b16 %v60
    %v297 = vunpack.c.l.b16 %v61
    %v298 = vunpack.c.h.b16 %v61
    %v299 = vunpack.c.l.b16 %v62
    %v300 = vunpack.c.h.b16 %v62
    %v301 = vunpack.c.l.b16 %v63
    %v302 = vunpack.c.h.b16 %v63
    %v303 = vunpack.c.l.b16 %v64
    %v304 = vunpack.c.h.b16 %v64
    %v305 = vunpack.c.l.b16 %v65
    %v306 = vunpack.c.h.b16 %v65
    %v307 = vunpack.c.l.b16 %v66
    %v308 = vunpack.c.h.b16 %v66
    %v309 = vunpack.c.l.b16 %v67
    %v310 = vunpack.c.h.b16 %v67
    %v311 = vunpack.c.l.b16 %v68
    %v312 = vunpack.c.h.b16 %v68
    %v313 = vunpack.c.l.b16 %v69
    %v314 = vunpack.c.h.b16 %v69
    %v315 = vunpack.c.l.b16 %v70
    %v316 = vunpack.c.h.b16 %v70
    %v317 = vunpack.c.l.b16 %v71
    %v318 = vunpack.c.h.b16 %v71
    %v319 = vunpack.c.l.b16 %v72
    %v320 = vunpack.c.h.b16 %v72
    %v321 = vunpack.c.l.b16 %v73
    %v322 = vunpack.c.h.b16 %v73
    %v323 = vunpack.c.l.b16 %v74
    %v324 = vunpack.c.h.b16 %v74
    %v325 = vunpack.c.l.b16 %v75
    %v326 = vunpack.c.h.b16 %v75
    %v327 = vunpack.c.l.b16 %v76
    %v328 = vunpack.c.h.b16 %v76
    %v329 = vunpack.c.l.b16 %v77
    %v330 = vunpack.c.h.b16 %v77
    %v331 = vunpack.c.l.b16 %v78
    %v332 = vunpack.c.h.b16 %v78
    %v333 = vunpack.c.l.b16 %v79
    %v334 = vunpack.c.h.b16 %v79
    %v335 = vunpack.c.l.b16 %v80
    %v336 = vunpack.c.h.b16 %v80
    %v337 = vunpack.c.l.b16 %v81
    %v338 = vunpack.c.h.b16 %v81
    %v339 = vunpack.c.l.b16 %v82
    %v340 = vunpack.c.h.b16 %v82
    %v341 = vunpack.c.l.b16 %v83
    %v342 = vunpack.c.h.b16 %v83
    %v343 = vunpack.c.l.b16 %v84
    %v344 = vunpack.c.h.b16 %v84
    %v345 = vunpack.c.l.b16 %v85
    %v346 = vunpack.c.h.b16 %v85
    %v347 = vunpack.c.l.b16 %v86
    %v348 = vunpack.c.h.b16 %v86
    %v349 = vunpack.c.l.b16 %v87
    %v350 = vunpack.c.h.b16 %v87
    %v351 = vunpack.c.l.b16 %v88
    %v352 = vunpack.c.h.b16 %v88
    %v353 = vunpack.c.l.b16 %v89
    %v354 = vunpack.c.h.b16 %v89
    %v355 = vunpack.c.l.b16 %v90
    %v356 = vunpack.c.h.b16 %v90
    %v357 = vunpack.c.l.b16 %v91
    %v358 = vunpack.c.h.b16 %v91
    %v359 = vunpack.c.l.b16 %v92
    %v360 = vunpack.c.h.b16 %v92
    %v361 = vunpack.c.l.b16 %v93
    %v362 = vunpack.c.h.b16 %v93
    %v363 = vunpack.c.l.b16 %v94
    %v364 = vunpack.c.h.b16 %v94
    %v365 = vunpack.c.l.b16 %v95
    %v366 = vunpack.c.h.b16 %v95
    %v367 = vunpack.c.l.b16 %v96
    %v368 = vunpack.c.h.b16 %v96
    %v369 = vunpack.c.l.b16 %v97
    %v370 = vunpack.c.h.b16 %v97
    %v371 = vunpack.c.l.b16 %v98
    %v372 = vunpack.c.h.b16 %v98
    %v373 = vunpack.c.l.b16 %v99
    %v374 = vunpack.c.h.b16 %v99
    %v375 = vunpack.c.l.b16 %v100
    %v376 = vunpack.c.h.b16 %v100
    %v377 = vunpack.c.l.b16 %v101
    %v378 = vunpack.c.h.b16 %v101
    %v379 = vunpack.c.l.b16 %v102
    %v380 = vunpack.c.h.b16 %v102
    %v381 = vunpack.c.l.b16 %v103
    %v382 = vunpack.c.h.b16 %v103
    %v383 = vunpack.c.l.b16 %v104
    %v384 = vunpack.c.h.b16 %v104
    %v385 = vunpack.c.l.b16 %v105
    %v386 = vunpack.c.h.b16 %v105
    %v387 = vunpack.c.l.b16 %v106
    %v388 = vunpack.c.h.b16 %v106
    %v389 = vunpack.c.l.b16 %v107
    %v390 = vunpack.c.h.b16 %v107
    %v391 = vunpack.c.l.b16 %v108
    %v392 = vunpack.c.h.b16 %v108
    %v393 = vunpack.c.l.b16 %v109
    %v394 = vunpack.c.h.b16 %v109
    %v395 = vunpack.c.l.b16 %v110
    %v396 = vunpack.c.h.b16 %v110
    %v397 = vunpack.c.l.b16 %v111
    %v398 = vunpack.c.h.b16 %v111
    %v399 = vunpack.c.l.b16 %v112
    %v400 = vunpack.c.h.b16 %v112
    %v401 = vunpack.c.l.b16 %v113
    %v402 = vunpack.c.h.b16 %v113
    %v403 = vunpack.c.l.b16 %v114
    %v404 = vunpack.c.h.b16 %v114
    %v405 = vunpack.c.l.b16 %v115
    %v406 = vunpack.c.h.b16 %v115
    %v407 = vunpack.c.l.b16 %v116
    %v408 = vunpack.c.h.b16 %v116
    %v409 = vunpack.c.l.b16 %v117
    %v410 = vunpack.c.h.b16 %v117
    %v411 = vunpack.c.l.b16 %v118
    %v412 = vunpack.c.h.b16 %v118
    %v413 = vunpack.c.l.b16 %v119
    %v414 = vunpack.c.h.b16 %v119
    %v415 = vunpack.c.l.b16 %v120
    %v416 = vunpack.c.h.b16 %v120
    %v417 = vunpack.c.l.b16 %v121
    %v418 = vunpack.c.h.b16 %v121
    %v419 = vunpack.c.l.b16 %v122
    %v420 = vunpack.c.h.b16 %v122
    %v421 = vunpack.c.l.b16 %v123
    %v422 = vunpack.c.h.b16 %v123
    %v423 = vunpack.c.l.b16 %v124
    %v424 = vunpack.c.h.b16 %v124
    %v425 = vunpack.c.l.b16 %v125
    %v426 = vunpack.c.h.b16 %v125
    %v427 = vunpack.c.l.b16 %v126
    %v428 = vunpack.c.h.b16 %v126
    %v429 = vunpack.c.l.b16 %v127
    %v430 = vunpack.c.h.b16 %v127
    %v431 = vunpack.c.l.b16 %v128
    %v432 = vunpack.c.h.b16 %v128
    %v433 = vunpack.c.l.b16 %v129
    %v434 = vunpack.c.h.b16 %v129
    %v435 = vunpack.c.l.b16 %v130
    %v436 = vunpack.c.h.b16 %v130
    %v437 = vunpack.c.l.b16 %v131
    %v438 = vunpack.c.h.b16 %v131
    %v439 = vunpack.c.l.b16 %v132
    %v440 = vunpack.c.h.b16 %v132
    %v441 = vunpack.c.l.b16 %v133
    %v442 = vunpack.c.h.b16 %v133
    %v443 = vunpack.c.l.b16 %v134
    %v444 = vunpack.c.h.b16 %v134
    %v445 = vunpack.c.l.b16 %v135
    %v446 = vunpack.c.h.b16 %v135
    %v447 = vunpack.c.l.b16 %v136
    %v448 = vunpack.c.h.b16 %v136
    %v449 = vunpack.c.l.b16 %v137
    %v450 = vunpack.c.h.b16 %v137
    %v451 = vunpack.c.l.b16 %v138
    %v452 = vunpack.c.h.b16 %v138
    %v453 = vunpack.c.l.b16 %v139
    %v454 = vunpack.c.h.b16 %v139
    %v455 = vunpack.c.l.b16 %v140
    %v456 = vunpack.c.h.b16 %v140
    %v457 = vunpack.c.l.b16 %v141
    %v458 = vunpack.c.h.b16 %v141
    %v459 = vunpack.c.l.b16 %v142
    %v460 = vunpack.c.h.b16 %v142
    %v461 = vunpack.c.l.b16 %v143
    %v462 = vunpack.c.h.b16 %v143
    %v463 = vpack.c.b16 %v277, %v271
    %v464 = vpack.c.b16 %v278, %v272
    %v465 = vpack.c.b16 %v279, %v273
    %v466 = vpack.c.b16 %v280, %v274
    %v467 = vpack.c.b16 %v281, %v275
    %v468 = vpack.c.b16 %v282, %v276
    %v469 = vpack.c.b16 %v289, %v283
    %v470 = vpack.c.b16 %v290, %v284
    %v471 = vpack.c.b16 %v291, %v285
    %v472 = vpack.c.b16 %v292, %v286
    %v473 = vpack.c.b16 %v293, %v287
    %v474 = vpack.c.b16 %v294, %v288
    %v475 = vpack.c.b16 %v301, %v295
    %v476 = vpack.c.b16 %v302, %v296
    %v477 = vpack.c.b16 %v303, %v297
    %v478 = vpack.c.b16 %v304, %v298
    %v479 = vpack.c.b16 %v305, %v299
    %v480 = vpack.c.b16 %v306, %v300
    %v481 = vpack.c.b16 %v313, %v307
    %v482 = vpack.c.b16 %v314, %v308
    %v483 = vpack.c.b16 %v315, %v309
    %v484 = vpack.c.b16 %v316, %v310
    %v485 = vpack.c.b16 %v317, %v311
    %v486 = vpack.c.b16 %v318, %v312
    %v487 = vpack.c.b16 %v325, %v319
    %v488 = vpack.c.b16 %v326, %v320
    %v489 = vpack.c.b16 %v327, %v321
    %v490 = vpack.c.b16 %v328, %v322
    %v491 = vpack.c.b16 %v329, %v323
    %v492 = vpack.c.b16 %v330, %v324
    %v493 = vpack.c.b16 %v337, %v331
    %v494 = vpack.c.b16 %v338, %v332
    %v495 = vpack.c.b16 %v339, %v333
    %v496 = vpack.c.b16 %v340, %v334
    %v497 = vpack.c.b16 %v341, %v335
    %v498 = vpack.c.b16 %v342, %v336
    %v499 = vpack.c.b16 %v349, %v343
    %v500 = vpack.c.b16 %v350, %v344
    %v501 = vpack.c.b16 %v351, %v345
    %v502 = vpack.c.b16 %v352, %v346
    %v503 = vpack.c.b16 %v353, %v347
    %v504 = vpack.c.b16 %v354, %v348
    %v505 = vpack.c.b16 %v361, %v355
    %v506 = vpack.c.b16 %v362, %v356
    %v507 = vpack.c.b16 %v363, %v357
    %v508 = vpack.c.b16 %v364, %v358
    %v509 = vpack.c.b16 %v365, %v359
    %v510 = vpack.c.b16 %v366, %v360
    %v511 = vpack.c.b16 %v373, %v367
    %v512 = vpack.c.b16 %v374, %v368
    %v513 = vpack.c.b16 %v375, %v369
    %v514 = vpack.c.b16 %v376, %v370
    %v515 = vpack.c.b16 %v377, %v371
    %v516 = vpack.c.b16 %v378, %v372
    %v517 = vpack.c.b16 %v385, %v379
    %v518 = vpack.c.b16 %v386, %v380
    %v519 = vpack.c.b16 %v387, %v381
    %v520 = vpack.c.b16 %v388, %v382
    %v521 = vpack.c.b16 %v389, %v383
    %v522 = vpack.c.b16 %v390, %v384
    %v523 = vpack.c.b16 %v397, %v391
    %v524 = vpack.c.b16 %v398, %v392
    %v525 = vpack.c.b16 %v399, %v393
    %v526 = vpack.c.b16 %v400, %v394
    %v527 = vpack.c.b16 %v401, %v395
    %v528 = vpack.c.b16 %v402, %v396
    %v529 = vpack.c.b16 %v409, %v403
    %v530 = vpack.c.b16 %v410, %v404
    %v531 = vpack.c.b16 %v411, %v405
    %v532 = vpack.c.b16 %v412, %v406
    %v533 = vpack.c.b16 %v413, %v407
    %v534 = vpack.c.b16 %v414, %v408
    %v535 = vpack.c.b16 %v421, %v415
    %v536 = vpack.c.b16 %v422, %v416
    %v537 = vpack.c.b16 %v423, %v417
    %v538 = vpack.c.b16 %v424, %v418
    %v539 = vpack.c.b16 %v425, %v419
    %v540 = vpack.c.b16 %v426, %v420
    %v541 = vpack.c.b16 %v433, %v427
    %v542 = vpack.c.b16 %v434, %v428
    %v543 = vpack.c.b16 %v435, %v429
    %v544 = vpack.c.b16 %v436, %v430
    %v545 = vpack.c.b16 %v437, %v431
    %v546 = vpack.c.b16 %v438, %v432
    %v547 = vpack.c.b16 %v445, %v439
    %v548 = vpack.c.b16 %v446, %v440
    %v549 = vpack.c.b16 %v447, %v441
    %v550 = vpack.c.b16 %v448, %v442
    %v551 = vpack.c.b16 %v449, %v443
    %v552 = vpack.c.b16 %v450, %v444
    %v553 = vpack.c.b16 %v457, %v451
    %v554 = vpack.c.b16 %v458, %v452
    %v555 = vpack.c.b16 %v459, %v453
    %v556 = vpack.c.b16 %v460, %v454
    %v557 = vpack.c.b16 %v461, %v455
    %v558 = vpack.c.b16 %v462, %v456
    %655 = vmatprep.subr.bf16.mxu0 %v506
    %656 = vmatpush1.bf16.msra.mxu0 %v505
    %657 = vmatprep.subr.bf16.mxu0 %v500
    %658 = vmatpush1.bf16.msra.mxu0 %v499
    %659 = vmatprep.subr.bf16.mxu0 %v494
    %660 = vmatpush1.bf16.msra.mxu0 %v493
    %661 = vmatprep.subr.bf16.mxu0 %v488
    %662 = vmatpush1.bf16.msra.mxu0 %v487
    %663 = vmatprep.subr.bf16.mxu0 %v482
    %664 = vmatpush1.bf16.msra.mxu0 %v481
    %665 = vmatprep.subr.bf16.mxu0 %v476
    %666 = vmatpush1.bf16.msra.mxu0 %v475
    %667 = vmatprep.subr.bf16.mxu0 %v470
    %668 = vmatpush1.bf16.msra.mxu0 %v469
    %669 = vmatprep.subr.bf16.mxu0 %v464
    %670 = vmatpush1.bf16.msra.mxu0 %v463
    %671 = vmatprep.subr.bf16.mxu0 %v554
    %672 = vmatpush2.bf16.msra.mxu0 %v553
    %673 = vmatprep.subr.bf16.mxu0 %v548
    %674 = vmatpush2.bf16.msra.mxu0 %v547
    %675 = vmatprep.subr.bf16.mxu0 %v542
    %676 = vmatpush2.bf16.msra.mxu0 %v541
    %677 = vmatprep.subr.bf16.mxu0 %v536
    %678 = vmatpush2.bf16.msra.mxu0 %v535
    %679 = vmatprep.subr.bf16.mxu0 %v530
    %680 = vmatpush2.bf16.msra.mxu0 %v529
    %681 = vmatprep.subr.bf16.mxu0 %v524
    %682 = vmatpush2.bf16.msra.mxu0 %v523
    %683 = vmatprep.subr.bf16.mxu0 %v518
    %684 = vmatpush2.bf16.msra.mxu0 %v517
    %685 = vmatprep.subr.bf16.mxu0 %v512
    %686 = vmatpush2.bf16.msra.mxu0 %v511
    %687 = vmatprep.mubr.bf16.mxu0 %v47
    %688 = vmatmul.mubr.bf16.gmra.mxu0 %v46
    %v689 = vpop.f32.mrf.mxu0
    %v690 = vadd.f32 %v148, %v689
    %v691 = vpop.f32.mrf.mxu0
    %v692 = vadd.f32 %v152, %v691
    %v693 = vpop.f32.mrf.mxu0
    %v694 = vpop.f32.mrf.mxu0
    %695 = vdwg.mxu0
    %696 = vmatprep.subr.bf16.mxu0 %v508
    %697 = vmatpush1.bf16.msra.mxu0 %v507
    %698 = vmatprep.subr.bf16.mxu0 %v502
    %699 = vmatpush1.bf16.msra.mxu0 %v501
    %700 = vmatprep.subr.bf16.mxu0 %v496
    %701 = vmatpush1.bf16.msra.mxu0 %v495
    %702 = vmatprep.subr.bf16.mxu0 %v490
    %703 = vmatpush1.bf16.msra.mxu0 %v489
    %704 = vmatprep.subr.bf16.mxu0 %v484
    %705 = vmatpush1.bf16.msra.mxu0 %v483
    %706 = vmatprep.subr.bf16.mxu0 %v478
    %707 = vmatpush1.bf16.msra.mxu0 %v477
    %708 = vmatprep.subr.bf16.mxu0 %v472
    %709 = vmatpush1.bf16.msra.mxu0 %v471
    %710 = vmatprep.subr.bf16.mxu0 %v466
    %711 = vmatpush1.bf16.msra.mxu0 %v465
    %712 = vmatprep.subr.bf16.mxu0 %v556
    %713 = vmatpush2.bf16.msra.mxu0 %v555
    %714 = vmatprep.subr.bf16.mxu0 %v550
    %715 = vmatpush2.bf16.msra.mxu0 %v549
    %716 = vmatprep.subr.bf16.mxu0 %v544
    %717 = vmatpush2.bf16.msra.mxu0 %v543
    %718 = vmatprep.subr.bf16.mxu0 %v538
    %719 = vmatpush2.bf16.msra.mxu0 %v537
    %720 = vmatprep.subr.bf16.mxu0 %v532
    %721 = vmatpush2.bf16.msra.mxu0 %v531
    %722 = vmatprep.subr.bf16.mxu0 %v526
    %723 = vmatpush2.bf16.msra.mxu0 %v525
    %724 = vmatprep.subr.bf16.mxu0 %v520
    %725 = vmatpush2.bf16.msra.mxu0 %v519
    %726 = vmatprep.subr.bf16.mxu0 %v514
    %727 = vmatpush2.bf16.msra.mxu0 %v513
    %728 = vmatprep.mubr.bf16.mxu0 %v47
    %729 = vmatmul.mubr.bf16.gmra.mxu0 %v46
    %v730 = vpop.f32.mrf.mxu0
    %v731 = vadd.f32 %v156, %v730
    %v732 = vpop.f32.mrf.mxu0
    %v733 = vadd.f32 %v160, %v732
    %v734 = vpop.f32.mrf.mxu0
    %v735 = vpop.f32.mrf.mxu0
    %736 = vdwg.mxu0
    %737 = vmatprep.subr.bf16.mxu0 %v510
    %738 = vmatpush1.bf16.msra.mxu0 %v509
    %739 = vmatprep.subr.bf16.mxu0 %v504
    %740 = vmatpush1.bf16.msra.mxu0 %v503
    %741 = vmatprep.subr.bf16.mxu0 %v498
    %742 = vmatpush1.bf16.msra.mxu0 %v497
    %743 = vmatprep.subr.bf16.mxu0 %v492
    %744 = vmatpush1.bf16.msra.mxu0 %v491
    %745 = vmatprep.subr.bf16.mxu0 %v486
    %746 = vmatpush1.bf16.msra.mxu0 %v485
    %747 = vmatprep.subr.bf16.mxu0 %v480
    %748 = vmatpush1.bf16.msra.mxu0 %v479
    %749 = vmatprep.subr.bf16.mxu0 %v474
    %750 = vmatpush1.bf16.msra.mxu0 %v473
    %751 = vmatprep.subr.bf16.mxu0 %v468
    %752 = vmatpush1.bf16.msra.mxu0 %v467
    %753 = vmatprep.subr.bf16.mxu0 %v558
    %754 = vmatpush2.bf16.msra.mxu0 %v557
    %755 = vmatprep.subr.bf16.mxu0 %v552
    %756 = vmatpush2.bf16.msra.mxu0 %v551
    %757 = vmatprep.subr.bf16.mxu0 %v546
    %758 = vmatpush2.bf16.msra.mxu0 %v545
    %759 = vmatprep.subr.bf16.mxu0 %v540
    %760 = vmatpush2.bf16.msra.mxu0 %v539
    %761 = vmatprep.subr.bf16.mxu0 %v534
    %762 = vmatpush2.bf16.msra.mxu0 %v533
    %763 = vmatprep.subr.bf16.mxu0 %v528
    %764 = vmatpush2.bf16.msra.mxu0 %v527
    %765 = vmatprep.subr.bf16.mxu0 %v522
    %766 = vmatpush2.bf16.msra.mxu0 %v521
    %767 = vmatprep.subr.bf16.mxu0 %v516
    %768 = vmatpush2.bf16.msra.mxu0 %v515
    %769 = vmatprep.mubr.bf16.mxu0 %v47
    %770 = vmatmul.mubr.bf16.gmra.mxu0 %v46
    %v771 = vpop.f32.mrf.mxu0
    %v772 = vadd.f32 %v164, %v771
    %v773 = vpop.f32.mrf.mxu0
    %v774 = vadd.f32 %v168, %v773
    %v775 = vpop.f32.mrf.mxu0
    %v776 = vpop.f32.mrf.mxu0
    %777 = vdwg.mxu0
    %v780 = vcombine.low %v690, %v692
    %v782 = vunpack.c.l.s4 1983009808
    %v783 = vunpack.c.0.s8 %v782
    %v784 = vlaneseq
    %v785 = vshrl.u32 %v784, 7
    %v786 = vsub.s32 %v783, %v785
    %v787 = vrot.slane %v780, %v786
    %v789 = vadd.f32 %v33, %v787
    %v790 = vxor.u32 %v789, 2147483648
    %v791 = vmul.f32 %v790, 1.442695
    %v792 = vpow.pop %v791
    %v793 = vadd.f32 %v792, 1.0
    %v794 = vrcp.pop %v793
    %v795 = vmul.f32 1.0, %v794
    %v797 = vrot.slane %v33, 4
    %v801 = vcombine.low %v731, %v733
    %v803 = vunpack.c.l.s4 1983009808
    %v804 = vunpack.c.0.s8 %v803
    %v805 = vlaneseq
    %v806 = vshrl.u32 %v805, 7
    %v807 = vsub.s32 %v804, %v806
    %v808 = vrot.slane %v801, %v807
    %v810 = vadd.f32 %v797, %v808
    %v811 = vxor.u32 %v810, 2147483648
    %v812 = vmul.f32 %v811, 1.442695
    %v813 = vpow.pop %v812
    %v814 = vadd.f32 %v813, 1.0
    %v815 = vrcp.pop %v814
    %v816 = vmul.f32 1.0, %v815
    %v819 = vcombine.low %v772, %v774
    %v821 = vunpack.c.l.s4 1983009808
    %v822 = vunpack.c.0.s8 %v821
    %v823 = vlaneseq
    %v824 = vshrl.u32 %v823, 7
    %v825 = vsub.s32 %v822, %v824
    %v826 = vrot.slane %v819, %v825
    %v828 = vmul.f32 %v795, %v826
    %v829 = vadd.f32 %v34, %v828
    %v830 = vtanh.pop %v829
    %v831 = vsub.f32 1.0, %v816
    %v832 = vmul.f32 %v831, %v830
    %v833 = vmul.f32 %v816, %v29
    %v834 = vadd.f32 %v832, %v833
    %v837 = vunpack.c.l.s4 1983009808
    %v838 = vunpack.c.0.s8 %v837
    %v839 = vlaneseq
    %v840 = vshrl.u32 %v839, 7
    %v841 = vsub.s32 %v838, %v840
    %v842 = vrot.slane %v834, %v841
    %v843 = vcombine.high %v842, %v842
    %v846 = vpack.c.bf16 %v842, %v842
    %v847 = vpack.c.bf16 %v843, %v843
    %v848 = vld [vmem:[%s3] sm:$0xf]
    %v849 = vld [vmem:[%s3 + $0x4] sm:$0xf]
    %v850 = vld [vmem:[%s3 + $0x8] sm:$0xf]
    %v851 = vld [vmem:[%s3 + $0xc] sm:$0xf]
    %v852 = vld [vmem:[%s3 + $0x10] sm:$0xf]
    %v853 = vld [vmem:[%s3 + $0x14] sm:$0xf]
    %v854 = vld [vmem:[%s3 + $0x18] sm:$0xf]
    %v855 = vld [vmem:[%s3 + $0x1c] sm:$0xf]
    %v856 = vld [vmem:[%s3 + $0x20] sm:$0xf]
    %v857 = vld [vmem:[%s3 + $0x24] sm:$0xf]
    %v858 = vld [vmem:[%s3 + $0x28] sm:$0xf]
    %v859 = vld [vmem:[%s3 + $0x2c] sm:$0xf]
    %v860 = vld [vmem:[%s3 + $0x30] sm:$0xf]
    %v861 = vld [vmem:[%s3 + $0x34] sm:$0xf]
    %v862 = vld [vmem:[%s3 + $0x38] sm:$0xf]
    %v863 = vld [vmem:[%s3 + $0x3c] sm:$0xf]
    %v864 = vld [vmem:[%s3 + $0x40] sm:$0xf]
    %v865 = vld [vmem:[%s3 + $0x44] sm:$0xf]
    %v866 = vld [vmem:[%s3 + $0x48] sm:$0xf]
    %v867 = vld [vmem:[%s3 + $0x4c] sm:$0xf]
    %v868 = vld [vmem:[%s3 + $0x50] sm:$0xf]
    %v869 = vld [vmem:[%s3 + $0x54] sm:$0xf]
    %v870 = vld [vmem:[%s3 + $0x58] sm:$0xf]
    %v871 = vld [vmem:[%s3 + $0x5c] sm:$0xf]
    %v872 = vld [vmem:[%s3 + $0x60] sm:$0xf]
    %v873 = vld [vmem:[%s3 + $0x64] sm:$0xf]
    %v874 = vld [vmem:[%s3 + $0x68] sm:$0xf]
    %v875 = vld [vmem:[%s3 + $0x6c] sm:$0xf]
    %v876 = vld [vmem:[%s3 + $0x70] sm:$0xf]
    %v877 = vld [vmem:[%s3 + $0x74] sm:$0xf]
    %v878 = vld [vmem:[%s3 + $0x78] sm:$0xf]
    %v879 = vld [vmem:[%s3 + $0x7c] sm:$0xf]
    %v881 = vlaneseq
    %v882 = vshrl.u32 %v881, 7
    %v883 = vsub.s32 0, %v882
    %v884 = vrot.slane %v22, %v883
    %v918 = vunpack.c.l.b16 %v848
    %v919 = vunpack.c.l.b16 %v849
    %v920 = vunpack.c.l.b16 %v850
    %v921 = vunpack.c.l.b16 %v851
    %v922 = vunpack.c.l.b16 %v852
    %v923 = vunpack.c.l.b16 %v853
    %v924 = vunpack.c.l.b16 %v854
    %v925 = vunpack.c.l.b16 %v855
    %v926 = vunpack.c.l.b16 %v856
    %v927 = vunpack.c.l.b16 %v857
    %v928 = vunpack.c.l.b16 %v858
    %v929 = vunpack.c.l.b16 %v859
    %v930 = vunpack.c.l.b16 %v860
    %v931 = vunpack.c.l.b16 %v861
    %v932 = vunpack.c.l.b16 %v862
    %v933 = vunpack.c.l.b16 %v863
    %v934 = vunpack.c.l.b16 %v864
    %v935 = vunpack.c.l.b16 %v865
    %v936 = vunpack.c.l.b16 %v866
    %v937 = vunpack.c.l.b16 %v867
    %v938 = vunpack.c.l.b16 %v868
    %v939 = vunpack.c.l.b16 %v869
    %v940 = vunpack.c.l.b16 %v870
    %v941 = vunpack.c.l.b16 %v871
    %v942 = vunpack.c.l.b16 %v872
    %v943 = vunpack.c.l.b16 %v873
    %v944 = vunpack.c.l.b16 %v874
    %v945 = vunpack.c.l.b16 %v875
    %v946 = vunpack.c.l.b16 %v876
    %v947 = vunpack.c.l.b16 %v877
    %v948 = vunpack.c.l.b16 %v878
    %v949 = vunpack.c.l.b16 %v879
    %v950 = vpack.c.b16 %v919, %v918
    %v951 = vpack.c.b16 %v921, %v920
    %v952 = vpack.c.b16 %v923, %v922
    %v953 = vpack.c.b16 %v925, %v924
    %v954 = vpack.c.b16 %v927, %v926
    %v955 = vpack.c.b16 %v929, %v928
    %v956 = vpack.c.b16 %v931, %v930
    %v957 = vpack.c.b16 %v933, %v932
    %v958 = vpack.c.b16 %v935, %v934
    %v959 = vpack.c.b16 %v937, %v936
    %v960 = vpack.c.b16 %v939, %v938
    %v961 = vpack.c.b16 %v941, %v940
    %v962 = vpack.c.b16 %v943, %v942
    %v963 = vpack.c.b16 %v945, %v944
    %v964 = vpack.c.b16 %v947, %v946
    %v965 = vpack.c.b16 %v949, %v948
    %982 = vmatprep.subr.bf16.mxu0 0
    %983 = vmatpush1.bf16.msra.mxu0 %v957
    %984 = vmatprep.subr.bf16.mxu0 0
    %985 = vmatpush1.bf16.msra.mxu0 %v956
    %986 = vmatprep.subr.bf16.mxu0 0
    %987 = vmatpush1.bf16.msra.mxu0 %v955
    %988 = vmatprep.subr.bf16.mxu0 0
    %989 = vmatpush1.bf16.msra.mxu0 %v954
    %990 = vmatprep.subr.bf16.mxu0 0
    %991 = vmatpush1.bf16.msra.mxu0 %v953
    %992 = vmatprep.subr.bf16.mxu0 0
    %993 = vmatpush1.bf16.msra.mxu0 %v952
    %994 = vmatprep.subr.bf16.mxu0 0
    %995 = vmatpush1.bf16.msra.mxu0 %v951
    %996 = vmatprep.subr.bf16.mxu0 0
    %997 = vmatpush1.bf16.msra.mxu0 %v950
    %998 = vmatprep.subr.bf16.mxu0 0
    %999 = vmatpush2.bf16.msra.mxu0 %v965
    %1000 = vmatprep.subr.bf16.mxu0 0
    %1001 = vmatpush2.bf16.msra.mxu0 %v964
    %1002 = vmatprep.subr.bf16.mxu0 0
    %1003 = vmatpush2.bf16.msra.mxu0 %v963
    %1004 = vmatprep.subr.bf16.mxu0 0
    %1005 = vmatpush2.bf16.msra.mxu0 %v962
    %1006 = vmatprep.subr.bf16.mxu0 0
    %1007 = vmatpush2.bf16.msra.mxu0 %v961
    %1008 = vmatprep.subr.bf16.mxu0 0
    %1009 = vmatpush2.bf16.msra.mxu0 %v960
    %1010 = vmatprep.subr.bf16.mxu0 0
    %1011 = vmatpush2.bf16.msra.mxu0 %v959
    %1012 = vmatprep.subr.bf16.mxu0 0
    %1013 = vmatpush2.bf16.msra.mxu0 %v958
    %1014 = vmatprep.mubr.bf16.mxu0 %v847
    %1015 = vmatmul.mubr.bf16.gmra.mxu0 %v846
    %v1016 = vpop.f32.mrf.mxu0
    %v1017 = vadd.f32 %v884, %v1016
    %v1018 = vpop.f32.mrf.mxu0
    %v1019 = vpop.f32.mrf.mxu0
    %v1020 = vpop.f32.mrf.mxu0
    %1021 = vdwg.mxu0
    %vm1022 = vcmask 58368
    %v1023 = vsel %vm1022, %v1017, -inf
    %1024 = vmax.xlane.f32.xlu0 %v1023
    %v1025 = vpop.xlane.xlu0 %1024
    %v1026 = vsub.f32 %v1017, %v1025
    %v1027 = vmul.f32 %v1026, 1.442695
    %v1028 = vpow.pop %v1027
    %v1029 = vsel %vm1022, %v1028, 0.0
    %1030 = vadd.xlane.f32.xlu0 %v1029
    %v1031 = vpop.xlane.xlu0 %1030
    %v1032 = vrcp.pop %v1031
    %v1033 = vmul.f32 %v1028, %v1032
    %s1034 = smul.u32 %s24, 2
    %s1035 = scalar_lea.vmem %s5, %s1034
    %1036 = vst.msk [vmem:[%s1035] sm:$0x3] %vm1022, %v1033
  $region26: #{emotion_recognizer_forward.7} parent=0 // loop_footer
    %s28 = sadd.s32 1, %s24
  $region27: #{emotion_recognizer_forward.7} parent=0 // loop_footer_branch
    %23 = sbr.rel target = $region23
  $region28: #{emotion_recognizer_forward.7} parent=0 // loop_exit
    _
  // Predicated region
  $region29: #{emotion_recognizer_forward.7} parent=0 // pred_check
    _
  $region30: #{emotion_recognizer_forward.7} parent=0 // pred_check_branch
    %1038 = sbr.rel (0) target = $region32
  $region31: #{emotion_recognizer_forward.7} parent=0 // pred_region
    _
  $region32: #{emotion_recognizer_forward.7} parent=0 // pred_fallthru
    _
  // Predicated region
  $region33: #{emotion_recognizer_forward.7} parent=0 // pred_check
    _
  $region34: #{emotion_recognizer_forward.7} parent=0 // pred_check_branch
    %1040 = sbr.rel (0) target = $region36
  $region35: #{emotion_recognizer_forward.7} parent=0 // pred_region
    _
  $region36: #{emotion_recognizer_forward.7} parent=0 // pred_fallthru
    _

</llo_original>
